<compile_context>
chip_gen: v7x
topology: tpu7x:2x2x1
jax: 0.10.0
libtpu: 0.0.40
codegen_flags: <defaults>
</compile_context>

<pallas_src>
import functools

import jax
import jax.numpy as jnp
import numpy as np
from jax.experimental import pallas as pl
from jax.experimental.pallas import tpu as pltpu

DILATIONS = (6, 12, 18, 24)


def _tap_window(d, kh, kw, H, W):
    """Trace-time valid output window for a dilated-conv tap (zero padding)."""
    dy, dx = (kh - 1) * d, (kw - 1) * d
    ro0, ro1 = max(0, -dy), min(H, H - dy)
    co0, co1 = max(0, -dx), min(W, W - dx)
    return dy, dx, ro0, ro1, co0, co1


def aspp_kernel(x_ref, w1_ref, b1_ref, wa_ref, ba_ref,
                wg_ref, bg_ref, gscale_ref, gshift_ref,
                wout_ref, bout_ref, o_ref, acc_scr, *, H, W, Cin, Cout):
    # x_ref: (H, W, Cin) bf16, already resident in VMEM in the right shape.
    x_flat = x_ref[...].reshape(H * W, Cin)

    # Running output accumulator: conv_out bias + sum_i branch_i @ wout[i].
    out = jnp.zeros((H * W, Cout), jnp.float32) + bout_ref[...]

    # ---- branch 0: 1x1 conv + ReLU, immediately folded into `out` ----------
    b = jnp.maximum(
        jnp.dot(x_flat, w1_ref[...], preferred_element_type=jnp.float32)
        + b1_ref[...], 0.0)
    out = out + jnp.dot(b.astype(jnp.bfloat16), wout_ref[0],
                        preferred_element_type=jnp.float32)

    # ---- branches 1..4: dilated 3x3 convs (padding == dilation) + ReLU -----
    for di, d in enumerate(DILATIONS):
        # Center tap covers the full (H, W) output, so use it (plus the conv
        # bias) to initialize the accumulator scratch -> no zero fill at all.
        center = (jnp.dot(x_flat, wa_ref[di, 1, 1],
                          preferred_element_type=jnp.float32) + ba_ref[di])
        acc_scr[...] = center.reshape(H, W, Cout)

        # Off-center taps: only the in-bounds output window gets a
        # contribution; fully out-of-range taps are skipped at trace time.
        for kh in range(3):
            for kw in range(3):
                if kh == 1 and kw == 1:
                    continue
                dy, dx, ro0, ro1, co0, co1 = _tap_window(d, kh, kw, H, W)
                if ro1 <= ro0 or co1 <= co0:
                    continue  # tap multiplies only zero padding
                hv = ro1 - ro0
                # Contiguous full-width row slab -> cheap reshape (no strided
                # column-window relayout copy).
                rows = x_ref[ro0 + dy:ro1 + dy, :, :].reshape(hv * W, Cin)
                y = jnp.dot(rows, wa_ref[di, kh, kw],
                            preferred_element_type=jnp.float32)
                y = y.reshape(hv, W, Cout)[:, co0 + dx:co1 + dx, :]
                acc_scr[ro0:ro1, co0:co1, :] = (
                    acc_scr[ro0:ro1, co0:co1, :] + y)

        b = jnp.maximum(acc_scr[...], 0.0).reshape(H * W, Cout)
        out = out + jnp.dot(b.astype(jnp.bfloat16), wout_ref[di + 1],
                            preferred_element_type=jnp.float32)

    # ---- branch 5: global avg pool -> 1x1 conv -> BN(eval) -> ReLU ---------
    # Bilinear upsample of a 1x1 map with align_corners=True is a constant
    # broadcast, so this branch stays (1, Cout) all the way through conv_out.
    # Mean via MXU ones-matvec (f32 accumulation), no f32 upcast of x.
    ones_row = jnp.ones((1, H * W), jnp.bfloat16)
    gmean = jnp.dot(ones_row, x_flat,
                    preferred_element_type=jnp.float32) * (1.0 / (H * W))
    g = jnp.dot(gmean, wg_ref[...],
                preferred_element_type=jnp.float32) + bg_ref[...]
    g = jnp.maximum(g * gscale_ref[...] + gshift_ref[...], 0.0)     # (1, Cout)
    out = out + jnp.dot(g.astype(jnp.bfloat16), wout_ref[5],
                        preferred_element_type=jnp.float32)

    o_ref[...] = out.reshape(H, W, Cout).astype(o_ref.dtype)


def enhanced_aspp(x_nchw, params):
    """x_nchw: (N, Cin, H, W) float32. Returns (N, Cout, H, W) float32."""
    x = jnp.transpose(x_nchw, (0, 2, 3, 1)).astype(jnp.bfloat16)   # NHWC bf16
    N, H, W, Cin = x.shape
    Cout = params["w1"].shape[1]

    # bf16 operands for the MXU matmuls (Cin contractions and the small
    # Cout x Cout fuse matmuls); biases / BN affine / wg stay f32.
    w1 = params["w1"].astype(jnp.bfloat16)
    wa = params["wa"].astype(jnp.bfloat16)
    wout = params["wout"].astype(jnp.bfloat16)

    in_arrays = (x, w1, params["b1"], wa, params["ba"],
                 params["wg"], params["bg"], params["gscale"],
                 params["gshift"], wout, params["bout"])

    def full_spec(a):
        nd = a.ndim
        return pl.BlockSpec(a.shape, lambda n, _nd=nd: (0,) * _nd)

    in_specs = [pl.BlockSpec((None, H, W, Cin), lambda n: (n, 0, 0, 0))]
    in_specs += [full_spec(a) for a in in_arrays[1:]]

    # Count only the valid-region tap rows actually multiplied.
    tap_rows = 0
    for d in DILATIONS:
        for kh in range(3):
            for kw in range(3):
                _, _, ro0, ro1, co0, co1 = _tap_window(d, kh, kw, H, W)
                if ro1 > ro0 and co1 > co0:
                    tap_rows += (ro1 - ro0) * W
    flops = (2 * N * H * W * Cin * Cout            # 1x1 branch
             + 2 * N * tap_rows * Cin * Cout       # dilated taps (valid rows)
             + 2 * N * H * W * Cout * Cout * 5     # fused conv_out
             + 2 * N * H * W * Cin                 # global mean matvec
             + 4 * N * Cin * Cout)                 # global 1x1 + its fuse
    bytes_accessed = (sum(int(a.size) * a.dtype.itemsize for a in in_arrays)
                      + N * H * W * Cout * 4)

    kernel = functools.partial(aspp_kernel, H=H, W=W, Cin=Cin, Cout=Cout)

    out_nhwc = pl.pallas_call(
        kernel,
        out_shape=jax.ShapeDtypeStruct((N, H, W, Cout), jnp.float32),
        grid=(N,),
        in_specs=in_specs,
        out_specs=pl.BlockSpec((None, H, W, Cout), lambda n: (n, 0, 0, 0)),
        scratch_shapes=[pltpu.VMEM((H, W, Cout), jnp.float32)],
        compiler_params=pltpu.CompilerParams(
            dimension_semantics=("parallel",),
            # Explicit scoped-VMEM budget: above the 16/32 MiB defaults, with
            # headroom under v7x's 64 MiB physical VMEM.
            vmem_limit_bytes=48 * 1024 * 1024),
        cost_estimate=pl.CostEstimate(flops=flops, transcendentals=0,
                                      bytes_accessed=bytes_accessed),
    )(*in_arrays)

    return jnp.transpose(out_nhwc, (0, 3, 1, 2))                   # back to NCHW


def ref_forward(x_nchw, params):
    """Pure-JAX reference (lax convs).

    Mirrors the kernel's MXU precision choices (x/w1/wa and the conv_out
    operands are bf16-rounded, f32 accumulation) so only summation order
    differs from the Pallas kernel.
    """
    rnd = lambda a: a.astype(jnp.bfloat16).astype(jnp.float32)
    x = rnd(jnp.transpose(x_nchw, (0, 2, 3, 1)))                   # NHWC
    dn = ("NHWC", "HWIO", "NHWC")

    def conv(inp, w, b, pad, dil):
        out = jax.lax.conv_general_dilated(
            inp, w, window_strides=(1, 1),
            padding=((pad, pad), (pad, pad)),
            rhs_dilation=(dil, dil), dimension_numbers=dn)
        return out + b.reshape(1, 1, 1, -1)

    Cin, Cout = params["w1"].shape
    x1 = jax.nn.relu(conv(x, rnd(params["w1"]).reshape(1, 1, Cin, Cout),
                          params["b1"][0], 0, 1))
    atrous = []
    for di, d in enumerate(DILATIONS):
        atrous.append(jax.nn.relu(conv(x, rnd(params["wa"][di]),
                                       params["ba"][di, 0], d, d)))
    gmean = jnp.mean(x, axis=(1, 2), keepdims=True)                # (N,1,1,Cin)
    g = conv(gmean, params["wg"].reshape(1, 1, Cin, Cout),
             params["bg"][0], 0, 1)
    g = jax.nn.relu(g * params["gscale"].reshape(1, 1, 1, -1)
                    + params["gshift"].reshape(1, 1, 1, -1))
    g = jnp.broadcast_to(g, x1.shape)           # bilinear of a 1x1 map
    cat = rnd(jnp.concatenate([x1] + atrous + [g], axis=-1))
    w_out = rnd(params["wout"]).reshape(6 * Cout, Cout)
    out = conv(cat, w_out.reshape(1, 1, 6 * Cout, Cout),
               params["bout"][0], 0, 1)
    return jnp.transpose(out, (0, 3, 1, 2))


def make_params(key, in_channels, out_channels):
    ks = jax.random.split(key, 10)
    s = 0.1
    p = {
        "w1": s * jax.random.normal(ks[0], (in_channels, out_channels), jnp.float32),
        "b1": s * jax.random.normal(ks[1], (1, out_channels), jnp.float32),
        "wa": s * jax.random.normal(ks[2], (4, 3, 3, in_channels, out_channels), jnp.float32),
        "ba": s * jax.random.normal(ks[3], (4, 1, out_channels), jnp.float32),
        "wg": s * jax.random.normal(ks[4], (in_channels, out_channels), jnp.float32),
        "bg": s * jax.random.normal(ks[5], (1, out_channels), jnp.float32),
        "wout": s * jax.random.normal(ks[6], (6, out_channels, out_channels), jnp.float32),
        "bout": s * jax.random.normal(ks[7], (1, out_channels), jnp.float32),
    }
    # Eval-mode BatchNorm2d with PyTorch default init:
    # gamma=1, beta=0, running_mean=0, running_var=1, eps=1e-5
    gamma = jnp.ones((out_channels,), jnp.float32)
    beta = jnp.zeros((out_channels,), jnp.float32)
    rmean = jnp.zeros((out_channels,), jnp.float32)
    rvar = jnp.ones((out_channels,), jnp.float32)
    scale = gamma / jnp.sqrt(rvar + 1e-5)
    shift = beta - rmean * scale
    p["gscale"] = scale.reshape(1, out_channels)
    p["gshift"] = shift.reshape(1, out_channels)
    return p


if __name__ == "__main__":
    key = jax.random.PRNGKey(0)
    kx, kp = jax.random.split(key)

    N, Cin, Cout, H, W = 2, 4, 8, 16, 16
    x = jax.random.normal(kx, (N, Cin, H, W), jnp.float32)
    params = make_params(kp, Cin, Cout)

    out = jax.block_until_ready(enhanced_aspp(x, params))
    ref = jax.block_until_ready(ref_forward(x, params))

    # Both sides use bf16-rounded MXU operands with f32 accumulation; only the
    # accumulation order (and, rarely, a bf16 rounding-boundary flip of a
    # branch activation before the fused conv_out) differs, hence 5e-3.
    np.testing.assert_allclose(np.asarray(out), np.asarray(ref),
                               rtol=5e-3, atol=5e-3)
    assert out.shape == (N, Cout, H, W)
    print("KERNEL_OK")
</pallas_src>

<mosaic_0001>
module attributes {stable_mosaic.version = 11 : i64} {
  func.func @aspp_kernel(%arg0: i32, %arg1: memref<1x16x16x4xbf16, #tpu.memory_space<vmem>>, %arg2: memref<4x8xbf16, #tpu.memory_space<vmem>>, %arg3: memref<1x8xf32, #tpu.memory_space<vmem>>, %arg4: memref<4x3x3x4x8xbf16, #tpu.memory_space<vmem>>, %arg5: memref<4x1x8xf32, #tpu.memory_space<vmem>>, %arg6: memref<4x8xf32, #tpu.memory_space<vmem>>, %arg7: memref<1x8xf32, #tpu.memory_space<vmem>>, %arg8: memref<1x8xf32, #tpu.memory_space<vmem>>, %arg9: memref<1x8xf32, #tpu.memory_space<vmem>>, %arg10: memref<6x8x8xbf16, #tpu.memory_space<vmem>>, %arg11: memref<1x8xf32, #tpu.memory_space<vmem>>, %arg12: memref<1x16x16x8xf32, #tpu.memory_space<vmem>>, %arg13: memref<16x16x8xf32, #tpu.memory_space<vmem>>) attributes {dimension_semantics = [#tpu.dimension_semantics<parallel>], iteration_bounds = array<i64: 2>, scalar_prefetch = 0 : i64, scratch_operands = 1 : i64, tpu.core_type = #tpu.core_type<tc>, window_params = [{transform_indices = @transform_0, window_bounds = array<i64: 1, 16, 16, 4>}, {pipeline_mode = #tpu.pipeline_mode<synchronous>, transform_indices = @transform_1, window_bounds = array<i64: 4, 8>}, {pipeline_mode = #tpu.pipeline_mode<synchronous>, transform_indices = @transform_2, window_bounds = array<i64: 1, 8>}, {pipeline_mode = #tpu.pipeline_mode<synchronous>, transform_indices = @transform_3, window_bounds = array<i64: 4, 3, 3, 4, 8>}, {pipeline_mode = #tpu.pipeline_mode<synchronous>, transform_indices = @transform_4, window_bounds = array<i64: 4, 1, 8>}, {pipeline_mode = #tpu.pipeline_mode<synchronous>, transform_indices = @transform_5, window_bounds = array<i64: 4, 8>}, {pipeline_mode = #tpu.pipeline_mode<synchronous>, transform_indices = @transform_6, window_bounds = array<i64: 1, 8>}, {pipeline_mode = #tpu.pipeline_mode<synchronous>, transform_indices = @transform_7, window_bounds = array<i64: 1, 8>}, {pipeline_mode = #tpu.pipeline_mode<synchronous>, transform_indices = @transform_8, window_bounds = array<i64: 1, 8>}, {pipeline_mode = #tpu.pipeline_mode<synchronous>, transform_indices = @transform_9, window_bounds = array<i64: 6, 8, 8>}, {pipeline_mode = #tpu.pipeline_mode<synchronous>, transform_indices = @transform_10, window_bounds = array<i64: 1, 8>}, {transform_indices = @transform_11, window_bounds = array<i64: 1, 16, 16, 8>}]} {
    %c0 = arith.constant 0 : index
    %c0_0 = arith.constant 0 : index
    %c0_1 = arith.constant 0 : index
    %c0_2 = arith.constant 0 : index
    %0 = vector.load %arg1[%c0, %c0_0, %c0_1, %c0_2] : memref<1x16x16x4xbf16, #tpu.memory_space<vmem>>, vector<1x16x16x4xbf16>
    %1 = vector.shape_cast %0 : vector<1x16x16x4xbf16> to vector<16x16x4xbf16>
    %2 = vector.shape_cast %1 : vector<16x16x4xbf16> to vector<256x4xbf16>
    %cst = arith.constant 0.000000e+00 : f32
    %3 = vector.broadcast %cst : f32 to vector<256x8xf32>
    %c0_3 = arith.constant 0 : index
    %c0_4 = arith.constant 0 : index
    %4 = vector.load %arg11[%c0_3, %c0_4] : memref<1x8xf32, #tpu.memory_space<vmem>>, vector<1x8xf32>
    %5 = vector.broadcast %4 : vector<1x8xf32> to vector<256x8xf32>
    %6 = arith.addf %3, %5 : vector<256x8xf32>
    %c0_5 = arith.constant 0 : index
    %c0_6 = arith.constant 0 : index
    %7 = vector.load %arg2[%c0_5, %c0_6] : memref<4x8xbf16, #tpu.memory_space<vmem>>, vector<4x8xbf16>
    %cst_7 = arith.constant dense<0.000000e+00> : vector<256x8xf32>
    %8 = tpu.matmul %2, %7, %cst_7 {dimension_numbers = #tpu.dot_dimension_numbers<[1], [0], [0], [1], [0, 0, 1, 1], [], []>} : vector<256x4xbf16>, vector<4x8xbf16>, vector<256x8xf32> -> vector<256x8xf32>
    %c0_8 = arith.constant 0 : index
    %c0_9 = arith.constant 0 : index
    %9 = vector.load %arg3[%c0_8, %c0_9] : memref<1x8xf32, #tpu.memory_space<vmem>>, vector<1x8xf32>
    %10 = vector.broadcast %9 : vector<1x8xf32> to vector<256x8xf32>
    %11 = arith.addf %8, %10 : vector<256x8xf32>
    %cst_10 = arith.constant 0.000000e+00 : f32
    %12 = vector.broadcast %cst_10 : f32 to vector<256x8xf32>
    %13 = arith.maximumf %11, %12 : vector<256x8xf32>
    %14 = arith.truncf %13 : vector<256x8xf32> to vector<256x8xbf16>
    %c0_11 = arith.constant 0 : index
    %c0_12 = arith.constant 0 : index
    %c0_13 = arith.constant 0 : index
    %15 = vector.load %arg10[%c0_11, %c0_12, %c0_13] : memref<6x8x8xbf16, #tpu.memory_space<vmem>>, vector<1x8x8xbf16>
    %16 = vector.shape_cast %15 : vector<1x8x8xbf16> to vector<8x8xbf16>
    %cst_14 = arith.constant dense<0.000000e+00> : vector<256x8xf32>
    %17 = tpu.matmul %14, %16, %cst_14 {dimension_numbers = #tpu.dot_dimension_numbers<[1], [0], [0], [1], [0, 0, 1, 1], [], []>} : vector<256x8xbf16>, vector<8x8xbf16>, vector<256x8xf32> -> vector<256x8xf32>
    %18 = arith.addf %6, %17 : vector<256x8xf32>
    %c0_15 = arith.constant 0 : index
    %c1 = arith.constant 1 : index
    %c1_16 = arith.constant 1 : index
    %c0_17 = arith.constant 0 : index
    %c0_18 = arith.constant 0 : index
    %19 = vector.load %arg4[%c0_15, %c1, %c1_16, %c0_17, %c0_18] : memref<4x3x3x4x8xbf16, #tpu.memory_space<vmem>>, vector<1x1x1x4x8xbf16>
    %20 = vector.shape_cast %19 : vector<1x1x1x4x8xbf16> to vector<4x8xbf16>
    %cst_19 = arith.constant dense<0.000000e+00> : vector<256x8xf32>
    %21 = tpu.matmul %2, %20, %cst_19 {dimension_numbers = #tpu.dot_dimension_numbers<[1], [0], [0], [1], [0, 0, 1, 1], [], []>} : vector<256x4xbf16>, vector<4x8xbf16>, vector<256x8xf32> -> vector<256x8xf32>
    %c0_20 = arith.constant 0 : index
    %c0_21 = arith.constant 0 : index
    %c0_22 = arith.constant 0 : index
    %22 = vector.load %arg5[%c0_20, %c0_21, %c0_22] : memref<4x1x8xf32, #tpu.memory_space<vmem>>, vector<1x1x8xf32>
    %23 = vector.shape_cast %22 : vector<1x1x8xf32> to vector<1x8xf32>
    %24 = vector.broadcast %23 : vector<1x8xf32> to vector<256x8xf32>
    %25 = arith.addf %21, %24 : vector<256x8xf32>
    %26 = vector.shape_cast %25 : vector<256x8xf32> to vector<16x16x8xf32>
    %c0_23 = arith.constant 0 : index
    %c0_24 = arith.constant 0 : index
    %c0_25 = arith.constant 0 : index
    %27 = vector.load %arg13[%c0_23, %c0_24, %c0_25] : memref<16x16x8xf32, #tpu.memory_space<vmem>>, vector<16x16x8xf32>
    tpu.vector_store %arg13[%c0_23, %c0_24, %c0_25], %26 {strides = array<i32>} : memref<16x16x8xf32, #tpu.memory_space<vmem>>, vector<16x16x8xf32>,
    %c0_26 = arith.constant 0 : index
    %c0_27 = arith.constant 0 : index
    %c0_28 = arith.constant 0 : index
    %c0_29 = arith.constant 0 : index
    %28 = vector.load %arg1[%c0_26, %c0_27, %c0_28, %c0_29] : memref<1x16x16x4xbf16, #tpu.memory_space<vmem>>, vector<1x10x16x4xbf16>
    %29 = vector.shape_cast %28 : vector<1x10x16x4xbf16> to vector<10x16x4xbf16>
    %30 = vector.shape_cast %29 : vector<10x16x4xbf16> to vector<160x4xbf16>
    %c0_30 = arith.constant 0 : index
    %c0_31 = arith.constant 0 : index
    %c0_32 = arith.constant 0 : index
    %c0_33 = arith.constant 0 : index
    %c0_34 = arith.constant 0 : index
    %31 = vector.load %arg4[%c0_30, %c0_31, %c0_32, %c0_33, %c0_34] : memref<4x3x3x4x8xbf16, #tpu.memory_space<vmem>>, vector<1x1x1x4x8xbf16>
    %32 = vector.shape_cast %31 : vector<1x1x1x4x8xbf16> to vector<4x8xbf16>
    %cst_35 = arith.constant dense<0.000000e+00> : vector<160x8xf32>
    %33 = tpu.matmul %30, %32, %cst_35 {dimension_numbers = #tpu.dot_dimension_numbers<[1], [0], [0], [1], [0, 0, 1, 1], [], []>} : vector<160x4xbf16>, vector<4x8xbf16>, vector<160x8xf32> -> vector<160x8xf32>
    %34 = vector.shape_cast %33 : vector<160x8xf32> to vector<10x16x8xf32>
    %35 = vector.extract_strided_slice %34 {offsets = [0, 0, 0], sizes = [10, 10, 8], strides = [1, 1, 1]} : vector<10x16x8xf32> to vector<10x10x8xf32>
    %c6 = arith.constant 6 : index
    %c6_36 = arith.constant 6 : index
    %c0_37 = arith.constant 0 : index
    %36 = vector.load %arg13[%c6, %c6_36, %c0_37] : memref<16x16x8xf32, #tpu.memory_space<vmem>>, vector<10x10x8xf32>
    %37 = arith.addf %36, %35 : vector<10x10x8xf32>
    %c6_38 = arith.constant 6 : index
    %c6_39 = arith.constant 6 : index
    %c0_40 = arith.constant 0 : index
    %38 = vector.load %arg13[%c6_38, %c6_39, %c0_40] : memref<16x16x8xf32, #tpu.memory_space<vmem>>, vector<10x10x8xf32>
    tpu.vector_store %arg13[%c6_38, %c6_39, %c0_40], %37 {strides = array<i32>} : memref<16x16x8xf32, #tpu.memory_space<vmem>>, vector<10x10x8xf32>,
    %c0_41 = arith.constant 0 : index
    %c0_42 = arith.constant 0 : index
    %c0_43 = arith.constant 0 : index
    %c0_44 = arith.constant 0 : index
    %39 = vector.load %arg1[%c0_41, %c0_42, %c0_43, %c0_44] : memref<1x16x16x4xbf16, #tpu.memory_space<vmem>>, vector<1x10x16x4xbf16>
    %40 = vector.shape_cast %39 : vector<1x10x16x4xbf16> to vector<10x16x4xbf16>
    %41 = vector.shape_cast %40 : vector<10x16x4xbf16> to vector<160x4xbf16>
    %c0_45 = arith.constant 0 : index
    %c0_46 = arith.constant 0 : index
    %c1_47 = arith.constant 1 : index
    %c0_48 = arith.constant 0 : index
    %c0_49 = arith.constant 0 : index
    %42 = vector.load %arg4[%c0_45, %c0_46, %c1_47, %c0_48, %c0_49] : memref<4x3x3x4x8xbf16, #tpu.memory_space<vmem>>, vector<1x1x1x4x8xbf16>
    %43 = vector.shape_cast %42 : vector<1x1x1x4x8xbf16> to vector<4x8xbf16>
    %cst_50 = arith.constant dense<0.000000e+00> : vector<160x8xf32>
    %44 = tpu.matmul %41, %43, %cst_50 {dimension_numbers = #tpu.dot_dimension_numbers<[1], [0], [0], [1], [0, 0, 1, 1], [], []>} : vector<160x4xbf16>, vector<4x8xbf16>, vector<160x8xf32> -> vector<160x8xf32>
    %45 = vector.shape_cast %44 : vector<160x8xf32> to vector<10x16x8xf32>
    %c6_51 = arith.constant 6 : index
    %c0_52 = arith.constant 0 : index
    %c0_53 = arith.constant 0 : index
    %46 = vector.load %arg13[%c6_51, %c0_52, %c0_53] : memref<16x16x8xf32, #tpu.memory_space<vmem>>, vector<10x16x8xf32>
    %47 = arith.addf %46, %45 : vector<10x16x8xf32>
    %c6_54 = arith.constant 6 : index
    %c0_55 = arith.constant 0 : index
    %c0_56 = arith.constant 0 : index
    %48 = vector.load %arg13[%c6_54, %c0_55, %c0_56] : memref<16x16x8xf32, #tpu.memory_space<vmem>>, vector<10x16x8xf32>
    tpu.vector_store %arg13[%c6_54, %c0_55, %c0_56], %47 {strides = array<i32>} : memref<16x16x8xf32, #tpu.memory_space<vmem>>, vector<10x16x8xf32>,
    %c0_57 = arith.constant 0 : index
    %c0_58 = arith.constant 0 : index
    %c0_59 = arith.constant 0 : index
    %c0_60 = arith.constant 0 : index
    %49 = vector.load %arg1[%c0_57, %c0_58, %c0_59, %c0_60] : memref<1x16x16x4xbf16, #tpu.memory_space<vmem>>, vector<1x10x16x4xbf16>
    %50 = vector.shape_cast %49 : vector<1x10x16x4xbf16> to vector<10x16x4xbf16>
    %51 = vector.shape_cast %50 : vector<10x16x4xbf16> to vector<160x4xbf16>
    %c0_61 = arith.constant 0 : index
    %c0_62 = arith.constant 0 : index
    %c2 = arith.constant 2 : index
    %c0_63 = arith.constant 0 : index
    %c0_64 = arith.constant 0 : index
    %52 = vector.load %arg4[%c0_61, %c0_62, %c2, %c0_63, %c0_64] : memref<4x3x3x4x8xbf16, #tpu.memory_space<vmem>>, vector<1x1x1x4x8xbf16>
    %53 = vector.shape_cast %52 : vector<1x1x1x4x8xbf16> to vector<4x8xbf16>
    %cst_65 = arith.constant dense<0.000000e+00> : vector<160x8xf32>
    %54 = tpu.matmul %51, %53, %cst_65 {dimension_numbers = #tpu.dot_dimension_numbers<[1], [0], [0], [1], [0, 0, 1, 1], [], []>} : vector<160x4xbf16>, vector<4x8xbf16>, vector<160x8xf32> -> vector<160x8xf32>
    %55 = vector.shape_cast %54 : vector<160x8xf32> to vector<10x16x8xf32>
    %56 = vector.extract_strided_slice %55 {offsets = [0, 6, 0], sizes = [10, 10, 8], strides = [1, 1, 1]} : vector<10x16x8xf32> to vector<10x10x8xf32>
    %c6_66 = arith.constant 6 : index
    %c0_67 = arith.constant 0 : index
    %c0_68 = arith.constant 0 : index
    %57 = vector.load %arg13[%c6_66, %c0_67, %c0_68] : memref<16x16x8xf32, #tpu.memory_space<vmem>>, vector<10x10x8xf32>
    %58 = arith.addf %57, %56 : vector<10x10x8xf32>
    %c6_69 = arith.constant 6 : index
    %c0_70 = arith.constant 0 : index
    %c0_71 = arith.constant 0 : index
    %59 = vector.load %arg13[%c6_69, %c0_70, %c0_71] : memref<16x16x8xf32, #tpu.memory_space<vmem>>, vector<10x10x8xf32>
    tpu.vector_store %arg13[%c6_69, %c0_70, %c0_71], %58 {strides = array<i32>} : memref<16x16x8xf32, #tpu.memory_space<vmem>>, vector<10x10x8xf32>,
    %c0_72 = arith.constant 0 : index
    %c0_73 = arith.constant 0 : index
    %c0_74 = arith.constant 0 : index
    %c0_75 = arith.constant 0 : index
    %60 = vector.load %arg1[%c0_72, %c0_73, %c0_74, %c0_75] : memref<1x16x16x4xbf16, #tpu.memory_space<vmem>>, vector<1x16x16x4xbf16>
    %61 = vector.shape_cast %60 : vector<1x16x16x4xbf16> to vector<16x16x4xbf16>
    %62 = vector.shape_cast %61 : vector<16x16x4xbf16> to vector<256x4xbf16>
    %c0_76 = arith.constant 0 : index
    %c1_77 = arith.constant 1 : index
    %c0_78 = arith.constant 0 : index
    %c0_79 = arith.constant 0 : index
    %c0_80 = arith.constant 0 : index
    %63 = vector.load %arg4[%c0_76, %c1_77, %c0_78, %c0_79, %c0_80] : memref<4x3x3x4x8xbf16, #tpu.memory_space<vmem>>, vector<1x1x1x4x8xbf16>
    %64 = vector.shape_cast %63 : vector<1x1x1x4x8xbf16> to vector<4x8xbf16>
    %cst_81 = arith.constant dense<0.000000e+00> : vector<256x8xf32>
    %65 = tpu.matmul %62, %64, %cst_81 {dimension_numbers = #tpu.dot_dimension_numbers<[1], [0], [0], [1], [0, 0, 1, 1], [], []>} : vector<256x4xbf16>, vector<4x8xbf16>, vector<256x8xf32> -> vector<256x8xf32>
    %66 = vector.shape_cast %65 : vector<256x8xf32> to vector<16x16x8xf32>
    %67 = vector.extract_strided_slice %66 {offsets = [0, 0, 0], sizes = [16, 10, 8], strides = [1, 1, 1]} : vector<16x16x8xf32> to vector<16x10x8xf32>
    %c0_82 = arith.constant 0 : index
    %c6_83 = arith.constant 6 : index
    %c0_84 = arith.constant 0 : index
    %68 = vector.load %arg13[%c0_82, %c6_83, %c0_84] : memref<16x16x8xf32, #tpu.memory_space<vmem>>, vector<16x10x8xf32>
    %69 = arith.addf %68, %67 : vector<16x10x8xf32>
    %c0_85 = arith.constant 0 : index
    %c6_86 = arith.constant 6 : index
    %c0_87 = arith.constant 0 : index
    %70 = vector.load %arg13[%c0_85, %c6_86, %c0_87] : memref<16x16x8xf32, #tpu.memory_space<vmem>>, vector<16x10x8xf32>
    tpu.vector_store %arg13[%c0_85, %c6_86, %c0_87], %69 {strides = array<i32>} : memref<16x16x8xf32, #tpu.memory_space<vmem>>, vector<16x10x8xf32>,
    %c0_88 = arith.constant 0 : index
    %c0_89 = arith.constant 0 : index
    %c0_90 = arith.constant 0 : index
    %c0_91 = arith.constant 0 : index
    %71 = vector.load %arg1[%c0_88, %c0_89, %c0_90, %c0_91] : memref<1x16x16x4xbf16, #tpu.memory_space<vmem>>, vector<1x16x16x4xbf16>
    %72 = vector.shape_cast %71 : vector<1x16x16x4xbf16> to vector<16x16x4xbf16>
    %73 = vector.shape_cast %72 : vector<16x16x4xbf16> to vector<256x4xbf16>
    %c0_92 = arith.constant 0 : index
    %c1_93 = arith.constant 1 : index
    %c2_94 = arith.constant 2 : index
    %c0_95 = arith.constant 0 : index
    %c0_96 = arith.constant 0 : index
    %74 = vector.load %arg4[%c0_92, %c1_93, %c2_94, %c0_95, %c0_96] : memref<4x3x3x4x8xbf16, #tpu.memory_space<vmem>>, vector<1x1x1x4x8xbf16>
    %75 = vector.shape_cast %74 : vector<1x1x1x4x8xbf16> to vector<4x8xbf16>
    %cst_97 = arith.constant dense<0.000000e+00> : vector<256x8xf32>
    %76 = tpu.matmul %73, %75, %cst_97 {dimension_numbers = #tpu.dot_dimension_numbers<[1], [0], [0], [1], [0, 0, 1, 1], [], []>} : vector<256x4xbf16>, vector<4x8xbf16>, vector<256x8xf32> -> vector<256x8xf32>
    %77 = vector.shape_cast %76 : vector<256x8xf32> to vector<16x16x8xf32>
    %78 = vector.extract_strided_slice %77 {offsets = [0, 6, 0], sizes = [16, 10, 8], strides = [1, 1, 1]} : vector<16x16x8xf32> to vector<16x10x8xf32>
    %c0_98 = arith.constant 0 : index
    %c0_99 = arith.constant 0 : index
    %c0_100 = arith.constant 0 : index
    %79 = vector.load %arg13[%c0_98, %c0_99, %c0_100] : memref<16x16x8xf32, #tpu.memory_space<vmem>>, vector<16x10x8xf32>
    %80 = arith.addf %79, %78 : vector<16x10x8xf32>
    %c0_101 = arith.constant 0 : index
    %c0_102 = arith.constant 0 : index
    %c0_103 = arith.constant 0 : index
    %81 = vector.load %arg13[%c0_101, %c0_102, %c0_103] : memref<16x16x8xf32, #tpu.memory_space<vmem>>, vector<16x10x8xf32>
    tpu.vector_store %arg13[%c0_101, %c0_102, %c0_103], %80 {strides = array<i32>} : memref<16x16x8xf32, #tpu.memory_space<vmem>>, vector<16x10x8xf32>,
    %c0_104 = arith.constant 0 : index
    %c6_105 = arith.constant 6 : index
    %c0_106 = arith.constant 0 : index
    %c0_107 = arith.constant 0 : index
    %82 = vector.load %arg1[%c0_104, %c6_105, %c0_106, %c0_107] : memref<1x16x16x4xbf16, #tpu.memory_space<vmem>>, vector<1x10x16x4xbf16>
    %83 = vector.shape_cast %82 : vector<1x10x16x4xbf16> to vector<10x16x4xbf16>
    %84 = vector.shape_cast %83 : vector<10x16x4xbf16> to vector<160x4xbf16>
    %c0_108 = arith.constant 0 : index
    %c2_109 = arith.constant 2 : index
    %c0_110 = arith.constant 0 : index
    %c0_111 = arith.constant 0 : index
    %c0_112 = arith.constant 0 : index
    %85 = vector.load %arg4[%c0_108, %c2_109, %c0_110, %c0_111, %c0_112] : memref<4x3x3x4x8xbf16, #tpu.memory_space<vmem>>, vector<1x1x1x4x8xbf16>
    %86 = vector.shape_cast %85 : vector<1x1x1x4x8xbf16> to vector<4x8xbf16>
    %cst_113 = arith.constant dense<0.000000e+00> : vector<160x8xf32>
    %87 = tpu.matmul %84, %86, %cst_113 {dimension_numbers = #tpu.dot_dimension_numbers<[1], [0], [0], [1], [0, 0, 1, 1], [], []>} : vector<160x4xbf16>, vector<4x8xbf16>, vector<160x8xf32> -> vector<160x8xf32>
    %88 = vector.shape_cast %87 : vector<160x8xf32> to vector<10x16x8xf32>
    %89 = vector.extract_strided_slice %88 {offsets = [0, 0, 0], sizes = [10, 10, 8], strides = [1, 1, 1]} : vector<10x16x8xf32> to vector<10x10x8xf32>
    %c0_114 = arith.constant 0 : index
    %c6_115 = arith.constant 6 : index
    %c0_116 = arith.constant 0 : index
    %90 = vector.load %arg13[%c0_114, %c6_115, %c0_116] : memref<16x16x8xf32, #tpu.memory_space<vmem>>, vector<10x10x8xf32>
    %91 = arith.addf %90, %89 : vector<10x10x8xf32>
    %c0_117 = arith.constant 0 : index
    %c6_118 = arith.constant 6 : index
    %c0_119 = arith.constant 0 : index
    %92 = vector.load %arg13[%c0_117, %c6_118, %c0_119] : memref<16x16x8xf32, #tpu.memory_space<vmem>>, vector<10x10x8xf32>
    tpu.vector_store %arg13[%c0_117, %c6_118, %c0_119], %91 {strides = array<i32>} : memref<16x16x8xf32, #tpu.memory_space<vmem>>, vector<10x10x8xf32>,
    %c0_120 = arith.constant 0 : index
    %c6_121 = arith.constant 6 : index
    %c0_122 = arith.constant 0 : index
    %c0_123 = arith.constant 0 : index
    %93 = vector.load %arg1[%c0_120, %c6_121, %c0_122, %c0_123] : memref<1x16x16x4xbf16, #tpu.memory_space<vmem>>, vector<1x10x16x4xbf16>
    %94 = vector.shape_cast %93 : vector<1x10x16x4xbf16> to vector<10x16x4xbf16>
    %95 = vector.shape_cast %94 : vector<10x16x4xbf16> to vector<160x4xbf16>
    %c0_124 = arith.constant 0 : index
    %c2_125 = arith.constant 2 : index
    %c1_126 = arith.constant 1 : index
    %c0_127 = arith.constant 0 : index
    %c0_128 = arith.constant 0 : index
    %96 = vector.load %arg4[%c0_124, %c2_125, %c1_126, %c0_127, %c0_128] : memref<4x3x3x4x8xbf16, #tpu.memory_space<vmem>>, vector<1x1x1x4x8xbf16>
    %97 = vector.shape_cast %96 : vector<1x1x1x4x8xbf16> to vector<4x8xbf16>
    %cst_129 = arith.constant dense<0.000000e+00> : vector<160x8xf32>
    %98 = tpu.matmul %95, %97, %cst_129 {dimension_numbers = #tpu.dot_dimension_numbers<[1], [0], [0], [1], [0, 0, 1, 1], [], []>} : vector<160x4xbf16>, vector<4x8xbf16>, vector<160x8xf32> -> vector<160x8xf32>
    %99 = vector.shape_cast %98 : vector<160x8xf32> to vector<10x16x8xf32>
    %c0_130 = arith.constant 0 : index
    %c0_131 = arith.constant 0 : index
    %c0_132 = arith.constant 0 : index
    %100 = vector.load %arg13[%c0_130, %c0_131, %c0_132] : memref<16x16x8xf32, #tpu.memory_space<vmem>>, vector<10x16x8xf32>
    %101 = arith.addf %100, %99 : vector<10x16x8xf32>
    %c0_133 = arith.constant 0 : index
    %c0_134 = arith.constant 0 : index
    %c0_135 = arith.constant 0 : index
    %102 = vector.load %arg13[%c0_133, %c0_134, %c0_135] : memref<16x16x8xf32, #tpu.memory_space<vmem>>, vector<10x16x8xf32>
    tpu.vector_store %arg13[%c0_133, %c0_134, %c0_135], %101 {strides = array<i32>} : memref<16x16x8xf32, #tpu.memory_space<vmem>>, vector<10x16x8xf32>,
    %c0_136 = arith.constant 0 : index
    %c6_137 = arith.constant 6 : index
    %c0_138 = arith.constant 0 : index
    %c0_139 = arith.constant 0 : index
    %103 = vector.load %arg1[%c0_136, %c6_137, %c0_138, %c0_139] : memref<1x16x16x4xbf16, #tpu.memory_space<vmem>>, vector<1x10x16x4xbf16>
    %104 = vector.shape_cast %103 : vector<1x10x16x4xbf16> to vector<10x16x4xbf16>
    %105 = vector.shape_cast %104 : vector<10x16x4xbf16> to vector<160x4xbf16>
    %c0_140 = arith.constant 0 : index
    %c2_141 = arith.constant 2 : index
    %c2_142 = arith.constant 2 : index
    %c0_143 = arith.constant 0 : index
    %c0_144 = arith.constant 0 : index
    %106 = vector.load %arg4[%c0_140, %c2_141, %c2_142, %c0_143, %c0_144] : memref<4x3x3x4x8xbf16, #tpu.memory_space<vmem>>, vector<1x1x1x4x8xbf16>
    %107 = vector.shape_cast %106 : vector<1x1x1x4x8xbf16> to vector<4x8xbf16>
    %cst_145 = arith.constant dense<0.000000e+00> : vector<160x8xf32>
    %108 = tpu.matmul %105, %107, %cst_145 {dimension_numbers = #tpu.dot_dimension_numbers<[1], [0], [0], [1], [0, 0, 1, 1], [], []>} : vector<160x4xbf16>, vector<4x8xbf16>, vector<160x8xf32> -> vector<160x8xf32>
    %109 = vector.shape_cast %108 : vector<160x8xf32> to vector<10x16x8xf32>
    %110 = vector.extract_strided_slice %109 {offsets = [0, 6, 0], sizes = [10, 10, 8], strides = [1, 1, 1]} : vector<10x16x8xf32> to vector<10x10x8xf32>
    %c0_146 = arith.constant 0 : index
    %c0_147 = arith.constant 0 : index
    %c0_148 = arith.constant 0 : index
    %111 = vector.load %arg13[%c0_146, %c0_147, %c0_148] : memref<16x16x8xf32, #tpu.memory_space<vmem>>, vector<10x10x8xf32>
    %112 = arith.addf %111, %110 : vector<10x10x8xf32>
    %c0_149 = arith.constant 0 : index
    %c0_150 = arith.constant 0 : index
    %c0_151 = arith.constant 0 : index
    %113 = vector.load %arg13[%c0_149, %c0_150, %c0_151] : memref<16x16x8xf32, #tpu.memory_space<vmem>>, vector<10x10x8xf32>
    tpu.vector_store %arg13[%c0_149, %c0_150, %c0_151], %112 {strides = array<i32>} : memref<16x16x8xf32, #tpu.memory_space<vmem>>, vector<10x10x8xf32>,
    %c0_152 = arith.constant 0 : index
    %c0_153 = arith.constant 0 : index
    %c0_154 = arith.constant 0 : index
    %114 = vector.load %arg13[%c0_152, %c0_153, %c0_154] : memref<16x16x8xf32, #tpu.memory_space<vmem>>, vector<16x16x8xf32>
    %cst_155 = arith.constant 0.000000e+00 : f32
    %115 = vector.broadcast %cst_155 : f32 to vector<16x16x8xf32>
    %116 = arith.maximumf %114, %115 : vector<16x16x8xf32>
    %117 = vector.shape_cast %116 : vector<16x16x8xf32> to vector<256x8xf32>
    %118 = arith.truncf %117 : vector<256x8xf32> to vector<256x8xbf16>
    %c1_156 = arith.constant 1 : index
    %c0_157 = arith.constant 0 : index
    %c0_158 = arith.constant 0 : index
    %119 = vector.load %arg10[%c1_156, %c0_157, %c0_158] : memref<6x8x8xbf16, #tpu.memory_space<vmem>>, vector<1x8x8xbf16>
    %120 = vector.shape_cast %119 : vector<1x8x8xbf16> to vector<8x8xbf16>
    %cst_159 = arith.constant dense<0.000000e+00> : vector<256x8xf32>
    %121 = tpu.matmul %118, %120, %cst_159 {dimension_numbers = #tpu.dot_dimension_numbers<[1], [0], [0], [1], [0, 0, 1, 1], [], []>} : vector<256x8xbf16>, vector<8x8xbf16>, vector<256x8xf32> -> vector<256x8xf32>
    %122 = arith.addf %18, %121 : vector<256x8xf32>
    %c1_160 = arith.constant 1 : index
    %c1_161 = arith.constant 1 : index
    %c1_162 = arith.constant 1 : index
    %c0_163 = arith.constant 0 : index
    %c0_164 = arith.constant 0 : index
    %123 = vector.load %arg4[%c1_160, %c1_161, %c1_162, %c0_163, %c0_164] : memref<4x3x3x4x8xbf16, #tpu.memory_space<vmem>>, vector<1x1x1x4x8xbf16>
    %124 = vector.shape_cast %123 : vector<1x1x1x4x8xbf16> to vector<4x8xbf16>
    %cst_165 = arith.constant dense<0.000000e+00> : vector<256x8xf32>
    %125 = tpu.matmul %2, %124, %cst_165 {dimension_numbers = #tpu.dot_dimension_numbers<[1], [0], [0], [1], [0, 0, 1, 1], [], []>} : vector<256x4xbf16>, vector<4x8xbf16>, vector<256x8xf32> -> vector<256x8xf32>
    %c1_166 = arith.constant 1 : index
    %c0_167 = arith.constant 0 : index
    %c0_168 = arith.constant 0 : index
    %126 = vector.load %arg5[%c1_166, %c0_167, %c0_168] : memref<4x1x8xf32, #tpu.memory_space<vmem>>, vector<1x1x8xf32>
    %127 = vector.shape_cast %126 : vector<1x1x8xf32> to vector<1x8xf32>
    %128 = vector.broadcast %127 : vector<1x8xf32> to vector<256x8xf32>
    %129 = arith.addf %125, %128 : vector<256x8xf32>
    %130 = vector.shape_cast %129 : vector<256x8xf32> to vector<16x16x8xf32>
    %c0_169 = arith.constant 0 : index
    %c0_170 = arith.constant 0 : index
    %c0_171 = arith.constant 0 : index
    %131 = vector.load %arg13[%c0_169, %c0_170, %c0_171] : memref<16x16x8xf32, #tpu.memory_space<vmem>>, vector<16x16x8xf32>
    tpu.vector_store %arg13[%c0_169, %c0_170, %c0_171], %130 {strides = array<i32>} : memref<16x16x8xf32, #tpu.memory_space<vmem>>, vector<16x16x8xf32>,
    %c0_172 = arith.constant 0 : index
    %c0_173 = arith.constant 0 : index
    %c0_174 = arith.constant 0 : index
    %c0_175 = arith.constant 0 : index
    %132 = vector.load %arg1[%c0_172, %c0_173, %c0_174, %c0_175] : memref<1x16x16x4xbf16, #tpu.memory_space<vmem>>, vector<1x4x16x4xbf16>
    %133 = vector.shape_cast %132 : vector<1x4x16x4xbf16> to vector<4x16x4xbf16>
    %134 = vector.shape_cast %133 : vector<4x16x4xbf16> to vector<64x4xbf16>
    %c1_176 = arith.constant 1 : index
    %c0_177 = arith.constant 0 : index
    %c0_178 = arith.constant 0 : index
    %c0_179 = arith.constant 0 : index
    %c0_180 = arith.constant 0 : index
    %135 = vector.load %arg4[%c1_176, %c0_177, %c0_178, %c0_179, %c0_180] : memref<4x3x3x4x8xbf16, #tpu.memory_space<vmem>>, vector<1x1x1x4x8xbf16>
    %136 = vector.shape_cast %135 : vector<1x1x1x4x8xbf16> to vector<4x8xbf16>
    %cst_181 = arith.constant dense<0.000000e+00> : vector<64x8xf32>
    %137 = tpu.matmul %134, %136, %cst_181 {dimension_numbers = #tpu.dot_dimension_numbers<[1], [0], [0], [1], [0, 0, 1, 1], [], []>} : vector<64x4xbf16>, vector<4x8xbf16>, vector<64x8xf32> -> vector<64x8xf32>
    %138 = vector.shape_cast %137 : vector<64x8xf32> to vector<4x16x8xf32>
    %139 = vector.extract_strided_slice %138 {offsets = [0, 0, 0], sizes = [4, 4, 8], strides = [1, 1, 1]} : vector<4x16x8xf32> to vector<4x4x8xf32>
    %c12 = arith.constant 12 : index
    %c12_182 = arith.constant 12 : index
    %c0_183 = arith.constant 0 : index
    %140 = vector.load %arg13[%c12, %c12_182, %c0_183] : memref<16x16x8xf32, #tpu.memory_space<vmem>>, vector<4x4x8xf32>
    %141 = arith.addf %140, %139 : vector<4x4x8xf32>
    %c12_184 = arith.constant 12 : index
    %c12_185 = arith.constant 12 : index
    %c0_186 = arith.constant 0 : index
    %142 = vector.load %arg13[%c12_184, %c12_185, %c0_186] : memref<16x16x8xf32, #tpu.memory_space<vmem>>, vector<4x4x8xf32>
    tpu.vector_store %arg13[%c12_184, %c12_185, %c0_186], %141 {strides = array<i32>} : memref<16x16x8xf32, #tpu.memory_space<vmem>>, vector<4x4x8xf32>,
    %c0_187 = arith.constant 0 : index
    %c0_188 = arith.constant 0 : index
    %c0_189 = arith.constant 0 : index
    %c0_190 = arith.constant 0 : index
    %143 = vector.load %arg1[%c0_187, %c0_188, %c0_189, %c0_190] : memref<1x16x16x4xbf16, #tpu.memory_space<vmem>>, vector<1x4x16x4xbf16>
    %144 = vector.shape_cast %143 : vector<1x4x16x4xbf16> to vector<4x16x4xbf16>
    %145 = vector.shape_cast %144 : vector<4x16x4xbf16> to vector<64x4xbf16>
    %c1_191 = arith.constant 1 : index
    %c0_192 = arith.constant 0 : index
    %c1_193 = arith.constant 1 : index
    %c0_194 = arith.constant 0 : index
    %c0_195 = arith.constant 0 : index
    %146 = vector.load %arg4[%c1_191, %c0_192, %c1_193, %c0_194, %c0_195] : memref<4x3x3x4x8xbf16, #tpu.memory_space<vmem>>, vector<1x1x1x4x8xbf16>
    %147 = vector.shape_cast %146 : vector<1x1x1x4x8xbf16> to vector<4x8xbf16>
    %cst_196 = arith.constant dense<0.000000e+00> : vector<64x8xf32>
    %148 = tpu.matmul %145, %147, %cst_196 {dimension_numbers = #tpu.dot_dimension_numbers<[1], [0], [0], [1], [0, 0, 1, 1], [], []>} : vector<64x4xbf16>, vector<4x8xbf16>, vector<64x8xf32> -> vector<64x8xf32>
    %149 = vector.shape_cast %148 : vector<64x8xf32> to vector<4x16x8xf32>
    %c12_197 = arith.constant 12 : index
    %c0_198 = arith.constant 0 : index
    %c0_199 = arith.constant 0 : index
    %150 = vector.load %arg13[%c12_197, %c0_198, %c0_199] : memref<16x16x8xf32, #tpu.memory_space<vmem>>, vector<4x16x8xf32>
    %151 = arith.addf %150, %149 : vector<4x16x8xf32>
    %c12_200 = arith.constant 12 : index
    %c0_201 = arith.constant 0 : index
    %c0_202 = arith.constant 0 : index
    %152 = vector.load %arg13[%c12_200, %c0_201, %c0_202] : memref<16x16x8xf32, #tpu.memory_space<vmem>>, vector<4x16x8xf32>
    tpu.vector_store %arg13[%c12_200, %c0_201, %c0_202], %151 {strides = array<i32>} : memref<16x16x8xf32, #tpu.memory_space<vmem>>, vector<4x16x8xf32>,
    %c0_203 = arith.constant 0 : index
    %c0_204 = arith.constant 0 : index
    %c0_205 = arith.constant 0 : index
    %c0_206 = arith.constant 0 : index
    %153 = vector.load %arg1[%c0_203, %c0_204, %c0_205, %c0_206] : memref<1x16x16x4xbf16, #tpu.memory_space<vmem>>, vector<1x4x16x4xbf16>
    %154 = vector.shape_cast %153 : vector<1x4x16x4xbf16> to vector<4x16x4xbf16>
    %155 = vector.shape_cast %154 : vector<4x16x4xbf16> to vector<64x4xbf16>
    %c1_207 = arith.constant 1 : index
    %c0_208 = arith.constant 0 : index
    %c2_209 = arith.constant 2 : index
    %c0_210 = arith.constant 0 : index
    %c0_211 = arith.constant 0 : index
    %156 = vector.load %arg4[%c1_207, %c0_208, %c2_209, %c0_210, %c0_211] : memref<4x3x3x4x8xbf16, #tpu.memory_space<vmem>>, vector<1x1x1x4x8xbf16>
    %157 = vector.shape_cast %156 : vector<1x1x1x4x8xbf16> to vector<4x8xbf16>
    %cst_212 = arith.constant dense<0.000000e+00> : vector<64x8xf32>
    %158 = tpu.matmul %155, %157, %cst_212 {dimension_numbers = #tpu.dot_dimension_numbers<[1], [0], [0], [1], [0, 0, 1, 1], [], []>} : vector<64x4xbf16>, vector<4x8xbf16>, vector<64x8xf32> -> vector<64x8xf32>
    %159 = vector.shape_cast %158 : vector<64x8xf32> to vector<4x16x8xf32>
    %160 = vector.extract_strided_slice %159 {offsets = [0, 12, 0], sizes = [4, 4, 8], strides = [1, 1, 1]} : vector<4x16x8xf32> to vector<4x4x8xf32>
    %c12_213 = arith.constant 12 : index
    %c0_214 = arith.constant 0 : index
    %c0_215 = arith.constant 0 : index
    %161 = vector.load %arg13[%c12_213, %c0_214, %c0_215] : memref<16x16x8xf32, #tpu.memory_space<vmem>>, vector<4x4x8xf32>
    %162 = arith.addf %161, %160 : vector<4x4x8xf32>
    %c12_216 = arith.constant 12 : index
    %c0_217 = arith.constant 0 : index
    %c0_218 = arith.constant 0 : index
    %163 = vector.load %arg13[%c12_216, %c0_217, %c0_218] : memref<16x16x8xf32, #tpu.memory_space<vmem>>, vector<4x4x8xf32>
    tpu.vector_store %arg13[%c12_216, %c0_217, %c0_218], %162 {strides = array<i32>} : memref<16x16x8xf32, #tpu.memory_space<vmem>>, vector<4x4x8xf32>,
    %c0_219 = arith.constant 0 : index
    %c0_220 = arith.constant 0 : index
    %c0_221 = arith.constant 0 : index
    %c0_222 = arith.constant 0 : index
    %164 = vector.load %arg1[%c0_219, %c0_220, %c0_221, %c0_222] : memref<1x16x16x4xbf16, #tpu.memory_space<vmem>>, vector<1x16x16x4xbf16>
    %165 = vector.shape_cast %164 : vector<1x16x16x4xbf16> to vector<16x16x4xbf16>
    %166 = vector.shape_cast %165 : vector<16x16x4xbf16> to vector<256x4xbf16>
    %c1_223 = arith.constant 1 : index
    %c1_224 = arith.constant 1 : index
    %c0_225 = arith.constant 0 : index
    %c0_226 = arith.constant 0 : index
    %c0_227 = arith.constant 0 : index
    %167 = vector.load %arg4[%c1_223, %c1_224, %c0_225, %c0_226, %c0_227] : memref<4x3x3x4x8xbf16, #tpu.memory_space<vmem>>, vector<1x1x1x4x8xbf16>
    %168 = vector.shape_cast %167 : vector<1x1x1x4x8xbf16> to vector<4x8xbf16>
    %cst_228 = arith.constant dense<0.000000e+00> : vector<256x8xf32>
    %169 = tpu.matmul %166, %168, %cst_228 {dimension_numbers = #tpu.dot_dimension_numbers<[1], [0], [0], [1], [0, 0, 1, 1], [], []>} : vector<256x4xbf16>, vector<4x8xbf16>, vector<256x8xf32> -> vector<256x8xf32>
    %170 = vector.shape_cast %169 : vector<256x8xf32> to vector<16x16x8xf32>
    %171 = vector.extract_strided_slice %170 {offsets = [0, 0, 0], sizes = [16, 4, 8], strides = [1, 1, 1]} : vector<16x16x8xf32> to vector<16x4x8xf32>
    %c0_229 = arith.constant 0 : index
    %c12_230 = arith.constant 12 : index
    %c0_231 = arith.constant 0 : index
    %172 = vector.load %arg13[%c0_229, %c12_230, %c0_231] : memref<16x16x8xf32, #tpu.memory_space<vmem>>, vector<16x4x8xf32>
    %173 = arith.addf %172, %171 : vector<16x4x8xf32>
    %c0_232 = arith.constant 0 : index
    %c12_233 = arith.constant 12 : index
    %c0_234 = arith.constant 0 : index
    %174 = vector.load %arg13[%c0_232, %c12_233, %c0_234] : memref<16x16x8xf32, #tpu.memory_space<vmem>>, vector<16x4x8xf32>
    tpu.vector_store %arg13[%c0_232, %c12_233, %c0_234], %173 {strides = array<i32>} : memref<16x16x8xf32, #tpu.memory_space<vmem>>, vector<16x4x8xf32>,
    %c0_235 = arith.constant 0 : index
    %c0_236 = arith.constant 0 : index
    %c0_237 = arith.constant 0 : index
    %c0_238 = arith.constant 0 : index
    %175 = vector.load %arg1[%c0_235, %c0_236, %c0_237, %c0_238] : memref<1x16x16x4xbf16, #tpu.memory_space<vmem>>, vector<1x16x16x4xbf16>
    %176 = vector.shape_cast %175 : vector<1x16x16x4xbf16> to vector<16x16x4xbf16>
    %177 = vector.shape_cast %176 : vector<16x16x4xbf16> to vector<256x4xbf16>
    %c1_239 = arith.constant 1 : index
    %c1_240 = arith.constant 1 : index
    %c2_241 = arith.constant 2 : index
    %c0_242 = arith.constant 0 : index
    %c0_243 = arith.constant 0 : index
    %178 = vector.load %arg4[%c1_239, %c1_240, %c2_241, %c0_242, %c0_243] : memref<4x3x3x4x8xbf16, #tpu.memory_space<vmem>>, vector<1x1x1x4x8xbf16>
    %179 = vector.shape_cast %178 : vector<1x1x1x4x8xbf16> to vector<4x8xbf16>
    %cst_244 = arith.constant dense<0.000000e+00> : vector<256x8xf32>
    %180 = tpu.matmul %177, %179, %cst_244 {dimension_numbers = #tpu.dot_dimension_numbers<[1], [0], [0], [1], [0, 0, 1, 1], [], []>} : vector<256x4xbf16>, vector<4x8xbf16>, vector<256x8xf32> -> vector<256x8xf32>
    %181 = vector.shape_cast %180 : vector<256x8xf32> to vector<16x16x8xf32>
    %182 = vector.extract_strided_slice %181 {offsets = [0, 12, 0], sizes = [16, 4, 8], strides = [1, 1, 1]} : vector<16x16x8xf32> to vector<16x4x8xf32>
    %c0_245 = arith.constant 0 : index
    %c0_246 = arith.constant 0 : index
    %c0_247 = arith.constant 0 : index
    %183 = vector.load %arg13[%c0_245, %c0_246, %c0_247] : memref<16x16x8xf32, #tpu.memory_space<vmem>>, vector<16x4x8xf32>
    %184 = arith.addf %183, %182 : vector<16x4x8xf32>
    %c0_248 = arith.constant 0 : index
    %c0_249 = arith.constant 0 : index
    %c0_250 = arith.constant 0 : index
    %185 = vector.load %arg13[%c0_248, %c0_249, %c0_250] : memref<16x16x8xf32, #tpu.memory_space<vmem>>, vector<16x4x8xf32>
    tpu.vector_store %arg13[%c0_248, %c0_249, %c0_250], %184 {strides = array<i32>} : memref<16x16x8xf32, #tpu.memory_space<vmem>>, vector<16x4x8xf32>,
    %c0_251 = arith.constant 0 : index
    %c12_252 = arith.constant 12 : index
    %c0_253 = arith.constant 0 : index
    %c0_254 = arith.constant 0 : index
    %186 = vector.load %arg1[%c0_251, %c12_252, %c0_253, %c0_254] : memref<1x16x16x4xbf16, #tpu.memory_space<vmem>>, vector<1x4x16x4xbf16>
    %187 = vector.shape_cast %186 : vector<1x4x16x4xbf16> to vector<4x16x4xbf16>
    %188 = vector.shape_cast %187 : vector<4x16x4xbf16> to vector<64x4xbf16>
    %c1_255 = arith.constant 1 : index
    %c2_256 = arith.constant 2 : index
    %c0_257 = arith.constant 0 : index
    %c0_258 = arith.constant 0 : index
    %c0_259 = arith.constant 0 : index
    %189 = vector.load %arg4[%c1_255, %c2_256, %c0_257, %c0_258, %c0_259] : memref<4x3x3x4x8xbf16, #tpu.memory_space<vmem>>, vector<1x1x1x4x8xbf16>
    %190 = vector.shape_cast %189 : vector<1x1x1x4x8xbf16> to vector<4x8xbf16>
    %cst_260 = arith.constant dense<0.000000e+00> : vector<64x8xf32>
    %191 = tpu.matmul %188, %190, %cst_260 {dimension_numbers = #tpu.dot_dimension_numbers<[1], [0], [0], [1], [0, 0, 1, 1], [], []>} : vector<64x4xbf16>, vector<4x8xbf16>, vector<64x8xf32> -> vector<64x8xf32>
    %192 = vector.shape_cast %191 : vector<64x8xf32> to vector<4x16x8xf32>
    %193 = vector.extract_strided_slice %192 {offsets = [0, 0, 0], sizes = [4, 4, 8], strides = [1, 1, 1]} : vector<4x16x8xf32> to vector<4x4x8xf32>
    %c0_261 = arith.constant 0 : index
    %c12_262 = arith.constant 12 : index
    %c0_263 = arith.constant 0 : index
    %194 = vector.load %arg13[%c0_261, %c12_262, %c0_263] : memref<16x16x8xf32, #tpu.memory_space<vmem>>, vector<4x4x8xf32>
    %195 = arith.addf %194, %193 : vector<4x4x8xf32>
    %c0_264 = arith.constant 0 : index
    %c12_265 = arith.constant 12 : index
    %c0_266 = arith.constant 0 : index
    %196 = vector.load %arg13[%c0_264, %c12_265, %c0_266] : memref<16x16x8xf32, #tpu.memory_space<vmem>>, vector<4x4x8xf32>
    tpu.vector_store %arg13[%c0_264, %c12_265, %c0_266], %195 {strides = array<i32>} : memref<16x16x8xf32, #tpu.memory_space<vmem>>, vector<4x4x8xf32>,
    %c0_267 = arith.constant 0 : index
    %c12_268 = arith.constant 12 : index
    %c0_269 = arith.constant 0 : index
    %c0_270 = arith.constant 0 : index
    %197 = vector.load %arg1[%c0_267, %c12_268, %c0_269, %c0_270] : memref<1x16x16x4xbf16, #tpu.memory_space<vmem>>, vector<1x4x16x4xbf16>
    %198 = vector.shape_cast %197 : vector<1x4x16x4xbf16> to vector<4x16x4xbf16>
    %199 = vector.shape_cast %198 : vector<4x16x4xbf16> to vector<64x4xbf16>
    %c1_271 = arith.constant 1 : index
    %c2_272 = arith.constant 2 : index
    %c1_273 = arith.constant 1 : index
    %c0_274 = arith.constant 0 : index
    %c0_275 = arith.constant 0 : index
    %200 = vector.load %arg4[%c1_271, %c2_272, %c1_273, %c0_274, %c0_275] : memref<4x3x3x4x8xbf16, #tpu.memory_space<vmem>>, vector<1x1x1x4x8xbf16>
    %201 = vector.shape_cast %200 : vector<1x1x1x4x8xbf16> to vector<4x8xbf16>
    %cst_276 = arith.constant dense<0.000000e+00> : vector<64x8xf32>
    %202 = tpu.matmul %199, %201, %cst_276 {dimension_numbers = #tpu.dot_dimension_numbers<[1], [0], [0], [1], [0, 0, 1, 1], [], []>} : vector<64x4xbf16>, vector<4x8xbf16>, vector<64x8xf32> -> vector<64x8xf32>
    %203 = vector.shape_cast %202 : vector<64x8xf32> to vector<4x16x8xf32>
    %c0_277 = arith.constant 0 : index
    %c0_278 = arith.constant 0 : index
    %c0_279 = arith.constant 0 : index
    %204 = vector.load %arg13[%c0_277, %c0_278, %c0_279] : memref<16x16x8xf32, #tpu.memory_space<vmem>>, vector<4x16x8xf32>
    %205 = arith.addf %204, %203 : vector<4x16x8xf32>
    %c0_280 = arith.constant 0 : index
    %c0_281 = arith.constant 0 : index
    %c0_282 = arith.constant 0 : index
    %206 = vector.load %arg13[%c0_280, %c0_281, %c0_282] : memref<16x16x8xf32, #tpu.memory_space<vmem>>, vector<4x16x8xf32>
    tpu.vector_store %arg13[%c0_280, %c0_281, %c0_282], %205 {strides = array<i32>} : memref<16x16x8xf32, #tpu.memory_space<vmem>>, vector<4x16x8xf32>,
    %c0_283 = arith.constant 0 : index
    %c12_284 = arith.constant 12 : index
    %c0_285 = arith.constant 0 : index
    %c0_286 = arith.constant 0 : index
    %207 = vector.load %arg1[%c0_283, %c12_284, %c0_285, %c0_286] : memref<1x16x16x4xbf16, #tpu.memory_space<vmem>>, vector<1x4x16x4xbf16>
    %208 = vector.shape_cast %207 : vector<1x4x16x4xbf16> to vector<4x16x4xbf16>
    %209 = vector.shape_cast %208 : vector<4x16x4xbf16> to vector<64x4xbf16>
    %c1_287 = arith.constant 1 : index
    %c2_288 = arith.constant 2 : index
    %c2_289 = arith.constant 2 : index
    %c0_290 = arith.constant 0 : index
    %c0_291 = arith.constant 0 : index
    %210 = vector.load %arg4[%c1_287, %c2_288, %c2_289, %c0_290, %c0_291] : memref<4x3x3x4x8xbf16, #tpu.memory_space<vmem>>, vector<1x1x1x4x8xbf16>
    %211 = vector.shape_cast %210 : vector<1x1x1x4x8xbf16> to vector<4x8xbf16>
    %cst_292 = arith.constant dense<0.000000e+00> : vector<64x8xf32>
    %212 = tpu.matmul %209, %211, %cst_292 {dimension_numbers = #tpu.dot_dimension_numbers<[1], [0], [0], [1], [0, 0, 1, 1], [], []>} : vector<64x4xbf16>, vector<4x8xbf16>, vector<64x8xf32> -> vector<64x8xf32>
    %213 = vector.shape_cast %212 : vector<64x8xf32> to vector<4x16x8xf32>
    %214 = vector.extract_strided_slice %213 {offsets = [0, 12, 0], sizes = [4, 4, 8], strides = [1, 1, 1]} : vector<4x16x8xf32> to vector<4x4x8xf32>
    %c0_293 = arith.constant 0 : index
    %c0_294 = arith.constant 0 : index
    %c0_295 = arith.constant 0 : index
    %215 = vector.load %arg13[%c0_293, %c0_294, %c0_295] : memref<16x16x8xf32, #tpu.memory_space<vmem>>, vector<4x4x8xf32>
    %216 = arith.addf %215, %214 : vector<4x4x8xf32>
    %c0_296 = arith.constant 0 : index
    %c0_297 = arith.constant 0 : index
    %c0_298 = arith.constant 0 : index
    %217 = vector.load %arg13[%c0_296, %c0_297, %c0_298] : memref<16x16x8xf32, #tpu.memory_space<vmem>>, vector<4x4x8xf32>
    tpu.vector_store %arg13[%c0_296, %c0_297, %c0_298], %216 {strides = array<i32>} : memref<16x16x8xf32, #tpu.memory_space<vmem>>, vector<4x4x8xf32>,
    %c0_299 = arith.constant 0 : index
    %c0_300 = arith.constant 0 : index
    %c0_301 = arith.constant 0 : index
    %218 = vector.load %arg13[%c0_299, %c0_300, %c0_301] : memref<16x16x8xf32, #tpu.memory_space<vmem>>, vector<16x16x8xf32>
    %cst_302 = arith.constant 0.000000e+00 : f32
    %219 = vector.broadcast %cst_302 : f32 to vector<16x16x8xf32>
    %220 = arith.maximumf %218, %219 : vector<16x16x8xf32>
    %221 = vector.shape_cast %220 : vector<16x16x8xf32> to vector<256x8xf32>
    %222 = arith.truncf %221 : vector<256x8xf32> to vector<256x8xbf16>
    %c2_303 = arith.constant 2 : index
    %c0_304 = arith.constant 0 : index
    %c0_305 = arith.constant 0 : index
    %223 = vector.load %arg10[%c2_303, %c0_304, %c0_305] : memref<6x8x8xbf16, #tpu.memory_space<vmem>>, vector<1x8x8xbf16>
    %224 = vector.shape_cast %223 : vector<1x8x8xbf16> to vector<8x8xbf16>
    %cst_306 = arith.constant dense<0.000000e+00> : vector<256x8xf32>
    %225 = tpu.matmul %222, %224, %cst_306 {dimension_numbers = #tpu.dot_dimension_numbers<[1], [0], [0], [1], [0, 0, 1, 1], [], []>} : vector<256x8xbf16>, vector<8x8xbf16>, vector<256x8xf32> -> vector<256x8xf32>
    %226 = arith.addf %122, %225 : vector<256x8xf32>
    %c2_307 = arith.constant 2 : index
    %c1_308 = arith.constant 1 : index
    %c1_309 = arith.constant 1 : index
    %c0_310 = arith.constant 0 : index
    %c0_311 = arith.constant 0 : index
    %227 = vector.load %arg4[%c2_307, %c1_308, %c1_309, %c0_310, %c0_311] : memref<4x3x3x4x8xbf16, #tpu.memory_space<vmem>>, vector<1x1x1x4x8xbf16>
    %228 = vector.shape_cast %227 : vector<1x1x1x4x8xbf16> to vector<4x8xbf16>
    %cst_312 = arith.constant dense<0.000000e+00> : vector<256x8xf32>
    %229 = tpu.matmul %2, %228, %cst_312 {dimension_numbers = #tpu.dot_dimension_numbers<[1], [0], [0], [1], [0, 0, 1, 1], [], []>} : vector<256x4xbf16>, vector<4x8xbf16>, vector<256x8xf32> -> vector<256x8xf32>
    %c2_313 = arith.constant 2 : index
    %c0_314 = arith.constant 0 : index
    %c0_315 = arith.constant 0 : index
    %230 = vector.load %arg5[%c2_313, %c0_314, %c0_315] : memref<4x1x8xf32, #tpu.memory_space<vmem>>, vector<1x1x8xf32>
    %231 = vector.shape_cast %230 : vector<1x1x8xf32> to vector<1x8xf32>
    %232 = vector.broadcast %231 : vector<1x8xf32> to vector<256x8xf32>
    %233 = arith.addf %229, %232 : vector<256x8xf32>
    %234 = vector.shape_cast %233 : vector<256x8xf32> to vector<16x16x8xf32>
    %c0_316 = arith.constant 0 : index
    %c0_317 = arith.constant 0 : index
    %c0_318 = arith.constant 0 : index
    %235 = vector.load %arg13[%c0_316, %c0_317, %c0_318] : memref<16x16x8xf32, #tpu.memory_space<vmem>>, vector<16x16x8xf32>
    tpu.vector_store %arg13[%c0_316, %c0_317, %c0_318], %234 {strides = array<i32>} : memref<16x16x8xf32, #tpu.memory_space<vmem>>, vector<16x16x8xf32>,
    %c0_319 = arith.constant 0 : index
    %c0_320 = arith.constant 0 : index
    %c0_321 = arith.constant 0 : index
    %236 = vector.load %arg13[%c0_319, %c0_320, %c0_321] : memref<16x16x8xf32, #tpu.memory_space<vmem>>, vector<16x16x8xf32>
    %cst_322 = arith.constant 0.000000e+00 : f32
    %237 = vector.broadcast %cst_322 : f32 to vector<16x16x8xf32>
    %238 = arith.maximumf %236, %237 : vector<16x16x8xf32>
    %239 = vector.shape_cast %238 : vector<16x16x8xf32> to vector<256x8xf32>
    %240 = arith.truncf %239 : vector<256x8xf32> to vector<256x8xbf16>
    %c3 = arith.constant 3 : index
    %c0_323 = arith.constant 0 : index
    %c0_324 = arith.constant 0 : index
    %241 = vector.load %arg10[%c3, %c0_323, %c0_324] : memref<6x8x8xbf16, #tpu.memory_space<vmem>>, vector<1x8x8xbf16>
    %242 = vector.shape_cast %241 : vector<1x8x8xbf16> to vector<8x8xbf16>
    %cst_325 = arith.constant dense<0.000000e+00> : vector<256x8xf32>
    %243 = tpu.matmul %240, %242, %cst_325 {dimension_numbers = #tpu.dot_dimension_numbers<[1], [0], [0], [1], [0, 0, 1, 1], [], []>} : vector<256x8xbf16>, vector<8x8xbf16>, vector<256x8xf32> -> vector<256x8xf32>
    %244 = arith.addf %226, %243 : vector<256x8xf32>
    %c3_326 = arith.constant 3 : index
    %c1_327 = arith.constant 1 : index
    %c1_328 = arith.constant 1 : index
    %c0_329 = arith.constant 0 : index
    %c0_330 = arith.constant 0 : index
    %245 = vector.load %arg4[%c3_326, %c1_327, %c1_328, %c0_329, %c0_330] : memref<4x3x3x4x8xbf16, #tpu.memory_space<vmem>>, vector<1x1x1x4x8xbf16>
    %246 = vector.shape_cast %245 : vector<1x1x1x4x8xbf16> to vector<4x8xbf16>
    %cst_331 = arith.constant dense<0.000000e+00> : vector<256x8xf32>
    %247 = tpu.matmul %2, %246, %cst_331 {dimension_numbers = #tpu.dot_dimension_numbers<[1], [0], [0], [1], [0, 0, 1, 1], [], []>} : vector<256x4xbf16>, vector<4x8xbf16>, vector<256x8xf32> -> vector<256x8xf32>
    %c3_332 = arith.constant 3 : index
    %c0_333 = arith.constant 0 : index
    %c0_334 = arith.constant 0 : index
    %248 = vector.load %arg5[%c3_332, %c0_333, %c0_334] : memref<4x1x8xf32, #tpu.memory_space<vmem>>, vector<1x1x8xf32>
    %249 = vector.shape_cast %248 : vector<1x1x8xf32> to vector<1x8xf32>
    %250 = vector.broadcast %249 : vector<1x8xf32> to vector<256x8xf32>
    %251 = arith.addf %247, %250 : vector<256x8xf32>
    %252 = vector.shape_cast %251 : vector<256x8xf32> to vector<16x16x8xf32>
    %c0_335 = arith.constant 0 : index
    %c0_336 = arith.constant 0 : index
    %c0_337 = arith.constant 0 : index
    %253 = vector.load %arg13[%c0_335, %c0_336, %c0_337] : memref<16x16x8xf32, #tpu.memory_space<vmem>>, vector<16x16x8xf32>
    tpu.vector_store %arg13[%c0_335, %c0_336, %c0_337], %252 {strides = array<i32>} : memref<16x16x8xf32, #tpu.memory_space<vmem>>, vector<16x16x8xf32>,
    %c0_338 = arith.constant 0 : index
    %c0_339 = arith.constant 0 : index
    %c0_340 = arith.constant 0 : index
    %254 = vector.load %arg13[%c0_338, %c0_339, %c0_340] : memref<16x16x8xf32, #tpu.memory_space<vmem>>, vector<16x16x8xf32>
    %cst_341 = arith.constant 0.000000e+00 : f32
    %255 = vector.broadcast %cst_341 : f32 to vector<16x16x8xf32>
    %256 = arith.maximumf %254, %255 : vector<16x16x8xf32>
    %257 = vector.shape_cast %256 : vector<16x16x8xf32> to vector<256x8xf32>
    %258 = arith.truncf %257 : vector<256x8xf32> to vector<256x8xbf16>
    %c4 = arith.constant 4 : index
    %c0_342 = arith.constant 0 : index
    %c0_343 = arith.constant 0 : index
    %259 = vector.load %arg10[%c4, %c0_342, %c0_343] : memref<6x8x8xbf16, #tpu.memory_space<vmem>>, vector<1x8x8xbf16>
    %260 = vector.shape_cast %259 : vector<1x8x8xbf16> to vector<8x8xbf16>
    %cst_344 = arith.constant dense<0.000000e+00> : vector<256x8xf32>
    %261 = tpu.matmul %258, %260, %cst_344 {dimension_numbers = #tpu.dot_dimension_numbers<[1], [0], [0], [1], [0, 0, 1, 1], [], []>} : vector<256x8xbf16>, vector<8x8xbf16>, vector<256x8xf32> -> vector<256x8xf32>
    %262 = arith.addf %244, %261 : vector<256x8xf32>
    %cst_345 = arith.constant 1.000000e+00 : bf16
    %263 = vector.broadcast %cst_345 : bf16 to vector<1x256xbf16>
    %cst_346 = arith.constant dense<0.000000e+00> : vector<1x4xf32>
    %264 = tpu.matmul %263, %2, %cst_346 {dimension_numbers = #tpu.dot_dimension_numbers<[1], [0], [0], [1], [0, 0, 1, 1], [], []>} : vector<1x256xbf16>, vector<256x4xbf16>, vector<1x4xf32> -> vector<1x4xf32>
    %cst_347 = arith.constant 3.906250e-03 : f32
    %265 = vector.broadcast %cst_347 : f32 to vector<1x4xf32>
    %266 = arith.mulf %264, %265 : vector<1x4xf32>
    %c0_348 = arith.constant 0 : index
    %c0_349 = arith.constant 0 : index
    %267 = vector.load %arg6[%c0_348, %c0_349] : memref<4x8xf32, #tpu.memory_space<vmem>>, vector<4x8xf32>
    %cst_350 = arith.constant dense<0.000000e+00> : vector<1x8xf32>
    %268 = tpu.matmul %266, %267, %cst_350 {dimension_numbers = #tpu.dot_dimension_numbers<[1], [0], [0], [1], [0, 0, 1, 1], [], []>} : vector<1x4xf32>, vector<4x8xf32>, vector<1x8xf32> -> vector<1x8xf32>
    %c0_351 = arith.constant 0 : index
    %c0_352 = arith.constant 0 : index
    %269 = vector.load %arg7[%c0_351, %c0_352] : memref<1x8xf32, #tpu.memory_space<vmem>>, vector<1x8xf32>
    %270 = arith.addf %268, %269 : vector<1x8xf32>
    %c0_353 = arith.constant 0 : index
    %c0_354 = arith.constant 0 : index
    %271 = vector.load %arg8[%c0_353, %c0_354] : memref<1x8xf32, #tpu.memory_space<vmem>>, vector<1x8xf32>
    %272 = arith.mulf %270, %271 : vector<1x8xf32>
    %c0_355 = arith.constant 0 : index
    %c0_356 = arith.constant 0 : index
    %273 = vector.load %arg9[%c0_355, %c0_356] : memref<1x8xf32, #tpu.memory_space<vmem>>, vector<1x8xf32>
    %274 = arith.addf %272, %273 : vector<1x8xf32>
    %cst_357 = arith.constant 0.000000e+00 : f32
    %275 = vector.broadcast %cst_357 : f32 to vector<1x8xf32>
    %276 = arith.maximumf %274, %275 : vector<1x8xf32>
    %277 = arith.truncf %276 : vector<1x8xf32> to vector<1x8xbf16>
    %c5 = arith.constant 5 : index
    %c0_358 = arith.constant 0 : index
    %c0_359 = arith.constant 0 : index
    %278 = vector.load %arg10[%c5, %c0_358, %c0_359] : memref<6x8x8xbf16, #tpu.memory_space<vmem>>, vector<1x8x8xbf16>
    %279 = vector.shape_cast %278 : vector<1x8x8xbf16> to vector<8x8xbf16>
    %cst_360 = arith.constant dense<0.000000e+00> : vector<1x8xf32>
    %280 = tpu.matmul %277, %279, %cst_360 {dimension_numbers = #tpu.dot_dimension_numbers<[1], [0], [0], [1], [0, 0, 1, 1], [], []>} : vector<1x8xbf16>, vector<8x8xbf16>, vector<1x8xf32> -> vector<1x8xf32>
    %281 = vector.broadcast %280 : vector<1x8xf32> to vector<256x8xf32>
    %282 = arith.addf %262, %281 : vector<256x8xf32>
    %283 = vector.shape_cast %282 : vector<256x8xf32> to vector<16x16x8xf32>
    %c0_361 = arith.constant 0 : index
    %c0_362 = arith.constant 0 : index
    %c0_363 = arith.constant 0 : index
    %c0_364 = arith.constant 0 : index
    %284 = vector.load %arg12[%c0_361, %c0_362, %c0_363, %c0_364] : memref<1x16x16x8xf32, #tpu.memory_space<vmem>>, vector<1x16x16x8xf32>
    %285 = vector.shape_cast %284 : vector<1x16x16x8xf32> to vector<16x16x8xf32>
    %286 = vector.shape_cast %283 : vector<16x16x8xf32> to vector<1x16x16x8xf32>
    tpu.vector_store %arg12[%c0_361, %c0_362, %c0_363, %c0_364], %286 {strides = array<i32>} : memref<1x16x16x8xf32, #tpu.memory_space<vmem>>, vector<1x16x16x8xf32>,
    return
  }
  func.func @transform_0(%arg0: i32) -> (i32, i32, i32, i32) {
    %c0_i32 = arith.constant 0 : i32
    %c0_i32_0 = arith.constant 0 : i32
    %c0_i32_1 = arith.constant 0 : i32
    %c0_i32_2 = arith.constant 0 : i32
    return %arg0, %c0_i32, %c0_i32_0, %c0_i32_1 : i32, i32, i32, i32
  }
  func.func @transform_1(%arg0: i32) -> (i32, i32) {
    %c0_i32 = arith.constant 0 : i32
    %c0_i32_0 = arith.constant 0 : i32
    %c0_i32_1 = arith.constant 0 : i32
    return %c0_i32, %c0_i32_0 : i32, i32
  }
  func.func @transform_2(%arg0: i32) -> (i32, i32) {
    %c0_i32 = arith.constant 0 : i32
    %c0_i32_0 = arith.constant 0 : i32
    %c0_i32_1 = arith.constant 0 : i32
    return %c0_i32, %c0_i32_0 : i32, i32
  }
  func.func @transform_3(%arg0: i32) -> (i32, i32, i32, i32, i32) {
    %c0_i32 = arith.constant 0 : i32
    %c0_i32_0 = arith.constant 0 : i32
    %c0_i32_1 = arith.constant 0 : i32
    %c0_i32_2 = arith.constant 0 : i32
    %c0_i32_3 = arith.constant 0 : i32
    %c0_i32_4 = arith.constant 0 : i32
    return %c0_i32, %c0_i32_0, %c0_i32_1, %c0_i32_2, %c0_i32_3 : i32, i32, i32, i32, i32
  }
  func.func @transform_4(%arg0: i32) -> (i32, i32, i32) {
    %c0_i32 = arith.constant 0 : i32
    %c0_i32_0 = arith.constant 0 : i32
    %c0_i32_1 = arith.constant 0 : i32
    %c0_i32_2 = arith.constant 0 : i32
    return %c0_i32, %c0_i32_0, %c0_i32_1 : i32, i32, i32
  }
  func.func @transform_5(%arg0: i32) -> (i32, i32) {
    %c0_i32 = arith.constant 0 : i32
    %c0_i32_0 = arith.constant 0 : i32
    %c0_i32_1 = arith.constant 0 : i32
    return %c0_i32, %c0_i32_0 : i32, i32
  }
  func.func @transform_6(%arg0: i32) -> (i32, i32) {
    %c0_i32 = arith.constant 0 : i32
    %c0_i32_0 = arith.constant 0 : i32
    %c0_i32_1 = arith.constant 0 : i32
    return %c0_i32, %c0_i32_0 : i32, i32
  }
  func.func @transform_7(%arg0: i32) -> (i32, i32) {
    %c0_i32 = arith.constant 0 : i32
    %c0_i32_0 = arith.constant 0 : i32
    %c0_i32_1 = arith.constant 0 : i32
    return %c0_i32, %c0_i32_0 : i32, i32
  }
  func.func @transform_8(%arg0: i32) -> (i32, i32) {
    %c0_i32 = arith.constant 0 : i32
    %c0_i32_0 = arith.constant 0 : i32
    %c0_i32_1 = arith.constant 0 : i32
    return %c0_i32, %c0_i32_0 : i32, i32
  }
  func.func @transform_9(%arg0: i32) -> (i32, i32, i32) {
    %c0_i32 = arith.constant 0 : i32
    %c0_i32_0 = arith.constant 0 : i32
    %c0_i32_1 = arith.constant 0 : i32
    %c0_i32_2 = arith.constant 0 : i32
    return %c0_i32, %c0_i32_0, %c0_i32_1 : i32, i32, i32
  }
  func.func @transform_10(%arg0: i32) -> (i32, i32) {
    %c0_i32 = arith.constant 0 : i32
    %c0_i32_0 = arith.constant 0 : i32
    %c0_i32_1 = arith.constant 0 : i32
    return %c0_i32, %c0_i32_0 : i32, i32
  }
  func.func @transform_11(%arg0: i32) -> (i32, i32, i32, i32) {
    %c0_i32 = arith.constant 0 : i32
    %c0_i32_0 = arith.constant 0 : i32
    %c0_i32_1 = arith.constant 0 : i32
    %c0_i32_2 = arith.constant 0 : i32
    return %arg0, %c0_i32, %c0_i32_0, %c0_i32_1 : i32, i32, i32, i32
  }
}

</mosaic_0001>

<llo_original>
// kernel: tpu_custom_call.1
$region0: #{tpu_custom_call.1}
  #allocation0 [shape = 'u32[]', space=smem, size = 0x4, offset = 0x4, fixed_abs, tag = 'smem constant byte address 0x4 - core index']
  #allocation1 [shape = 'u32[144,128]{1,0:T(1,128)}', space=vmem, size = 0x12000, scoped, tag = 'internal scratch']
  #allocation2 [shape = 'f32[16,16,8]{2,1,0:T(8,128)}', space=vmem, size = 0x20000, scoped, tag = 'scratch operand']
  %s0 = inlined_call_operand.vmem [shape: bf16[2,16,16,4], index: 0, kind: input, shape index: {}]
  %s1 = inlined_call_operand.vmem [shape: bf16[4,8], index: 1, kind: input, shape index: {}]
  %s2 = inlined_call_operand.vmem [shape: f32[1,8], index: 2, kind: input, shape index: {}]
  %s3 = inlined_call_operand.vmem [shape: bf16[4,3,3,4,8], index: 3, kind: input, shape index: {}]
  %s4 = inlined_call_operand.vmem [shape: f32[4,1,8], index: 4, kind: input, shape index: {}]
  %s5 = inlined_call_operand.vmem [shape: f32[4,8], index: 5, kind: input, shape index: {}]
  %s6 = inlined_call_operand.vmem [shape: f32[1,8], index: 6, kind: input, shape index: {}]
  %s7 = inlined_call_operand.vmem [shape: f32[1,8], index: 7, kind: input, shape index: {}]
  %s8 = inlined_call_operand.vmem [shape: f32[1,8], index: 8, kind: input, shape index: {}]
  %s9 = inlined_call_operand.vmem [shape: bf16[6,8,8], index: 9, kind: input, shape index: {}]
  %s10 = inlined_call_operand.vmem [shape: f32[1,8], index: 10, kind: input, shape index: {}]
  %s11 = inlined_call_operand.vmem [shape: f32[2,16,16,8], index: 11, kind: output, shape index: {}]
  %s12 = sld [smem:[#allocation0]]
  $region77: #{tpu_custom_call.1} parent=0
    _
  %s14 = ssub.s32 1, %s12
  %s15 = scalar_select 0, %s14, %s12
  loop: start=0, step=1, limit=4
  $region2: #{tpu_custom_call.1} parent=0 // loop_pre_header
    _
  $region3: #{tpu_custom_call.1} parent=0 // loop_header
    %s17 = sphi 0, %s21
    %p18 = scmp.ge.s32.totalorder %s17, 4
    %s27 = sphi 0, %s29
    %s30 = sphi 0, %s27
    %s31 = sphi 0, %s30
    %s47 = sphi 0, %s31
    %s51 = sphi 0, %s51
    %s53 = sphi 0, %s51
    %s54 = sphi 0, %s53
    %s68 = sphi 0, %s54
    %s72 = sphi 0, %s72
    %s74 = sphi 0, %s72
    %s75 = sphi 0, %s74
    %s89 = sphi 0, %s75
    %s93 = sphi 0, %s93
    %s95 = sphi 0, %s93
    %s96 = sphi 0, %s95
    %s110 = sphi 0, %s96
    %s114 = sphi 0, %s114
    %s116 = sphi 0, %s114
    %s117 = sphi 0, %s116
    %s131 = sphi 0, %s117
    %s135 = sphi 0, %s135
    %s137 = sphi 0, %s135
    %s138 = sphi 0, %s137
    %s152 = sphi 0, %s138
    %s156 = sphi 0, %s156
    %s158 = sphi 0, %s156
    %s159 = sphi 0, %s158
    %s173 = sphi 0, %s159
    %s177 = sphi 0, %s177
    %s179 = sphi 0, %s177
    %s180 = sphi 0, %s179
    %s194 = sphi 0, %s180
    %s198 = sphi 0, %s198
    %s200 = sphi 0, %s198
    %s201 = sphi 0, %s200
    %s215 = sphi 0, %s201
    %s219 = sphi 0, %s219
    %s221 = sphi 0, %s219
    %s222 = sphi 0, %s221
    %s236 = sphi 0, %s222
    %s240 = sphi 0, %s240
    %s242 = sphi 0, %s240
    %s243 = sphi 0, %s242
    %s257 = sphi 0, %s243
    %s263 = sphi 0, %s265
    %s266 = sphi 0, %s263
    %s267 = sphi 0, %s266
    %s283 = sphi 0, %s267
  $region4: #{tpu_custom_call.1} parent=0 // loop_header_branch
    %20 = sbr.rel (%p18) target = $region8
  $region5: #{tpu_custom_call.1} parent=0 // loop_body
    %s22 = ssub.s32 %s17, 1
    %s23 = ssub.s32 %s17, 2
    %s24 = sadd.s32 %s17, 1
    %s25 = ssub.s32 %s17, %s24
    %p26 = scmp.eq.s32.totalorder %s25, 0
    %s28 = sadd.s32 %s27, 1
    %s29 = scalar_select %p26, %s27, %s28
    %p32 = pneg %p26
    %p33 = scmp.eq.s32.totalorder %s17, 1
    %p34 = por %p32, %p33
    %p35 = scmp.ne.s32.totalorder %s27, %s30
    %p36 = scmp.eq.s32.totalorder %s17, 0
    %p37 = por %p35, %p36
    %p38 = scmp.ne.s32.totalorder %s27, %s30
    %p39 = scmp.eq.s32.totalorder %s22, 1
    %p40 = por %p38, %p39
    %p41 = scmp.ne.s32.totalorder %s30, %s31
    %p42 = scmp.eq.s32.totalorder %s22, 0
    %p43 = por %p41, %p42
    %p44 = scmp.ne.s32.totalorder %s30, %s31
    %p45 = scmp.eq.s32.totalorder %s23, 1
    %p46 = por %p44, %p45
    %p48 = scmp.ne.s32.totalorder %s31, %s47
    %p49 = scmp.eq.s32.totalorder %s23, 0
    %p50 = por %p48, %p49
    %s52 = sadd.s32 %s51, 1
    %p55 = scmp.eq.s32.totalorder %s17, 1
    %p56 = scmp.ne.s32.totalorder %s51, %s53
    %p57 = scmp.eq.s32.totalorder %s17, 0
    %p58 = por %p56, %p57
    %p59 = scmp.ne.s32.totalorder %s51, %s53
    %p60 = scmp.eq.s32.totalorder %s22, 1
    %p61 = por %p59, %p60
    %p62 = scmp.ne.s32.totalorder %s53, %s54
    %p63 = scmp.eq.s32.totalorder %s22, 0
    %p64 = por %p62, %p63
    %p65 = scmp.ne.s32.totalorder %s53, %s54
    %p66 = scmp.eq.s32.totalorder %s23, 1
    %p67 = por %p65, %p66
    %p69 = scmp.ne.s32.totalorder %s54, %s68
    %p70 = scmp.eq.s32.totalorder %s23, 0
    %p71 = por %p69, %p70
    %s73 = sadd.s32 %s72, 1
    %p76 = scmp.eq.s32.totalorder %s17, 1
    %p77 = scmp.ne.s32.totalorder %s72, %s74
    %p78 = scmp.eq.s32.totalorder %s17, 0
    %p79 = por %p77, %p78
    %p80 = scmp.ne.s32.totalorder %s72, %s74
    %p81 = scmp.eq.s32.totalorder %s22, 1
    %p82 = por %p80, %p81
    %p83 = scmp.ne.s32.totalorder %s74, %s75
    %p84 = scmp.eq.s32.totalorder %s22, 0
    %p85 = por %p83, %p84
    %p86 = scmp.ne.s32.totalorder %s74, %s75
    %p87 = scmp.eq.s32.totalorder %s23, 1
    %p88 = por %p86, %p87
    %p90 = scmp.ne.s32.totalorder %s75, %s89
    %p91 = scmp.eq.s32.totalorder %s23, 0
    %p92 = por %p90, %p91
    %s94 = sadd.s32 %s93, 1
    %p97 = scmp.eq.s32.totalorder %s17, 1
    %p98 = scmp.ne.s32.totalorder %s93, %s95
    %p99 = scmp.eq.s32.totalorder %s17, 0
    %p100 = por %p98, %p99
    %p101 = scmp.ne.s32.totalorder %s93, %s95
    %p102 = scmp.eq.s32.totalorder %s22, 1
    %p103 = por %p101, %p102
    %p104 = scmp.ne.s32.totalorder %s95, %s96
    %p105 = scmp.eq.s32.totalorder %s22, 0
    %p106 = por %p104, %p105
    %p107 = scmp.ne.s32.totalorder %s95, %s96
    %p108 = scmp.eq.s32.totalorder %s23, 1
    %p109 = por %p107, %p108
    %p111 = scmp.ne.s32.totalorder %s96, %s110
    %p112 = scmp.eq.s32.totalorder %s23, 0
    %p113 = por %p111, %p112
    %s115 = sadd.s32 %s114, 1
    %p118 = scmp.eq.s32.totalorder %s17, 1
    %p119 = scmp.ne.s32.totalorder %s114, %s116
    %p120 = scmp.eq.s32.totalorder %s17, 0
    %p121 = por %p119, %p120
    %p122 = scmp.ne.s32.totalorder %s114, %s116
    %p123 = scmp.eq.s32.totalorder %s22, 1
    %p124 = por %p122, %p123
    %p125 = scmp.ne.s32.totalorder %s116, %s117
    %p126 = scmp.eq.s32.totalorder %s22, 0
    %p127 = por %p125, %p126
    %p128 = scmp.ne.s32.totalorder %s116, %s117
    %p129 = scmp.eq.s32.totalorder %s23, 1
    %p130 = por %p128, %p129
    %p132 = scmp.ne.s32.totalorder %s117, %s131
    %p133 = scmp.eq.s32.totalorder %s23, 0
    %p134 = por %p132, %p133
    %s136 = sadd.s32 %s135, 1
    %p139 = scmp.eq.s32.totalorder %s17, 1
    %p140 = scmp.ne.s32.totalorder %s135, %s137
    %p141 = scmp.eq.s32.totalorder %s17, 0
    %p142 = por %p140, %p141
    %p143 = scmp.ne.s32.totalorder %s135, %s137
    %p144 = scmp.eq.s32.totalorder %s22, 1
    %p145 = por %p143, %p144
    %p146 = scmp.ne.s32.totalorder %s137, %s138
    %p147 = scmp.eq.s32.totalorder %s22, 0
    %p148 = por %p146, %p147
    %p149 = scmp.ne.s32.totalorder %s137, %s138
    %p150 = scmp.eq.s32.totalorder %s23, 1
    %p151 = por %p149, %p150
    %p153 = scmp.ne.s32.totalorder %s138, %s152
    %p154 = scmp.eq.s32.totalorder %s23, 0
    %p155 = por %p153, %p154
    %s157 = sadd.s32 %s156, 1
    %p160 = scmp.eq.s32.totalorder %s17, 1
    %p161 = scmp.ne.s32.totalorder %s156, %s158
    %p162 = scmp.eq.s32.totalorder %s17, 0
    %p163 = por %p161, %p162
    %p164 = scmp.ne.s32.totalorder %s156, %s158
    %p165 = scmp.eq.s32.totalorder %s22, 1
    %p166 = por %p164, %p165
    %p167 = scmp.ne.s32.totalorder %s158, %s159
    %p168 = scmp.eq.s32.totalorder %s22, 0
    %p169 = por %p167, %p168
    %p170 = scmp.ne.s32.totalorder %s158, %s159
    %p171 = scmp.eq.s32.totalorder %s23, 1
    %p172 = por %p170, %p171
    %p174 = scmp.ne.s32.totalorder %s159, %s173
    %p175 = scmp.eq.s32.totalorder %s23, 0
    %p176 = por %p174, %p175
    %s178 = sadd.s32 %s177, 1
    %p181 = scmp.eq.s32.totalorder %s17, 1
    %p182 = scmp.ne.s32.totalorder %s177, %s179
    %p183 = scmp.eq.s32.totalorder %s17, 0
    %p184 = por %p182, %p183
    %p185 = scmp.ne.s32.totalorder %s177, %s179
    %p186 = scmp.eq.s32.totalorder %s22, 1
    %p187 = por %p185, %p186
    %p188 = scmp.ne.s32.totalorder %s179, %s180
    %p189 = scmp.eq.s32.totalorder %s22, 0
    %p190 = por %p188, %p189
    %p191 = scmp.ne.s32.totalorder %s179, %s180
    %p192 = scmp.eq.s32.totalorder %s23, 1
    %p193 = por %p191, %p192
    %p195 = scmp.ne.s32.totalorder %s180, %s194
    %p196 = scmp.eq.s32.totalorder %s23, 0
    %p197 = por %p195, %p196
    %s199 = sadd.s32 %s198, 1
    %p202 = scmp.eq.s32.totalorder %s17, 1
    %p203 = scmp.ne.s32.totalorder %s198, %s200
    %p204 = scmp.eq.s32.totalorder %s17, 0
    %p205 = por %p203, %p204
    %p206 = scmp.ne.s32.totalorder %s198, %s200
    %p207 = scmp.eq.s32.totalorder %s22, 1
    %p208 = por %p206, %p207
    %p209 = scmp.ne.s32.totalorder %s200, %s201
    %p210 = scmp.eq.s32.totalorder %s22, 0
    %p211 = por %p209, %p210
    %p212 = scmp.ne.s32.totalorder %s200, %s201
    %p213 = scmp.eq.s32.totalorder %s23, 1
    %p214 = por %p212, %p213
    %p216 = scmp.ne.s32.totalorder %s201, %s215
    %p217 = scmp.eq.s32.totalorder %s23, 0
    %p218 = por %p216, %p217
    %s220 = sadd.s32 %s219, 1
    %p223 = scmp.eq.s32.totalorder %s17, 1
    %p224 = scmp.ne.s32.totalorder %s219, %s221
    %p225 = scmp.eq.s32.totalorder %s17, 0
    %p226 = por %p224, %p225
    %p227 = scmp.ne.s32.totalorder %s219, %s221
    %p228 = scmp.eq.s32.totalorder %s22, 1
    %p229 = por %p227, %p228
    %p230 = scmp.ne.s32.totalorder %s221, %s222
    %p231 = scmp.eq.s32.totalorder %s22, 0
    %p232 = por %p230, %p231
    %p233 = scmp.ne.s32.totalorder %s221, %s222
    %p234 = scmp.eq.s32.totalorder %s23, 1
    %p235 = por %p233, %p234
    %p237 = scmp.ne.s32.totalorder %s222, %s236
    %p238 = scmp.eq.s32.totalorder %s23, 0
    %p239 = por %p237, %p238
    %s241 = sadd.s32 %s240, 1
    %p244 = scmp.eq.s32.totalorder %s17, 1
    %p245 = scmp.ne.s32.totalorder %s240, %s242
    %p246 = scmp.eq.s32.totalorder %s17, 0
    %p247 = por %p245, %p246
    %p248 = scmp.ne.s32.totalorder %s240, %s242
    %p249 = scmp.eq.s32.totalorder %s22, 1
    %p250 = por %p248, %p249
    %p251 = scmp.ne.s32.totalorder %s242, %s243
    %p252 = scmp.eq.s32.totalorder %s22, 0
    %p253 = por %p251, %p252
    %p254 = scmp.ne.s32.totalorder %s242, %s243
    %p255 = scmp.eq.s32.totalorder %s23, 1
    %p256 = por %p254, %p255
    %p258 = scmp.ne.s32.totalorder %s243, %s257
    %p259 = scmp.eq.s32.totalorder %s23, 0
    %p260 = por %p258, %p259
    %s261 = ssub.s32 %s17, %s24
    %p262 = scmp.eq.s32.totalorder %s261, 0
    %s264 = sadd.s32 %s263, 1
    %s265 = scalar_select %p262, %s263, %s264
    %p268 = pneg %p262
    %p269 = scmp.eq.s32.totalorder %s17, 1
    %p270 = por %p268, %p269
    %p271 = scmp.ne.s32.totalorder %s263, %s266
    %p272 = scmp.eq.s32.totalorder %s17, 0
    %p273 = por %p271, %p272
    %p274 = scmp.ne.s32.totalorder %s263, %s266
    %p275 = scmp.eq.s32.totalorder %s22, 1
    %p276 = por %p274, %p275
    %p277 = scmp.ne.s32.totalorder %s266, %s267
    %p278 = scmp.eq.s32.totalorder %s22, 0
    %p279 = por %p277, %p278
    %p280 = scmp.ne.s32.totalorder %s266, %s267
    %p281 = scmp.eq.s32.totalorder %s23, 1
    %p282 = por %p280, %p281
    %p284 = scmp.ne.s32.totalorder %s267, %s283
    %p285 = scmp.eq.s32.totalorder %s23, 0
    %p286 = por %p284, %p285
    %p287 = scmp.le.s32.totalorder 1, %s17
    %p288 = scmp.lt.s32.totalorder %s17, 3
    %p289 = pnand %p287, %p288
    %p290 = pneg %p289
    // Predicated region
    $region9: #{tpu_custom_call.1} parent=5 // pred_check
      _
    $region10: #{tpu_custom_call.1} parent=5 // pred_check_branch
      %292 = sbr.rel (%p289) target = $region12
    $region11: #{tpu_custom_call.1} parent=5 // pred_region
      %s293 = ssub.s32 %s17, 1
      // Predicated region
      $region13: #{tpu_custom_call.1} parent=11 // pred_check
        %p294 = pneg %p64
      $region14: #{tpu_custom_call.1} parent=11 // pred_check_branch
        %296 = sbr.rel (%p294) target = $region16
      $region15: #{tpu_custom_call.1} parent=11 // pred_region
        _
      $region16: #{tpu_custom_call.1} parent=11 // pred_fallthru
        _
      // Predicated region
      $region17: #{tpu_custom_call.1} parent=11 // pred_check
        %p297 = pneg %p85
      $region18: #{tpu_custom_call.1} parent=11 // pred_check_branch
        %299 = sbr.rel (%p297) target = $region20
      $region19: #{tpu_custom_call.1} parent=11 // pred_region
        _
      $region20: #{tpu_custom_call.1} parent=11 // pred_fallthru
        _
      // Predicated region
      $region21: #{tpu_custom_call.1} parent=11 // pred_check
        %p300 = pneg %p106
      $region22: #{tpu_custom_call.1} parent=11 // pred_check_branch
        %302 = sbr.rel (%p300) target = $region24
      $region23: #{tpu_custom_call.1} parent=11 // pred_region
        _
      $region24: #{tpu_custom_call.1} parent=11 // pred_fallthru
        _
      // Predicated region
      $region25: #{tpu_custom_call.1} parent=11 // pred_check
        %p303 = pneg %p127
      $region26: #{tpu_custom_call.1} parent=11 // pred_check_branch
        %305 = sbr.rel (%p303) target = $region28
      $region27: #{tpu_custom_call.1} parent=11 // pred_region
        _
      $region28: #{tpu_custom_call.1} parent=11 // pred_fallthru
        _
      // Predicated region
      $region29: #{tpu_custom_call.1} parent=11 // pred_check
        %p306 = pneg %p148
      $region30: #{tpu_custom_call.1} parent=11 // pred_check_branch
        %308 = sbr.rel (%p306) target = $region32
      $region31: #{tpu_custom_call.1} parent=11 // pred_region
        _
      $region32: #{tpu_custom_call.1} parent=11 // pred_fallthru
        _
      // Predicated region
      $region33: #{tpu_custom_call.1} parent=11 // pred_check
        %p309 = pneg %p169
      $region34: #{tpu_custom_call.1} parent=11 // pred_check_branch
        %311 = sbr.rel (%p309) target = $region36
      $region35: #{tpu_custom_call.1} parent=11 // pred_region
        _
      $region36: #{tpu_custom_call.1} parent=11 // pred_fallthru
        _
      // Predicated region
      $region37: #{tpu_custom_call.1} parent=11 // pred_check
        %p312 = pneg %p190
      $region38: #{tpu_custom_call.1} parent=11 // pred_check_branch
        %314 = sbr.rel (%p312) target = $region40
      $region39: #{tpu_custom_call.1} parent=11 // pred_region
        _
      $region40: #{tpu_custom_call.1} parent=11 // pred_fallthru
        _
      // Predicated region
      $region41: #{tpu_custom_call.1} parent=11 // pred_check
        %p315 = pneg %p211
      $region42: #{tpu_custom_call.1} parent=11 // pred_check_branch
        %317 = sbr.rel (%p315) target = $region44
      $region43: #{tpu_custom_call.1} parent=11 // pred_region
        _
      $region44: #{tpu_custom_call.1} parent=11 // pred_fallthru
        _
      // Predicated region
      $region45: #{tpu_custom_call.1} parent=11 // pred_check
        %p318 = pneg %p232
      $region46: #{tpu_custom_call.1} parent=11 // pred_check_branch
        %320 = sbr.rel (%p318) target = $region48
      $region47: #{tpu_custom_call.1} parent=11 // pred_region
        _
      $region48: #{tpu_custom_call.1} parent=11 // pred_fallthru
        _
      // Predicated region
      $region49: #{tpu_custom_call.1} parent=11 // pred_check
        %p321 = pneg %p253
      $region50: #{tpu_custom_call.1} parent=11 // pred_check_branch
        %323 = sbr.rel (%p321) target = $region52
      $region51: #{tpu_custom_call.1} parent=11 // pred_region
        _
      $region52: #{tpu_custom_call.1} parent=11 // pred_fallthru
        _
    $region12: #{tpu_custom_call.1} parent=5 // pred_fallthru
      _
    %p324 = scmp.lt.s32.totalorder %s17, 2
    // Predicated region
    $region53: #{tpu_custom_call.1} parent=5 // pred_check
      %p325 = pneg %p324
    $region54: #{tpu_custom_call.1} parent=5 // pred_check_branch
      %327 = sbr.rel (%p325) target = $region56
    $region55: #{tpu_custom_call.1} parent=5 // pred_region
      // Predicated region
      $region57: #{tpu_custom_call.1} parent=55 // pred_check
        %p328 = pneg %p37
      $region58: #{tpu_custom_call.1} parent=55 // pred_check_branch
        %330 = sbr.rel (%p328) target = $region60
      $region59: #{tpu_custom_call.1} parent=55 // pred_region
        %p331 = scmp.lt.s32.totalorder %s17, 1
        %s332 = scalar_select %p331, %s17, 1
        %s333 = smul.addr %s332, 32
        %s334 = smul.addr %s333, 4
        %s335 = scalar_lea.vmem %s0, %s334
      $region60: #{tpu_custom_call.1} parent=55 // pred_fallthru
        _
    $region56: #{tpu_custom_call.1} parent=5 // pred_fallthru
      _
    %p336 = scmp.le.s32.totalorder 1, %s17
    %p337 = scmp.lt.s32.totalorder %s17, 3
    %p338 = pnand %p336, %p337
    %p339 = pneg %p338
    // Predicated region
    $region61: #{tpu_custom_call.1} parent=5 // pred_check
      _
    $region62: #{tpu_custom_call.1} parent=5 // pred_check_branch
      %341 = sbr.rel (%p338) target = $region64
    $region63: #{tpu_custom_call.1} parent=5 // pred_region
      %s342 = ssub.s32 %s17, 1
      %p343 = scmp.lt.s32.totalorder %s22, 1
      %s344 = scalar_select %p343, %s22, 1
      %s345 = smul.addr %s344, 32
      %s346 = smul.addr %s345, 4
      %s347 = scalar_lea.vmem %s0, %s346
      %p348 = pneg %p43
      %p349 = pneg %p40
      %p350 = pneg %p64
      %p351 = pneg %p61
      %p352 = pneg %p85
      %p353 = pneg %p82
      %p354 = pneg %p106
      %p355 = pneg %p103
      %p356 = pneg %p127
      %p357 = pneg %p124
      %p358 = pneg %p148
      %p359 = pneg %p145
      %p360 = pneg %p169
      %p361 = pneg %p166
      %p362 = pneg %p190
      %p363 = pneg %p187
      %p364 = pneg %p211
      %p365 = pneg %p208
      %p366 = pneg %p232
      %p367 = pneg %p229
      %p368 = pneg %p253
      %p369 = pneg %p250
      %p370 = pneg %p279
      %p371 = pneg %p276
      %p372 = scmp.lt.s32.totalorder %s22, 1
      %s373 = scalar_select %p372, %s22, 1
      %s374 = smul.addr %s373, 32
      %s375 = smul.addr %s374, 8
      %s376 = scalar_lea.vmem %s11, %s375
      %p377 = scmp.lt.s32.totalorder %s22, 1
      %s378 = scalar_select %p377, %s22, 1
      %s379 = smul.addr %s378, 32
      %s380 = smul.addr %s379, 4
      %s381 = scalar_lea.vmem %s0, %s380
      %p382 = scmp.lt.s32.totalorder %s22, 1
      %s383 = scalar_select %p382, %s22, 1
      %s384 = smul.addr %s383, 32
      %s385 = smul.addr %s384, 8
      %s386 = scalar_lea.vmem %s11, %s385
      %v389 = vld [vmem:[%s381] sm:$0xf]
      %v390 = vld [vmem:[%s381 + $0x4] sm:$0xf]
      %v391 = vld [vmem:[%s381 + $0x8] sm:$0xf]
      %v392 = vld [vmem:[%s381 + $0xc] sm:$0xf]
      %v393 = vld [vmem:[%s381 + $0x10] sm:$0xf]
      %v394 = vld [vmem:[%s381 + $0x14] sm:$0xf]
      %v395 = vld [vmem:[%s381 + $0x18] sm:$0xf]
      %v396 = vld [vmem:[%s381 + $0x1c] sm:$0xf]
      %v397 = vld [vmem:[%s381 + $0x20] sm:$0xf]
      %v398 = vld [vmem:[%s381 + $0x24] sm:$0xf]
      %v399 = vld [vmem:[%s381 + $0x28] sm:$0xf]
      %v400 = vld [vmem:[%s381 + $0x2c] sm:$0xf]
      %v401 = vld [vmem:[%s381 + $0x30] sm:$0xf]
      %v402 = vld [vmem:[%s381 + $0x34] sm:$0xf]
      %v403 = vld [vmem:[%s381 + $0x38] sm:$0xf]
      %v404 = vld [vmem:[%s381 + $0x3c] sm:$0xf]
      %v405 = vld [vmem:[%s381 + $0x40] sm:$0xf]
      %v406 = vld [vmem:[%s381 + $0x44] sm:$0xf]
      %v407 = vld [vmem:[%s381 + $0x48] sm:$0xf]
      %v408 = vld [vmem:[%s381 + $0x4c] sm:$0xf]
      %v409 = vld [vmem:[%s381 + $0x50] sm:$0xf]
      %v410 = vld [vmem:[%s381 + $0x54] sm:$0xf]
      %v411 = vld [vmem:[%s381 + $0x58] sm:$0xf]
      %v412 = vld [vmem:[%s381 + $0x5c] sm:$0xf]
      %v413 = vld [vmem:[%s381 + $0x60] sm:$0xf]
      %v414 = vld [vmem:[%s381 + $0x64] sm:$0xf]
      %v415 = vld [vmem:[%s381 + $0x68] sm:$0xf]
      %v416 = vld [vmem:[%s381 + $0x6c] sm:$0xf]
      %v417 = vld [vmem:[%s381 + $0x70] sm:$0xf]
      %v418 = vld [vmem:[%s381 + $0x74] sm:$0xf]
      %v419 = vld [vmem:[%s381 + $0x78] sm:$0xf]
      %v420 = vld [vmem:[%s381 + $0x7c] sm:$0xf]
      %v421 = vld [vmem:[%s10] sm:$0x1]
      %v423 = vlaneseq
      %v424 = vshrl.u32 %v423, 7
      %v425 = vsub.s32 0, %v424
      %v426 = vrot.slane %v421, %v425
      %v428 = vadd.f32 %v426, 0.0
      %v429 = vld [vmem:[%s1] sm:$0x3]
      %v430 = vld [vmem:[%s2] sm:$0x1]
      %v432 = vlaneseq
      %v433 = vshrl.u32 %v432, 7
      %v434 = vsub.s32 0, %v433
      %v435 = vrot.slane %v430, %v434
      %v469 = vunpack.c.l.b16 %v389
      %v470 = vunpack.c.l.b16 %v390
      %v471 = vunpack.c.l.b16 %v391
      %v472 = vunpack.c.l.b16 %v392
      %v473 = vunpack.c.l.b16 %v393
      %v474 = vunpack.c.l.b16 %v394
      %v475 = vunpack.c.l.b16 %v395
      %v476 = vunpack.c.l.b16 %v396
      %v477 = vunpack.c.l.b16 %v397
      %v478 = vunpack.c.l.b16 %v398
      %v479 = vunpack.c.l.b16 %v399
      %v480 = vunpack.c.l.b16 %v400
      %v481 = vunpack.c.l.b16 %v401
      %v482 = vunpack.c.l.b16 %v402
      %v483 = vunpack.c.l.b16 %v403
      %v484 = vunpack.c.l.b16 %v404
      %v485 = vunpack.c.l.b16 %v405
      %v486 = vunpack.c.l.b16 %v406
      %v487 = vunpack.c.l.b16 %v407
      %v488 = vunpack.c.l.b16 %v408
      %v489 = vunpack.c.l.b16 %v409
      %v490 = vunpack.c.l.b16 %v410
      %v491 = vunpack.c.l.b16 %v411
      %v492 = vunpack.c.l.b16 %v412
      %v493 = vunpack.c.l.b16 %v413
      %v494 = vunpack.c.l.b16 %v414
      %v495 = vunpack.c.l.b16 %v415
      %v496 = vunpack.c.l.b16 %v416
      %v497 = vunpack.c.l.b16 %v417
      %v498 = vunpack.c.l.b16 %v418
      %v499 = vunpack.c.l.b16 %v419
      %v500 = vunpack.c.l.b16 %v420
      %v501 = vpack.c.b16 %v470, %v469
      %v502 = vpack.c.b16 %v472, %v471
      %v503 = vpack.c.b16 %v474, %v473
      %v504 = vpack.c.b16 %v476, %v475
      %v505 = vpack.c.b16 %v478, %v477
      %v506 = vpack.c.b16 %v480, %v479
      %v507 = vpack.c.b16 %v482, %v481
      %v508 = vpack.c.b16 %v484, %v483
      %v509 = vpack.c.b16 %v486, %v485
      %v510 = vpack.c.b16 %v488, %v487
      %v511 = vpack.c.b16 %v490, %v489
      %v512 = vpack.c.b16 %v492, %v491
      %v513 = vpack.c.b16 %v494, %v493
      %v514 = vpack.c.b16 %v496, %v495
      %v515 = vpack.c.b16 %v498, %v497
      %v516 = vpack.c.b16 %v500, %v499
      %vm517 = vcmask 31744
      %v519 = vsel %vm517, %v501, 0
      %v522 = vsel %vm517, %v502, 0
      %v525 = vsel %vm517, %v503, 0
      %v528 = vsel %vm517, %v504, 0
      %v531 = vsel %vm517, %v505, 0
      %v534 = vsel %vm517, %v506, 0
      %v537 = vsel %vm517, %v507, 0
      %v540 = vsel %vm517, %v508, 0
      %v543 = vsel %vm517, %v509, 0
      %v546 = vsel %vm517, %v510, 0
      %v549 = vsel %vm517, %v511, 0
      %v552 = vsel %vm517, %v512, 0
      %v555 = vsel %vm517, %v513, 0
      %v558 = vsel %vm517, %v514, 0
      %v561 = vsel %vm517, %v515, 0
      %v564 = vsel %vm517, %v516, 0
      %vm566 = vcmask 1041408
      %v568 = vsel %vm566, %v429, 0
      %570 = vmatprep.subr.bf16.mxu0 0
      %571 = vmatpush1.bf16.msra.mxu0 %v568
      %572 = vmatprep.subr.bf16.mxu0 0
      %573 = vmatpush1.bf16.msra.mxu0 0
      %574 = vmatprep.subr.bf16.mxu0 0
      %575 = vmatpush1.bf16.msra.mxu0 0
      %576 = vmatprep.subr.bf16.mxu0 0
      %577 = vmatpush1.bf16.msra.mxu0 0
      %578 = vmatprep.subr.bf16.mxu0 0
      %579 = vmatpush1.bf16.msra.mxu0 0
      %580 = vmatprep.subr.bf16.mxu0 0
      %581 = vmatpush1.bf16.msra.mxu0 0
      %582 = vmatprep.subr.bf16.mxu0 0
      %583 = vmatpush1.bf16.msra.mxu0 0
      %584 = vmatprep.subr.bf16.mxu0 0
      %585 = vmatpush1.bf16.msra.mxu0 0
      %586 = vmatprep.subr.bf16.mxu0 0
      %587 = vmatpush1.bf16.msra.mxu0 0
      %588 = vmatprep.subr.bf16.mxu0 0
      %589 = vmatpush1.bf16.msra.mxu0 0
      %590 = vmatprep.subr.bf16.mxu0 0
      %591 = vmatpush1.bf16.msra.mxu0 0
      %592 = vmatprep.subr.bf16.mxu0 0
      %593 = vmatpush1.bf16.msra.mxu0 0
      %594 = vmatprep.subr.bf16.mxu0 0
      %595 = vmatpush1.bf16.msra.mxu0 0
      %596 = vmatprep.subr.bf16.mxu0 0
      %597 = vmatpush1.bf16.msra.mxu0 0
      %598 = vmatprep.subr.bf16.mxu0 0
      %599 = vmatpush1.bf16.msra.mxu0 0
      %600 = vmatprep.subr.bf16.mxu0 0
      %601 = vmatpush1.bf16.msra.mxu0 0
      %602 = vmatprep.mubr.bf16.mxu0 0
      %603 = vmatmul.mubr.bf16.gmra.mrb[0].mxu0 %v519
      %v604 = vpop.f32.mrb[0].mxu0
      %v605 = vadd.f32 %v435, %v604
      %v606 = vpop.f32.mrb[0].mxu0
      %v607 = vpop.f32.mrb[0].mxu0
      %v608 = vadd.f32 %v435, %v607
      %v609 = vpop.f32.mrb[0].mxu0
      %610 = vmatprep.mubr.bf16.mxu0 0
      %611 = vmatmul.mubr.bf16.gmra.mrb[0].mxu0 %v522
      %v612 = vpop.f32.mrb[0].mxu0
      %v613 = vadd.f32 %v435, %v612
      %v614 = vpop.f32.mrb[0].mxu0
      %v615 = vpop.f32.mrb[0].mxu0
      %v616 = vadd.f32 %v435, %v615
      %v617 = vpop.f32.mrb[0].mxu0
      %618 = vmatprep.mubr.bf16.mxu0 0
      %619 = vmatmul.mubr.bf16.gmra.mrb[0].mxu0 %v525
      %v620 = vpop.f32.mrb[0].mxu0
      %v621 = vadd.f32 %v435, %v620
      %v622 = vpop.f32.mrb[0].mxu0
      %v623 = vpop.f32.mrb[0].mxu0
      %v624 = vadd.f32 %v435, %v623
      %v625 = vpop.f32.mrb[0].mxu0
      %626 = vmatprep.mubr.bf16.mxu0 0
      %627 = vmatmul.mubr.bf16.gmra.mrb[0].mxu0 %v528
      %v628 = vpop.f32.mrb[0].mxu0
      %v629 = vadd.f32 %v435, %v628
      %v630 = vpop.f32.mrb[0].mxu0
      %v631 = vpop.f32.mrb[0].mxu0
      %v632 = vadd.f32 %v435, %v631
      %v633 = vpop.f32.mrb[0].mxu0
      %634 = vmatprep.mubr.bf16.mxu0 0
      %635 = vmatmul.mubr.bf16.gmra.mrb[0].mxu0 %v531
      %v636 = vpop.f32.mrb[0].mxu0
      %v637 = vadd.f32 %v435, %v636
      %v638 = vpop.f32.mrb[0].mxu0
      %v639 = vpop.f32.mrb[0].mxu0
      %v640 = vadd.f32 %v435, %v639
      %v641 = vpop.f32.mrb[0].mxu0
      %642 = vmatprep.mubr.bf16.mxu0 0
      %643 = vmatmul.mubr.bf16.gmra.mrb[0].mxu0 %v534
      %v644 = vpop.f32.mrb[0].mxu0
      %v645 = vadd.f32 %v435, %v644
      %v646 = vpop.f32.mrb[0].mxu0
      %v647 = vpop.f32.mrb[0].mxu0
      %v648 = vadd.f32 %v435, %v647
      %v649 = vpop.f32.mrb[0].mxu0
      %650 = vmatprep.mubr.bf16.mxu0 0
      %651 = vmatmul.mubr.bf16.gmra.mrb[0].mxu0 %v537
      %v652 = vpop.f32.mrb[0].mxu0
      %v653 = vadd.f32 %v435, %v652
      %v654 = vpop.f32.mrb[0].mxu0
      %v655 = vpop.f32.mrb[0].mxu0
      %v656 = vadd.f32 %v435, %v655
      %v657 = vpop.f32.mrb[0].mxu0
      %658 = vmatprep.mubr.bf16.mxu0 0
      %659 = vmatmul.mubr.bf16.gmra.mrb[0].mxu0 %v540
      %v660 = vpop.f32.mrb[0].mxu0
      %v661 = vadd.f32 %v435, %v660
      %v662 = vpop.f32.mrb[0].mxu0
      %v663 = vpop.f32.mrb[0].mxu0
      %v664 = vadd.f32 %v435, %v663
      %v665 = vpop.f32.mrb[0].mxu0
      %666 = vmatprep.mubr.bf16.mxu0 0
      %667 = vmatmul.mubr.bf16.gmra.mrb[0].mxu0 %v543
      %v668 = vpop.f32.mrb[0].mxu0
      %v669 = vadd.f32 %v435, %v668
      %v670 = vpop.f32.mrb[0].mxu0
      %v671 = vpop.f32.mrb[0].mxu0
      %v672 = vadd.f32 %v435, %v671
      %v673 = vpop.f32.mrb[0].mxu0
      %674 = vmatprep.mubr.bf16.mxu0 0
      %675 = vmatmul.mubr.bf16.gmra.mrb[0].mxu0 %v546
      %v676 = vpop.f32.mrb[0].mxu0
      %v677 = vadd.f32 %v435, %v676
      %v678 = vpop.f32.mrb[0].mxu0
      %v679 = vpop.f32.mrb[0].mxu0
      %v680 = vadd.f32 %v435, %v679
      %v681 = vpop.f32.mrb[0].mxu0
      %682 = vmatprep.mubr.bf16.mxu0 0
      %683 = vmatmul.mubr.bf16.gmra.mrb[0].mxu0 %v549
      %v684 = vpop.f32.mrb[0].mxu0
      %v685 = vadd.f32 %v435, %v684
      %v686 = vpop.f32.mrb[0].mxu0
      %v687 = vpop.f32.mrb[0].mxu0
      %v688 = vadd.f32 %v435, %v687
      %v689 = vpop.f32.mrb[0].mxu0
      %690 = vmatprep.mubr.bf16.mxu0 0
      %691 = vmatmul.mubr.bf16.gmra.mrb[0].mxu0 %v552
      %v692 = vpop.f32.mrb[0].mxu0
      %v693 = vadd.f32 %v435, %v692
      %v694 = vpop.f32.mrb[0].mxu0
      %v695 = vpop.f32.mrb[0].mxu0
      %v696 = vadd.f32 %v435, %v695
      %v697 = vpop.f32.mrb[0].mxu0
      %698 = vmatprep.mubr.bf16.mxu0 0
      %699 = vmatmul.mubr.bf16.gmra.mrb[0].mxu0 %v555
      %v700 = vpop.f32.mrb[0].mxu0
      %v701 = vadd.f32 %v435, %v700
      %v702 = vpop.f32.mrb[0].mxu0
      %v703 = vpop.f32.mrb[0].mxu0
      %v704 = vadd.f32 %v435, %v703
      %v705 = vpop.f32.mrb[0].mxu0
      %706 = vmatprep.mubr.bf16.mxu0 0
      %707 = vmatmul.mubr.bf16.gmra.mrb[0].mxu0 %v558
      %v708 = vpop.f32.mrb[0].mxu0
      %v709 = vadd.f32 %v435, %v708
      %v710 = vpop.f32.mrb[0].mxu0
      %v711 = vpop.f32.mrb[0].mxu0
      %v712 = vadd.f32 %v435, %v711
      %v713 = vpop.f32.mrb[0].mxu0
      %714 = vmatprep.mubr.bf16.mxu0 0
      %715 = vmatmul.mubr.bf16.gmra.mrb[0].mxu0 %v561
      %v716 = vpop.f32.mrb[0].mxu0
      %v717 = vadd.f32 %v435, %v716
      %v718 = vpop.f32.mrb[0].mxu0
      %v719 = vpop.f32.mrb[0].mxu0
      %v720 = vadd.f32 %v435, %v719
      %v721 = vpop.f32.mrb[0].mxu0
      %722 = vmatprep.mubr.bf16.mxu0 0
      %723 = vmatmul.mubr.bf16.gmra.mrb[0].mxu0 %v564
      %v724 = vpop.f32.mrb[0].mxu0
      %v725 = vadd.f32 %v435, %v724
      %v726 = vpop.f32.mrb[0].mxu0
      %v727 = vpop.f32.mrb[0].mxu0
      %v728 = vadd.f32 %v435, %v727
      %v729 = vpop.f32.mrb[0].mxu0
      %730 = vdwg.mxu0
      %v731 = vmax.f32 %v605, 0.0
      %v732 = vmax.f32 %v608, 0.0
      %v733 = vmax.f32 %v613, 0.0
      %v734 = vmax.f32 %v616, 0.0
      %v735 = vmax.f32 %v621, 0.0
      %v736 = vmax.f32 %v624, 0.0
      %v737 = vmax.f32 %v629, 0.0
      %v738 = vmax.f32 %v632, 0.0
      %v739 = vmax.f32 %v637, 0.0
      %v740 = vmax.f32 %v640, 0.0
      %v741 = vmax.f32 %v645, 0.0
      %v742 = vmax.f32 %v648, 0.0
      %v743 = vmax.f32 %v653, 0.0
      %v744 = vmax.f32 %v656, 0.0
      %v745 = vmax.f32 %v661, 0.0
      %v746 = vmax.f32 %v664, 0.0
      %v747 = vmax.f32 %v669, 0.0
      %v748 = vmax.f32 %v672, 0.0
      %v749 = vmax.f32 %v677, 0.0
      %v750 = vmax.f32 %v680, 0.0
      %v751 = vmax.f32 %v685, 0.0
      %v752 = vmax.f32 %v688, 0.0
      %v753 = vmax.f32 %v693, 0.0
      %v754 = vmax.f32 %v696, 0.0
      %v755 = vmax.f32 %v701, 0.0
      %v756 = vmax.f32 %v704, 0.0
      %v757 = vmax.f32 %v709, 0.0
      %v758 = vmax.f32 %v712, 0.0
      %v759 = vmax.f32 %v717, 0.0
      %v760 = vmax.f32 %v720, 0.0
      %v761 = vmax.f32 %v725, 0.0
      %v762 = vmax.f32 %v728, 0.0
      %v763 = vpack.c.bf16 %v732, %v731
      %v764 = vpack.c.bf16 %v734, %v733
      %v765 = vpack.c.bf16 %v736, %v735
      %v766 = vpack.c.bf16 %v738, %v737
      %v767 = vpack.c.bf16 %v740, %v739
      %v768 = vpack.c.bf16 %v742, %v741
      %v769 = vpack.c.bf16 %v744, %v743
      %v770 = vpack.c.bf16 %v746, %v745
      %v771 = vpack.c.bf16 %v748, %v747
      %v772 = vpack.c.bf16 %v750, %v749
      %v773 = vpack.c.bf16 %v752, %v751
      %v774 = vpack.c.bf16 %v754, %v753
      %v775 = vpack.c.bf16 %v756, %v755
      %v776 = vpack.c.bf16 %v758, %v757
      %v777 = vpack.c.bf16 %v760, %v759
      %v778 = vpack.c.bf16 %v762, %v761
      %v779 = vld [vmem:[%s9] sm:$0xf]
      %vm780 = vcmask 64512
      %v782 = vsel %vm780, %v763, 0
      %v785 = vsel %vm780, %v764, 0
      %v788 = vsel %vm780, %v765, 0
      %v791 = vsel %vm780, %v766, 0
      %v794 = vsel %vm780, %v767, 0
      %v797 = vsel %vm780, %v768, 0
      %v800 = vsel %vm780, %v769, 0
      %v803 = vsel %vm780, %v770, 0
      %v806 = vsel %vm780, %v771, 0
      %v809 = vsel %vm780, %v772, 0
      %v812 = vsel %vm780, %v773, 0
      %v815 = vsel %vm780, %v774, 0
      %v818 = vsel %vm780, %v775, 0
      %v821 = vsel %vm780, %v776, 0
      %v824 = vsel %vm780, %v777, 0
      %v827 = vsel %vm780, %v778, 0
      %vm829 = vcmask 1043456
      %v831 = vsel %vm829, %v779, 0
      %833 = vmatprep.subr.bf16.mxu0 0
      %834 = vmatpush1.bf16.msra.mxu0 %v831
      %835 = vmatprep.subr.bf16.mxu0 0
      %836 = vmatpush1.bf16.msra.mxu0 0
      %837 = vmatprep.subr.bf16.mxu0 0
      %838 = vmatpush1.bf16.msra.mxu0 0
      %839 = vmatprep.subr.bf16.mxu0 0
      %840 = vmatpush1.bf16.msra.mxu0 0
      %841 = vmatprep.subr.bf16.mxu0 0
      %842 = vmatpush1.bf16.msra.mxu0 0
      %843 = vmatprep.subr.bf16.mxu0 0
      %844 = vmatpush1.bf16.msra.mxu0 0
      %845 = vmatprep.subr.bf16.mxu0 0
      %846 = vmatpush1.bf16.msra.mxu0 0
      %847 = vmatprep.subr.bf16.mxu0 0
      %848 = vmatpush1.bf16.msra.mxu0 0
      %849 = vmatprep.subr.bf16.mxu0 0
      %850 = vmatpush1.bf16.msra.mxu0 0
      %851 = vmatprep.subr.bf16.mxu0 0
      %852 = vmatpush1.bf16.msra.mxu0 0
      %853 = vmatprep.subr.bf16.mxu0 0
      %854 = vmatpush1.bf16.msra.mxu0 0
      %855 = vmatprep.subr.bf16.mxu0 0
      %856 = vmatpush1.bf16.msra.mxu0 0
      %857 = vmatprep.subr.bf16.mxu0 0
      %858 = vmatpush1.bf16.msra.mxu0 0
      %859 = vmatprep.subr.bf16.mxu0 0
      %860 = vmatpush1.bf16.msra.mxu0 0
      %861 = vmatprep.subr.bf16.mxu0 0
      %862 = vmatpush1.bf16.msra.mxu0 0
      %863 = vmatprep.subr.bf16.mxu0 0
      %864 = vmatpush1.bf16.msra.mxu0 0
      %865 = vmatprep.mubr.bf16.mxu0 0
      %866 = vmatmul.mubr.bf16.gmra.mrb[0].mxu0 %v782
      %v867 = vpop.f32.mrb[0].mxu0
      %v868 = vadd.f32 0.0, %v867
      %v869 = vpop.f32.mrb[0].mxu0
      %v870 = vpop.f32.mrb[0].mxu0
      %v871 = vadd.f32 0.0, %v870
      %v872 = vpop.f32.mrb[0].mxu0
      %873 = vmatprep.mubr.bf16.mxu0 0
      %874 = vmatmul.mubr.bf16.gmra.mrb[0].mxu0 %v785
      %v875 = vpop.f32.mrb[0].mxu0
      %v876 = vadd.f32 0.0, %v875
      %v877 = vpop.f32.mrb[0].mxu0
      %v878 = vpop.f32.mrb[0].mxu0
      %v879 = vadd.f32 0.0, %v878
      %v880 = vpop.f32.mrb[0].mxu0
      %881 = vmatprep.mubr.bf16.mxu0 0
      %882 = vmatmul.mubr.bf16.gmra.mrb[0].mxu0 %v788
      %v883 = vpop.f32.mrb[0].mxu0
      %v884 = vadd.f32 0.0, %v883
      %v885 = vpop.f32.mrb[0].mxu0
      %v886 = vpop.f32.mrb[0].mxu0
      %v887 = vadd.f32 0.0, %v886
      %v888 = vpop.f32.mrb[0].mxu0
      %889 = vmatprep.mubr.bf16.mxu0 0
      %890 = vmatmul.mubr.bf16.gmra.mrb[0].mxu0 %v791
      %v891 = vpop.f32.mrb[0].mxu0
      %v892 = vadd.f32 0.0, %v891
      %v893 = vpop.f32.mrb[0].mxu0
      %v894 = vpop.f32.mrb[0].mxu0
      %v895 = vadd.f32 0.0, %v894
      %v896 = vpop.f32.mrb[0].mxu0
      %897 = vmatprep.mubr.bf16.mxu0 0
      %898 = vmatmul.mubr.bf16.gmra.mrb[0].mxu0 %v794
      %v899 = vpop.f32.mrb[0].mxu0
      %v900 = vadd.f32 0.0, %v899
      %v901 = vpop.f32.mrb[0].mxu0
      %v902 = vpop.f32.mrb[0].mxu0
      %v903 = vadd.f32 0.0, %v902
      %v904 = vpop.f32.mrb[0].mxu0
      %905 = vmatprep.mubr.bf16.mxu0 0
      %906 = vmatmul.mubr.bf16.gmra.mrb[0].mxu0 %v797
      %v907 = vpop.f32.mrb[0].mxu0
      %v908 = vadd.f32 0.0, %v907
      %v909 = vpop.f32.mrb[0].mxu0
      %v910 = vpop.f32.mrb[0].mxu0
      %v911 = vadd.f32 0.0, %v910
      %v912 = vpop.f32.mrb[0].mxu0
      %913 = vmatprep.mubr.bf16.mxu0 0
      %914 = vmatmul.mubr.bf16.gmra.mrb[0].mxu0 %v800
      %v915 = vpop.f32.mrb[0].mxu0
      %v916 = vadd.f32 0.0, %v915
      %v917 = vpop.f32.mrb[0].mxu0
      %v918 = vpop.f32.mrb[0].mxu0
      %v919 = vadd.f32 0.0, %v918
      %v920 = vpop.f32.mrb[0].mxu0
      %921 = vmatprep.mubr.bf16.mxu0 0
      %922 = vmatmul.mubr.bf16.gmra.mrb[0].mxu0 %v803
      %v923 = vpop.f32.mrb[0].mxu0
      %v924 = vadd.f32 0.0, %v923
      %v925 = vpop.f32.mrb[0].mxu0
      %v926 = vpop.f32.mrb[0].mxu0
      %v927 = vadd.f32 0.0, %v926
      %v928 = vpop.f32.mrb[0].mxu0
      %929 = vmatprep.mubr.bf16.mxu0 0
      %930 = vmatmul.mubr.bf16.gmra.mrb[0].mxu0 %v806
      %v931 = vpop.f32.mrb[0].mxu0
      %v932 = vadd.f32 0.0, %v931
      %v933 = vpop.f32.mrb[0].mxu0
      %v934 = vpop.f32.mrb[0].mxu0
      %v935 = vadd.f32 0.0, %v934
      %v936 = vpop.f32.mrb[0].mxu0
      %937 = vmatprep.mubr.bf16.mxu0 0
      %938 = vmatmul.mubr.bf16.gmra.mrb[0].mxu0 %v809
      %v939 = vpop.f32.mrb[0].mxu0
      %v940 = vadd.f32 0.0, %v939
      %v941 = vpop.f32.mrb[0].mxu0
      %v942 = vpop.f32.mrb[0].mxu0
      %v943 = vadd.f32 0.0, %v942
      %v944 = vpop.f32.mrb[0].mxu0
      %945 = vmatprep.mubr.bf16.mxu0 0
      %946 = vmatmul.mubr.bf16.gmra.mrb[0].mxu0 %v812
      %v947 = vpop.f32.mrb[0].mxu0
      %v948 = vadd.f32 0.0, %v947
      %v949 = vpop.f32.mrb[0].mxu0
      %v950 = vpop.f32.mrb[0].mxu0
      %v951 = vadd.f32 0.0, %v950
      %v952 = vpop.f32.mrb[0].mxu0
      %953 = vmatprep.mubr.bf16.mxu0 0
      %954 = vmatmul.mubr.bf16.gmra.mrb[0].mxu0 %v815
      %v955 = vpop.f32.mrb[0].mxu0
      %v956 = vadd.f32 0.0, %v955
      %v957 = vpop.f32.mrb[0].mxu0
      %v958 = vpop.f32.mrb[0].mxu0
      %v959 = vadd.f32 0.0, %v958
      %v960 = vpop.f32.mrb[0].mxu0
      %961 = vmatprep.mubr.bf16.mxu0 0
      %962 = vmatmul.mubr.bf16.gmra.mrb[0].mxu0 %v818
      %v963 = vpop.f32.mrb[0].mxu0
      %v964 = vadd.f32 0.0, %v963
      %v965 = vpop.f32.mrb[0].mxu0
      %v966 = vpop.f32.mrb[0].mxu0
      %v967 = vadd.f32 0.0, %v966
      %v968 = vpop.f32.mrb[0].mxu0
      %969 = vmatprep.mubr.bf16.mxu0 0
      %970 = vmatmul.mubr.bf16.gmra.mrb[0].mxu0 %v821
      %v971 = vpop.f32.mrb[0].mxu0
      %v972 = vadd.f32 0.0, %v971
      %v973 = vpop.f32.mrb[0].mxu0
      %v974 = vpop.f32.mrb[0].mxu0
      %v975 = vadd.f32 0.0, %v974
      %v976 = vpop.f32.mrb[0].mxu0
      %977 = vmatprep.mubr.bf16.mxu0 0
      %978 = vmatmul.mubr.bf16.gmra.mrb[0].mxu0 %v824
      %v979 = vpop.f32.mrb[0].mxu0
      %v980 = vadd.f32 0.0, %v979
      %v981 = vpop.f32.mrb[0].mxu0
      %v982 = vpop.f32.mrb[0].mxu0
      %v983 = vadd.f32 0.0, %v982
      %v984 = vpop.f32.mrb[0].mxu0
      %985 = vmatprep.mubr.bf16.mxu0 0
      %986 = vmatmul.mubr.bf16.gmra.mrb[0].mxu0 %v827
      %v987 = vpop.f32.mrb[0].mxu0
      %v988 = vadd.f32 0.0, %v987
      %v989 = vpop.f32.mrb[0].mxu0
      %v990 = vpop.f32.mrb[0].mxu0
      %v991 = vadd.f32 0.0, %v990
      %v992 = vpop.f32.mrb[0].mxu0
      %993 = vdwg.mxu0
      %v994 = vadd.f32 %v428, %v868
      %v995 = vadd.f32 %v428, %v871
      %v996 = vadd.f32 %v428, %v876
      %v997 = vadd.f32 %v428, %v879
      %v998 = vadd.f32 %v428, %v884
      %v999 = vadd.f32 %v428, %v887
      %v1000 = vadd.f32 %v428, %v892
      %v1001 = vadd.f32 %v428, %v895
      %v1002 = vadd.f32 %v428, %v900
      %v1003 = vadd.f32 %v428, %v903
      %v1004 = vadd.f32 %v428, %v908
      %v1005 = vadd.f32 %v428, %v911
      %v1006 = vadd.f32 %v428, %v916
      %v1007 = vadd.f32 %v428, %v919
      %v1008 = vadd.f32 %v428, %v924
      %v1009 = vadd.f32 %v428, %v927
      %v1010 = vadd.f32 %v428, %v932
      %v1011 = vadd.f32 %v428, %v935
      %v1012 = vadd.f32 %v428, %v940
      %v1013 = vadd.f32 %v428, %v943
      %v1014 = vadd.f32 %v428, %v948
      %v1015 = vadd.f32 %v428, %v951
      %v1016 = vadd.f32 %v428, %v956
      %v1017 = vadd.f32 %v428, %v959
      %v1018 = vadd.f32 %v428, %v964
      %v1019 = vadd.f32 %v428, %v967
      %v1020 = vadd.f32 %v428, %v972
      %v1021 = vadd.f32 %v428, %v975
      %v1022 = vadd.f32 %v428, %v980
      %v1023 = vadd.f32 %v428, %v983
      %v1024 = vadd.f32 %v428, %v988
      %v1025 = vadd.f32 %v428, %v991
      %s1026 = scalar_lea.vmem %s3, 8
      %v1027 = vld [vmem:[%s1026] sm:$0x3]
      %v1028 = vld [vmem:[%s4] sm:$0x1]
      %v1030 = vlaneseq
      %v1031 = vshrl.u32 %v1030, 7
      %v1032 = vsub.s32 0, %v1031
      %v1033 = vrot.slane %v1028, %v1032
      %v1036 = vsel %vm566, %v1027, 0
      %1038 = vmatprep.subr.bf16.mxu0 0
      %1039 = vmatpush1.bf16.msra.mxu0 %v1036
      %1040 = vmatprep.subr.bf16.mxu0 0
      %1041 = vmatpush1.bf16.msra.mxu0 0
      %1042 = vmatprep.subr.bf16.mxu0 0
      %1043 = vmatpush1.bf16.msra.mxu0 0
      %1044 = vmatprep.subr.bf16.mxu0 0
      %1045 = vmatpush1.bf16.msra.mxu0 0
      %1046 = vmatprep.subr.bf16.mxu0 0
      %1047 = vmatpush1.bf16.msra.mxu0 0
      %1048 = vmatprep.subr.bf16.mxu0 0
      %1049 = vmatpush1.bf16.msra.mxu0 0
      %1050 = vmatprep.subr.bf16.mxu0 0
      %1051 = vmatpush1.bf16.msra.mxu0 0
      %1052 = vmatprep.subr.bf16.mxu0 0
      %1053 = vmatpush1.bf16.msra.mxu0 0
      %1054 = vmatprep.subr.bf16.mxu0 0
      %1055 = vmatpush1.bf16.msra.mxu0 0
      %1056 = vmatprep.subr.bf16.mxu0 0
      %1057 = vmatpush1.bf16.msra.mxu0 0
      %1058 = vmatprep.subr.bf16.mxu0 0
      %1059 = vmatpush1.bf16.msra.mxu0 0
      %1060 = vmatprep.subr.bf16.mxu0 0
      %1061 = vmatpush1.bf16.msra.mxu0 0
      %1062 = vmatprep.subr.bf16.mxu0 0
      %1063 = vmatpush1.bf16.msra.mxu0 0
      %1064 = vmatprep.subr.bf16.mxu0 0
      %1065 = vmatpush1.bf16.msra.mxu0 0
      %1066 = vmatprep.subr.bf16.mxu0 0
      %1067 = vmatpush1.bf16.msra.mxu0 0
      %1068 = vmatprep.subr.bf16.mxu0 0
      %1069 = vmatpush1.bf16.msra.mxu0 0
      %1070 = vmatprep.mubr.bf16.mxu0 0
      %1071 = vmatmul.mubr.bf16.gmra.mrb[0].mxu0 %v519
      %v1072 = vpop.f32.mrb[0].mxu0
      %v1073 = vadd.f32 %v1033, %v1072
      %v1074 = vpop.f32.mrb[0].mxu0
      %v1075 = vpop.f32.mrb[0].mxu0
      %v1076 = vadd.f32 %v1033, %v1075
      %v1077 = vpop.f32.mrb[0].mxu0
      %1078 = vmatprep.mubr.bf16.mxu0 0
      %1079 = vmatmul.mubr.bf16.gmra.mrb[0].mxu0 %v522
      %v1080 = vpop.f32.mrb[0].mxu0
      %v1081 = vadd.f32 %v1033, %v1080
      %v1082 = vpop.f32.mrb[0].mxu0
      %v1083 = vpop.f32.mrb[0].mxu0
      %v1084 = vadd.f32 %v1033, %v1083
      %v1085 = vpop.f32.mrb[0].mxu0
      %1086 = vmatprep.mubr.bf16.mxu0 0
      %1087 = vmatmul.mubr.bf16.gmra.mrb[0].mxu0 %v525
      %v1088 = vpop.f32.mrb[0].mxu0
      %v1089 = vadd.f32 %v1033, %v1088
      %v1090 = vpop.f32.mrb[0].mxu0
      %v1091 = vpop.f32.mrb[0].mxu0
      %v1092 = vadd.f32 %v1033, %v1091
      %v1093 = vpop.f32.mrb[0].mxu0
      %1094 = vmatprep.mubr.bf16.mxu0 0
      %1095 = vmatmul.mubr.bf16.gmra.mrb[0].mxu0 %v528
      %v1096 = vpop.f32.mrb[0].mxu0
      %v1097 = vadd.f32 %v1033, %v1096
      %v1098 = vpop.f32.mrb[0].mxu0
      %v1099 = vpop.f32.mrb[0].mxu0
      %v1100 = vadd.f32 %v1033, %v1099
      %v1101 = vpop.f32.mrb[0].mxu0
      %1102 = vmatprep.mubr.bf16.mxu0 0
      %1103 = vmatmul.mubr.bf16.gmra.mrb[0].mxu0 %v531
      %v1104 = vpop.f32.mrb[0].mxu0
      %v1105 = vadd.f32 %v1033, %v1104
      %v1106 = vpop.f32.mrb[0].mxu0
      %v1107 = vpop.f32.mrb[0].mxu0
      %v1108 = vadd.f32 %v1033, %v1107
      %v1109 = vpop.f32.mrb[0].mxu0
      %1110 = vmatprep.mubr.bf16.mxu0 0
      %1111 = vmatmul.mubr.bf16.gmra.mrb[0].mxu0 %v534
      %v1112 = vpop.f32.mrb[0].mxu0
      %v1113 = vadd.f32 %v1033, %v1112
      %v1114 = vpop.f32.mrb[0].mxu0
      %v1115 = vpop.f32.mrb[0].mxu0
      %v1116 = vadd.f32 %v1033, %v1115
      %v1117 = vpop.f32.mrb[0].mxu0
      %1118 = vmatprep.mubr.bf16.mxu0 0
      %1119 = vmatmul.mubr.bf16.gmra.mrb[0].mxu0 %v537
      %v1120 = vpop.f32.mrb[0].mxu0
      %v1121 = vadd.f32 %v1033, %v1120
      %v1122 = vpop.f32.mrb[0].mxu0
      %v1123 = vpop.f32.mrb[0].mxu0
      %v1124 = vadd.f32 %v1033, %v1123
      %v1125 = vpop.f32.mrb[0].mxu0
      %1126 = vmatprep.mubr.bf16.mxu0 0
      %1127 = vmatmul.mubr.bf16.gmra.mrb[0].mxu0 %v540
      %v1128 = vpop.f32.mrb[0].mxu0
      %v1129 = vadd.f32 %v1033, %v1128
      %v1130 = vpop.f32.mrb[0].mxu0
      %v1131 = vpop.f32.mrb[0].mxu0
      %v1132 = vadd.f32 %v1033, %v1131
      %v1133 = vpop.f32.mrb[0].mxu0
      %1134 = vmatprep.mubr.bf16.mxu0 0
      %1135 = vmatmul.mubr.bf16.gmra.mrb[0].mxu0 %v543
      %v1136 = vpop.f32.mrb[0].mxu0
      %v1137 = vadd.f32 %v1033, %v1136
      %v1138 = vpop.f32.mrb[0].mxu0
      %v1139 = vpop.f32.mrb[0].mxu0
      %v1140 = vadd.f32 %v1033, %v1139
      %v1141 = vpop.f32.mrb[0].mxu0
      %1142 = vmatprep.mubr.bf16.mxu0 0
      %1143 = vmatmul.mubr.bf16.gmra.mrb[0].mxu0 %v546
      %v1144 = vpop.f32.mrb[0].mxu0
      %v1145 = vadd.f32 %v1033, %v1144
      %v1146 = vpop.f32.mrb[0].mxu0
      %v1147 = vpop.f32.mrb[0].mxu0
      %v1148 = vadd.f32 %v1033, %v1147
      %v1149 = vpop.f32.mrb[0].mxu0
      %1150 = vmatprep.mubr.bf16.mxu0 0
      %1151 = vmatmul.mubr.bf16.gmra.mrb[0].mxu0 %v549
      %v1152 = vpop.f32.mrb[0].mxu0
      %v1153 = vadd.f32 %v1033, %v1152
      %v1154 = vpop.f32.mrb[0].mxu0
      %v1155 = vpop.f32.mrb[0].mxu0
      %v1156 = vadd.f32 %v1033, %v1155
      %v1157 = vpop.f32.mrb[0].mxu0
      %1158 = vmatprep.mubr.bf16.mxu0 0
      %1159 = vmatmul.mubr.bf16.gmra.mrb[0].mxu0 %v552
      %v1160 = vpop.f32.mrb[0].mxu0
      %v1161 = vadd.f32 %v1033, %v1160
      %v1162 = vpop.f32.mrb[0].mxu0
      %v1163 = vpop.f32.mrb[0].mxu0
      %v1164 = vadd.f32 %v1033, %v1163
      %v1165 = vpop.f32.mrb[0].mxu0
      %1166 = vmatprep.mubr.bf16.mxu0 0
      %1167 = vmatmul.mubr.bf16.gmra.mrb[0].mxu0 %v555
      %v1168 = vpop.f32.mrb[0].mxu0
      %v1169 = vadd.f32 %v1033, %v1168
      %v1170 = vpop.f32.mrb[0].mxu0
      %v1171 = vpop.f32.mrb[0].mxu0
      %v1172 = vadd.f32 %v1033, %v1171
      %v1173 = vpop.f32.mrb[0].mxu0
      %1174 = vmatprep.mubr.bf16.mxu0 0
      %1175 = vmatmul.mubr.bf16.gmra.mrb[0].mxu0 %v558
      %v1176 = vpop.f32.mrb[0].mxu0
      %v1177 = vadd.f32 %v1033, %v1176
      %v1178 = vpop.f32.mrb[0].mxu0
      %v1179 = vpop.f32.mrb[0].mxu0
      %v1180 = vadd.f32 %v1033, %v1179
      %v1181 = vpop.f32.mrb[0].mxu0
      %1182 = vmatprep.mubr.bf16.mxu0 0
      %1183 = vmatmul.mubr.bf16.gmra.mrb[0].mxu0 %v561
      %v1184 = vpop.f32.mrb[0].mxu0
      %v1185 = vadd.f32 %v1033, %v1184
      %v1186 = vpop.f32.mrb[0].mxu0
      %v1187 = vpop.f32.mrb[0].mxu0
      %v1188 = vadd.f32 %v1033, %v1187
      %v1189 = vpop.f32.mrb[0].mxu0
      %1190 = vmatprep.mubr.bf16.mxu0 0
      %1191 = vmatmul.mubr.bf16.gmra.mrb[0].mxu0 %v564
      %v1192 = vpop.f32.mrb[0].mxu0
      %v1193 = vadd.f32 %v1033, %v1192
      %v1194 = vpop.f32.mrb[0].mxu0
      %v1195 = vpop.f32.mrb[0].mxu0
      %v1196 = vadd.f32 %v1033, %v1195
      %v1197 = vpop.f32.mrb[0].mxu0
      %1198 = vdwg.mxu0
      %1199 = vst.msk [vmem:[#allocation2] sm:$0xff] %vm780, %v1073
      %1200 = vst.msk [vmem:[#allocation2 + $0x8] sm:$0xff] %vm780, %v1076
      %1201 = vst.msk [vmem:[#allocation2 + $0x10] sm:$0xff] %vm780, %v1081
      %1202 = vst.msk [vmem:[#allocation2 + $0x18] sm:$0xff] %vm780, %v1084
      %1203 = vst.msk [vmem:[#allocation2 + $0x20] sm:$0xff] %vm780, %v1089
      %1204 = vst.msk [vmem:[#allocation2 + $0x28] sm:$0xff] %vm780, %v1092
      %1205 = vst.msk [vmem:[#allocation2 + $0x30] sm:$0xff] %vm780, %v1097
      %1206 = vst.msk [vmem:[#allocation2 + $0x38] sm:$0xff] %vm780, %v1100
      %1207 = vst.msk [vmem:[#allocation2 + $0x40] sm:$0xff] %vm780, %v1105
      %1208 = vst.msk [vmem:[#allocation2 + $0x48] sm:$0xff] %vm780, %v1108
      %1209 = vst.msk [vmem:[#allocation2 + $0x50] sm:$0xff] %vm780, %v1113
      %1210 = vst.msk [vmem:[#allocation2 + $0x58] sm:$0xff] %vm780, %v1116
      %1211 = vst.msk [vmem:[#allocation2 + $0x60] sm:$0xff] %vm780, %v1121
      %1212 = vst.msk [vmem:[#allocation2 + $0x68] sm:$0xff] %vm780, %v1124
      %1213 = vst.msk [vmem:[#allocation2 + $0x70] sm:$0xff] %vm780, %v1129
      %1214 = vst.msk [vmem:[#allocation2 + $0x78] sm:$0xff] %vm780, %v1132
      %1215 = vst.msk [vmem:[#allocation2 + $0x80] sm:$0xff] %vm780, %v1137
      %1216 = vst.msk [vmem:[#allocation2 + $0x88] sm:$0xff] %vm780, %v1140
      %1217 = vst.msk [vmem:[#allocation2 + $0x90] sm:$0xff] %vm780, %v1145
      %1218 = vst.msk [vmem:[#allocation2 + $0x98] sm:$0xff] %vm780, %v1148
      %1219 = vst.msk [vmem:[#allocation2 + $0xa0] sm:$0xff] %vm780, %v1153
      %1220 = vst.msk [vmem:[#allocation2 + $0xa8] sm:$0xff] %vm780, %v1156
      %1221 = vst.msk [vmem:[#allocation2 + $0xb0] sm:$0xff] %vm780, %v1161
      %1222 = vst.msk [vmem:[#allocation2 + $0xb8] sm:$0xff] %vm780, %v1164
      %1223 = vst.msk [vmem:[#allocation2 + $0xc0] sm:$0xff] %vm780, %v1169
      %1224 = vst.msk [vmem:[#allocation2 + $0xc8] sm:$0xff] %vm780, %v1172
      %1225 = vst.msk [vmem:[#allocation2 + $0xd0] sm:$0xff] %vm780, %v1177
      %1226 = vst.msk [vmem:[#allocation2 + $0xd8] sm:$0xff] %vm780, %v1180
      %1227 = vst.msk [vmem:[#allocation2 + $0xe0] sm:$0xff] %vm780, %v1185
      %1228 = vst.msk [vmem:[#allocation2 + $0xe8] sm:$0xff] %vm780, %v1188
      %1229 = vst.msk [vmem:[#allocation2 + $0xf0] sm:$0xff] %vm780, %v1193
      %1230 = vst.msk [vmem:[#allocation2 + $0xf8] sm:$0xff] %vm780, %v1196
      %v1231 = vld [vmem:[%s381] sm:$0xf]
      %v1232 = vld [vmem:[%s381 + $0x4] sm:$0xf]
      %v1233 = vld [vmem:[%s381 + $0x8] sm:$0xf]
      %v1234 = vld [vmem:[%s381 + $0xc] sm:$0xf]
      %v1235 = vld [vmem:[%s381 + $0x10] sm:$0xf]
      %v1236 = vld [vmem:[%s381 + $0x14] sm:$0xf]
      %v1237 = vld [vmem:[%s381 + $0x18] sm:$0xf]
      %v1238 = vld [vmem:[%s381 + $0x1c] sm:$0xf]
      %v1239 = vld [vmem:[%s381 + $0x20] sm:$0xf]
      %v1240 = vld [vmem:[%s381 + $0x24] sm:$0xf]
      %v1241 = vld [vmem:[%s381 + $0x28] sm:$0xf]
      %v1242 = vld [vmem:[%s381 + $0x2c] sm:$0xf]
      %v1243 = vld [vmem:[%s381 + $0x30] sm:$0xf]
      %v1244 = vld [vmem:[%s381 + $0x34] sm:$0xf]
      %v1245 = vld [vmem:[%s381 + $0x38] sm:$0xf]
      %v1246 = vld [vmem:[%s381 + $0x3c] sm:$0xf]
      %v1247 = vld [vmem:[%s381 + $0x40] sm:$0xf]
      %v1248 = vld [vmem:[%s381 + $0x44] sm:$0xf]
      %v1249 = vld [vmem:[%s381 + $0x48] sm:$0xf]
      %v1250 = vld [vmem:[%s381 + $0x4c] sm:$0xf]
      %v1251 = vld [vmem:[%s3] sm:$0x3]
      %v1272 = vunpack.c.l.b16 %v1231
      %v1273 = vunpack.c.l.b16 %v1232
      %v1274 = vunpack.c.l.b16 %v1233
      %v1275 = vunpack.c.l.b16 %v1234
      %v1276 = vunpack.c.l.b16 %v1235
      %v1277 = vunpack.c.l.b16 %v1236
      %v1278 = vunpack.c.l.b16 %v1237
      %v1279 = vunpack.c.l.b16 %v1238
      %v1280 = vunpack.c.l.b16 %v1239
      %v1281 = vunpack.c.l.b16 %v1240
      %v1282 = vunpack.c.l.b16 %v1241
      %v1283 = vunpack.c.l.b16 %v1242
      %v1284 = vunpack.c.l.b16 %v1243
      %v1285 = vunpack.c.l.b16 %v1244
      %v1286 = vunpack.c.l.b16 %v1245
      %v1287 = vunpack.c.l.b16 %v1246
      %v1288 = vunpack.c.l.b16 %v1247
      %v1289 = vunpack.c.l.b16 %v1248
      %v1290 = vunpack.c.l.b16 %v1249
      %v1291 = vunpack.c.l.b16 %v1250
      %v1292 = vpack.c.b16 %v1273, %v1272
      %v1293 = vpack.c.b16 %v1275, %v1274
      %v1294 = vpack.c.b16 %v1277, %v1276
      %v1295 = vpack.c.b16 %v1279, %v1278
      %v1296 = vpack.c.b16 %v1281, %v1280
      %v1297 = vpack.c.b16 %v1283, %v1282
      %v1298 = vpack.c.b16 %v1285, %v1284
      %v1299 = vpack.c.b16 %v1287, %v1286
      %v1300 = vpack.c.b16 %v1289, %v1288
      %v1301 = vpack.c.b16 %v1291, %v1290
      %v1303 = vsel %vm517, %v1292, 0
      %v1306 = vsel %vm517, %v1293, 0
      %v1309 = vsel %vm517, %v1294, 0
      %v1312 = vsel %vm517, %v1295, 0
      %v1315 = vsel %vm517, %v1296, 0
      %v1318 = vsel %vm517, %v1297, 0
      %v1321 = vsel %vm517, %v1298, 0
      %v1324 = vsel %vm517, %v1299, 0
      %v1327 = vsel %vm517, %v1300, 0
      %v1330 = vsel %vm517, %v1301, 0
      %v1333 = vsel %vm566, %v1251, 0
      %1335 = vmatprep.subr.bf16.mxu0 0
      %1336 = vmatpush1.bf16.msra.mxu0 %v1333
      %1337 = vmatprep.subr.bf16.mxu0 0
      %1338 = vmatpush1.bf16.msra.mxu0 0
      %1339 = vmatprep.subr.bf16.mxu0 0
      %1340 = vmatpush1.bf16.msra.mxu0 0
      %1341 = vmatprep.subr.bf16.mxu0 0
      %1342 = vmatpush1.bf16.msra.mxu0 0
      %1343 = vmatprep.subr.bf16.mxu0 0
      %1344 = vmatpush1.bf16.msra.mxu0 0
      %1345 = vmatprep.subr.bf16.mxu0 0
      %1346 = vmatpush1.bf16.msra.mxu0 0
      %1347 = vmatprep.subr.bf16.mxu0 0
      %1348 = vmatpush1.bf16.msra.mxu0 0
      %1349 = vmatprep.subr.bf16.mxu0 0
      %1350 = vmatpush1.bf16.msra.mxu0 0
      %1351 = vmatprep.subr.bf16.mxu0 0
      %1352 = vmatpush1.bf16.msra.mxu0 0
      %1353 = vmatprep.subr.bf16.mxu0 0
      %1354 = vmatpush1.bf16.msra.mxu0 0
      %1355 = vmatprep.subr.bf16.mxu0 0
      %1356 = vmatpush1.bf16.msra.mxu0 0
      %1357 = vmatprep.subr.bf16.mxu0 0
      %1358 = vmatpush1.bf16.msra.mxu0 0
      %1359 = vmatprep.subr.bf16.mxu0 0
      %1360 = vmatpush1.bf16.msra.mxu0 0
      %1361 = vmatprep.subr.bf16.mxu0 0
      %1362 = vmatpush1.bf16.msra.mxu0 0
      %1363 = vmatprep.subr.bf16.mxu0 0
      %1364 = vmatpush1.bf16.msra.mxu0 0
      %1365 = vmatprep.subr.bf16.mxu0 0
      %1366 = vmatpush1.bf16.msra.mxu0 0
      %1367 = vmatprep.mubr.bf16.mxu0 0
      %1368 = vmatmul.mubr.bf16.gmra.mrb[0].mxu0 %v1303
      %v1369 = vpop.f32.mrb[0].mxu0
      %v1370 = vadd.f32 0.0, %v1369
      %v1371 = vpop.f32.mrb[0].mxu0
      %v1372 = vpop.f32.mrb[0].mxu0
      %v1373 = vadd.f32 0.0, %v1372
      %v1374 = vpop.f32.mrb[0].mxu0
      %1375 = vmatprep.mubr.bf16.mxu0 0
      %1376 = vmatmul.mubr.bf16.gmra.mrb[0].mxu0 %v1306
      %v1377 = vpop.f32.mrb[0].mxu0
      %v1378 = vadd.f32 0.0, %v1377
      %v1379 = vpop.f32.mrb[0].mxu0
      %v1380 = vpop.f32.mrb[0].mxu0
      %v1381 = vadd.f32 0.0, %v1380
      %v1382 = vpop.f32.mrb[0].mxu0
      %1383 = vmatprep.mubr.bf16.mxu0 0
      %1384 = vmatmul.mubr.bf16.gmra.mrb[0].mxu0 %v1309
      %v1385 = vpop.f32.mrb[0].mxu0
      %v1386 = vadd.f32 0.0, %v1385
      %v1387 = vpop.f32.mrb[0].mxu0
      %v1388 = vpop.f32.mrb[0].mxu0
      %v1389 = vadd.f32 0.0, %v1388
      %v1390 = vpop.f32.mrb[0].mxu0
      %1391 = vmatprep.mubr.bf16.mxu0 0
      %1392 = vmatmul.mubr.bf16.gmra.mrb[0].mxu0 %v1312
      %v1393 = vpop.f32.mrb[0].mxu0
      %v1394 = vadd.f32 0.0, %v1393
      %v1395 = vpop.f32.mrb[0].mxu0
      %v1396 = vpop.f32.mrb[0].mxu0
      %v1397 = vadd.f32 0.0, %v1396
      %v1398 = vpop.f32.mrb[0].mxu0
      %1399 = vmatprep.mubr.bf16.mxu0 0
      %1400 = vmatmul.mubr.bf16.gmra.mrb[0].mxu0 %v1315
      %v1401 = vpop.f32.mrb[0].mxu0
      %v1402 = vadd.f32 0.0, %v1401
      %v1403 = vpop.f32.mrb[0].mxu0
      %v1404 = vpop.f32.mrb[0].mxu0
      %v1405 = vadd.f32 0.0, %v1404
      %v1406 = vpop.f32.mrb[0].mxu0
      %1407 = vmatprep.mubr.bf16.mxu0 0
      %1408 = vmatmul.mubr.bf16.gmra.mrb[0].mxu0 %v1318
      %v1409 = vpop.f32.mrb[0].mxu0
      %v1410 = vadd.f32 0.0, %v1409
      %v1411 = vpop.f32.mrb[0].mxu0
      %v1412 = vpop.f32.mrb[0].mxu0
      %v1413 = vadd.f32 0.0, %v1412
      %v1414 = vpop.f32.mrb[0].mxu0
      %1415 = vmatprep.mubr.bf16.mxu0 0
      %1416 = vmatmul.mubr.bf16.gmra.mrb[0].mxu0 %v1321
      %v1417 = vpop.f32.mrb[0].mxu0
      %v1418 = vadd.f32 0.0, %v1417
      %v1419 = vpop.f32.mrb[0].mxu0
      %v1420 = vpop.f32.mrb[0].mxu0
      %v1421 = vadd.f32 0.0, %v1420
      %v1422 = vpop.f32.mrb[0].mxu0
      %1423 = vmatprep.mubr.bf16.mxu0 0
      %1424 = vmatmul.mubr.bf16.gmra.mrb[0].mxu0 %v1324
      %v1425 = vpop.f32.mrb[0].mxu0
      %v1426 = vadd.f32 0.0, %v1425
      %v1427 = vpop.f32.mrb[0].mxu0
      %v1428 = vpop.f32.mrb[0].mxu0
      %v1429 = vadd.f32 0.0, %v1428
      %v1430 = vpop.f32.mrb[0].mxu0
      %1431 = vmatprep.mubr.bf16.mxu0 0
      %1432 = vmatmul.mubr.bf16.gmra.mrb[0].mxu0 %v1327
      %v1433 = vpop.f32.mrb[0].mxu0
      %v1434 = vadd.f32 0.0, %v1433
      %v1435 = vpop.f32.mrb[0].mxu0
      %v1436 = vpop.f32.mrb[0].mxu0
      %v1437 = vadd.f32 0.0, %v1436
      %v1438 = vpop.f32.mrb[0].mxu0
      %1439 = vmatprep.mubr.bf16.mxu0 0
      %1440 = vmatmul.mubr.bf16.gmra.mrb[0].mxu0 %v1330
      %v1441 = vpop.f32.mrb[0].mxu0
      %v1442 = vadd.f32 0.0, %v1441
      %v1443 = vpop.f32.mrb[0].mxu0
      %v1444 = vpop.f32.mrb[0].mxu0
      %v1445 = vadd.f32 0.0, %v1444
      %v1446 = vpop.f32.mrb[0].mxu0
      %1447 = vdwg.mxu0
      %s1448 = scalar_lea.vmem [#allocation2], 96
      %v1449 = vld [vmem:[%s1448 + $0x6] sm:$0xff]
      %v1450 = vld [vmem:[%s1448 + $0xe] sm:$0x3]
      %v1451 = vld [vmem:[%s1448 + $0x16] sm:$0xff]
      %v1452 = vld [vmem:[%s1448 + $0x1e] sm:$0x3]
      %v1453 = vld [vmem:[%s1448 + $0x26] sm:$0xff]
      %v1454 = vld [vmem:[%s1448 + $0x2e] sm:$0x3]
      %v1455 = vld [vmem:[%s1448 + $0x36] sm:$0xff]
      %v1456 = vld [vmem:[%s1448 + $0x3e] sm:$0x3]
      %v1457 = vld [vmem:[%s1448 + $0x46] sm:$0xff]
      %v1458 = vld [vmem:[%s1448 + $0x4e] sm:$0x3]
      %v1459 = vld [vmem:[%s1448 + $0x56] sm:$0xff]
      %v1460 = vld [vmem:[%s1448 + $0x5e] sm:$0x3]
      %v1461 = vld [vmem:[%s1448 + $0x66] sm:$0xff]
      %v1462 = vld [vmem:[%s1448 + $0x6e] sm:$0x3]
      %v1463 = vld [vmem:[%s1448 + $0x76] sm:$0xff]
      %v1464 = vld [vmem:[%s1448 + $0x7e] sm:$0x3]
      %v1465 = vld [vmem:[%s1448 + $0x86] sm:$0xff]
      %v1466 = vld [vmem:[%s1448 + $0x8e] sm:$0x3]
      %v1467 = vld [vmem:[%s1448 + $0x96] sm:$0xff]
      %v1468 = vld [vmem:[%s1448 + $0x9e] sm:$0x3]
      %v1469 = vadd.f32 %v1449, %v1370
      %v1470 = vadd.f32 %v1450, %v1373
      %v1471 = vadd.f32 %v1451, %v1378
      %v1472 = vadd.f32 %v1452, %v1381
      %v1473 = vadd.f32 %v1453, %v1386
      %v1474 = vadd.f32 %v1454, %v1389
      %v1475 = vadd.f32 %v1455, %v1394
      %v1476 = vadd.f32 %v1456, %v1397
      %v1477 = vadd.f32 %v1457, %v1402
      %v1478 = vadd.f32 %v1458, %v1405
      %v1479 = vadd.f32 %v1459, %v1410
      %v1480 = vadd.f32 %v1460, %v1413
      %v1481 = vadd.f32 %v1461, %v1418
      %v1482 = vadd.f32 %v1462, %v1421
      %v1483 = vadd.f32 %v1463, %v1426
      %v1484 = vadd.f32 %v1464, %v1429
      %v1485 = vadd.f32 %v1465, %v1434
      %v1486 = vadd.f32 %v1466, %v1437
      %v1487 = vadd.f32 %v1467, %v1442
      %v1488 = vadd.f32 %v1468, %v1445
      %1489 = vst.msk [vmem:[%s1448 + $0x6] sm:$0xff] %vm780, %v1469
      %vm1490 = vcmask 58368
      %1491 = vst.msk [vmem:[%s1448 + $0xe] sm:$0x3] %vm1490, %v1470
      %1492 = vst.msk [vmem:[%s1448 + $0x16] sm:$0xff] %vm780, %v1471
      %1493 = vst.msk [vmem:[%s1448 + $0x1e] sm:$0x3] %vm1490, %v1472
      %1494 = vst.msk [vmem:[%s1448 + $0x26] sm:$0xff] %vm780, %v1473
      %1495 = vst.msk [vmem:[%s1448 + $0x2e] sm:$0x3] %vm1490, %v1474
      %1496 = vst.msk [vmem:[%s1448 + $0x36] sm:$0xff] %vm780, %v1475
      %1497 = vst.msk [vmem:[%s1448 + $0x3e] sm:$0x3] %vm1490, %v1476
      %1498 = vst.msk [vmem:[%s1448 + $0x46] sm:$0xff] %vm780, %v1477
      %1499 = vst.msk [vmem:[%s1448 + $0x4e] sm:$0x3] %vm1490, %v1478
      %1500 = vst.msk [vmem:[%s1448 + $0x56] sm:$0xff] %vm780, %v1479
      %1501 = vst.msk [vmem:[%s1448 + $0x5e] sm:$0x3] %vm1490, %v1480
      %1502 = vst.msk [vmem:[%s1448 + $0x66] sm:$0xff] %vm780, %v1481
      %1503 = vst.msk [vmem:[%s1448 + $0x6e] sm:$0x3] %vm1490, %v1482
      %1504 = vst.msk [vmem:[%s1448 + $0x76] sm:$0xff] %vm780, %v1483
      %1505 = vst.msk [vmem:[%s1448 + $0x7e] sm:$0x3] %vm1490, %v1484
      %1506 = vst.msk [vmem:[%s1448 + $0x86] sm:$0xff] %vm780, %v1485
      %1507 = vst.msk [vmem:[%s1448 + $0x8e] sm:$0x3] %vm1490, %v1486
      %1508 = vst.msk [vmem:[%s1448 + $0x96] sm:$0xff] %vm780, %v1487
      %1509 = vst.msk [vmem:[%s1448 + $0x9e] sm:$0x3] %vm1490, %v1488
      %v1510 = vld [vmem:[%s381] sm:$0xf]
      %v1511 = vld [vmem:[%s381 + $0x4] sm:$0xf]
      %v1512 = vld [vmem:[%s381 + $0x8] sm:$0xf]
      %v1513 = vld [vmem:[%s381 + $0xc] sm:$0xf]
      %v1514 = vld [vmem:[%s381 + $0x10] sm:$0xf]
      %v1515 = vld [vmem:[%s381 + $0x14] sm:$0xf]
      %v1516 = vld [vmem:[%s381 + $0x18] sm:$0xf]
      %v1517 = vld [vmem:[%s381 + $0x1c] sm:$0xf]
      %v1518 = vld [vmem:[%s381 + $0x20] sm:$0xf]
      %v1519 = vld [vmem:[%s381 + $0x24] sm:$0xf]
      %v1520 = vld [vmem:[%s381 + $0x28] sm:$0xf]
      %v1521 = vld [vmem:[%s381 + $0x2c] sm:$0xf]
      %v1522 = vld [vmem:[%s381 + $0x30] sm:$0xf]
      %v1523 = vld [vmem:[%s381 + $0x34] sm:$0xf]
      %v1524 = vld [vmem:[%s381 + $0x38] sm:$0xf]
      %v1525 = vld [vmem:[%s381 + $0x3c] sm:$0xf]
      %v1526 = vld [vmem:[%s381 + $0x40] sm:$0xf]
      %v1527 = vld [vmem:[%s381 + $0x44] sm:$0xf]
      %v1528 = vld [vmem:[%s381 + $0x48] sm:$0xf]
      %v1529 = vld [vmem:[%s381 + $0x4c] sm:$0xf]
      %s1530 = scalar_lea.vmem %s3, 2
      %v1531 = vld [vmem:[%s1530] sm:$0x3]
      %v1552 = vunpack.c.l.b16 %v1510
      %v1553 = vunpack.c.l.b16 %v1511
      %v1554 = vunpack.c.l.b16 %v1512
      %v1555 = vunpack.c.l.b16 %v1513
      %v1556 = vunpack.c.l.b16 %v1514
      %v1557 = vunpack.c.l.b16 %v1515
      %v1558 = vunpack.c.l.b16 %v1516
      %v1559 = vunpack.c.l.b16 %v1517
      %v1560 = vunpack.c.l.b16 %v1518
      %v1561 = vunpack.c.l.b16 %v1519
      %v1562 = vunpack.c.l.b16 %v1520
      %v1563 = vunpack.c.l.b16 %v1521
      %v1564 = vunpack.c.l.b16 %v1522
      %v1565 = vunpack.c.l.b16 %v1523
      %v1566 = vunpack.c.l.b16 %v1524
      %v1567 = vunpack.c.l.b16 %v1525
      %v1568 = vunpack.c.l.b16 %v1526
      %v1569 = vunpack.c.l.b16 %v1527
      %v1570 = vunpack.c.l.b16 %v1528
      %v1571 = vunpack.c.l.b16 %v1529
      %v1572 = vpack.c.b16 %v1553, %v1552
      %v1573 = vpack.c.b16 %v1555, %v1554
      %v1574 = vpack.c.b16 %v1557, %v1556
      %v1575 = vpack.c.b16 %v1559, %v1558
      %v1576 = vpack.c.b16 %v1561, %v1560
      %v1577 = vpack.c.b16 %v1563, %v1562
      %v1578 = vpack.c.b16 %v1565, %v1564
      %v1579 = vpack.c.b16 %v1567, %v1566
      %v1580 = vpack.c.b16 %v1569, %v1568
      %v1581 = vpack.c.b16 %v1571, %v1570
      %v1583 = vsel %vm517, %v1572, 0
      %v1586 = vsel %vm517, %v1573, 0
      %v1589 = vsel %vm517, %v1574, 0
      %v1592 = vsel %vm517, %v1575, 0
      %v1595 = vsel %vm517, %v1576, 0
      %v1598 = vsel %vm517, %v1577, 0
      %v1601 = vsel %vm517, %v1578, 0
      %v1604 = vsel %vm517, %v1579, 0
      %v1607 = vsel %vm517, %v1580, 0
      %v1610 = vsel %vm517, %v1581, 0
      %v1613 = vsel %vm566, %v1531, 0
      %1615 = vmatprep.subr.bf16.mxu0 0
      %1616 = vmatpush1.bf16.msra.mxu0 %v1613
      %1617 = vmatprep.subr.bf16.mxu0 0
      %1618 = vmatpush1.bf16.msra.mxu0 0
      %1619 = vmatprep.subr.bf16.mxu0 0
      %1620 = vmatpush1.bf16.msra.mxu0 0
      %1621 = vmatprep.subr.bf16.mxu0 0
      %1622 = vmatpush1.bf16.msra.mxu0 0
      %1623 = vmatprep.subr.bf16.mxu0 0
      %1624 = vmatpush1.bf16.msra.mxu0 0
      %1625 = vmatprep.subr.bf16.mxu0 0
      %1626 = vmatpush1.bf16.msra.mxu0 0
      %1627 = vmatprep.subr.bf16.mxu0 0
      %1628 = vmatpush1.bf16.msra.mxu0 0
      %1629 = vmatprep.subr.bf16.mxu0 0
      %1630 = vmatpush1.bf16.msra.mxu0 0
      %1631 = vmatprep.subr.bf16.mxu0 0
      %1632 = vmatpush1.bf16.msra.mxu0 0
      %1633 = vmatprep.subr.bf16.mxu0 0
      %1634 = vmatpush1.bf16.msra.mxu0 0
      %1635 = vmatprep.subr.bf16.mxu0 0
      %1636 = vmatpush1.bf16.msra.mxu0 0
      %1637 = vmatprep.subr.bf16.mxu0 0
      %1638 = vmatpush1.bf16.msra.mxu0 0
      %1639 = vmatprep.subr.bf16.mxu0 0
      %1640 = vmatpush1.bf16.msra.mxu0 0
      %1641 = vmatprep.subr.bf16.mxu0 0
      %1642 = vmatpush1.bf16.msra.mxu0 0
      %1643 = vmatprep.subr.bf16.mxu0 0
      %1644 = vmatpush1.bf16.msra.mxu0 0
      %1645 = vmatprep.subr.bf16.mxu0 0
      %1646 = vmatpush1.bf16.msra.mxu0 0
      %1647 = vmatprep.mubr.bf16.mxu0 0
      %1648 = vmatmul.mubr.bf16.gmra.mrb[0].mxu0 %v1583
      %v1649 = vpop.f32.mrb[0].mxu0
      %v1650 = vadd.f32 0.0, %v1649
      %v1651 = vpop.f32.mrb[0].mxu0
      %v1652 = vpop.f32.mrb[0].mxu0
      %v1653 = vadd.f32 0.0, %v1652
      %v1654 = vpop.f32.mrb[0].mxu0
      %1655 = vmatprep.mubr.bf16.mxu0 0
      %1656 = vmatmul.mubr.bf16.gmra.mrb[0].mxu0 %v1586
      %v1657 = vpop.f32.mrb[0].mxu0
      %v1658 = vadd.f32 0.0, %v1657
      %v1659 = vpop.f32.mrb[0].mxu0
      %v1660 = vpop.f32.mrb[0].mxu0
      %v1661 = vadd.f32 0.0, %v1660
      %v1662 = vpop.f32.mrb[0].mxu0
      %1663 = vmatprep.mubr.bf16.mxu0 0
      %1664 = vmatmul.mubr.bf16.gmra.mrb[0].mxu0 %v1589
      %v1665 = vpop.f32.mrb[0].mxu0
      %v1666 = vadd.f32 0.0, %v1665
      %v1667 = vpop.f32.mrb[0].mxu0
      %v1668 = vpop.f32.mrb[0].mxu0
      %v1669 = vadd.f32 0.0, %v1668
      %v1670 = vpop.f32.mrb[0].mxu0
      %1671 = vmatprep.mubr.bf16.mxu0 0
      %1672 = vmatmul.mubr.bf16.gmra.mrb[0].mxu0 %v1592
      %v1673 = vpop.f32.mrb[0].mxu0
      %v1674 = vadd.f32 0.0, %v1673
      %v1675 = vpop.f32.mrb[0].mxu0
      %v1676 = vpop.f32.mrb[0].mxu0
      %v1677 = vadd.f32 0.0, %v1676
      %v1678 = vpop.f32.mrb[0].mxu0
      %1679 = vmatprep.mubr.bf16.mxu0 0
      %1680 = vmatmul.mubr.bf16.gmra.mrb[0].mxu0 %v1595
      %v1681 = vpop.f32.mrb[0].mxu0
      %v1682 = vadd.f32 0.0, %v1681
      %v1683 = vpop.f32.mrb[0].mxu0
      %v1684 = vpop.f32.mrb[0].mxu0
      %v1685 = vadd.f32 0.0, %v1684
      %v1686 = vpop.f32.mrb[0].mxu0
      %1687 = vmatprep.mubr.bf16.mxu0 0
      %1688 = vmatmul.mubr.bf16.gmra.mrb[0].mxu0 %v1598
      %v1689 = vpop.f32.mrb[0].mxu0
      %v1690 = vadd.f32 0.0, %v1689
      %v1691 = vpop.f32.mrb[0].mxu0
      %v1692 = vpop.f32.mrb[0].mxu0
      %v1693 = vadd.f32 0.0, %v1692
      %v1694 = vpop.f32.mrb[0].mxu0
      %1695 = vmatprep.mubr.bf16.mxu0 0
      %1696 = vmatmul.mubr.bf16.gmra.mrb[0].mxu0 %v1601
      %v1697 = vpop.f32.mrb[0].mxu0
      %v1698 = vadd.f32 0.0, %v1697
      %v1699 = vpop.f32.mrb[0].mxu0
      %v1700 = vpop.f32.mrb[0].mxu0
      %v1701 = vadd.f32 0.0, %v1700
      %v1702 = vpop.f32.mrb[0].mxu0
      %1703 = vmatprep.mubr.bf16.mxu0 0
      %1704 = vmatmul.mubr.bf16.gmra.mrb[0].mxu0 %v1604
      %v1705 = vpop.f32.mrb[0].mxu0
      %v1706 = vadd.f32 0.0, %v1705
      %v1707 = vpop.f32.mrb[0].mxu0
      %v1708 = vpop.f32.mrb[0].mxu0
      %v1709 = vadd.f32 0.0, %v1708
      %v1710 = vpop.f32.mrb[0].mxu0
      %1711 = vmatprep.mubr.bf16.mxu0 0
      %1712 = vmatmul.mubr.bf16.gmra.mrb[0].mxu0 %v1607
      %v1713 = vpop.f32.mrb[0].mxu0
      %v1714 = vadd.f32 0.0, %v1713
      %v1715 = vpop.f32.mrb[0].mxu0
      %v1716 = vpop.f32.mrb[0].mxu0
      %v1717 = vadd.f32 0.0, %v1716
      %v1718 = vpop.f32.mrb[0].mxu0
      %1719 = vmatprep.mubr.bf16.mxu0 0
      %1720 = vmatmul.mubr.bf16.gmra.mrb[0].mxu0 %v1610
      %v1721 = vpop.f32.mrb[0].mxu0
      %v1722 = vadd.f32 0.0, %v1721
      %v1723 = vpop.f32.mrb[0].mxu0
      %v1724 = vpop.f32.mrb[0].mxu0
      %v1725 = vadd.f32 0.0, %v1724
      %v1726 = vpop.f32.mrb[0].mxu0
      %1727 = vdwg.mxu0
      %v1728 = vld [vmem:[%s1448] sm:$0xff]
      %v1729 = vld [vmem:[%s1448 + $0x8] sm:$0xff]
      %v1730 = vld [vmem:[%s1448 + $0x10] sm:$0xff]
      %v1731 = vld [vmem:[%s1448 + $0x18] sm:$0xff]
      %v1732 = vld [vmem:[%s1448 + $0x20] sm:$0xff]
      %v1733 = vld [vmem:[%s1448 + $0x28] sm:$0xff]
      %v1734 = vld [vmem:[%s1448 + $0x30] sm:$0xff]
      %v1735 = vld [vmem:[%s1448 + $0x38] sm:$0xff]
      %v1736 = vld [vmem:[%s1448 + $0x40] sm:$0xff]
      %v1737 = vld [vmem:[%s1448 + $0x48] sm:$0xff]
      %v1738 = vld [vmem:[%s1448 + $0x50] sm:$0xff]
      %v1739 = vld [vmem:[%s1448 + $0x58] sm:$0xff]
      %v1740 = vld [vmem:[%s1448 + $0x60] sm:$0xff]
      %v1741 = vld [vmem:[%s1448 + $0x68] sm:$0xff]
      %v1742 = vld [vmem:[%s1448 + $0x70] sm:$0xff]
      %v1743 = vld [vmem:[%s1448 + $0x78] sm:$0xff]
      %v1744 = vld [vmem:[%s1448 + $0x80] sm:$0xff]
      %v1745 = vld [vmem:[%s1448 + $0x88] sm:$0xff]
      %v1746 = vld [vmem:[%s1448 + $0x90] sm:$0xff]
      %v1747 = vld [vmem:[%s1448 + $0x98] sm:$0xff]
      %v1748 = vadd.f32 %v1728, %v1650
      %v1749 = vadd.f32 %v1729, %v1653
      %v1750 = vadd.f32 %v1730, %v1658
      %v1751 = vadd.f32 %v1731, %v1661
      %v1752 = vadd.f32 %v1732, %v1666
      %v1753 = vadd.f32 %v1733, %v1669
      %v1754 = vadd.f32 %v1734, %v1674
      %v1755 = vadd.f32 %v1735, %v1677
      %v1756 = vadd.f32 %v1736, %v1682
      %v1757 = vadd.f32 %v1737, %v1685
      %v1758 = vadd.f32 %v1738, %v1690
      %v1759 = vadd.f32 %v1739, %v1693
      %v1760 = vadd.f32 %v1740, %v1698
      %v1761 = vadd.f32 %v1741, %v1701
      %v1762 = vadd.f32 %v1742, %v1706
      %v1763 = vadd.f32 %v1743, %v1709
      %v1764 = vadd.f32 %v1744, %v1714
      %v1765 = vadd.f32 %v1745, %v1717
      %v1766 = vadd.f32 %v1746, %v1722
      %v1767 = vadd.f32 %v1747, %v1725
      %1768 = vst.msk [vmem:[%s1448] sm:$0xff] %vm780, %v1748
      %1769 = vst.msk [vmem:[%s1448 + $0x8] sm:$0xff] %vm780, %v1749
      %1770 = vst.msk [vmem:[%s1448 + $0x10] sm:$0xff] %vm780, %v1750
      %1771 = vst.msk [vmem:[%s1448 + $0x18] sm:$0xff] %vm780, %v1751
      %1772 = vst.msk [vmem:[%s1448 + $0x20] sm:$0xff] %vm780, %v1752
      %1773 = vst.msk [vmem:[%s1448 + $0x28] sm:$0xff] %vm780, %v1753
      %1774 = vst.msk [vmem:[%s1448 + $0x30] sm:$0xff] %vm780, %v1754
      %1775 = vst.msk [vmem:[%s1448 + $0x38] sm:$0xff] %vm780, %v1755
      %1776 = vst.msk [vmem:[%s1448 + $0x40] sm:$0xff] %vm780, %v1756
      %1777 = vst.msk [vmem:[%s1448 + $0x48] sm:$0xff] %vm780, %v1757
      %1778 = vst.msk [vmem:[%s1448 + $0x50] sm:$0xff] %vm780, %v1758
      %1779 = vst.msk [vmem:[%s1448 + $0x58] sm:$0xff] %vm780, %v1759
      %1780 = vst.msk [vmem:[%s1448 + $0x60] sm:$0xff] %vm780, %v1760
      %1781 = vst.msk [vmem:[%s1448 + $0x68] sm:$0xff] %vm780, %v1761
      %1782 = vst.msk [vmem:[%s1448 + $0x70] sm:$0xff] %vm780, %v1762
      %1783 = vst.msk [vmem:[%s1448 + $0x78] sm:$0xff] %vm780, %v1763
      %1784 = vst.msk [vmem:[%s1448 + $0x80] sm:$0xff] %vm780, %v1764
      %1785 = vst.msk [vmem:[%s1448 + $0x88] sm:$0xff] %vm780, %v1765
      %1786 = vst.msk [vmem:[%s1448 + $0x90] sm:$0xff] %vm780, %v1766
      %1787 = vst.msk [vmem:[%s1448 + $0x98] sm:$0xff] %vm780, %v1767
      %v1788 = vld [vmem:[%s381] sm:$0xf]
      %v1789 = vld [vmem:[%s381 + $0x4] sm:$0xf]
      %v1790 = vld [vmem:[%s381 + $0x8] sm:$0xf]
      %v1791 = vld [vmem:[%s381 + $0xc] sm:$0xf]
      %v1792 = vld [vmem:[%s381 + $0x10] sm:$0xf]
      %v1793 = vld [vmem:[%s381 + $0x14] sm:$0xf]
      %v1794 = vld [vmem:[%s381 + $0x18] sm:$0xf]
      %v1795 = vld [vmem:[%s381 + $0x1c] sm:$0xf]
      %v1796 = vld [vmem:[%s381 + $0x20] sm:$0xf]
      %v1797 = vld [vmem:[%s381 + $0x24] sm:$0xf]
      %v1798 = vld [vmem:[%s381 + $0x28] sm:$0xf]
      %v1799 = vld [vmem:[%s381 + $0x2c] sm:$0xf]
      %v1800 = vld [vmem:[%s381 + $0x30] sm:$0xf]
      %v1801 = vld [vmem:[%s381 + $0x34] sm:$0xf]
      %v1802 = vld [vmem:[%s381 + $0x38] sm:$0xf]
      %v1803 = vld [vmem:[%s381 + $0x3c] sm:$0xf]
      %v1804 = vld [vmem:[%s381 + $0x40] sm:$0xf]
      %v1805 = vld [vmem:[%s381 + $0x44] sm:$0xf]
      %v1806 = vld [vmem:[%s381 + $0x48] sm:$0xf]
      %v1807 = vld [vmem:[%s381 + $0x4c] sm:$0xf]
      %s1808 = scalar_lea.vmem %s3, 4
      %v1809 = vld [vmem:[%s1808] sm:$0x3]
      %v1830 = vunpack.c.l.b16 %v1788
      %v1831 = vunpack.c.l.b16 %v1789
      %v1832 = vunpack.c.l.b16 %v1790
      %v1833 = vunpack.c.l.b16 %v1791
      %v1834 = vunpack.c.l.b16 %v1792
      %v1835 = vunpack.c.l.b16 %v1793
      %v1836 = vunpack.c.l.b16 %v1794
      %v1837 = vunpack.c.l.b16 %v1795
      %v1838 = vunpack.c.l.b16 %v1796
      %v1839 = vunpack.c.l.b16 %v1797
      %v1840 = vunpack.c.l.b16 %v1798
      %v1841 = vunpack.c.l.b16 %v1799
      %v1842 = vunpack.c.l.b16 %v1800
      %v1843 = vunpack.c.l.b16 %v1801
      %v1844 = vunpack.c.l.b16 %v1802
      %v1845 = vunpack.c.l.b16 %v1803
      %v1846 = vunpack.c.l.b16 %v1804
      %v1847 = vunpack.c.l.b16 %v1805
      %v1848 = vunpack.c.l.b16 %v1806
      %v1849 = vunpack.c.l.b16 %v1807
      %v1850 = vpack.c.b16 %v1831, %v1830
      %v1851 = vpack.c.b16 %v1833, %v1832
      %v1852 = vpack.c.b16 %v1835, %v1834
      %v1853 = vpack.c.b16 %v1837, %v1836
      %v1854 = vpack.c.b16 %v1839, %v1838
      %v1855 = vpack.c.b16 %v1841, %v1840
      %v1856 = vpack.c.b16 %v1843, %v1842
      %v1857 = vpack.c.b16 %v1845, %v1844
      %v1858 = vpack.c.b16 %v1847, %v1846
      %v1859 = vpack.c.b16 %v1849, %v1848
      %v1861 = vsel %vm517, %v1850, 0
      %v1864 = vsel %vm517, %v1851, 0
      %v1867 = vsel %vm517, %v1852, 0
      %v1870 = vsel %vm517, %v1853, 0
      %v1873 = vsel %vm517, %v1854, 0
      %v1876 = vsel %vm517, %v1855, 0
      %v1879 = vsel %vm517, %v1856, 0
      %v1882 = vsel %vm517, %v1857, 0
      %v1885 = vsel %vm517, %v1858, 0
      %v1888 = vsel %vm517, %v1859, 0
      %v1891 = vsel %vm566, %v1809, 0
      %1893 = vmatprep.subr.bf16.mxu0 0
      %1894 = vmatpush1.bf16.msra.mxu0 %v1891
      %1895 = vmatprep.subr.bf16.mxu0 0
      %1896 = vmatpush1.bf16.msra.mxu0 0
      %1897 = vmatprep.subr.bf16.mxu0 0
      %1898 = vmatpush1.bf16.msra.mxu0 0
      %1899 = vmatprep.subr.bf16.mxu0 0
      %1900 = vmatpush1.bf16.msra.mxu0 0
      %1901 = vmatprep.subr.bf16.mxu0 0
      %1902 = vmatpush1.bf16.msra.mxu0 0
      %1903 = vmatprep.subr.bf16.mxu0 0
      %1904 = vmatpush1.bf16.msra.mxu0 0
      %1905 = vmatprep.subr.bf16.mxu0 0
      %1906 = vmatpush1.bf16.msra.mxu0 0
      %1907 = vmatprep.subr.bf16.mxu0 0
      %1908 = vmatpush1.bf16.msra.mxu0 0
      %1909 = vmatprep.subr.bf16.mxu0 0
      %1910 = vmatpush1.bf16.msra.mxu0 0
      %1911 = vmatprep.subr.bf16.mxu0 0
      %1912 = vmatpush1.bf16.msra.mxu0 0
      %1913 = vmatprep.subr.bf16.mxu0 0
      %1914 = vmatpush1.bf16.msra.mxu0 0
      %1915 = vmatprep.subr.bf16.mxu0 0
      %1916 = vmatpush1.bf16.msra.mxu0 0
      %1917 = vmatprep.subr.bf16.mxu0 0
      %1918 = vmatpush1.bf16.msra.mxu0 0
      %1919 = vmatprep.subr.bf16.mxu0 0
      %1920 = vmatpush1.bf16.msra.mxu0 0
      %1921 = vmatprep.subr.bf16.mxu0 0
      %1922 = vmatpush1.bf16.msra.mxu0 0
      %1923 = vmatprep.subr.bf16.mxu0 0
      %1924 = vmatpush1.bf16.msra.mxu0 0
      %1925 = vmatprep.mubr.bf16.mxu0 0
      %1926 = vmatmul.mubr.bf16.gmra.mrb[0].mxu0 %v1861
      %v1927 = vpop.f32.mrb[0].mxu0
      %v1928 = vadd.f32 0.0, %v1927
      %v1929 = vpop.f32.mrb[0].mxu0
      %v1930 = vpop.f32.mrb[0].mxu0
      %v1931 = vadd.f32 0.0, %v1930
      %v1932 = vpop.f32.mrb[0].mxu0
      %1933 = vmatprep.mubr.bf16.mxu0 0
      %1934 = vmatmul.mubr.bf16.gmra.mrb[0].mxu0 %v1864
      %v1935 = vpop.f32.mrb[0].mxu0
      %v1936 = vadd.f32 0.0, %v1935
      %v1937 = vpop.f32.mrb[0].mxu0
      %v1938 = vpop.f32.mrb[0].mxu0
      %v1939 = vadd.f32 0.0, %v1938
      %v1940 = vpop.f32.mrb[0].mxu0
      %1941 = vmatprep.mubr.bf16.mxu0 0
      %1942 = vmatmul.mubr.bf16.gmra.mrb[0].mxu0 %v1867
      %v1943 = vpop.f32.mrb[0].mxu0
      %v1944 = vadd.f32 0.0, %v1943
      %v1945 = vpop.f32.mrb[0].mxu0
      %v1946 = vpop.f32.mrb[0].mxu0
      %v1947 = vadd.f32 0.0, %v1946
      %v1948 = vpop.f32.mrb[0].mxu0
      %1949 = vmatprep.mubr.bf16.mxu0 0
      %1950 = vmatmul.mubr.bf16.gmra.mrb[0].mxu0 %v1870
      %v1951 = vpop.f32.mrb[0].mxu0
      %v1952 = vadd.f32 0.0, %v1951
      %v1953 = vpop.f32.mrb[0].mxu0
      %v1954 = vpop.f32.mrb[0].mxu0
      %v1955 = vadd.f32 0.0, %v1954
      %v1956 = vpop.f32.mrb[0].mxu0
      %1957 = vmatprep.mubr.bf16.mxu0 0
      %1958 = vmatmul.mubr.bf16.gmra.mrb[0].mxu0 %v1873
      %v1959 = vpop.f32.mrb[0].mxu0
      %v1960 = vadd.f32 0.0, %v1959
      %v1961 = vpop.f32.mrb[0].mxu0
      %v1962 = vpop.f32.mrb[0].mxu0
      %v1963 = vadd.f32 0.0, %v1962
      %v1964 = vpop.f32.mrb[0].mxu0
      %1965 = vmatprep.mubr.bf16.mxu0 0
      %1966 = vmatmul.mubr.bf16.gmra.mrb[0].mxu0 %v1876
      %v1967 = vpop.f32.mrb[0].mxu0
      %v1968 = vadd.f32 0.0, %v1967
      %v1969 = vpop.f32.mrb[0].mxu0
      %v1970 = vpop.f32.mrb[0].mxu0
      %v1971 = vadd.f32 0.0, %v1970
      %v1972 = vpop.f32.mrb[0].mxu0
      %1973 = vmatprep.mubr.bf16.mxu0 0
      %1974 = vmatmul.mubr.bf16.gmra.mrb[0].mxu0 %v1879
      %v1975 = vpop.f32.mrb[0].mxu0
      %v1976 = vadd.f32 0.0, %v1975
      %v1977 = vpop.f32.mrb[0].mxu0
      %v1978 = vpop.f32.mrb[0].mxu0
      %v1979 = vadd.f32 0.0, %v1978
      %v1980 = vpop.f32.mrb[0].mxu0
      %1981 = vmatprep.mubr.bf16.mxu0 0
      %1982 = vmatmul.mubr.bf16.gmra.mrb[0].mxu0 %v1882
      %v1983 = vpop.f32.mrb[0].mxu0
      %v1984 = vadd.f32 0.0, %v1983
      %v1985 = vpop.f32.mrb[0].mxu0
      %v1986 = vpop.f32.mrb[0].mxu0
      %v1987 = vadd.f32 0.0, %v1986
      %v1988 = vpop.f32.mrb[0].mxu0
      %1989 = vmatprep.mubr.bf16.mxu0 0
      %1990 = vmatmul.mubr.bf16.gmra.mrb[0].mxu0 %v1885
      %v1991 = vpop.f32.mrb[0].mxu0
      %v1992 = vadd.f32 0.0, %v1991
      %v1993 = vpop.f32.mrb[0].mxu0
      %v1994 = vpop.f32.mrb[0].mxu0
      %v1995 = vadd.f32 0.0, %v1994
      %v1996 = vpop.f32.mrb[0].mxu0
      %1997 = vmatprep.mubr.bf16.mxu0 0
      %1998 = vmatmul.mubr.bf16.gmra.mrb[0].mxu0 %v1888
      %v1999 = vpop.f32.mrb[0].mxu0
      %v2000 = vadd.f32 0.0, %v1999
      %v2001 = vpop.f32.mrb[0].mxu0
      %v2002 = vpop.f32.mrb[0].mxu0
      %v2003 = vadd.f32 0.0, %v2002
      %v2004 = vpop.f32.mrb[0].mxu0
      %2005 = vdwg.mxu0
      %v2006 = vld [vmem:[%s1448] sm:$0xff]
      %v2007 = vld [vmem:[%s1448 + $0x8] sm:$0x3]
      %v2008 = vld [vmem:[%s1448 + $0x10] sm:$0xff]
      %v2009 = vld [vmem:[%s1448 + $0x18] sm:$0x3]
      %v2010 = vld [vmem:[%s1448 + $0x20] sm:$0xff]
      %v2011 = vld [vmem:[%s1448 + $0x28] sm:$0x3]
      %v2012 = vld [vmem:[%s1448 + $0x30] sm:$0xff]
      %v2013 = vld [vmem:[%s1448 + $0x38] sm:$0x3]
      %v2014 = vld [vmem:[%s1448 + $0x40] sm:$0xff]
      %v2015 = vld [vmem:[%s1448 + $0x48] sm:$0x3]
      %v2016 = vld [vmem:[%s1448 + $0x50] sm:$0xff]
      %v2017 = vld [vmem:[%s1448 + $0x58] sm:$0x3]
      %v2018 = vld [vmem:[%s1448 + $0x60] sm:$0xff]
      %v2019 = vld [vmem:[%s1448 + $0x68] sm:$0x3]
      %v2020 = vld [vmem:[%s1448 + $0x70] sm:$0xff]
      %v2021 = vld [vmem:[%s1448 + $0x78] sm:$0x3]
      %v2022 = vld [vmem:[%s1448 + $0x80] sm:$0xff]
      %v2023 = vld [vmem:[%s1448 + $0x88] sm:$0x3]
      %v2024 = vld [vmem:[%s1448 + $0x90] sm:$0xff]
      %v2025 = vld [vmem:[%s1448 + $0x98] sm:$0x3]
      %v2046 = vrot.slane %v1928, 6
      %v2047 = vrot.slane %v1931, 6
      %v2048 = vsel %vm566, %v2046, %v2047
      %v2049 = vrot.slane %v1936, 6
      %v2050 = vrot.slane %v1939, 6
      %v2051 = vsel %vm566, %v2049, %v2050
      %v2052 = vrot.slane %v1944, 6
      %v2053 = vrot.slane %v1947, 6
      %v2054 = vsel %vm566, %v2052, %v2053
      %v2055 = vrot.slane %v1952, 6
      %v2056 = vrot.slane %v1955, 6
      %v2057 = vsel %vm566, %v2055, %v2056
      %v2058 = vrot.slane %v1960, 6
      %v2059 = vrot.slane %v1963, 6
      %v2060 = vsel %vm566, %v2058, %v2059
      %v2061 = vrot.slane %v1968, 6
      %v2062 = vrot.slane %v1971, 6
      %v2063 = vsel %vm566, %v2061, %v2062
      %v2064 = vrot.slane %v1976, 6
      %v2065 = vrot.slane %v1979, 6
      %v2066 = vsel %vm566, %v2064, %v2065
      %v2067 = vrot.slane %v1984, 6
      %v2068 = vrot.slane %v1987, 6
      %v2069 = vsel %vm566, %v2067, %v2068
      %v2070 = vrot.slane %v1992, 6
      %v2071 = vrot.slane %v1995, 6
      %v2072 = vsel %vm566, %v2070, %v2071
      %v2073 = vrot.slane %v2000, 6
      %v2074 = vrot.slane %v2003, 6
      %v2075 = vsel %vm566, %v2073, %v2074
      %v2096 = vadd.f32 %v2006, %v2048
      %v2097 = vadd.f32 %v2007, %v2047
      %v2098 = vadd.f32 %v2008, %v2051
      %v2099 = vadd.f32 %v2009, %v2050
      %v2100 = vadd.f32 %v2010, %v2054
      %v2101 = vadd.f32 %v2011, %v2053
      %v2102 = vadd.f32 %v2012, %v2057
      %v2103 = vadd.f32 %v2013, %v2056
      %v2104 = vadd.f32 %v2014, %v2060
      %v2105 = vadd.f32 %v2015, %v2059
      %v2106 = vadd.f32 %v2016, %v2063
      %v2107 = vadd.f32 %v2017, %v2062
      %v2108 = vadd.f32 %v2018, %v2066
      %v2109 = vadd.f32 %v2019, %v2065
      %v2110 = vadd.f32 %v2020, %v2069
      %v2111 = vadd.f32 %v2021, %v2068
      %v2112 = vadd.f32 %v2022, %v2072
      %v2113 = vadd.f32 %v2023, %v2071
      %v2114 = vadd.f32 %v2024, %v2075
      %v2115 = vadd.f32 %v2025, %v2074
      %2116 = vst.msk [vmem:[%s1448] sm:$0xff] %vm780, %v2096
      %2117 = vst.msk [vmem:[%s1448 + $0x8] sm:$0x3] %vm1490, %v2097
      %2118 = vst.msk [vmem:[%s1448 + $0x10] sm:$0xff] %vm780, %v2098
      %2119 = vst.msk [vmem:[%s1448 + $0x18] sm:$0x3] %vm1490, %v2099
      %2120 = vst.msk [vmem:[%s1448 + $0x20] sm:$0xff] %vm780, %v2100
      %2121 = vst.msk [vmem:[%s1448 + $0x28] sm:$0x3] %vm1490, %v2101
      %2122 = vst.msk [vmem:[%s1448 + $0x30] sm:$0xff] %vm780, %v2102
      %2123 = vst.msk [vmem:[%s1448 + $0x38] sm:$0x3] %vm1490, %v2103
      %2124 = vst.msk [vmem:[%s1448 + $0x40] sm:$0xff] %vm780, %v2104
      %2125 = vst.msk [vmem:[%s1448 + $0x48] sm:$0x3] %vm1490, %v2105
      %2126 = vst.msk [vmem:[%s1448 + $0x50] sm:$0xff] %vm780, %v2106
      %2127 = vst.msk [vmem:[%s1448 + $0x58] sm:$0x3] %vm1490, %v2107
      %2128 = vst.msk [vmem:[%s1448 + $0x60] sm:$0xff] %vm780, %v2108
      %2129 = vst.msk [vmem:[%s1448 + $0x68] sm:$0x3] %vm1490, %v2109
      %2130 = vst.msk [vmem:[%s1448 + $0x70] sm:$0xff] %vm780, %v2110
      %2131 = vst.msk [vmem:[%s1448 + $0x78] sm:$0x3] %vm1490, %v2111
      %2132 = vst.msk [vmem:[%s1448 + $0x80] sm:$0xff] %vm780, %v2112
      %2133 = vst.msk [vmem:[%s1448 + $0x88] sm:$0x3] %vm1490, %v2113
      %2134 = vst.msk [vmem:[%s1448 + $0x90] sm:$0xff] %vm780, %v2114
      %2135 = vst.msk [vmem:[%s1448 + $0x98] sm:$0x3] %vm1490, %v2115
      %v2136 = vld [vmem:[%s381] sm:$0xf]
      %v2137 = vld [vmem:[%s381 + $0x4] sm:$0xf]
      %v2138 = vld [vmem:[%s381 + $0x8] sm:$0xf]
      %v2139 = vld [vmem:[%s381 + $0xc] sm:$0xf]
      %v2140 = vld [vmem:[%s381 + $0x10] sm:$0xf]
      %v2141 = vld [vmem:[%s381 + $0x14] sm:$0xf]
      %v2142 = vld [vmem:[%s381 + $0x18] sm:$0xf]
      %v2143 = vld [vmem:[%s381 + $0x1c] sm:$0xf]
      %v2144 = vld [vmem:[%s381 + $0x20] sm:$0xf]
      %v2145 = vld [vmem:[%s381 + $0x24] sm:$0xf]
      %v2146 = vld [vmem:[%s381 + $0x28] sm:$0xf]
      %v2147 = vld [vmem:[%s381 + $0x2c] sm:$0xf]
      %v2148 = vld [vmem:[%s381 + $0x30] sm:$0xf]
      %v2149 = vld [vmem:[%s381 + $0x34] sm:$0xf]
      %v2150 = vld [vmem:[%s381 + $0x38] sm:$0xf]
      %v2151 = vld [vmem:[%s381 + $0x3c] sm:$0xf]
      %v2152 = vld [vmem:[%s381 + $0x40] sm:$0xf]
      %v2153 = vld [vmem:[%s381 + $0x44] sm:$0xf]
      %v2154 = vld [vmem:[%s381 + $0x48] sm:$0xf]
      %v2155 = vld [vmem:[%s381 + $0x4c] sm:$0xf]
      %v2156 = vld [vmem:[%s381 + $0x50] sm:$0xf]
      %v2157 = vld [vmem:[%s381 + $0x54] sm:$0xf]
      %v2158 = vld [vmem:[%s381 + $0x58] sm:$0xf]
      %v2159 = vld [vmem:[%s381 + $0x5c] sm:$0xf]
      %v2160 = vld [vmem:[%s381 + $0x60] sm:$0xf]
      %v2161 = vld [vmem:[%s381 + $0x64] sm:$0xf]
      %v2162 = vld [vmem:[%s381 + $0x68] sm:$0xf]
      %v2163 = vld [vmem:[%s381 + $0x6c] sm:$0xf]
      %v2164 = vld [vmem:[%s381 + $0x70] sm:$0xf]
      %v2165 = vld [vmem:[%s381 + $0x74] sm:$0xf]
      %v2166 = vld [vmem:[%s381 + $0x78] sm:$0xf]
      %v2167 = vld [vmem:[%s381 + $0x7c] sm:$0xf]
      %s2168 = scalar_lea.vmem %s3, 6
      %v2169 = vld [vmem:[%s2168] sm:$0x3]
      %v2202 = vunpack.c.l.b16 %v2136
      %v2203 = vunpack.c.l.b16 %v2137
      %v2204 = vunpack.c.l.b16 %v2138
      %v2205 = vunpack.c.l.b16 %v2139
      %v2206 = vunpack.c.l.b16 %v2140
      %v2207 = vunpack.c.l.b16 %v2141
      %v2208 = vunpack.c.l.b16 %v2142
      %v2209 = vunpack.c.l.b16 %v2143
      %v2210 = vunpack.c.l.b16 %v2144
      %v2211 = vunpack.c.l.b16 %v2145
      %v2212 = vunpack.c.l.b16 %v2146
      %v2213 = vunpack.c.l.b16 %v2147
      %v2214 = vunpack.c.l.b16 %v2148
      %v2215 = vunpack.c.l.b16 %v2149
      %v2216 = vunpack.c.l.b16 %v2150
      %v2217 = vunpack.c.l.b16 %v2151
      %v2218 = vunpack.c.l.b16 %v2152
      %v2219 = vunpack.c.l.b16 %v2153
      %v2220 = vunpack.c.l.b16 %v2154
      %v2221 = vunpack.c.l.b16 %v2155
      %v2222 = vunpack.c.l.b16 %v2156
      %v2223 = vunpack.c.l.b16 %v2157
      %v2224 = vunpack.c.l.b16 %v2158
      %v2225 = vunpack.c.l.b16 %v2159
      %v2226 = vunpack.c.l.b16 %v2160
      %v2227 = vunpack.c.l.b16 %v2161
      %v2228 = vunpack.c.l.b16 %v2162
      %v2229 = vunpack.c.l.b16 %v2163
      %v2230 = vunpack.c.l.b16 %v2164
      %v2231 = vunpack.c.l.b16 %v2165
      %v2232 = vunpack.c.l.b16 %v2166
      %v2233 = vunpack.c.l.b16 %v2167
      %v2234 = vpack.c.b16 %v2203, %v2202
      %v2235 = vpack.c.b16 %v2205, %v2204
      %v2236 = vpack.c.b16 %v2207, %v2206
      %v2237 = vpack.c.b16 %v2209, %v2208
      %v2238 = vpack.c.b16 %v2211, %v2210
      %v2239 = vpack.c.b16 %v2213, %v2212
      %v2240 = vpack.c.b16 %v2215, %v2214
      %v2241 = vpack.c.b16 %v2217, %v2216
      %v2242 = vpack.c.b16 %v2219, %v2218
      %v2243 = vpack.c.b16 %v2221, %v2220
      %v2244 = vpack.c.b16 %v2223, %v2222
      %v2245 = vpack.c.b16 %v2225, %v2224
      %v2246 = vpack.c.b16 %v2227, %v2226
      %v2247 = vpack.c.b16 %v2229, %v2228
      %v2248 = vpack.c.b16 %v2231, %v2230
      %v2249 = vpack.c.b16 %v2233, %v2232
      %v2251 = vsel %vm517, %v2234, 0
      %v2254 = vsel %vm517, %v2235, 0
      %v2257 = vsel %vm517, %v2236, 0
      %v2260 = vsel %vm517, %v2237, 0
      %v2263 = vsel %vm517, %v2238, 0
      %v2266 = vsel %vm517, %v2239, 0
      %v2269 = vsel %vm517, %v2240, 0
      %v2272 = vsel %vm517, %v2241, 0
      %v2275 = vsel %vm517, %v2242, 0
      %v2278 = vsel %vm517, %v2243, 0
      %v2281 = vsel %vm517, %v2244, 0
      %v2284 = vsel %vm517, %v2245, 0
      %v2287 = vsel %vm517, %v2246, 0
      %v2290 = vsel %vm517, %v2247, 0
      %v2293 = vsel %vm517, %v2248, 0
      %v2296 = vsel %vm517, %v2249, 0
      %v2299 = vsel %vm566, %v2169, 0
      %2301 = vmatprep.subr.bf16.mxu0 0
      %2302 = vmatpush1.bf16.msra.mxu0 %v2299
      %2303 = vmatprep.subr.bf16.mxu0 0
      %2304 = vmatpush1.bf16.msra.mxu0 0
      %2305 = vmatprep.subr.bf16.mxu0 0
      %2306 = vmatpush1.bf16.msra.mxu0 0
      %2307 = vmatprep.subr.bf16.mxu0 0
      %2308 = vmatpush1.bf16.msra.mxu0 0
      %2309 = vmatprep.subr.bf16.mxu0 0
      %2310 = vmatpush1.bf16.msra.mxu0 0
      %2311 = vmatprep.subr.bf16.mxu0 0
      %2312 = vmatpush1.bf16.msra.mxu0 0
      %2313 = vmatprep.subr.bf16.mxu0 0
      %2314 = vmatpush1.bf16.msra.mxu0 0
      %2315 = vmatprep.subr.bf16.mxu0 0
      %2316 = vmatpush1.bf16.msra.mxu0 0
      %2317 = vmatprep.subr.bf16.mxu0 0
      %2318 = vmatpush1.bf16.msra.mxu0 0
      %2319 = vmatprep.subr.bf16.mxu0 0
      %2320 = vmatpush1.bf16.msra.mxu0 0
      %2321 = vmatprep.subr.bf16.mxu0 0
      %2322 = vmatpush1.bf16.msra.mxu0 0
      %2323 = vmatprep.subr.bf16.mxu0 0
      %2324 = vmatpush1.bf16.msra.mxu0 0
      %2325 = vmatprep.subr.bf16.mxu0 0
      %2326 = vmatpush1.bf16.msra.mxu0 0
      %2327 = vmatprep.subr.bf16.mxu0 0
      %2328 = vmatpush1.bf16.msra.mxu0 0
      %2329 = vmatprep.subr.bf16.mxu0 0
      %2330 = vmatpush1.bf16.msra.mxu0 0
      %2331 = vmatprep.subr.bf16.mxu0 0
      %2332 = vmatpush1.bf16.msra.mxu0 0
      %2333 = vmatprep.mubr.bf16.mxu0 0
      %2334 = vmatmul.mubr.bf16.gmra.mrb[0].mxu0 %v2251
      %v2335 = vpop.f32.mrb[0].mxu0
      %v2336 = vadd.f32 0.0, %v2335
      %v2337 = vpop.f32.mrb[0].mxu0
      %v2338 = vpop.f32.mrb[0].mxu0
      %v2339 = vadd.f32 0.0, %v2338
      %v2340 = vpop.f32.mrb[0].mxu0
      %2341 = vmatprep.mubr.bf16.mxu0 0
      %2342 = vmatmul.mubr.bf16.gmra.mrb[0].mxu0 %v2254
      %v2343 = vpop.f32.mrb[0].mxu0
      %v2344 = vadd.f32 0.0, %v2343
      %v2345 = vpop.f32.mrb[0].mxu0
      %v2346 = vpop.f32.mrb[0].mxu0
      %v2347 = vadd.f32 0.0, %v2346
      %v2348 = vpop.f32.mrb[0].mxu0
      %2349 = vmatprep.mubr.bf16.mxu0 0
      %2350 = vmatmul.mubr.bf16.gmra.mrb[0].mxu0 %v2257
      %v2351 = vpop.f32.mrb[0].mxu0
      %v2352 = vadd.f32 0.0, %v2351
      %v2353 = vpop.f32.mrb[0].mxu0
      %v2354 = vpop.f32.mrb[0].mxu0
      %v2355 = vadd.f32 0.0, %v2354
      %v2356 = vpop.f32.mrb[0].mxu0
      %2357 = vmatprep.mubr.bf16.mxu0 0
      %2358 = vmatmul.mubr.bf16.gmra.mrb[0].mxu0 %v2260
      %v2359 = vpop.f32.mrb[0].mxu0
      %v2360 = vadd.f32 0.0, %v2359
      %v2361 = vpop.f32.mrb[0].mxu0
      %v2362 = vpop.f32.mrb[0].mxu0
      %v2363 = vadd.f32 0.0, %v2362
      %v2364 = vpop.f32.mrb[0].mxu0
      %2365 = vmatprep.mubr.bf16.mxu0 0
      %2366 = vmatmul.mubr.bf16.gmra.mrb[0].mxu0 %v2263
      %v2367 = vpop.f32.mrb[0].mxu0
      %v2368 = vadd.f32 0.0, %v2367
      %v2369 = vpop.f32.mrb[0].mxu0
      %v2370 = vpop.f32.mrb[0].mxu0
      %v2371 = vadd.f32 0.0, %v2370
      %v2372 = vpop.f32.mrb[0].mxu0
      %2373 = vmatprep.mubr.bf16.mxu0 0
      %2374 = vmatmul.mubr.bf16.gmra.mrb[0].mxu0 %v2266
      %v2375 = vpop.f32.mrb[0].mxu0
      %v2376 = vadd.f32 0.0, %v2375
      %v2377 = vpop.f32.mrb[0].mxu0
      %v2378 = vpop.f32.mrb[0].mxu0
      %v2379 = vadd.f32 0.0, %v2378
      %v2380 = vpop.f32.mrb[0].mxu0
      %2381 = vmatprep.mubr.bf16.mxu0 0
      %2382 = vmatmul.mubr.bf16.gmra.mrb[0].mxu0 %v2269
      %v2383 = vpop.f32.mrb[0].mxu0
      %v2384 = vadd.f32 0.0, %v2383
      %v2385 = vpop.f32.mrb[0].mxu0
      %v2386 = vpop.f32.mrb[0].mxu0
      %v2387 = vadd.f32 0.0, %v2386
      %v2388 = vpop.f32.mrb[0].mxu0
      %2389 = vmatprep.mubr.bf16.mxu0 0
      %2390 = vmatmul.mubr.bf16.gmra.mrb[0].mxu0 %v2272
      %v2391 = vpop.f32.mrb[0].mxu0
      %v2392 = vadd.f32 0.0, %v2391
      %v2393 = vpop.f32.mrb[0].mxu0
      %v2394 = vpop.f32.mrb[0].mxu0
      %v2395 = vadd.f32 0.0, %v2394
      %v2396 = vpop.f32.mrb[0].mxu0
      %2397 = vmatprep.mubr.bf16.mxu0 0
      %2398 = vmatmul.mubr.bf16.gmra.mrb[0].mxu0 %v2275
      %v2399 = vpop.f32.mrb[0].mxu0
      %v2400 = vadd.f32 0.0, %v2399
      %v2401 = vpop.f32.mrb[0].mxu0
      %v2402 = vpop.f32.mrb[0].mxu0
      %v2403 = vadd.f32 0.0, %v2402
      %v2404 = vpop.f32.mrb[0].mxu0
      %2405 = vmatprep.mubr.bf16.mxu0 0
      %2406 = vmatmul.mubr.bf16.gmra.mrb[0].mxu0 %v2278
      %v2407 = vpop.f32.mrb[0].mxu0
      %v2408 = vadd.f32 0.0, %v2407
      %v2409 = vpop.f32.mrb[0].mxu0
      %v2410 = vpop.f32.mrb[0].mxu0
      %v2411 = vadd.f32 0.0, %v2410
      %v2412 = vpop.f32.mrb[0].mxu0
      %2413 = vmatprep.mubr.bf16.mxu0 0
      %2414 = vmatmul.mubr.bf16.gmra.mrb[0].mxu0 %v2281
      %v2415 = vpop.f32.mrb[0].mxu0
      %v2416 = vadd.f32 0.0, %v2415
      %v2417 = vpop.f32.mrb[0].mxu0
      %v2418 = vpop.f32.mrb[0].mxu0
      %v2419 = vadd.f32 0.0, %v2418
      %v2420 = vpop.f32.mrb[0].mxu0
      %2421 = vmatprep.mubr.bf16.mxu0 0
      %2422 = vmatmul.mubr.bf16.gmra.mrb[0].mxu0 %v2284
      %v2423 = vpop.f32.mrb[0].mxu0
      %v2424 = vadd.f32 0.0, %v2423
      %v2425 = vpop.f32.mrb[0].mxu0
      %v2426 = vpop.f32.mrb[0].mxu0
      %v2427 = vadd.f32 0.0, %v2426
      %v2428 = vpop.f32.mrb[0].mxu0
      %2429 = vmatprep.mubr.bf16.mxu0 0
      %2430 = vmatmul.mubr.bf16.gmra.mrb[0].mxu0 %v2287
      %v2431 = vpop.f32.mrb[0].mxu0
      %v2432 = vadd.f32 0.0, %v2431
      %v2433 = vpop.f32.mrb[0].mxu0
      %v2434 = vpop.f32.mrb[0].mxu0
      %v2435 = vadd.f32 0.0, %v2434
      %v2436 = vpop.f32.mrb[0].mxu0
      %2437 = vmatprep.mubr.bf16.mxu0 0
      %2438 = vmatmul.mubr.bf16.gmra.mrb[0].mxu0 %v2290
      %v2439 = vpop.f32.mrb[0].mxu0
      %v2440 = vadd.f32 0.0, %v2439
      %v2441 = vpop.f32.mrb[0].mxu0
      %v2442 = vpop.f32.mrb[0].mxu0
      %v2443 = vadd.f32 0.0, %v2442
      %v2444 = vpop.f32.mrb[0].mxu0
      %2445 = vmatprep.mubr.bf16.mxu0 0
      %2446 = vmatmul.mubr.bf16.gmra.mrb[0].mxu0 %v2293
      %v2447 = vpop.f32.mrb[0].mxu0
      %v2448 = vadd.f32 0.0, %v2447
      %v2449 = vpop.f32.mrb[0].mxu0
      %v2450 = vpop.f32.mrb[0].mxu0
      %v2451 = vadd.f32 0.0, %v2450
      %v2452 = vpop.f32.mrb[0].mxu0
      %2453 = vmatprep.mubr.bf16.mxu0 0
      %2454 = vmatmul.mubr.bf16.gmra.mrb[0].mxu0 %v2296
      %v2455 = vpop.f32.mrb[0].mxu0
      %v2456 = vadd.f32 0.0, %v2455
      %v2457 = vpop.f32.mrb[0].mxu0
      %v2458 = vpop.f32.mrb[0].mxu0
      %v2459 = vadd.f32 0.0, %v2458
      %v2460 = vpop.f32.mrb[0].mxu0
      %2461 = vdwg.mxu0
      %v2462 = vld [vmem:[#allocation2 + $0x6] sm:$0xff]
      %v2463 = vld [vmem:[#allocation2 + $0xe] sm:$0x3]
      %v2464 = vld [vmem:[#allocation2 + $0x16] sm:$0xff]
      %v2465 = vld [vmem:[#allocation2 + $0x1e] sm:$0x3]
      %v2466 = vld [vmem:[#allocation2 + $0x26] sm:$0xff]
      %v2467 = vld [vmem:[#allocation2 + $0x2e] sm:$0x3]
      %v2468 = vld [vmem:[#allocation2 + $0x36] sm:$0xff]
      %v2469 = vld [vmem:[#allocation2 + $0x3e] sm:$0x3]
      %v2470 = vld [vmem:[#allocation2 + $0x46] sm:$0xff]
      %v2471 = vld [vmem:[#allocation2 + $0x4e] sm:$0x3]
      %v2472 = vld [vmem:[#allocation2 + $0x56] sm:$0xff]
      %v2473 = vld [vmem:[#allocation2 + $0x5e] sm:$0x3]
      %v2474 = vld [vmem:[#allocation2 + $0x66] sm:$0xff]
      %v2475 = vld [vmem:[#allocation2 + $0x6e] sm:$0x3]
      %v2476 = vld [vmem:[#allocation2 + $0x76] sm:$0xff]
      %v2477 = vld [vmem:[#allocation2 + $0x7e] sm:$0x3]
      %v2478 = vld [vmem:[#allocation2 + $0x86] sm:$0xff]
      %v2479 = vld [vmem:[#allocation2 + $0x8e] sm:$0x3]
      %v2480 = vld [vmem:[#allocation2 + $0x96] sm:$0xff]
      %v2481 = vld [vmem:[#allocation2 + $0x9e] sm:$0x3]
      %v2482 = vld [vmem:[#allocation2 + $0xa6] sm:$0xff]
      %v2483 = vld [vmem:[#allocation2 + $0xae] sm:$0x3]
      %v2484 = vld [vmem:[#allocation2 + $0xb6] sm:$0xff]
      %v2485 = vld [vmem:[#allocation2 + $0xbe] sm:$0x3]
      %v2486 = vld [vmem:[#allocation2 + $0xc6] sm:$0xff]
      %v2487 = vld [vmem:[#allocation2 + $0xce] sm:$0x3]
      %v2488 = vld [vmem:[#allocation2 + $0xd6] sm:$0xff]
      %v2489 = vld [vmem:[#allocation2 + $0xde] sm:$0x3]
      %v2490 = vld [vmem:[#allocation2 + $0xe6] sm:$0xff]
      %v2491 = vld [vmem:[#allocation2 + $0xee] sm:$0x3]
      %v2492 = vld [vmem:[#allocation2 + $0xf6] sm:$0xff]
      %v2493 = vld [vmem:[#allocation2 + $0xfe] sm:$0x3]
      %v2494 = vadd.f32 %v2462, %v2336
      %v2495 = vadd.f32 %v2463, %v2339
      %v2496 = vadd.f32 %v2464, %v2344
      %v2497 = vadd.f32 %v2465, %v2347
      %v2498 = vadd.f32 %v2466, %v2352
      %v2499 = vadd.f32 %v2467, %v2355
      %v2500 = vadd.f32 %v2468, %v2360
      %v2501 = vadd.f32 %v2469, %v2363
      %v2502 = vadd.f32 %v2470, %v2368
      %v2503 = vadd.f32 %v2471, %v2371
      %v2504 = vadd.f32 %v2472, %v2376
      %v2505 = vadd.f32 %v2473, %v2379
      %v2506 = vadd.f32 %v2474, %v2384
      %v2507 = vadd.f32 %v2475, %v2387
      %v2508 = vadd.f32 %v2476, %v2392
      %v2509 = vadd.f32 %v2477, %v2395
      %v2510 = vadd.f32 %v2478, %v2400
      %v2511 = vadd.f32 %v2479, %v2403
      %v2512 = vadd.f32 %v2480, %v2408
      %v2513 = vadd.f32 %v2481, %v2411
      %v2514 = vadd.f32 %v2482, %v2416
      %v2515 = vadd.f32 %v2483, %v2419
      %v2516 = vadd.f32 %v2484, %v2424
      %v2517 = vadd.f32 %v2485, %v2427
      %v2518 = vadd.f32 %v2486, %v2432
      %v2519 = vadd.f32 %v2487, %v2435
      %v2520 = vadd.f32 %v2488, %v2440
      %v2521 = vadd.f32 %v2489, %v2443
      %v2522 = vadd.f32 %v2490, %v2448
      %v2523 = vadd.f32 %v2491, %v2451
      %v2524 = vadd.f32 %v2492, %v2456
      %v2525 = vadd.f32 %v2493, %v2459
      %2526 = vst.msk [vmem:[#allocation2 + $0x6] sm:$0xff] %vm780, %v2494
      %2527 = vst.msk [vmem:[#allocation2 + $0xe] sm:$0x3] %vm1490, %v2495
      %2528 = vst.msk [vmem:[#allocation2 + $0x16] sm:$0xff] %vm780, %v2496
      %2529 = vst.msk [vmem:[#allocation2 + $0x1e] sm:$0x3] %vm1490, %v2497
      %2530 = vst.msk [vmem:[#allocation2 + $0x26] sm:$0xff] %vm780, %v2498
      %2531 = vst.msk [vmem:[#allocation2 + $0x2e] sm:$0x3] %vm1490, %v2499
      %2532 = vst.msk [vmem:[#allocation2 + $0x36] sm:$0xff] %vm780, %v2500
      %2533 = vst.msk [vmem:[#allocation2 + $0x3e] sm:$0x3] %vm1490, %v2501
      %2534 = vst.msk [vmem:[#allocation2 + $0x46] sm:$0xff] %vm780, %v2502
      %2535 = vst.msk [vmem:[#allocation2 + $0x4e] sm:$0x3] %vm1490, %v2503
      %2536 = vst.msk [vmem:[#allocation2 + $0x56] sm:$0xff] %vm780, %v2504
      %2537 = vst.msk [vmem:[#allocation2 + $0x5e] sm:$0x3] %vm1490, %v2505
      %2538 = vst.msk [vmem:[#allocation2 + $0x66] sm:$0xff] %vm780, %v2506
      %2539 = vst.msk [vmem:[#allocation2 + $0x6e] sm:$0x3] %vm1490, %v2507
      %2540 = vst.msk [vmem:[#allocation2 + $0x76] sm:$0xff] %vm780, %v2508
      %2541 = vst.msk [vmem:[#allocation2 + $0x7e] sm:$0x3] %vm1490, %v2509
      %2542 = vst.msk [vmem:[#allocation2 + $0x86] sm:$0xff] %vm780, %v2510
      %2543 = vst.msk [vmem:[#allocation2 + $0x8e] sm:$0x3] %vm1490, %v2511
      %2544 = vst.msk [vmem:[#allocation2 + $0x96] sm:$0xff] %vm780, %v2512
      %2545 = vst.msk [vmem:[#allocation2 + $0x9e] sm:$0x3] %vm1490, %v2513
      %2546 = vst.msk [vmem:[#allocation2 + $0xa6] sm:$0xff] %vm780, %v2514
      %2547 = vst.msk [vmem:[#allocation2 + $0xae] sm:$0x3] %vm1490, %v2515
      %2548 = vst.msk [vmem:[#allocation2 + $0xb6] sm:$0xff] %vm780, %v2516
      %2549 = vst.msk [vmem:[#allocation2 + $0xbe] sm:$0x3] %vm1490, %v2517
      %2550 = vst.msk [vmem:[#allocation2 + $0xc6] sm:$0xff] %vm780, %v2518
      %2551 = vst.msk [vmem:[#allocation2 + $0xce] sm:$0x3] %vm1490, %v2519
      %2552 = vst.msk [vmem:[#allocation2 + $0xd6] sm:$0xff] %vm780, %v2520
      %2553 = vst.msk [vmem:[#allocation2 + $0xde] sm:$0x3] %vm1490, %v2521
      %2554 = vst.msk [vmem:[#allocation2 + $0xe6] sm:$0xff] %vm780, %v2522
      %2555 = vst.msk [vmem:[#allocation2 + $0xee] sm:$0x3] %vm1490, %v2523
      %2556 = vst.msk [vmem:[#allocation2 + $0xf6] sm:$0xff] %vm780, %v2524
      %2557 = vst.msk [vmem:[#allocation2 + $0xfe] sm:$0x3] %vm1490, %v2525
      %v2558 = vld [vmem:[%s381] sm:$0xf]
      %v2559 = vld [vmem:[%s381 + $0x4] sm:$0xf]
      %v2560 = vld [vmem:[%s381 + $0x8] sm:$0xf]
      %v2561 = vld [vmem:[%s381 + $0xc] sm:$0xf]
      %v2562 = vld [vmem:[%s381 + $0x10] sm:$0xf]
      %v2563 = vld [vmem:[%s381 + $0x14] sm:$0xf]
      %v2564 = vld [vmem:[%s381 + $0x18] sm:$0xf]
      %v2565 = vld [vmem:[%s381 + $0x1c] sm:$0xf]
      %v2566 = vld [vmem:[%s381 + $0x20] sm:$0xf]
      %v2567 = vld [vmem:[%s381 + $0x24] sm:$0xf]
      %v2568 = vld [vmem:[%s381 + $0x28] sm:$0xf]
      %v2569 = vld [vmem:[%s381 + $0x2c] sm:$0xf]
      %v2570 = vld [vmem:[%s381 + $0x30] sm:$0xf]
      %v2571 = vld [vmem:[%s381 + $0x34] sm:$0xf]
      %v2572 = vld [vmem:[%s381 + $0x38] sm:$0xf]
      %v2573 = vld [vmem:[%s381 + $0x3c] sm:$0xf]
      %v2574 = vld [vmem:[%s381 + $0x40] sm:$0xf]
      %v2575 = vld [vmem:[%s381 + $0x44] sm:$0xf]
      %v2576 = vld [vmem:[%s381 + $0x48] sm:$0xf]
      %v2577 = vld [vmem:[%s381 + $0x4c] sm:$0xf]
      %v2578 = vld [vmem:[%s381 + $0x50] sm:$0xf]
      %v2579 = vld [vmem:[%s381 + $0x54] sm:$0xf]
      %v2580 = vld [vmem:[%s381 + $0x58] sm:$0xf]
      %v2581 = vld [vmem:[%s381 + $0x5c] sm:$0xf]
      %v2582 = vld [vmem:[%s381 + $0x60] sm:$0xf]
      %v2583 = vld [vmem:[%s381 + $0x64] sm:$0xf]
      %v2584 = vld [vmem:[%s381 + $0x68] sm:$0xf]
      %v2585 = vld [vmem:[%s381 + $0x6c] sm:$0xf]
      %v2586 = vld [vmem:[%s381 + $0x70] sm:$0xf]
      %v2587 = vld [vmem:[%s381 + $0x74] sm:$0xf]
      %v2588 = vld [vmem:[%s381 + $0x78] sm:$0xf]
      %v2589 = vld [vmem:[%s381 + $0x7c] sm:$0xf]
      %s2590 = scalar_lea.vmem %s3, 10
      %v2591 = vld [vmem:[%s2590] sm:$0x3]
      %v2624 = vunpack.c.l.b16 %v2558
      %v2625 = vunpack.c.l.b16 %v2559
      %v2626 = vunpack.c.l.b16 %v2560
      %v2627 = vunpack.c.l.b16 %v2561
      %v2628 = vunpack.c.l.b16 %v2562
      %v2629 = vunpack.c.l.b16 %v2563
      %v2630 = vunpack.c.l.b16 %v2564
      %v2631 = vunpack.c.l.b16 %v2565
      %v2632 = vunpack.c.l.b16 %v2566
      %v2633 = vunpack.c.l.b16 %v2567
      %v2634 = vunpack.c.l.b16 %v2568
      %v2635 = vunpack.c.l.b16 %v2569
      %v2636 = vunpack.c.l.b16 %v2570
      %v2637 = vunpack.c.l.b16 %v2571
      %v2638 = vunpack.c.l.b16 %v2572
      %v2639 = vunpack.c.l.b16 %v2573
      %v2640 = vunpack.c.l.b16 %v2574
      %v2641 = vunpack.c.l.b16 %v2575
      %v2642 = vunpack.c.l.b16 %v2576
      %v2643 = vunpack.c.l.b16 %v2577
      %v2644 = vunpack.c.l.b16 %v2578
      %v2645 = vunpack.c.l.b16 %v2579
      %v2646 = vunpack.c.l.b16 %v2580
      %v2647 = vunpack.c.l.b16 %v2581
      %v2648 = vunpack.c.l.b16 %v2582
      %v2649 = vunpack.c.l.b16 %v2583
      %v2650 = vunpack.c.l.b16 %v2584
      %v2651 = vunpack.c.l.b16 %v2585
      %v2652 = vunpack.c.l.b16 %v2586
      %v2653 = vunpack.c.l.b16 %v2587
      %v2654 = vunpack.c.l.b16 %v2588
      %v2655 = vunpack.c.l.b16 %v2589
      %v2656 = vpack.c.b16 %v2625, %v2624
      %v2657 = vpack.c.b16 %v2627, %v2626
      %v2658 = vpack.c.b16 %v2629, %v2628
      %v2659 = vpack.c.b16 %v2631, %v2630
      %v2660 = vpack.c.b16 %v2633, %v2632
      %v2661 = vpack.c.b16 %v2635, %v2634
      %v2662 = vpack.c.b16 %v2637, %v2636
      %v2663 = vpack.c.b16 %v2639, %v2638
      %v2664 = vpack.c.b16 %v2641, %v2640
      %v2665 = vpack.c.b16 %v2643, %v2642
      %v2666 = vpack.c.b16 %v2645, %v2644
      %v2667 = vpack.c.b16 %v2647, %v2646
      %v2668 = vpack.c.b16 %v2649, %v2648
      %v2669 = vpack.c.b16 %v2651, %v2650
      %v2670 = vpack.c.b16 %v2653, %v2652
      %v2671 = vpack.c.b16 %v2655, %v2654
      %v2673 = vsel %vm517, %v2656, 0
      %v2676 = vsel %vm517, %v2657, 0
      %v2679 = vsel %vm517, %v2658, 0
      %v2682 = vsel %vm517, %v2659, 0
      %v2685 = vsel %vm517, %v2660, 0
      %v2688 = vsel %vm517, %v2661, 0
      %v2691 = vsel %vm517, %v2662, 0
      %v2694 = vsel %vm517, %v2663, 0
      %v2697 = vsel %vm517, %v2664, 0
      %v2700 = vsel %vm517, %v2665, 0
      %v2703 = vsel %vm517, %v2666, 0
      %v2706 = vsel %vm517, %v2667, 0
      %v2709 = vsel %vm517, %v2668, 0
      %v2712 = vsel %vm517, %v2669, 0
      %v2715 = vsel %vm517, %v2670, 0
      %v2718 = vsel %vm517, %v2671, 0
      %v2721 = vsel %vm566, %v2591, 0
      %2723 = vmatprep.subr.bf16.mxu0 0
      %2724 = vmatpush1.bf16.msra.mxu0 %v2721
      %2725 = vmatprep.subr.bf16.mxu0 0
      %2726 = vmatpush1.bf16.msra.mxu0 0
      %2727 = vmatprep.subr.bf16.mxu0 0
      %2728 = vmatpush1.bf16.msra.mxu0 0
      %2729 = vmatprep.subr.bf16.mxu0 0
      %2730 = vmatpush1.bf16.msra.mxu0 0
      %2731 = vmatprep.subr.bf16.mxu0 0
      %2732 = vmatpush1.bf16.msra.mxu0 0
      %2733 = vmatprep.subr.bf16.mxu0 0
      %2734 = vmatpush1.bf16.msra.mxu0 0
      %2735 = vmatprep.subr.bf16.mxu0 0
      %2736 = vmatpush1.bf16.msra.mxu0 0
      %2737 = vmatprep.subr.bf16.mxu0 0
      %2738 = vmatpush1.bf16.msra.mxu0 0
      %2739 = vmatprep.subr.bf16.mxu0 0
      %2740 = vmatpush1.bf16.msra.mxu0 0
      %2741 = vmatprep.subr.bf16.mxu0 0
      %2742 = vmatpush1.bf16.msra.mxu0 0
      %2743 = vmatprep.subr.bf16.mxu0 0
      %2744 = vmatpush1.bf16.msra.mxu0 0
      %2745 = vmatprep.subr.bf16.mxu0 0
      %2746 = vmatpush1.bf16.msra.mxu0 0
      %2747 = vmatprep.subr.bf16.mxu0 0
      %2748 = vmatpush1.bf16.msra.mxu0 0
      %2749 = vmatprep.subr.bf16.mxu0 0
      %2750 = vmatpush1.bf16.msra.mxu0 0
      %2751 = vmatprep.subr.bf16.mxu0 0
      %2752 = vmatpush1.bf16.msra.mxu0 0
      %2753 = vmatprep.subr.bf16.mxu0 0
      %2754 = vmatpush1.bf16.msra.mxu0 0
      %2755 = vmatprep.mubr.bf16.mxu0 0
      %2756 = vmatmul.mubr.bf16.gmra.mrb[0].mxu0 %v2673
      %v2757 = vpop.f32.mrb[0].mxu0
      %v2758 = vadd.f32 0.0, %v2757
      %v2759 = vpop.f32.mrb[0].mxu0
      %v2760 = vpop.f32.mrb[0].mxu0
      %v2761 = vadd.f32 0.0, %v2760
      %v2762 = vpop.f32.mrb[0].mxu0
      %2763 = vmatprep.mubr.bf16.mxu0 0
      %2764 = vmatmul.mubr.bf16.gmra.mrb[0].mxu0 %v2676
      %v2765 = vpop.f32.mrb[0].mxu0
      %v2766 = vadd.f32 0.0, %v2765
      %v2767 = vpop.f32.mrb[0].mxu0
      %v2768 = vpop.f32.mrb[0].mxu0
      %v2769 = vadd.f32 0.0, %v2768
      %v2770 = vpop.f32.mrb[0].mxu0
      %2771 = vmatprep.mubr.bf16.mxu0 0
      %2772 = vmatmul.mubr.bf16.gmra.mrb[0].mxu0 %v2679
      %v2773 = vpop.f32.mrb[0].mxu0
      %v2774 = vadd.f32 0.0, %v2773
      %v2775 = vpop.f32.mrb[0].mxu0
      %v2776 = vpop.f32.mrb[0].mxu0
      %v2777 = vadd.f32 0.0, %v2776
      %v2778 = vpop.f32.mrb[0].mxu0
      %2779 = vmatprep.mubr.bf16.mxu0 0
      %2780 = vmatmul.mubr.bf16.gmra.mrb[0].mxu0 %v2682
      %v2781 = vpop.f32.mrb[0].mxu0
      %v2782 = vadd.f32 0.0, %v2781
      %v2783 = vpop.f32.mrb[0].mxu0
      %v2784 = vpop.f32.mrb[0].mxu0
      %v2785 = vadd.f32 0.0, %v2784
      %v2786 = vpop.f32.mrb[0].mxu0
      %2787 = vmatprep.mubr.bf16.mxu0 0
      %2788 = vmatmul.mubr.bf16.gmra.mrb[0].mxu0 %v2685
      %v2789 = vpop.f32.mrb[0].mxu0
      %v2790 = vadd.f32 0.0, %v2789
      %v2791 = vpop.f32.mrb[0].mxu0
      %v2792 = vpop.f32.mrb[0].mxu0
      %v2793 = vadd.f32 0.0, %v2792
      %v2794 = vpop.f32.mrb[0].mxu0
      %2795 = vmatprep.mubr.bf16.mxu0 0
      %2796 = vmatmul.mubr.bf16.gmra.mrb[0].mxu0 %v2688
      %v2797 = vpop.f32.mrb[0].mxu0
      %v2798 = vadd.f32 0.0, %v2797
      %v2799 = vpop.f32.mrb[0].mxu0
      %v2800 = vpop.f32.mrb[0].mxu0
      %v2801 = vadd.f32 0.0, %v2800
      %v2802 = vpop.f32.mrb[0].mxu0
      %2803 = vmatprep.mubr.bf16.mxu0 0
      %2804 = vmatmul.mubr.bf16.gmra.mrb[0].mxu0 %v2691
      %v2805 = vpop.f32.mrb[0].mxu0
      %v2806 = vadd.f32 0.0, %v2805
      %v2807 = vpop.f32.mrb[0].mxu0
      %v2808 = vpop.f32.mrb[0].mxu0
      %v2809 = vadd.f32 0.0, %v2808
      %v2810 = vpop.f32.mrb[0].mxu0
      %2811 = vmatprep.mubr.bf16.mxu0 0
      %2812 = vmatmul.mubr.bf16.gmra.mrb[0].mxu0 %v2694
      %v2813 = vpop.f32.mrb[0].mxu0
      %v2814 = vadd.f32 0.0, %v2813
      %v2815 = vpop.f32.mrb[0].mxu0
      %v2816 = vpop.f32.mrb[0].mxu0
      %v2817 = vadd.f32 0.0, %v2816
      %v2818 = vpop.f32.mrb[0].mxu0
      %2819 = vmatprep.mubr.bf16.mxu0 0
      %2820 = vmatmul.mubr.bf16.gmra.mrb[0].mxu0 %v2697
      %v2821 = vpop.f32.mrb[0].mxu0
      %v2822 = vadd.f32 0.0, %v2821
      %v2823 = vpop.f32.mrb[0].mxu0
      %v2824 = vpop.f32.mrb[0].mxu0
      %v2825 = vadd.f32 0.0, %v2824
      %v2826 = vpop.f32.mrb[0].mxu0
      %2827 = vmatprep.mubr.bf16.mxu0 0
      %2828 = vmatmul.mubr.bf16.gmra.mrb[0].mxu0 %v2700
      %v2829 = vpop.f32.mrb[0].mxu0
      %v2830 = vadd.f32 0.0, %v2829
      %v2831 = vpop.f32.mrb[0].mxu0
      %v2832 = vpop.f32.mrb[0].mxu0
      %v2833 = vadd.f32 0.0, %v2832
      %v2834 = vpop.f32.mrb[0].mxu0
      %2835 = vmatprep.mubr.bf16.mxu0 0
      %2836 = vmatmul.mubr.bf16.gmra.mrb[0].mxu0 %v2703
      %v2837 = vpop.f32.mrb[0].mxu0
      %v2838 = vadd.f32 0.0, %v2837
      %v2839 = vpop.f32.mrb[0].mxu0
      %v2840 = vpop.f32.mrb[0].mxu0
      %v2841 = vadd.f32 0.0, %v2840
      %v2842 = vpop.f32.mrb[0].mxu0
      %2843 = vmatprep.mubr.bf16.mxu0 0
      %2844 = vmatmul.mubr.bf16.gmra.mrb[0].mxu0 %v2706
      %v2845 = vpop.f32.mrb[0].mxu0
      %v2846 = vadd.f32 0.0, %v2845
      %v2847 = vpop.f32.mrb[0].mxu0
      %v2848 = vpop.f32.mrb[0].mxu0
      %v2849 = vadd.f32 0.0, %v2848
      %v2850 = vpop.f32.mrb[0].mxu0
      %2851 = vmatprep.mubr.bf16.mxu0 0
      %2852 = vmatmul.mubr.bf16.gmra.mrb[0].mxu0 %v2709
      %v2853 = vpop.f32.mrb[0].mxu0
      %v2854 = vadd.f32 0.0, %v2853
      %v2855 = vpop.f32.mrb[0].mxu0
      %v2856 = vpop.f32.mrb[0].mxu0
      %v2857 = vadd.f32 0.0, %v2856
      %v2858 = vpop.f32.mrb[0].mxu0
      %2859 = vmatprep.mubr.bf16.mxu0 0
      %2860 = vmatmul.mubr.bf16.gmra.mrb[0].mxu0 %v2712
      %v2861 = vpop.f32.mrb[0].mxu0
      %v2862 = vadd.f32 0.0, %v2861
      %v2863 = vpop.f32.mrb[0].mxu0
      %v2864 = vpop.f32.mrb[0].mxu0
      %v2865 = vadd.f32 0.0, %v2864
      %v2866 = vpop.f32.mrb[0].mxu0
      %2867 = vmatprep.mubr.bf16.mxu0 0
      %2868 = vmatmul.mubr.bf16.gmra.mrb[0].mxu0 %v2715
      %v2869 = vpop.f32.mrb[0].mxu0
      %v2870 = vadd.f32 0.0, %v2869
      %v2871 = vpop.f32.mrb[0].mxu0
      %v2872 = vpop.f32.mrb[0].mxu0
      %v2873 = vadd.f32 0.0, %v2872
      %v2874 = vpop.f32.mrb[0].mxu0
      %2875 = vmatprep.mubr.bf16.mxu0 0
      %2876 = vmatmul.mubr.bf16.gmra.mrb[0].mxu0 %v2718
      %v2877 = vpop.f32.mrb[0].mxu0
      %v2878 = vadd.f32 0.0, %v2877
      %v2879 = vpop.f32.mrb[0].mxu0
      %v2880 = vpop.f32.mrb[0].mxu0
      %v2881 = vadd.f32 0.0, %v2880
      %v2882 = vpop.f32.mrb[0].mxu0
      %2883 = vdwg.mxu0
      %v2884 = vld [vmem:[#allocation2] sm:$0xff]
      %v2885 = vld [vmem:[#allocation2 + $0x8] sm:$0x3]
      %v2886 = vld [vmem:[#allocation2 + $0x10] sm:$0xff]
      %v2887 = vld [vmem:[#allocation2 + $0x18] sm:$0x3]
      %v2888 = vld [vmem:[#allocation2 + $0x20] sm:$0xff]
      %v2889 = vld [vmem:[#allocation2 + $0x28] sm:$0x3]
      %v2890 = vld [vmem:[#allocation2 + $0x30] sm:$0xff]
      %v2891 = vld [vmem:[#allocation2 + $0x38] sm:$0x3]
      %v2892 = vld [vmem:[#allocation2 + $0x40] sm:$0xff]
      %v2893 = vld [vmem:[#allocation2 + $0x48] sm:$0x3]
      %v2894 = vld [vmem:[#allocation2 + $0x50] sm:$0xff]
      %v2895 = vld [vmem:[#allocation2 + $0x58] sm:$0x3]
      %v2896 = vld [vmem:[#allocation2 + $0x60] sm:$0xff]
      %v2897 = vld [vmem:[#allocation2 + $0x68] sm:$0x3]
      %v2898 = vld [vmem:[#allocation2 + $0x70] sm:$0xff]
      %v2899 = vld [vmem:[#allocation2 + $0x78] sm:$0x3]
      %v2900 = vld [vmem:[#allocation2 + $0x80] sm:$0xff]
      %v2901 = vld [vmem:[#allocation2 + $0x88] sm:$0x3]
      %v2902 = vld [vmem:[#allocation2 + $0x90] sm:$0xff]
      %v2903 = vld [vmem:[#allocation2 + $0x98] sm:$0x3]
      %v2904 = vld [vmem:[#allocation2 + $0xa0] sm:$0xff]
      %v2905 = vld [vmem:[#allocation2 + $0xa8] sm:$0x3]
      %v2906 = vld [vmem:[#allocation2 + $0xb0] sm:$0xff]
      %v2907 = vld [vmem:[#allocation2 + $0xb8] sm:$0x3]
      %v2908 = vld [vmem:[#allocation2 + $0xc0] sm:$0xff]
      %v2909 = vld [vmem:[#allocation2 + $0xc8] sm:$0x3]
      %v2910 = vld [vmem:[#allocation2 + $0xd0] sm:$0xff]
      %v2911 = vld [vmem:[#allocation2 + $0xd8] sm:$0x3]
      %v2912 = vld [vmem:[#allocation2 + $0xe0] sm:$0xff]
      %v2913 = vld [vmem:[#allocation2 + $0xe8] sm:$0x3]
      %v2914 = vld [vmem:[#allocation2 + $0xf0] sm:$0xff]
      %v2915 = vld [vmem:[#allocation2 + $0xf8] sm:$0x3]
      %v2948 = vrot.slane %v2758, 6
      %v2949 = vrot.slane %v2761, 6
      %v2950 = vsel %vm566, %v2948, %v2949
      %v2951 = vrot.slane %v2766, 6
      %v2952 = vrot.slane %v2769, 6
      %v2953 = vsel %vm566, %v2951, %v2952
      %v2954 = vrot.slane %v2774, 6
      %v2955 = vrot.slane %v2777, 6
      %v2956 = vsel %vm566, %v2954, %v2955
      %v2957 = vrot.slane %v2782, 6
      %v2958 = vrot.slane %v2785, 6
      %v2959 = vsel %vm566, %v2957, %v2958
      %v2960 = vrot.slane %v2790, 6
      %v2961 = vrot.slane %v2793, 6
      %v2962 = vsel %vm566, %v2960, %v2961
      %v2963 = vrot.slane %v2798, 6
      %v2964 = vrot.slane %v2801, 6
      %v2965 = vsel %vm566, %v2963, %v2964
      %v2966 = vrot.slane %v2806, 6
      %v2967 = vrot.slane %v2809, 6
      %v2968 = vsel %vm566, %v2966, %v2967
      %v2969 = vrot.slane %v2814, 6
      %v2970 = vrot.slane %v2817, 6
      %v2971 = vsel %vm566, %v2969, %v2970
      %v2972 = vrot.slane %v2822, 6
      %v2973 = vrot.slane %v2825, 6
      %v2974 = vsel %vm566, %v2972, %v2973
      %v2975 = vrot.slane %v2830, 6
      %v2976 = vrot.slane %v2833, 6
      %v2977 = vsel %vm566, %v2975, %v2976
      %v2978 = vrot.slane %v2838, 6
      %v2979 = vrot.slane %v2841, 6
      %v2980 = vsel %vm566, %v2978, %v2979
      %v2981 = vrot.slane %v2846, 6
      %v2982 = vrot.slane %v2849, 6
      %v2983 = vsel %vm566, %v2981, %v2982
      %v2984 = vrot.slane %v2854, 6
      %v2985 = vrot.slane %v2857, 6
      %v2986 = vsel %vm566, %v2984, %v2985
      %v2987 = vrot.slane %v2862, 6
      %v2988 = vrot.slane %v2865, 6
      %v2989 = vsel %vm566, %v2987, %v2988
      %v2990 = vrot.slane %v2870, 6
      %v2991 = vrot.slane %v2873, 6
      %v2992 = vsel %vm566, %v2990, %v2991
      %v2993 = vrot.slane %v2878, 6
      %v2994 = vrot.slane %v2881, 6
      %v2995 = vsel %vm566, %v2993, %v2994
      %v3028 = vadd.f32 %v2884, %v2950
      %v3029 = vadd.f32 %v2885, %v2949
      %v3030 = vadd.f32 %v2886, %v2953
      %v3031 = vadd.f32 %v2887, %v2952
      %v3032 = vadd.f32 %v2888, %v2956
      %v3033 = vadd.f32 %v2889, %v2955
      %v3034 = vadd.f32 %v2890, %v2959
      %v3035 = vadd.f32 %v2891, %v2958
      %v3036 = vadd.f32 %v2892, %v2962
      %v3037 = vadd.f32 %v2893, %v2961
      %v3038 = vadd.f32 %v2894, %v2965
      %v3039 = vadd.f32 %v2895, %v2964
      %v3040 = vadd.f32 %v2896, %v2968
      %v3041 = vadd.f32 %v2897, %v2967
      %v3042 = vadd.f32 %v2898, %v2971
      %v3043 = vadd.f32 %v2899, %v2970
      %v3044 = vadd.f32 %v2900, %v2974
      %v3045 = vadd.f32 %v2901, %v2973
      %v3046 = vadd.f32 %v2902, %v2977
      %v3047 = vadd.f32 %v2903, %v2976
      %v3048 = vadd.f32 %v2904, %v2980
      %v3049 = vadd.f32 %v2905, %v2979
      %v3050 = vadd.f32 %v2906, %v2983
      %v3051 = vadd.f32 %v2907, %v2982
      %v3052 = vadd.f32 %v2908, %v2986
      %v3053 = vadd.f32 %v2909, %v2985
      %v3054 = vadd.f32 %v2910, %v2989
      %v3055 = vadd.f32 %v2911, %v2988
      %v3056 = vadd.f32 %v2912, %v2992
      %v3057 = vadd.f32 %v2913, %v2991
      %v3058 = vadd.f32 %v2914, %v2995
      %v3059 = vadd.f32 %v2915, %v2994
      %3060 = vst.msk [vmem:[#allocation2] sm:$0xff] %vm780, %v3028
      %3061 = vst.msk [vmem:[#allocation2 + $0x8] sm:$0x3] %vm1490, %v3029
      %3062 = vst.msk [vmem:[#allocation2 + $0x10] sm:$0xff] %vm780, %v3030
      %3063 = vst.msk [vmem:[#allocation2 + $0x18] sm:$0x3] %vm1490, %v3031
      %3064 = vst.msk [vmem:[#allocation2 + $0x20] sm:$0xff] %vm780, %v3032
      %3065 = vst.msk [vmem:[#allocation2 + $0x28] sm:$0x3] %vm1490, %v3033
      %3066 = vst.msk [vmem:[#allocation2 + $0x30] sm:$0xff] %vm780, %v3034
      %3067 = vst.msk [vmem:[#allocation2 + $0x38] sm:$0x3] %vm1490, %v3035
      %3068 = vst.msk [vmem:[#allocation2 + $0x40] sm:$0xff] %vm780, %v3036
      %3069 = vst.msk [vmem:[#allocation2 + $0x48] sm:$0x3] %vm1490, %v3037
      %3070 = vst.msk [vmem:[#allocation2 + $0x50] sm:$0xff] %vm780, %v3038
      %3071 = vst.msk [vmem:[#allocation2 + $0x58] sm:$0x3] %vm1490, %v3039
      %3072 = vst.msk [vmem:[#allocation2 + $0x60] sm:$0xff] %vm780, %v3040
      %3073 = vst.msk [vmem:[#allocation2 + $0x68] sm:$0x3] %vm1490, %v3041
      %3074 = vst.msk [vmem:[#allocation2 + $0x70] sm:$0xff] %vm780, %v3042
      %3075 = vst.msk [vmem:[#allocation2 + $0x78] sm:$0x3] %vm1490, %v3043
      %3076 = vst.msk [vmem:[#allocation2 + $0x80] sm:$0xff] %vm780, %v3044
      %3077 = vst.msk [vmem:[#allocation2 + $0x88] sm:$0x3] %vm1490, %v3045
      %3078 = vst.msk [vmem:[#allocation2 + $0x90] sm:$0xff] %vm780, %v3046
      %3079 = vst.msk [vmem:[#allocation2 + $0x98] sm:$0x3] %vm1490, %v3047
      %3080 = vst.msk [vmem:[#allocation2 + $0xa0] sm:$0xff] %vm780, %v3048
      %3081 = vst.msk [vmem:[#allocation2 + $0xa8] sm:$0x3] %vm1490, %v3049
      %3082 = vst.msk [vmem:[#allocation2 + $0xb0] sm:$0xff] %vm780, %v3050
      %3083 = vst.msk [vmem:[#allocation2 + $0xb8] sm:$0x3] %vm1490, %v3051
      %3084 = vst.msk [vmem:[#allocation2 + $0xc0] sm:$0xff] %vm780, %v3052
      %3085 = vst.msk [vmem:[#allocation2 + $0xc8] sm:$0x3] %vm1490, %v3053
      %3086 = vst.msk [vmem:[#allocation2 + $0xd0] sm:$0xff] %vm780, %v3054
      %3087 = vst.msk [vmem:[#allocation2 + $0xd8] sm:$0x3] %vm1490, %v3055
      %3088 = vst.msk [vmem:[#allocation2 + $0xe0] sm:$0xff] %vm780, %v3056
      %3089 = vst.msk [vmem:[#allocation2 + $0xe8] sm:$0x3] %vm1490, %v3057
      %3090 = vst.msk [vmem:[#allocation2 + $0xf0] sm:$0xff] %vm780, %v3058
      %3091 = vst.msk [vmem:[#allocation2 + $0xf8] sm:$0x3] %vm1490, %v3059
      %s3092 = scalar_lea.vmem %s381, 48
      %v3093 = vld [vmem:[%s3092] sm:$0xf]
      %v3094 = vld [vmem:[%s3092 + $0x4] sm:$0xf]
      %v3095 = vld [vmem:[%s3092 + $0x8] sm:$0xf]
      %v3096 = vld [vmem:[%s3092 + $0xc] sm:$0xf]
      %v3097 = vld [vmem:[%s3092 + $0x10] sm:$0xf]
      %v3098 = vld [vmem:[%s3092 + $0x14] sm:$0xf]
      %v3099 = vld [vmem:[%s3092 + $0x18] sm:$0xf]
      %v3100 = vld [vmem:[%s3092 + $0x1c] sm:$0xf]
      %v3101 = vld [vmem:[%s3092 + $0x20] sm:$0xf]
      %v3102 = vld [vmem:[%s3092 + $0x24] sm:$0xf]
      %v3103 = vld [vmem:[%s3092 + $0x28] sm:$0xf]
      %v3104 = vld [vmem:[%s3092 + $0x2c] sm:$0xf]
      %v3105 = vld [vmem:[%s3092 + $0x30] sm:$0xf]
      %v3106 = vld [vmem:[%s3092 + $0x34] sm:$0xf]
      %v3107 = vld [vmem:[%s3092 + $0x38] sm:$0xf]
      %v3108 = vld [vmem:[%s3092 + $0x3c] sm:$0xf]
      %v3109 = vld [vmem:[%s3092 + $0x40] sm:$0xf]
      %v3110 = vld [vmem:[%s3092 + $0x44] sm:$0xf]
      %v3111 = vld [vmem:[%s3092 + $0x48] sm:$0xf]
      %v3112 = vld [vmem:[%s3092 + $0x4c] sm:$0xf]
      %s3113 = scalar_lea.vmem %s3, 12
      %v3114 = vld [vmem:[%s3113] sm:$0x3]
      %v3135 = vunpack.c.l.b16 %v3093
      %v3136 = vunpack.c.l.b16 %v3094
      %v3137 = vunpack.c.l.b16 %v3095
      %v3138 = vunpack.c.l.b16 %v3096
      %v3139 = vunpack.c.l.b16 %v3097
      %v3140 = vunpack.c.l.b16 %v3098
      %v3141 = vunpack.c.l.b16 %v3099
      %v3142 = vunpack.c.l.b16 %v3100
      %v3143 = vunpack.c.l.b16 %v3101
      %v3144 = vunpack.c.l.b16 %v3102
      %v3145 = vunpack.c.l.b16 %v3103
      %v3146 = vunpack.c.l.b16 %v3104
      %v3147 = vunpack.c.l.b16 %v3105
      %v3148 = vunpack.c.l.b16 %v3106
      %v3149 = vunpack.c.l.b16 %v3107
      %v3150 = vunpack.c.l.b16 %v3108
      %v3151 = vunpack.c.l.b16 %v3109
      %v3152 = vunpack.c.l.b16 %v3110
      %v3153 = vunpack.c.l.b16 %v3111
      %v3154 = vunpack.c.l.b16 %v3112
      %v3155 = vpack.c.b16 %v3136, %v3135
      %v3156 = vpack.c.b16 %v3138, %v3137
      %v3157 = vpack.c.b16 %v3140, %v3139
      %v3158 = vpack.c.b16 %v3142, %v3141
      %v3159 = vpack.c.b16 %v3144, %v3143
      %v3160 = vpack.c.b16 %v3146, %v3145
      %v3161 = vpack.c.b16 %v3148, %v3147
      %v3162 = vpack.c.b16 %v3150, %v3149
      %v3163 = vpack.c.b16 %v3152, %v3151
      %v3164 = vpack.c.b16 %v3154, %v3153
      %v3166 = vsel %vm517, %v3155, 0
      %v3169 = vsel %vm517, %v3156, 0
      %v3172 = vsel %vm517, %v3157, 0
      %v3175 = vsel %vm517, %v3158, 0
      %v3178 = vsel %vm517, %v3159, 0
      %v3181 = vsel %vm517, %v3160, 0
      %v3184 = vsel %vm517, %v3161, 0
      %v3187 = vsel %vm517, %v3162, 0
      %v3190 = vsel %vm517, %v3163, 0
      %v3193 = vsel %vm517, %v3164, 0
      %v3196 = vsel %vm566, %v3114, 0
      %3198 = vmatprep.subr.bf16.mxu0 0
      %3199 = vmatpush1.bf16.msra.mxu0 %v3196
      %3200 = vmatprep.subr.bf16.mxu0 0
      %3201 = vmatpush1.bf16.msra.mxu0 0
      %3202 = vmatprep.subr.bf16.mxu0 0
      %3203 = vmatpush1.bf16.msra.mxu0 0
      %3204 = vmatprep.subr.bf16.mxu0 0
      %3205 = vmatpush1.bf16.msra.mxu0 0
      %3206 = vmatprep.subr.bf16.mxu0 0
      %3207 = vmatpush1.bf16.msra.mxu0 0
      %3208 = vmatprep.subr.bf16.mxu0 0
      %3209 = vmatpush1.bf16.msra.mxu0 0
      %3210 = vmatprep.subr.bf16.mxu0 0
      %3211 = vmatpush1.bf16.msra.mxu0 0
      %3212 = vmatprep.subr.bf16.mxu0 0
      %3213 = vmatpush1.bf16.msra.mxu0 0
      %3214 = vmatprep.subr.bf16.mxu0 0
      %3215 = vmatpush1.bf16.msra.mxu0 0
      %3216 = vmatprep.subr.bf16.mxu0 0
      %3217 = vmatpush1.bf16.msra.mxu0 0
      %3218 = vmatprep.subr.bf16.mxu0 0
      %3219 = vmatpush1.bf16.msra.mxu0 0
      %3220 = vmatprep.subr.bf16.mxu0 0
      %3221 = vmatpush1.bf16.msra.mxu0 0
      %3222 = vmatprep.subr.bf16.mxu0 0
      %3223 = vmatpush1.bf16.msra.mxu0 0
      %3224 = vmatprep.subr.bf16.mxu0 0
      %3225 = vmatpush1.bf16.msra.mxu0 0
      %3226 = vmatprep.subr.bf16.mxu0 0
      %3227 = vmatpush1.bf16.msra.mxu0 0
      %3228 = vmatprep.subr.bf16.mxu0 0
      %3229 = vmatpush1.bf16.msra.mxu0 0
      %3230 = vmatprep.mubr.bf16.mxu0 0
      %3231 = vmatmul.mubr.bf16.gmra.mrb[0].mxu0 %v3166
      %v3232 = vpop.f32.mrb[0].mxu0
      %v3233 = vadd.f32 0.0, %v3232
      %v3234 = vpop.f32.mrb[0].mxu0
      %v3235 = vpop.f32.mrb[0].mxu0
      %v3236 = vadd.f32 0.0, %v3235
      %v3237 = vpop.f32.mrb[0].mxu0
      %3238 = vmatprep.mubr.bf16.mxu0 0
      %3239 = vmatmul.mubr.bf16.gmra.mrb[0].mxu0 %v3169
      %v3240 = vpop.f32.mrb[0].mxu0
      %v3241 = vadd.f32 0.0, %v3240
      %v3242 = vpop.f32.mrb[0].mxu0
      %v3243 = vpop.f32.mrb[0].mxu0
      %v3244 = vadd.f32 0.0, %v3243
      %v3245 = vpop.f32.mrb[0].mxu0
      %3246 = vmatprep.mubr.bf16.mxu0 0
      %3247 = vmatmul.mubr.bf16.gmra.mrb[0].mxu0 %v3172
      %v3248 = vpop.f32.mrb[0].mxu0
      %v3249 = vadd.f32 0.0, %v3248
      %v3250 = vpop.f32.mrb[0].mxu0
      %v3251 = vpop.f32.mrb[0].mxu0
      %v3252 = vadd.f32 0.0, %v3251
      %v3253 = vpop.f32.mrb[0].mxu0
      %3254 = vmatprep.mubr.bf16.mxu0 0
      %3255 = vmatmul.mubr.bf16.gmra.mrb[0].mxu0 %v3175
      %v3256 = vpop.f32.mrb[0].mxu0
      %v3257 = vadd.f32 0.0, %v3256
      %v3258 = vpop.f32.mrb[0].mxu0
      %v3259 = vpop.f32.mrb[0].mxu0
      %v3260 = vadd.f32 0.0, %v3259
      %v3261 = vpop.f32.mrb[0].mxu0
      %3262 = vmatprep.mubr.bf16.mxu0 0
      %3263 = vmatmul.mubr.bf16.gmra.mrb[0].mxu0 %v3178
      %v3264 = vpop.f32.mrb[0].mxu0
      %v3265 = vadd.f32 0.0, %v3264
      %v3266 = vpop.f32.mrb[0].mxu0
      %v3267 = vpop.f32.mrb[0].mxu0
      %v3268 = vadd.f32 0.0, %v3267
      %v3269 = vpop.f32.mrb[0].mxu0
      %3270 = vmatprep.mubr.bf16.mxu0 0
      %3271 = vmatmul.mubr.bf16.gmra.mrb[0].mxu0 %v3181
      %v3272 = vpop.f32.mrb[0].mxu0
      %v3273 = vadd.f32 0.0, %v3272
      %v3274 = vpop.f32.mrb[0].mxu0
      %v3275 = vpop.f32.mrb[0].mxu0
      %v3276 = vadd.f32 0.0, %v3275
      %v3277 = vpop.f32.mrb[0].mxu0
      %3278 = vmatprep.mubr.bf16.mxu0 0
      %3279 = vmatmul.mubr.bf16.gmra.mrb[0].mxu0 %v3184
      %v3280 = vpop.f32.mrb[0].mxu0
      %v3281 = vadd.f32 0.0, %v3280
      %v3282 = vpop.f32.mrb[0].mxu0
      %v3283 = vpop.f32.mrb[0].mxu0
      %v3284 = vadd.f32 0.0, %v3283
      %v3285 = vpop.f32.mrb[0].mxu0
      %3286 = vmatprep.mubr.bf16.mxu0 0
      %3287 = vmatmul.mubr.bf16.gmra.mrb[0].mxu0 %v3187
      %v3288 = vpop.f32.mrb[0].mxu0
      %v3289 = vadd.f32 0.0, %v3288
      %v3290 = vpop.f32.mrb[0].mxu0
      %v3291 = vpop.f32.mrb[0].mxu0
      %v3292 = vadd.f32 0.0, %v3291
      %v3293 = vpop.f32.mrb[0].mxu0
      %3294 = vmatprep.mubr.bf16.mxu0 0
      %3295 = vmatmul.mubr.bf16.gmra.mrb[0].mxu0 %v3190
      %v3296 = vpop.f32.mrb[0].mxu0
      %v3297 = vadd.f32 0.0, %v3296
      %v3298 = vpop.f32.mrb[0].mxu0
      %v3299 = vpop.f32.mrb[0].mxu0
      %v3300 = vadd.f32 0.0, %v3299
      %v3301 = vpop.f32.mrb[0].mxu0
      %3302 = vmatprep.mubr.bf16.mxu0 0
      %3303 = vmatmul.mubr.bf16.gmra.mrb[0].mxu0 %v3193
      %v3304 = vpop.f32.mrb[0].mxu0
      %v3305 = vadd.f32 0.0, %v3304
      %v3306 = vpop.f32.mrb[0].mxu0
      %v3307 = vpop.f32.mrb[0].mxu0
      %v3308 = vadd.f32 0.0, %v3307
      %v3309 = vpop.f32.mrb[0].mxu0
      %3310 = vdwg.mxu0
      %v3311 = vld [vmem:[#allocation2 + $0x6] sm:$0xff]
      %v3312 = vld [vmem:[#allocation2 + $0xe] sm:$0x3]
      %v3313 = vld [vmem:[#allocation2 + $0x16] sm:$0xff]
      %v3314 = vld [vmem:[#allocation2 + $0x1e] sm:$0x3]
      %v3315 = vld [vmem:[#allocation2 + $0x26] sm:$0xff]
      %v3316 = vld [vmem:[#allocation2 + $0x2e] sm:$0x3]
      %v3317 = vld [vmem:[#allocation2 + $0x36] sm:$0xff]
      %v3318 = vld [vmem:[#allocation2 + $0x3e] sm:$0x3]
      %v3319 = vld [vmem:[#allocation2 + $0x46] sm:$0xff]
      %v3320 = vld [vmem:[#allocation2 + $0x4e] sm:$0x3]
      %v3321 = vld [vmem:[#allocation2 + $0x56] sm:$0xff]
      %v3322 = vld [vmem:[#allocation2 + $0x5e] sm:$0x3]
      %v3323 = vld [vmem:[#allocation2 + $0x66] sm:$0xff]
      %v3324 = vld [vmem:[#allocation2 + $0x6e] sm:$0x3]
      %v3325 = vld [vmem:[#allocation2 + $0x76] sm:$0xff]
      %v3326 = vld [vmem:[#allocation2 + $0x7e] sm:$0x3]
      %v3327 = vld [vmem:[#allocation2 + $0x86] sm:$0xff]
      %v3328 = vld [vmem:[#allocation2 + $0x8e] sm:$0x3]
      %v3329 = vld [vmem:[#allocation2 + $0x96] sm:$0xff]
      %v3330 = vld [vmem:[#allocation2 + $0x9e] sm:$0x3]
      %v3331 = vadd.f32 %v3311, %v3233
      %v3332 = vadd.f32 %v3312, %v3236
      %v3333 = vadd.f32 %v3313, %v3241
      %v3334 = vadd.f32 %v3314, %v3244
      %v3335 = vadd.f32 %v3315, %v3249
      %v3336 = vadd.f32 %v3316, %v3252
      %v3337 = vadd.f32 %v3317, %v3257
      %v3338 = vadd.f32 %v3318, %v3260
      %v3339 = vadd.f32 %v3319, %v3265
      %v3340 = vadd.f32 %v3320, %v3268
      %v3341 = vadd.f32 %v3321, %v3273
      %v3342 = vadd.f32 %v3322, %v3276
      %v3343 = vadd.f32 %v3323, %v3281
      %v3344 = vadd.f32 %v3324, %v3284
      %v3345 = vadd.f32 %v3325, %v3289
      %v3346 = vadd.f32 %v3326, %v3292
      %v3347 = vadd.f32 %v3327, %v3297
      %v3348 = vadd.f32 %v3328, %v3300
      %v3349 = vadd.f32 %v3329, %v3305
      %v3350 = vadd.f32 %v3330, %v3308
      %3351 = vst.msk [vmem:[#allocation2 + $0x6] sm:$0xff] %vm780, %v3331
      %3352 = vst.msk [vmem:[#allocation2 + $0xe] sm:$0x3] %vm1490, %v3332
      %3353 = vst.msk [vmem:[#allocation2 + $0x16] sm:$0xff] %vm780, %v3333
      %3354 = vst.msk [vmem:[#allocation2 + $0x1e] sm:$0x3] %vm1490, %v3334
      %3355 = vst.msk [vmem:[#allocation2 + $0x26] sm:$0xff] %vm780, %v3335
      %3356 = vst.msk [vmem:[#allocation2 + $0x2e] sm:$0x3] %vm1490, %v3336
      %3357 = vst.msk [vmem:[#allocation2 + $0x36] sm:$0xff] %vm780, %v3337
      %3358 = vst.msk [vmem:[#allocation2 + $0x3e] sm:$0x3] %vm1490, %v3338
      %3359 = vst.msk [vmem:[#allocation2 + $0x46] sm:$0xff] %vm780, %v3339
      %3360 = vst.msk [vmem:[#allocation2 + $0x4e] sm:$0x3] %vm1490, %v3340
      %3361 = vst.msk [vmem:[#allocation2 + $0x56] sm:$0xff] %vm780, %v3341
      %3362 = vst.msk [vmem:[#allocation2 + $0x5e] sm:$0x3] %vm1490, %v3342
      %3363 = vst.msk [vmem:[#allocation2 + $0x66] sm:$0xff] %vm780, %v3343
      %3364 = vst.msk [vmem:[#allocation2 + $0x6e] sm:$0x3] %vm1490, %v3344
      %3365 = vst.msk [vmem:[#allocation2 + $0x76] sm:$0xff] %vm780, %v3345
      %3366 = vst.msk [vmem:[#allocation2 + $0x7e] sm:$0x3] %vm1490, %v3346
      %3367 = vst.msk [vmem:[#allocation2 + $0x86] sm:$0xff] %vm780, %v3347
      %3368 = vst.msk [vmem:[#allocation2 + $0x8e] sm:$0x3] %vm1490, %v3348
      %3369 = vst.msk [vmem:[#allocation2 + $0x96] sm:$0xff] %vm780, %v3349
      %3370 = vst.msk [vmem:[#allocation2 + $0x9e] sm:$0x3] %vm1490, %v3350
      %v3371 = vld [vmem:[%s3092] sm:$0xf]
      %v3372 = vld [vmem:[%s3092 + $0x4] sm:$0xf]
      %v3373 = vld [vmem:[%s3092 + $0x8] sm:$0xf]
      %v3374 = vld [vmem:[%s3092 + $0xc] sm:$0xf]
      %v3375 = vld [vmem:[%s3092 + $0x10] sm:$0xf]
      %v3376 = vld [vmem:[%s3092 + $0x14] sm:$0xf]
      %v3377 = vld [vmem:[%s3092 + $0x18] sm:$0xf]
      %v3378 = vld [vmem:[%s3092 + $0x1c] sm:$0xf]
      %v3379 = vld [vmem:[%s3092 + $0x20] sm:$0xf]
      %v3380 = vld [vmem:[%s3092 + $0x24] sm:$0xf]
      %v3381 = vld [vmem:[%s3092 + $0x28] sm:$0xf]
      %v3382 = vld [vmem:[%s3092 + $0x2c] sm:$0xf]
      %v3383 = vld [vmem:[%s3092 + $0x30] sm:$0xf]
      %v3384 = vld [vmem:[%s3092 + $0x34] sm:$0xf]
      %v3385 = vld [vmem:[%s3092 + $0x38] sm:$0xf]
      %v3386 = vld [vmem:[%s3092 + $0x3c] sm:$0xf]
      %v3387 = vld [vmem:[%s3092 + $0x40] sm:$0xf]
      %v3388 = vld [vmem:[%s3092 + $0x44] sm:$0xf]
      %v3389 = vld [vmem:[%s3092 + $0x48] sm:$0xf]
      %v3390 = vld [vmem:[%s3092 + $0x4c] sm:$0xf]
      %s3391 = scalar_lea.vmem %s3, 14
      %v3392 = vld [vmem:[%s3391] sm:$0x3]
      %v3413 = vunpack.c.l.b16 %v3371
      %v3414 = vunpack.c.l.b16 %v3372
      %v3415 = vunpack.c.l.b16 %v3373
      %v3416 = vunpack.c.l.b16 %v3374
      %v3417 = vunpack.c.l.b16 %v3375
      %v3418 = vunpack.c.l.b16 %v3376
      %v3419 = vunpack.c.l.b16 %v3377
      %v3420 = vunpack.c.l.b16 %v3378
      %v3421 = vunpack.c.l.b16 %v3379
      %v3422 = vunpack.c.l.b16 %v3380
      %v3423 = vunpack.c.l.b16 %v3381
      %v3424 = vunpack.c.l.b16 %v3382
      %v3425 = vunpack.c.l.b16 %v3383
      %v3426 = vunpack.c.l.b16 %v3384
      %v3427 = vunpack.c.l.b16 %v3385
      %v3428 = vunpack.c.l.b16 %v3386
      %v3429 = vunpack.c.l.b16 %v3387
      %v3430 = vunpack.c.l.b16 %v3388
      %v3431 = vunpack.c.l.b16 %v3389
      %v3432 = vunpack.c.l.b16 %v3390
      %v3433 = vpack.c.b16 %v3414, %v3413
      %v3434 = vpack.c.b16 %v3416, %v3415
      %v3435 = vpack.c.b16 %v3418, %v3417
      %v3436 = vpack.c.b16 %v3420, %v3419
      %v3437 = vpack.c.b16 %v3422, %v3421
      %v3438 = vpack.c.b16 %v3424, %v3423
      %v3439 = vpack.c.b16 %v3426, %v3425
      %v3440 = vpack.c.b16 %v3428, %v3427
      %v3441 = vpack.c.b16 %v3430, %v3429
      %v3442 = vpack.c.b16 %v3432, %v3431
      %v3444 = vsel %vm517, %v3433, 0
      %v3447 = vsel %vm517, %v3434, 0
      %v3450 = vsel %vm517, %v3435, 0
      %v3453 = vsel %vm517, %v3436, 0
      %v3456 = vsel %vm517, %v3437, 0
      %v3459 = vsel %vm517, %v3438, 0
      %v3462 = vsel %vm517, %v3439, 0
      %v3465 = vsel %vm517, %v3440, 0
      %v3468 = vsel %vm517, %v3441, 0
      %v3471 = vsel %vm517, %v3442, 0
      %v3474 = vsel %vm566, %v3392, 0
      %3476 = vmatprep.subr.bf16.mxu0 0
      %3477 = vmatpush1.bf16.msra.mxu0 %v3474
      %3478 = vmatprep.subr.bf16.mxu0 0
      %3479 = vmatpush1.bf16.msra.mxu0 0
      %3480 = vmatprep.subr.bf16.mxu0 0
      %3481 = vmatpush1.bf16.msra.mxu0 0
      %3482 = vmatprep.subr.bf16.mxu0 0
      %3483 = vmatpush1.bf16.msra.mxu0 0
      %3484 = vmatprep.subr.bf16.mxu0 0
      %3485 = vmatpush1.bf16.msra.mxu0 0
      %3486 = vmatprep.subr.bf16.mxu0 0
      %3487 = vmatpush1.bf16.msra.mxu0 0
      %3488 = vmatprep.subr.bf16.mxu0 0
      %3489 = vmatpush1.bf16.msra.mxu0 0
      %3490 = vmatprep.subr.bf16.mxu0 0
      %3491 = vmatpush1.bf16.msra.mxu0 0
      %3492 = vmatprep.subr.bf16.mxu0 0
      %3493 = vmatpush1.bf16.msra.mxu0 0
      %3494 = vmatprep.subr.bf16.mxu0 0
      %3495 = vmatpush1.bf16.msra.mxu0 0
      %3496 = vmatprep.subr.bf16.mxu0 0
      %3497 = vmatpush1.bf16.msra.mxu0 0
      %3498 = vmatprep.subr.bf16.mxu0 0
      %3499 = vmatpush1.bf16.msra.mxu0 0
      %3500 = vmatprep.subr.bf16.mxu0 0
      %3501 = vmatpush1.bf16.msra.mxu0 0
      %3502 = vmatprep.subr.bf16.mxu0 0
      %3503 = vmatpush1.bf16.msra.mxu0 0
      %3504 = vmatprep.subr.bf16.mxu0 0
      %3505 = vmatpush1.bf16.msra.mxu0 0
      %3506 = vmatprep.subr.bf16.mxu0 0
      %3507 = vmatpush1.bf16.msra.mxu0 0
      %3508 = vmatprep.mubr.bf16.mxu0 0
      %3509 = vmatmul.mubr.bf16.gmra.mrb[0].mxu0 %v3444
      %v3510 = vpop.f32.mrb[0].mxu0
      %v3511 = vadd.f32 0.0, %v3510
      %v3512 = vpop.f32.mrb[0].mxu0
      %v3513 = vpop.f32.mrb[0].mxu0
      %v3514 = vadd.f32 0.0, %v3513
      %v3515 = vpop.f32.mrb[0].mxu0
      %3516 = vmatprep.mubr.bf16.mxu0 0
      %3517 = vmatmul.mubr.bf16.gmra.mrb[0].mxu0 %v3447
      %v3518 = vpop.f32.mrb[0].mxu0
      %v3519 = vadd.f32 0.0, %v3518
      %v3520 = vpop.f32.mrb[0].mxu0
      %v3521 = vpop.f32.mrb[0].mxu0
      %v3522 = vadd.f32 0.0, %v3521
      %v3523 = vpop.f32.mrb[0].mxu0
      %3524 = vmatprep.mubr.bf16.mxu0 0
      %3525 = vmatmul.mubr.bf16.gmra.mrb[0].mxu0 %v3450
      %v3526 = vpop.f32.mrb[0].mxu0
      %v3527 = vadd.f32 0.0, %v3526
      %v3528 = vpop.f32.mrb[0].mxu0
      %v3529 = vpop.f32.mrb[0].mxu0
      %v3530 = vadd.f32 0.0, %v3529
      %v3531 = vpop.f32.mrb[0].mxu0
      %3532 = vmatprep.mubr.bf16.mxu0 0
      %3533 = vmatmul.mubr.bf16.gmra.mrb[0].mxu0 %v3453
      %v3534 = vpop.f32.mrb[0].mxu0
      %v3535 = vadd.f32 0.0, %v3534
      %v3536 = vpop.f32.mrb[0].mxu0
      %v3537 = vpop.f32.mrb[0].mxu0
      %v3538 = vadd.f32 0.0, %v3537
      %v3539 = vpop.f32.mrb[0].mxu0
      %3540 = vmatprep.mubr.bf16.mxu0 0
      %3541 = vmatmul.mubr.bf16.gmra.mrb[0].mxu0 %v3456
      %v3542 = vpop.f32.mrb[0].mxu0
      %v3543 = vadd.f32 0.0, %v3542
      %v3544 = vpop.f32.mrb[0].mxu0
      %v3545 = vpop.f32.mrb[0].mxu0
      %v3546 = vadd.f32 0.0, %v3545
      %v3547 = vpop.f32.mrb[0].mxu0
      %3548 = vmatprep.mubr.bf16.mxu0 0
      %3549 = vmatmul.mubr.bf16.gmra.mrb[0].mxu0 %v3459
      %v3550 = vpop.f32.mrb[0].mxu0
      %v3551 = vadd.f32 0.0, %v3550
      %v3552 = vpop.f32.mrb[0].mxu0
      %v3553 = vpop.f32.mrb[0].mxu0
      %v3554 = vadd.f32 0.0, %v3553
      %v3555 = vpop.f32.mrb[0].mxu0
      %3556 = vmatprep.mubr.bf16.mxu0 0
      %3557 = vmatmul.mubr.bf16.gmra.mrb[0].mxu0 %v3462
      %v3558 = vpop.f32.mrb[0].mxu0
      %v3559 = vadd.f32 0.0, %v3558
      %v3560 = vpop.f32.mrb[0].mxu0
      %v3561 = vpop.f32.mrb[0].mxu0
      %v3562 = vadd.f32 0.0, %v3561
      %v3563 = vpop.f32.mrb[0].mxu0
      %3564 = vmatprep.mubr.bf16.mxu0 0
      %3565 = vmatmul.mubr.bf16.gmra.mrb[0].mxu0 %v3465
      %v3566 = vpop.f32.mrb[0].mxu0
      %v3567 = vadd.f32 0.0, %v3566
      %v3568 = vpop.f32.mrb[0].mxu0
      %v3569 = vpop.f32.mrb[0].mxu0
      %v3570 = vadd.f32 0.0, %v3569
      %v3571 = vpop.f32.mrb[0].mxu0
      %3572 = vmatprep.mubr.bf16.mxu0 0
      %3573 = vmatmul.mubr.bf16.gmra.mrb[0].mxu0 %v3468
      %v3574 = vpop.f32.mrb[0].mxu0
      %v3575 = vadd.f32 0.0, %v3574
      %v3576 = vpop.f32.mrb[0].mxu0
      %v3577 = vpop.f32.mrb[0].mxu0
      %v3578 = vadd.f32 0.0, %v3577
      %v3579 = vpop.f32.mrb[0].mxu0
      %3580 = vmatprep.mubr.bf16.mxu0 0
      %3581 = vmatmul.mubr.bf16.gmra.mrb[0].mxu0 %v3471
      %v3582 = vpop.f32.mrb[0].mxu0
      %v3583 = vadd.f32 0.0, %v3582
      %v3584 = vpop.f32.mrb[0].mxu0
      %v3585 = vpop.f32.mrb[0].mxu0
      %v3586 = vadd.f32 0.0, %v3585
      %v3587 = vpop.f32.mrb[0].mxu0
      %3588 = vdwg.mxu0
      %v3589 = vld [vmem:[#allocation2] sm:$0xff]
      %v3590 = vld [vmem:[#allocation2 + $0x8] sm:$0xff]
      %v3591 = vld [vmem:[#allocation2 + $0x10] sm:$0xff]
      %v3592 = vld [vmem:[#allocation2 + $0x18] sm:$0xff]
      %v3593 = vld [vmem:[#allocation2 + $0x20] sm:$0xff]
      %v3594 = vld [vmem:[#allocation2 + $0x28] sm:$0xff]
      %v3595 = vld [vmem:[#allocation2 + $0x30] sm:$0xff]
      %v3596 = vld [vmem:[#allocation2 + $0x38] sm:$0xff]
      %v3597 = vld [vmem:[#allocation2 + $0x40] sm:$0xff]
      %v3598 = vld [vmem:[#allocation2 + $0x48] sm:$0xff]
      %v3599 = vld [vmem:[#allocation2 + $0x50] sm:$0xff]
      %v3600 = vld [vmem:[#allocation2 + $0x58] sm:$0xff]
      %v3601 = vld [vmem:[#allocation2 + $0x60] sm:$0xff]
      %v3602 = vld [vmem:[#allocation2 + $0x68] sm:$0xff]
      %v3603 = vld [vmem:[#allocation2 + $0x70] sm:$0xff]
      %v3604 = vld [vmem:[#allocation2 + $0x78] sm:$0xff]
      %v3605 = vld [vmem:[#allocation2 + $0x80] sm:$0xff]
      %v3606 = vld [vmem:[#allocation2 + $0x88] sm:$0xff]
      %v3607 = vld [vmem:[#allocation2 + $0x90] sm:$0xff]
      %v3608 = vld [vmem:[#allocation2 + $0x98] sm:$0xff]
      %v3609 = vadd.f32 %v3589, %v3511
      %v3610 = vadd.f32 %v3590, %v3514
      %v3611 = vadd.f32 %v3591, %v3519
      %v3612 = vadd.f32 %v3592, %v3522
      %v3613 = vadd.f32 %v3593, %v3527
      %v3614 = vadd.f32 %v3594, %v3530
      %v3615 = vadd.f32 %v3595, %v3535
      %v3616 = vadd.f32 %v3596, %v3538
      %v3617 = vadd.f32 %v3597, %v3543
      %v3618 = vadd.f32 %v3598, %v3546
      %v3619 = vadd.f32 %v3599, %v3551
      %v3620 = vadd.f32 %v3600, %v3554
      %v3621 = vadd.f32 %v3601, %v3559
      %v3622 = vadd.f32 %v3602, %v3562
      %v3623 = vadd.f32 %v3603, %v3567
      %v3624 = vadd.f32 %v3604, %v3570
      %v3625 = vadd.f32 %v3605, %v3575
      %v3626 = vadd.f32 %v3606, %v3578
      %v3627 = vadd.f32 %v3607, %v3583
      %v3628 = vadd.f32 %v3608, %v3586
      %3629 = vst.msk [vmem:[#allocation2] sm:$0xff] %vm780, %v3609
      %3630 = vst.msk [vmem:[#allocation2 + $0x8] sm:$0xff] %vm780, %v3610
      %3631 = vst.msk [vmem:[#allocation2 + $0x10] sm:$0xff] %vm780, %v3611
      %3632 = vst.msk [vmem:[#allocation2 + $0x18] sm:$0xff] %vm780, %v3612
      %3633 = vst.msk [vmem:[#allocation2 + $0x20] sm:$0xff] %vm780, %v3613
      %3634 = vst.msk [vmem:[#allocation2 + $0x28] sm:$0xff] %vm780, %v3614
      %3635 = vst.msk [vmem:[#allocation2 + $0x30] sm:$0xff] %vm780, %v3615
      %3636 = vst.msk [vmem:[#allocation2 + $0x38] sm:$0xff] %vm780, %v3616
      %3637 = vst.msk [vmem:[#allocation2 + $0x40] sm:$0xff] %vm780, %v3617
      %3638 = vst.msk [vmem:[#allocation2 + $0x48] sm:$0xff] %vm780, %v3618
      %3639 = vst.msk [vmem:[#allocation2 + $0x50] sm:$0xff] %vm780, %v3619
      %3640 = vst.msk [vmem:[#allocation2 + $0x58] sm:$0xff] %vm780, %v3620
      %3641 = vst.msk [vmem:[#allocation2 + $0x60] sm:$0xff] %vm780, %v3621
      %3642 = vst.msk [vmem:[#allocation2 + $0x68] sm:$0xff] %vm780, %v3622
      %3643 = vst.msk [vmem:[#allocation2 + $0x70] sm:$0xff] %vm780, %v3623
      %3644 = vst.msk [vmem:[#allocation2 + $0x78] sm:$0xff] %vm780, %v3624
      %3645 = vst.msk [vmem:[#allocation2 + $0x80] sm:$0xff] %vm780, %v3625
      %3646 = vst.msk [vmem:[#allocation2 + $0x88] sm:$0xff] %vm780, %v3626
      %3647 = vst.msk [vmem:[#allocation2 + $0x90] sm:$0xff] %vm780, %v3627
      %3648 = vst.msk [vmem:[#allocation2 + $0x98] sm:$0xff] %vm780, %v3628
      %v3649 = vld [vmem:[%s3092] sm:$0xf]
      %v3650 = vld [vmem:[%s3092 + $0x4] sm:$0xf]
      %v3651 = vld [vmem:[%s3092 + $0x8] sm:$0xf]
      %v3652 = vld [vmem:[%s3092 + $0xc] sm:$0xf]
      %v3653 = vld [vmem:[%s3092 + $0x10] sm:$0xf]
      %v3654 = vld [vmem:[%s3092 + $0x14] sm:$0xf]
      %v3655 = vld [vmem:[%s3092 + $0x18] sm:$0xf]
      %v3656 = vld [vmem:[%s3092 + $0x1c] sm:$0xf]
      %v3657 = vld [vmem:[%s3092 + $0x20] sm:$0xf]
      %v3658 = vld [vmem:[%s3092 + $0x24] sm:$0xf]
      %v3659 = vld [vmem:[%s3092 + $0x28] sm:$0xf]
      %v3660 = vld [vmem:[%s3092 + $0x2c] sm:$0xf]
      %v3661 = vld [vmem:[%s3092 + $0x30] sm:$0xf]
      %v3662 = vld [vmem:[%s3092 + $0x34] sm:$0xf]
      %v3663 = vld [vmem:[%s3092 + $0x38] sm:$0xf]
      %v3664 = vld [vmem:[%s3092 + $0x3c] sm:$0xf]
      %v3665 = vld [vmem:[%s3092 + $0x40] sm:$0xf]
      %v3666 = vld [vmem:[%s3092 + $0x44] sm:$0xf]
      %v3667 = vld [vmem:[%s3092 + $0x48] sm:$0xf]
      %v3668 = vld [vmem:[%s3092 + $0x4c] sm:$0xf]
      %s3669 = scalar_lea.vmem %s3, 16
      %v3670 = vld [vmem:[%s3669] sm:$0x3]
      %v3691 = vunpack.c.l.b16 %v3649
      %v3692 = vunpack.c.l.b16 %v3650
      %v3693 = vunpack.c.l.b16 %v3651
      %v3694 = vunpack.c.l.b16 %v3652
      %v3695 = vunpack.c.l.b16 %v3653
      %v3696 = vunpack.c.l.b16 %v3654
      %v3697 = vunpack.c.l.b16 %v3655
      %v3698 = vunpack.c.l.b16 %v3656
      %v3699 = vunpack.c.l.b16 %v3657
      %v3700 = vunpack.c.l.b16 %v3658
      %v3701 = vunpack.c.l.b16 %v3659
      %v3702 = vunpack.c.l.b16 %v3660
      %v3703 = vunpack.c.l.b16 %v3661
      %v3704 = vunpack.c.l.b16 %v3662
      %v3705 = vunpack.c.l.b16 %v3663
      %v3706 = vunpack.c.l.b16 %v3664
      %v3707 = vunpack.c.l.b16 %v3665
      %v3708 = vunpack.c.l.b16 %v3666
      %v3709 = vunpack.c.l.b16 %v3667
      %v3710 = vunpack.c.l.b16 %v3668
      %v3711 = vpack.c.b16 %v3692, %v3691
      %v3712 = vpack.c.b16 %v3694, %v3693
      %v3713 = vpack.c.b16 %v3696, %v3695
      %v3714 = vpack.c.b16 %v3698, %v3697
      %v3715 = vpack.c.b16 %v3700, %v3699
      %v3716 = vpack.c.b16 %v3702, %v3701
      %v3717 = vpack.c.b16 %v3704, %v3703
      %v3718 = vpack.c.b16 %v3706, %v3705
      %v3719 = vpack.c.b16 %v3708, %v3707
      %v3720 = vpack.c.b16 %v3710, %v3709
      %v3722 = vsel %vm517, %v3711, 0
      %v3725 = vsel %vm517, %v3712, 0
      %v3728 = vsel %vm517, %v3713, 0
      %v3731 = vsel %vm517, %v3714, 0
      %v3734 = vsel %vm517, %v3715, 0
      %v3737 = vsel %vm517, %v3716, 0
      %v3740 = vsel %vm517, %v3717, 0
      %v3743 = vsel %vm517, %v3718, 0
      %v3746 = vsel %vm517, %v3719, 0
      %v3749 = vsel %vm517, %v3720, 0
      %v3752 = vsel %vm566, %v3670, 0
      %3754 = vmatprep.subr.bf16.mxu0 0
      %3755 = vmatpush1.bf16.msra.mxu0 %v3752
      %3756 = vmatprep.subr.bf16.mxu0 0
      %3757 = vmatpush1.bf16.msra.mxu0 0
      %3758 = vmatprep.subr.bf16.mxu0 0
      %3759 = vmatpush1.bf16.msra.mxu0 0
      %3760 = vmatprep.subr.bf16.mxu0 0
      %3761 = vmatpush1.bf16.msra.mxu0 0
      %3762 = vmatprep.subr.bf16.mxu0 0
      %3763 = vmatpush1.bf16.msra.mxu0 0
      %3764 = vmatprep.subr.bf16.mxu0 0
      %3765 = vmatpush1.bf16.msra.mxu0 0
      %3766 = vmatprep.subr.bf16.mxu0 0
      %3767 = vmatpush1.bf16.msra.mxu0 0
      %3768 = vmatprep.subr.bf16.mxu0 0
      %3769 = vmatpush1.bf16.msra.mxu0 0
      %3770 = vmatprep.subr.bf16.mxu0 0
      %3771 = vmatpush1.bf16.msra.mxu0 0
      %3772 = vmatprep.subr.bf16.mxu0 0
      %3773 = vmatpush1.bf16.msra.mxu0 0
      %3774 = vmatprep.subr.bf16.mxu0 0
      %3775 = vmatpush1.bf16.msra.mxu0 0
      %3776 = vmatprep.subr.bf16.mxu0 0
      %3777 = vmatpush1.bf16.msra.mxu0 0
      %3778 = vmatprep.subr.bf16.mxu0 0
      %3779 = vmatpush1.bf16.msra.mxu0 0
      %3780 = vmatprep.subr.bf16.mxu0 0
      %3781 = vmatpush1.bf16.msra.mxu0 0
      %3782 = vmatprep.subr.bf16.mxu0 0
      %3783 = vmatpush1.bf16.msra.mxu0 0
      %3784 = vmatprep.subr.bf16.mxu0 0
      %3785 = vmatpush1.bf16.msra.mxu0 0
      %3786 = vmatprep.mubr.bf16.mxu0 0
      %3787 = vmatmul.mubr.bf16.gmra.mrb[0].mxu0 %v3722
      %v3788 = vpop.f32.mrb[0].mxu0
      %v3789 = vadd.f32 0.0, %v3788
      %v3790 = vpop.f32.mrb[0].mxu0
      %v3791 = vpop.f32.mrb[0].mxu0
      %v3792 = vadd.f32 0.0, %v3791
      %v3793 = vpop.f32.mrb[0].mxu0
      %3794 = vmatprep.mubr.bf16.mxu0 0
      %3795 = vmatmul.mubr.bf16.gmra.mrb[0].mxu0 %v3725
      %v3796 = vpop.f32.mrb[0].mxu0
      %v3797 = vadd.f32 0.0, %v3796
      %v3798 = vpop.f32.mrb[0].mxu0
      %v3799 = vpop.f32.mrb[0].mxu0
      %v3800 = vadd.f32 0.0, %v3799
      %v3801 = vpop.f32.mrb[0].mxu0
      %3802 = vmatprep.mubr.bf16.mxu0 0
      %3803 = vmatmul.mubr.bf16.gmra.mrb[0].mxu0 %v3728
      %v3804 = vpop.f32.mrb[0].mxu0
      %v3805 = vadd.f32 0.0, %v3804
      %v3806 = vpop.f32.mrb[0].mxu0
      %v3807 = vpop.f32.mrb[0].mxu0
      %v3808 = vadd.f32 0.0, %v3807
      %v3809 = vpop.f32.mrb[0].mxu0
      %3810 = vmatprep.mubr.bf16.mxu0 0
      %3811 = vmatmul.mubr.bf16.gmra.mrb[0].mxu0 %v3731
      %v3812 = vpop.f32.mrb[0].mxu0
      %v3813 = vadd.f32 0.0, %v3812
      %v3814 = vpop.f32.mrb[0].mxu0
      %v3815 = vpop.f32.mrb[0].mxu0
      %v3816 = vadd.f32 0.0, %v3815
      %v3817 = vpop.f32.mrb[0].mxu0
      %3818 = vmatprep.mubr.bf16.mxu0 0
      %3819 = vmatmul.mubr.bf16.gmra.mrb[0].mxu0 %v3734
      %v3820 = vpop.f32.mrb[0].mxu0
      %v3821 = vadd.f32 0.0, %v3820
      %v3822 = vpop.f32.mrb[0].mxu0
      %v3823 = vpop.f32.mrb[0].mxu0
      %v3824 = vadd.f32 0.0, %v3823
      %v3825 = vpop.f32.mrb[0].mxu0
      %3826 = vmatprep.mubr.bf16.mxu0 0
      %3827 = vmatmul.mubr.bf16.gmra.mrb[0].mxu0 %v3737
      %v3828 = vpop.f32.mrb[0].mxu0
      %v3829 = vadd.f32 0.0, %v3828
      %v3830 = vpop.f32.mrb[0].mxu0
      %v3831 = vpop.f32.mrb[0].mxu0
      %v3832 = vadd.f32 0.0, %v3831
      %v3833 = vpop.f32.mrb[0].mxu0
      %3834 = vmatprep.mubr.bf16.mxu0 0
      %3835 = vmatmul.mubr.bf16.gmra.mrb[0].mxu0 %v3740
      %v3836 = vpop.f32.mrb[0].mxu0
      %v3837 = vadd.f32 0.0, %v3836
      %v3838 = vpop.f32.mrb[0].mxu0
      %v3839 = vpop.f32.mrb[0].mxu0
      %v3840 = vadd.f32 0.0, %v3839
      %v3841 = vpop.f32.mrb[0].mxu0
      %3842 = vmatprep.mubr.bf16.mxu0 0
      %3843 = vmatmul.mubr.bf16.gmra.mrb[0].mxu0 %v3743
      %v3844 = vpop.f32.mrb[0].mxu0
      %v3845 = vadd.f32 0.0, %v3844
      %v3846 = vpop.f32.mrb[0].mxu0
      %v3847 = vpop.f32.mrb[0].mxu0
      %v3848 = vadd.f32 0.0, %v3847
      %v3849 = vpop.f32.mrb[0].mxu0
      %3850 = vmatprep.mubr.bf16.mxu0 0
      %3851 = vmatmul.mubr.bf16.gmra.mrb[0].mxu0 %v3746
      %v3852 = vpop.f32.mrb[0].mxu0
      %v3853 = vadd.f32 0.0, %v3852
      %v3854 = vpop.f32.mrb[0].mxu0
      %v3855 = vpop.f32.mrb[0].mxu0
      %v3856 = vadd.f32 0.0, %v3855
      %v3857 = vpop.f32.mrb[0].mxu0
      %3858 = vmatprep.mubr.bf16.mxu0 0
      %3859 = vmatmul.mubr.bf16.gmra.mrb[0].mxu0 %v3749
      %v3860 = vpop.f32.mrb[0].mxu0
      %v3861 = vadd.f32 0.0, %v3860
      %v3862 = vpop.f32.mrb[0].mxu0
      %v3863 = vpop.f32.mrb[0].mxu0
      %v3864 = vadd.f32 0.0, %v3863
      %v3865 = vpop.f32.mrb[0].mxu0
      %3866 = vdwg.mxu0
      %v3867 = vld [vmem:[#allocation2] sm:$0xff]
      %v3868 = vld [vmem:[#allocation2 + $0x8] sm:$0x3]
      %v3869 = vld [vmem:[#allocation2 + $0x10] sm:$0xff]
      %v3870 = vld [vmem:[#allocation2 + $0x18] sm:$0x3]
      %v3871 = vld [vmem:[#allocation2 + $0x20] sm:$0xff]
      %v3872 = vld [vmem:[#allocation2 + $0x28] sm:$0x3]
      %v3873 = vld [vmem:[#allocation2 + $0x30] sm:$0xff]
      %v3874 = vld [vmem:[#allocation2 + $0x38] sm:$0x3]
      %v3875 = vld [vmem:[#allocation2 + $0x40] sm:$0xff]
      %v3876 = vld [vmem:[#allocation2 + $0x48] sm:$0x3]
      %v3877 = vld [vmem:[#allocation2 + $0x50] sm:$0xff]
      %v3878 = vld [vmem:[#allocation2 + $0x58] sm:$0x3]
      %v3879 = vld [vmem:[#allocation2 + $0x60] sm:$0xff]
      %v3880 = vld [vmem:[#allocation2 + $0x68] sm:$0x3]
      %v3881 = vld [vmem:[#allocation2 + $0x70] sm:$0xff]
      %v3882 = vld [vmem:[#allocation2 + $0x78] sm:$0x3]
      %v3883 = vld [vmem:[#allocation2 + $0x80] sm:$0xff]
      %v3884 = vld [vmem:[#allocation2 + $0x88] sm:$0x3]
      %v3885 = vld [vmem:[#allocation2 + $0x90] sm:$0xff]
      %v3886 = vld [vmem:[#allocation2 + $0x98] sm:$0x3]
      %v3907 = vrot.slane %v3789, 6
      %v3908 = vrot.slane %v3792, 6
      %v3909 = vsel %vm566, %v3907, %v3908
      %v3910 = vrot.slane %v3797, 6
      %v3911 = vrot.slane %v3800, 6
      %v3912 = vsel %vm566, %v3910, %v3911
      %v3913 = vrot.slane %v3805, 6
      %v3914 = vrot.slane %v3808, 6
      %v3915 = vsel %vm566, %v3913, %v3914
      %v3916 = vrot.slane %v3813, 6
      %v3917 = vrot.slane %v3816, 6
      %v3918 = vsel %vm566, %v3916, %v3917
      %v3919 = vrot.slane %v3821, 6
      %v3920 = vrot.slane %v3824, 6
      %v3921 = vsel %vm566, %v3919, %v3920
      %v3922 = vrot.slane %v3829, 6
      %v3923 = vrot.slane %v3832, 6
      %v3924 = vsel %vm566, %v3922, %v3923
      %v3925 = vrot.slane %v3837, 6
      %v3926 = vrot.slane %v3840, 6
      %v3927 = vsel %vm566, %v3925, %v3926
      %v3928 = vrot.slane %v3845, 6
      %v3929 = vrot.slane %v3848, 6
      %v3930 = vsel %vm566, %v3928, %v3929
      %v3931 = vrot.slane %v3853, 6
      %v3932 = vrot.slane %v3856, 6
      %v3933 = vsel %vm566, %v3931, %v3932
      %v3934 = vrot.slane %v3861, 6
      %v3935 = vrot.slane %v3864, 6
      %v3936 = vsel %vm566, %v3934, %v3935
      %v3957 = vadd.f32 %v3867, %v3909
      %v3958 = vadd.f32 %v3868, %v3908
      %v3959 = vadd.f32 %v3869, %v3912
      %v3960 = vadd.f32 %v3870, %v3911
      %v3961 = vadd.f32 %v3871, %v3915
      %v3962 = vadd.f32 %v3872, %v3914
      %v3963 = vadd.f32 %v3873, %v3918
      %v3964 = vadd.f32 %v3874, %v3917
      %v3965 = vadd.f32 %v3875, %v3921
      %v3966 = vadd.f32 %v3876, %v3920
      %v3967 = vadd.f32 %v3877, %v3924
      %v3968 = vadd.f32 %v3878, %v3923
      %v3969 = vadd.f32 %v3879, %v3927
      %v3970 = vadd.f32 %v3880, %v3926
      %v3971 = vadd.f32 %v3881, %v3930
      %v3972 = vadd.f32 %v3882, %v3929
      %v3973 = vadd.f32 %v3883, %v3933
      %v3974 = vadd.f32 %v3884, %v3932
      %v3975 = vadd.f32 %v3885, %v3936
      %v3976 = vadd.f32 %v3886, %v3935
      %3977 = vst.msk [vmem:[#allocation2] sm:$0xff] %vm780, %v3957
      %3978 = vst.msk [vmem:[#allocation2 + $0x8] sm:$0x3] %vm1490, %v3958
      %3979 = vst.msk [vmem:[#allocation2 + $0x10] sm:$0xff] %vm780, %v3959
      %3980 = vst.msk [vmem:[#allocation2 + $0x18] sm:$0x3] %vm1490, %v3960
      %3981 = vst.msk [vmem:[#allocation2 + $0x20] sm:$0xff] %vm780, %v3961
      %3982 = vst.msk [vmem:[#allocation2 + $0x28] sm:$0x3] %vm1490, %v3962
      %3983 = vst.msk [vmem:[#allocation2 + $0x30] sm:$0xff] %vm780, %v3963
      %3984 = vst.msk [vmem:[#allocation2 + $0x38] sm:$0x3] %vm1490, %v3964
      %3985 = vst.msk [vmem:[#allocation2 + $0x40] sm:$0xff] %vm780, %v3965
      %3986 = vst.msk [vmem:[#allocation2 + $0x48] sm:$0x3] %vm1490, %v3966
      %3987 = vst.msk [vmem:[#allocation2 + $0x50] sm:$0xff] %vm780, %v3967
      %3988 = vst.msk [vmem:[#allocation2 + $0x58] sm:$0x3] %vm1490, %v3968
      %3989 = vst.msk [vmem:[#allocation2 + $0x60] sm:$0xff] %vm780, %v3969
      %3990 = vst.msk [vmem:[#allocation2 + $0x68] sm:$0x3] %vm1490, %v3970
      %3991 = vst.msk [vmem:[#allocation2 + $0x70] sm:$0xff] %vm780, %v3971
      %3992 = vst.msk [vmem:[#allocation2 + $0x78] sm:$0x3] %vm1490, %v3972
      %3993 = vst.msk [vmem:[#allocation2 + $0x80] sm:$0xff] %vm780, %v3973
      %3994 = vst.msk [vmem:[#allocation2 + $0x88] sm:$0x3] %vm1490, %v3974
      %3995 = vst.msk [vmem:[#allocation2 + $0x90] sm:$0xff] %vm780, %v3975
      %3996 = vst.msk [vmem:[#allocation2 + $0x98] sm:$0x3] %vm1490, %v3976
      %v3997 = vld [vmem:[#allocation2] sm:$0xff]
      %v3998 = vld [vmem:[#allocation2 + $0x8] sm:$0xff]
      %v3999 = vld [vmem:[#allocation2 + $0x10] sm:$0xff]
      %v4000 = vld [vmem:[#allocation2 + $0x18] sm:$0xff]
      %v4001 = vld [vmem:[#allocation2 + $0x20] sm:$0xff]
      %v4002 = vld [vmem:[#allocation2 + $0x28] sm:$0xff]
      %v4003 = vld [vmem:[#allocation2 + $0x30] sm:$0xff]
      %v4004 = vld [vmem:[#allocation2 + $0x38] sm:$0xff]
      %v4005 = vld [vmem:[#allocation2 + $0x40] sm:$0xff]
      %v4006 = vld [vmem:[#allocation2 + $0x48] sm:$0xff]
      %v4007 = vld [vmem:[#allocation2 + $0x50] sm:$0xff]
      %v4008 = vld [vmem:[#allocation2 + $0x58] sm:$0xff]
      %v4009 = vld [vmem:[#allocation2 + $0x60] sm:$0xff]
      %v4010 = vld [vmem:[#allocation2 + $0x68] sm:$0xff]
      %v4011 = vld [vmem:[#allocation2 + $0x70] sm:$0xff]
      %v4012 = vld [vmem:[#allocation2 + $0x78] sm:$0xff]
      %v4013 = vld [vmem:[#allocation2 + $0x80] sm:$0xff]
      %v4014 = vld [vmem:[#allocation2 + $0x88] sm:$0xff]
      %v4015 = vld [vmem:[#allocation2 + $0x90] sm:$0xff]
      %v4016 = vld [vmem:[#allocation2 + $0x98] sm:$0xff]
      %v4017 = vld [vmem:[#allocation2 + $0xa0] sm:$0xff]
      %v4018 = vld [vmem:[#allocation2 + $0xa8] sm:$0xff]
      %v4019 = vld [vmem:[#allocation2 + $0xb0] sm:$0xff]
      %v4020 = vld [vmem:[#allocation2 + $0xb8] sm:$0xff]
      %v4021 = vld [vmem:[#allocation2 + $0xc0] sm:$0xff]
      %v4022 = vld [vmem:[#allocation2 + $0xc8] sm:$0xff]
      %v4023 = vld [vmem:[#allocation2 + $0xd0] sm:$0xff]
      %v4024 = vld [vmem:[#allocation2 + $0xd8] sm:$0xff]
      %v4025 = vld [vmem:[#allocation2 + $0xe0] sm:$0xff]
      %v4026 = vld [vmem:[#allocation2 + $0xe8] sm:$0xff]
      %v4027 = vld [vmem:[#allocation2 + $0xf0] sm:$0xff]
      %v4028 = vld [vmem:[#allocation2 + $0xf8] sm:$0xff]
      %v4029 = vmax.f32 %v3997, 0.0
      %v4030 = vmax.f32 %v3998, 0.0
      %v4031 = vmax.f32 %v3999, 0.0
      %v4032 = vmax.f32 %v4000, 0.0
      %v4033 = vmax.f32 %v4001, 0.0
      %v4034 = vmax.f32 %v4002, 0.0
      %v4035 = vmax.f32 %v4003, 0.0
      %v4036 = vmax.f32 %v4004, 0.0
      %v4037 = vmax.f32 %v4005, 0.0
      %v4038 = vmax.f32 %v4006, 0.0
      %v4039 = vmax.f32 %v4007, 0.0
      %v4040 = vmax.f32 %v4008, 0.0
      %v4041 = vmax.f32 %v4009, 0.0
      %v4042 = vmax.f32 %v4010, 0.0
      %v4043 = vmax.f32 %v4011, 0.0
      %v4044 = vmax.f32 %v4012, 0.0
      %v4045 = vmax.f32 %v4013, 0.0
      %v4046 = vmax.f32 %v4014, 0.0
      %v4047 = vmax.f32 %v4015, 0.0
      %v4048 = vmax.f32 %v4016, 0.0
      %v4049 = vmax.f32 %v4017, 0.0
      %v4050 = vmax.f32 %v4018, 0.0
      %v4051 = vmax.f32 %v4019, 0.0
      %v4052 = vmax.f32 %v4020, 0.0
      %v4053 = vmax.f32 %v4021, 0.0
      %v4054 = vmax.f32 %v4022, 0.0
      %v4055 = vmax.f32 %v4023, 0.0
      %v4056 = vmax.f32 %v4024, 0.0
      %v4057 = vmax.f32 %v4025, 0.0
      %v4058 = vmax.f32 %v4026, 0.0
      %v4059 = vmax.f32 %v4027, 0.0
      %v4060 = vmax.f32 %v4028, 0.0
      %v4061 = vpack.c.bf16 %v4030, %v4029
      %v4062 = vpack.c.bf16 %v4032, %v4031
      %v4063 = vpack.c.bf16 %v4034, %v4033
      %v4064 = vpack.c.bf16 %v4036, %v4035
      %v4065 = vpack.c.bf16 %v4038, %v4037
      %v4066 = vpack.c.bf16 %v4040, %v4039
      %v4067 = vpack.c.bf16 %v4042, %v4041
      %v4068 = vpack.c.bf16 %v4044, %v4043
      %v4069 = vpack.c.bf16 %v4046, %v4045
      %v4070 = vpack.c.bf16 %v4048, %v4047
      %v4071 = vpack.c.bf16 %v4050, %v4049
      %v4072 = vpack.c.bf16 %v4052, %v4051
      %v4073 = vpack.c.bf16 %v4054, %v4053
      %v4074 = vpack.c.bf16 %v4056, %v4055
      %v4075 = vpack.c.bf16 %v4058, %v4057
      %v4076 = vpack.c.bf16 %v4060, %v4059
      %s4077 = scalar_lea.vmem %s9, 4
      %v4078 = vld [vmem:[%s4077] sm:$0xf]
      %v4080 = vsel %vm780, %v4061, 0
      %v4083 = vsel %vm780, %v4062, 0
      %v4086 = vsel %vm780, %v4063, 0
      %v4089 = vsel %vm780, %v4064, 0
      %v4092 = vsel %vm780, %v4065, 0
      %v4095 = vsel %vm780, %v4066, 0
      %v4098 = vsel %vm780, %v4067, 0
      %v4101 = vsel %vm780, %v4068, 0
      %v4104 = vsel %vm780, %v4069, 0
      %v4107 = vsel %vm780, %v4070, 0
      %v4110 = vsel %vm780, %v4071, 0
      %v4113 = vsel %vm780, %v4072, 0
      %v4116 = vsel %vm780, %v4073, 0
      %v4119 = vsel %vm780, %v4074, 0
      %v4122 = vsel %vm780, %v4075, 0
      %v4125 = vsel %vm780, %v4076, 0
      %v4128 = vsel %vm829, %v4078, 0
      %4130 = vmatprep.subr.bf16.mxu0 0
      %4131 = vmatpush1.bf16.msra.mxu0 %v4128
      %4132 = vmatprep.subr.bf16.mxu0 0
      %4133 = vmatpush1.bf16.msra.mxu0 0
      %4134 = vmatprep.subr.bf16.mxu0 0
      %4135 = vmatpush1.bf16.msra.mxu0 0
      %4136 = vmatprep.subr.bf16.mxu0 0
      %4137 = vmatpush1.bf16.msra.mxu0 0
      %4138 = vmatprep.subr.bf16.mxu0 0
      %4139 = vmatpush1.bf16.msra.mxu0 0
      %4140 = vmatprep.subr.bf16.mxu0 0
      %4141 = vmatpush1.bf16.msra.mxu0 0
      %4142 = vmatprep.subr.bf16.mxu0 0
      %4143 = vmatpush1.bf16.msra.mxu0 0
      %4144 = vmatprep.subr.bf16.mxu0 0
      %4145 = vmatpush1.bf16.msra.mxu0 0
      %4146 = vmatprep.subr.bf16.mxu0 0
      %4147 = vmatpush1.bf16.msra.mxu0 0
      %4148 = vmatprep.subr.bf16.mxu0 0
      %4149 = vmatpush1.bf16.msra.mxu0 0
      %4150 = vmatprep.subr.bf16.mxu0 0
      %4151 = vmatpush1.bf16.msra.mxu0 0
      %4152 = vmatprep.subr.bf16.mxu0 0
      %4153 = vmatpush1.bf16.msra.mxu0 0
      %4154 = vmatprep.subr.bf16.mxu0 0
      %4155 = vmatpush1.bf16.msra.mxu0 0
      %4156 = vmatprep.subr.bf16.mxu0 0
      %4157 = vmatpush1.bf16.msra.mxu0 0
      %4158 = vmatprep.subr.bf16.mxu0 0
      %4159 = vmatpush1.bf16.msra.mxu0 0
      %4160 = vmatprep.subr.bf16.mxu0 0
      %4161 = vmatpush1.bf16.msra.mxu0 0
      %4162 = vmatprep.mubr.bf16.mxu0 0
      %4163 = vmatmul.mubr.bf16.gmra.mrb[0].mxu0 %v4080
      %v4164 = vpop.f32.mrb[0].mxu0
      %v4165 = vadd.f32 0.0, %v4164
      %v4166 = vpop.f32.mrb[0].mxu0
      %v4167 = vpop.f32.mrb[0].mxu0
      %v4168 = vadd.f32 0.0, %v4167
      %v4169 = vpop.f32.mrb[0].mxu0
      %4170 = vmatprep.mubr.bf16.mxu0 0
      %4171 = vmatmul.mubr.bf16.gmra.mrb[0].mxu0 %v4083
      %v4172 = vpop.f32.mrb[0].mxu0
      %v4173 = vadd.f32 0.0, %v4172
      %v4174 = vpop.f32.mrb[0].mxu0
      %v4175 = vpop.f32.mrb[0].mxu0
      %v4176 = vadd.f32 0.0, %v4175
      %v4177 = vpop.f32.mrb[0].mxu0
      %4178 = vmatprep.mubr.bf16.mxu0 0
      %4179 = vmatmul.mubr.bf16.gmra.mrb[0].mxu0 %v4086
      %v4180 = vpop.f32.mrb[0].mxu0
      %v4181 = vadd.f32 0.0, %v4180
      %v4182 = vpop.f32.mrb[0].mxu0
      %v4183 = vpop.f32.mrb[0].mxu0
      %v4184 = vadd.f32 0.0, %v4183
      %v4185 = vpop.f32.mrb[0].mxu0
      %4186 = vmatprep.mubr.bf16.mxu0 0
      %4187 = vmatmul.mubr.bf16.gmra.mrb[0].mxu0 %v4089
      %v4188 = vpop.f32.mrb[0].mxu0
      %v4189 = vadd.f32 0.0, %v4188
      %v4190 = vpop.f32.mrb[0].mxu0
      %v4191 = vpop.f32.mrb[0].mxu0
      %v4192 = vadd.f32 0.0, %v4191
      %v4193 = vpop.f32.mrb[0].mxu0
      %4194 = vmatprep.mubr.bf16.mxu0 0
      %4195 = vmatmul.mubr.bf16.gmra.mrb[0].mxu0 %v4092
      %v4196 = vpop.f32.mrb[0].mxu0
      %v4197 = vadd.f32 0.0, %v4196
      %v4198 = vpop.f32.mrb[0].mxu0
      %v4199 = vpop.f32.mrb[0].mxu0
      %v4200 = vadd.f32 0.0, %v4199
      %v4201 = vpop.f32.mrb[0].mxu0
      %4202 = vmatprep.mubr.bf16.mxu0 0
      %4203 = vmatmul.mubr.bf16.gmra.mrb[0].mxu0 %v4095
      %v4204 = vpop.f32.mrb[0].mxu0
      %v4205 = vadd.f32 0.0, %v4204
      %v4206 = vpop.f32.mrb[0].mxu0
      %v4207 = vpop.f32.mrb[0].mxu0
      %v4208 = vadd.f32 0.0, %v4207
      %v4209 = vpop.f32.mrb[0].mxu0
      %4210 = vmatprep.mubr.bf16.mxu0 0
      %4211 = vmatmul.mubr.bf16.gmra.mrb[0].mxu0 %v4098
      %v4212 = vpop.f32.mrb[0].mxu0
      %v4213 = vadd.f32 0.0, %v4212
      %v4214 = vpop.f32.mrb[0].mxu0
      %v4215 = vpop.f32.mrb[0].mxu0
      %v4216 = vadd.f32 0.0, %v4215
      %v4217 = vpop.f32.mrb[0].mxu0
      %4218 = vmatprep.mubr.bf16.mxu0 0
      %4219 = vmatmul.mubr.bf16.gmra.mrb[0].mxu0 %v4101
      %v4220 = vpop.f32.mrb[0].mxu0
      %v4221 = vadd.f32 0.0, %v4220
      %v4222 = vpop.f32.mrb[0].mxu0
      %v4223 = vpop.f32.mrb[0].mxu0
      %v4224 = vadd.f32 0.0, %v4223
      %v4225 = vpop.f32.mrb[0].mxu0
      %4226 = vmatprep.mubr.bf16.mxu0 0
      %4227 = vmatmul.mubr.bf16.gmra.mrb[0].mxu0 %v4104
      %v4228 = vpop.f32.mrb[0].mxu0
      %v4229 = vadd.f32 0.0, %v4228
      %v4230 = vpop.f32.mrb[0].mxu0
      %v4231 = vpop.f32.mrb[0].mxu0
      %v4232 = vadd.f32 0.0, %v4231
      %v4233 = vpop.f32.mrb[0].mxu0
      %4234 = vmatprep.mubr.bf16.mxu0 0
      %4235 = vmatmul.mubr.bf16.gmra.mrb[0].mxu0 %v4107
      %v4236 = vpop.f32.mrb[0].mxu0
      %v4237 = vadd.f32 0.0, %v4236
      %v4238 = vpop.f32.mrb[0].mxu0
      %v4239 = vpop.f32.mrb[0].mxu0
      %v4240 = vadd.f32 0.0, %v4239
      %v4241 = vpop.f32.mrb[0].mxu0
      %4242 = vmatprep.mubr.bf16.mxu0 0
      %4243 = vmatmul.mubr.bf16.gmra.mrb[0].mxu0 %v4110
      %v4244 = vpop.f32.mrb[0].mxu0
      %v4245 = vadd.f32 0.0, %v4244
      %v4246 = vpop.f32.mrb[0].mxu0
      %v4247 = vpop.f32.mrb[0].mxu0
      %v4248 = vadd.f32 0.0, %v4247
      %v4249 = vpop.f32.mrb[0].mxu0
      %4250 = vmatprep.mubr.bf16.mxu0 0
      %4251 = vmatmul.mubr.bf16.gmra.mrb[0].mxu0 %v4113
      %v4252 = vpop.f32.mrb[0].mxu0
      %v4253 = vadd.f32 0.0, %v4252
      %v4254 = vpop.f32.mrb[0].mxu0
      %v4255 = vpop.f32.mrb[0].mxu0
      %v4256 = vadd.f32 0.0, %v4255
      %v4257 = vpop.f32.mrb[0].mxu0
      %4258 = vmatprep.mubr.bf16.mxu0 0
      %4259 = vmatmul.mubr.bf16.gmra.mrb[0].mxu0 %v4116
      %v4260 = vpop.f32.mrb[0].mxu0
      %v4261 = vadd.f32 0.0, %v4260
      %v4262 = vpop.f32.mrb[0].mxu0
      %v4263 = vpop.f32.mrb[0].mxu0
      %v4264 = vadd.f32 0.0, %v4263
      %v4265 = vpop.f32.mrb[0].mxu0
      %4266 = vmatprep.mubr.bf16.mxu0 0
      %4267 = vmatmul.mubr.bf16.gmra.mrb[0].mxu0 %v4119
      %v4268 = vpop.f32.mrb[0].mxu0
      %v4269 = vadd.f32 0.0, %v4268
      %v4270 = vpop.f32.mrb[0].mxu0
      %v4271 = vpop.f32.mrb[0].mxu0
      %v4272 = vadd.f32 0.0, %v4271
      %v4273 = vpop.f32.mrb[0].mxu0
      %4274 = vmatprep.mubr.bf16.mxu0 0
      %4275 = vmatmul.mubr.bf16.gmra.mrb[0].mxu0 %v4122
      %v4276 = vpop.f32.mrb[0].mxu0
      %v4277 = vadd.f32 0.0, %v4276
      %v4278 = vpop.f32.mrb[0].mxu0
      %v4279 = vpop.f32.mrb[0].mxu0
      %v4280 = vadd.f32 0.0, %v4279
      %v4281 = vpop.f32.mrb[0].mxu0
      %4282 = vmatprep.mubr.bf16.mxu0 0
      %4283 = vmatmul.mubr.bf16.gmra.mrb[0].mxu0 %v4125
      %v4284 = vpop.f32.mrb[0].mxu0
      %v4285 = vadd.f32 0.0, %v4284
      %v4286 = vpop.f32.mrb[0].mxu0
      %v4287 = vpop.f32.mrb[0].mxu0
      %v4288 = vadd.f32 0.0, %v4287
      %v4289 = vpop.f32.mrb[0].mxu0
      %4290 = vdwg.mxu0
      %v4291 = vadd.f32 %v994, %v4165
      %v4292 = vadd.f32 %v995, %v4168
      %v4293 = vadd.f32 %v996, %v4173
      %v4294 = vadd.f32 %v997, %v4176
      %v4295 = vadd.f32 %v998, %v4181
      %v4296 = vadd.f32 %v999, %v4184
      %v4297 = vadd.f32 %v1000, %v4189
      %v4298 = vadd.f32 %v1001, %v4192
      %v4299 = vadd.f32 %v1002, %v4197
      %v4300 = vadd.f32 %v1003, %v4200
      %v4301 = vadd.f32 %v1004, %v4205
      %v4302 = vadd.f32 %v1005, %v4208
      %v4303 = vadd.f32 %v1006, %v4213
      %v4304 = vadd.f32 %v1007, %v4216
      %v4305 = vadd.f32 %v1008, %v4221
      %v4306 = vadd.f32 %v1009, %v4224
      %v4307 = vadd.f32 %v1010, %v4229
      %v4308 = vadd.f32 %v1011, %v4232
      %v4309 = vadd.f32 %v1012, %v4237
      %v4310 = vadd.f32 %v1013, %v4240
      %v4311 = vadd.f32 %v1014, %v4245
      %v4312 = vadd.f32 %v1015, %v4248
      %v4313 = vadd.f32 %v1016, %v4253
      %v4314 = vadd.f32 %v1017, %v4256
      %v4315 = vadd.f32 %v1018, %v4261
      %v4316 = vadd.f32 %v1019, %v4264
      %v4317 = vadd.f32 %v1020, %v4269
      %v4318 = vadd.f32 %v1021, %v4272
      %v4319 = vadd.f32 %v1022, %v4277
      %v4320 = vadd.f32 %v1023, %v4280
      %v4321 = vadd.f32 %v1024, %v4285
      %v4322 = vadd.f32 %v1025, %v4288
      %s4323 = scalar_lea.vmem %s3, 26
      %v4324 = vld [vmem:[%s4323] sm:$0x3]
      %s4325 = scalar_lea.vmem %s4, 1
      %v4326 = vld [vmem:[%s4325] sm:$0x1]
      %v4328 = vlaneseq
      %v4329 = vshrl.u32 %v4328, 7
      %v4330 = vsub.s32 0, %v4329
      %v4331 = vrot.slane %v4326, %v4330
      %v4334 = vsel %vm566, %v4324, 0
      %4336 = vmatprep.subr.bf16.mxu0 0
      %4337 = vmatpush1.bf16.msra.mxu0 %v4334
      %4338 = vmatprep.subr.bf16.mxu0 0
      %4339 = vmatpush1.bf16.msra.mxu0 0
      %4340 = vmatprep.subr.bf16.mxu0 0
      %4341 = vmatpush1.bf16.msra.mxu0 0
      %4342 = vmatprep.subr.bf16.mxu0 0
      %4343 = vmatpush1.bf16.msra.mxu0 0
      %4344 = vmatprep.subr.bf16.mxu0 0
      %4345 = vmatpush1.bf16.msra.mxu0 0
      %4346 = vmatprep.subr.bf16.mxu0 0
      %4347 = vmatpush1.bf16.msra.mxu0 0
      %4348 = vmatprep.subr.bf16.mxu0 0
      %4349 = vmatpush1.bf16.msra.mxu0 0
      %4350 = vmatprep.subr.bf16.mxu0 0
      %4351 = vmatpush1.bf16.msra.mxu0 0
      %4352 = vmatprep.subr.bf16.mxu0 0
      %4353 = vmatpush1.bf16.msra.mxu0 0
      %4354 = vmatprep.subr.bf16.mxu0 0
      %4355 = vmatpush1.bf16.msra.mxu0 0
      %4356 = vmatprep.subr.bf16.mxu0 0
      %4357 = vmatpush1.bf16.msra.mxu0 0
      %4358 = vmatprep.subr.bf16.mxu0 0
      %4359 = vmatpush1.bf16.msra.mxu0 0
      %4360 = vmatprep.subr.bf16.mxu0 0
      %4361 = vmatpush1.bf16.msra.mxu0 0
      %4362 = vmatprep.subr.bf16.mxu0 0
      %4363 = vmatpush1.bf16.msra.mxu0 0
      %4364 = vmatprep.subr.bf16.mxu0 0
      %4365 = vmatpush1.bf16.msra.mxu0 0
      %4366 = vmatprep.subr.bf16.mxu0 0
      %4367 = vmatpush1.bf16.msra.mxu0 0
      %4368 = vmatprep.mubr.bf16.mxu0 0
      %4369 = vmatmul.mubr.bf16.gmra.mrb[0].mxu0 %v519
      %v4370 = vpop.f32.mrb[0].mxu0
      %v4371 = vadd.f32 %v4331, %v4370
      %v4372 = vpop.f32.mrb[0].mxu0
      %v4373 = vpop.f32.mrb[0].mxu0
      %v4374 = vadd.f32 %v4331, %v4373
      %v4375 = vpop.f32.mrb[0].mxu0
      %4376 = vmatprep.mubr.bf16.mxu0 0
      %4377 = vmatmul.mubr.bf16.gmra.mrb[0].mxu0 %v522
      %v4378 = vpop.f32.mrb[0].mxu0
      %v4379 = vadd.f32 %v4331, %v4378
      %v4380 = vpop.f32.mrb[0].mxu0
      %v4381 = vpop.f32.mrb[0].mxu0
      %v4382 = vadd.f32 %v4331, %v4381
      %v4383 = vpop.f32.mrb[0].mxu0
      %4384 = vmatprep.mubr.bf16.mxu0 0
      %4385 = vmatmul.mubr.bf16.gmra.mrb[0].mxu0 %v525
      %v4386 = vpop.f32.mrb[0].mxu0
      %v4387 = vadd.f32 %v4331, %v4386
      %v4388 = vpop.f32.mrb[0].mxu0
      %v4389 = vpop.f32.mrb[0].mxu0
      %v4390 = vadd.f32 %v4331, %v4389
      %v4391 = vpop.f32.mrb[0].mxu0
      %4392 = vmatprep.mubr.bf16.mxu0 0
      %4393 = vmatmul.mubr.bf16.gmra.mrb[0].mxu0 %v528
      %v4394 = vpop.f32.mrb[0].mxu0
      %v4395 = vadd.f32 %v4331, %v4394
      %v4396 = vpop.f32.mrb[0].mxu0
      %v4397 = vpop.f32.mrb[0].mxu0
      %v4398 = vadd.f32 %v4331, %v4397
      %v4399 = vpop.f32.mrb[0].mxu0
      %4400 = vmatprep.mubr.bf16.mxu0 0
      %4401 = vmatmul.mubr.bf16.gmra.mrb[0].mxu0 %v531
      %v4402 = vpop.f32.mrb[0].mxu0
      %v4403 = vadd.f32 %v4331, %v4402
      %v4404 = vpop.f32.mrb[0].mxu0
      %v4405 = vpop.f32.mrb[0].mxu0
      %v4406 = vadd.f32 %v4331, %v4405
      %v4407 = vpop.f32.mrb[0].mxu0
      %4408 = vmatprep.mubr.bf16.mxu0 0
      %4409 = vmatmul.mubr.bf16.gmra.mrb[0].mxu0 %v534
      %v4410 = vpop.f32.mrb[0].mxu0
      %v4411 = vadd.f32 %v4331, %v4410
      %v4412 = vpop.f32.mrb[0].mxu0
      %v4413 = vpop.f32.mrb[0].mxu0
      %v4414 = vadd.f32 %v4331, %v4413
      %v4415 = vpop.f32.mrb[0].mxu0
      %4416 = vmatprep.mubr.bf16.mxu0 0
      %4417 = vmatmul.mubr.bf16.gmra.mrb[0].mxu0 %v537
      %v4418 = vpop.f32.mrb[0].mxu0
      %v4419 = vadd.f32 %v4331, %v4418
      %v4420 = vpop.f32.mrb[0].mxu0
      %v4421 = vpop.f32.mrb[0].mxu0
      %v4422 = vadd.f32 %v4331, %v4421
      %v4423 = vpop.f32.mrb[0].mxu0
      %4424 = vmatprep.mubr.bf16.mxu0 0
      %4425 = vmatmul.mubr.bf16.gmra.mrb[0].mxu0 %v540
      %v4426 = vpop.f32.mrb[0].mxu0
      %v4427 = vadd.f32 %v4331, %v4426
      %v4428 = vpop.f32.mrb[0].mxu0
      %v4429 = vpop.f32.mrb[0].mxu0
      %v4430 = vadd.f32 %v4331, %v4429
      %v4431 = vpop.f32.mrb[0].mxu0
      %4432 = vmatprep.mubr.bf16.mxu0 0
      %4433 = vmatmul.mubr.bf16.gmra.mrb[0].mxu0 %v543
      %v4434 = vpop.f32.mrb[0].mxu0
      %v4435 = vadd.f32 %v4331, %v4434
      %v4436 = vpop.f32.mrb[0].mxu0
      %v4437 = vpop.f32.mrb[0].mxu0
      %v4438 = vadd.f32 %v4331, %v4437
      %v4439 = vpop.f32.mrb[0].mxu0
      %4440 = vmatprep.mubr.bf16.mxu0 0
      %4441 = vmatmul.mubr.bf16.gmra.mrb[0].mxu0 %v546
      %v4442 = vpop.f32.mrb[0].mxu0
      %v4443 = vadd.f32 %v4331, %v4442
      %v4444 = vpop.f32.mrb[0].mxu0
      %v4445 = vpop.f32.mrb[0].mxu0
      %v4446 = vadd.f32 %v4331, %v4445
      %v4447 = vpop.f32.mrb[0].mxu0
      %4448 = vmatprep.mubr.bf16.mxu0 0
      %4449 = vmatmul.mubr.bf16.gmra.mrb[0].mxu0 %v549
      %v4450 = vpop.f32.mrb[0].mxu0
      %v4451 = vadd.f32 %v4331, %v4450
      %v4452 = vpop.f32.mrb[0].mxu0
      %v4453 = vpop.f32.mrb[0].mxu0
      %v4454 = vadd.f32 %v4331, %v4453
      %v4455 = vpop.f32.mrb[0].mxu0
      %4456 = vmatprep.mubr.bf16.mxu0 0
      %4457 = vmatmul.mubr.bf16.gmra.mrb[0].mxu0 %v552
      %v4458 = vpop.f32.mrb[0].mxu0
      %v4459 = vadd.f32 %v4331, %v4458
      %v4460 = vpop.f32.mrb[0].mxu0
      %v4461 = vpop.f32.mrb[0].mxu0
      %v4462 = vadd.f32 %v4331, %v4461
      %v4463 = vpop.f32.mrb[0].mxu0
      %4464 = vmatprep.mubr.bf16.mxu0 0
      %4465 = vmatmul.mubr.bf16.gmra.mrb[0].mxu0 %v555
      %v4466 = vpop.f32.mrb[0].mxu0
      %v4467 = vadd.f32 %v4331, %v4466
      %v4468 = vpop.f32.mrb[0].mxu0
      %v4469 = vpop.f32.mrb[0].mxu0
      %v4470 = vadd.f32 %v4331, %v4469
      %v4471 = vpop.f32.mrb[0].mxu0
      %4472 = vmatprep.mubr.bf16.mxu0 0
      %4473 = vmatmul.mubr.bf16.gmra.mrb[0].mxu0 %v558
      %v4474 = vpop.f32.mrb[0].mxu0
      %v4475 = vadd.f32 %v4331, %v4474
      %v4476 = vpop.f32.mrb[0].mxu0
      %v4477 = vpop.f32.mrb[0].mxu0
      %v4478 = vadd.f32 %v4331, %v4477
      %v4479 = vpop.f32.mrb[0].mxu0
      %4480 = vmatprep.mubr.bf16.mxu0 0
      %4481 = vmatmul.mubr.bf16.gmra.mrb[0].mxu0 %v561
      %v4482 = vpop.f32.mrb[0].mxu0
      %v4483 = vadd.f32 %v4331, %v4482
      %v4484 = vpop.f32.mrb[0].mxu0
      %v4485 = vpop.f32.mrb[0].mxu0
      %v4486 = vadd.f32 %v4331, %v4485
      %v4487 = vpop.f32.mrb[0].mxu0
      %4488 = vmatprep.mubr.bf16.mxu0 0
      %4489 = vmatmul.mubr.bf16.gmra.mrb[0].mxu0 %v564
      %v4490 = vpop.f32.mrb[0].mxu0
      %v4491 = vadd.f32 %v4331, %v4490
      %v4492 = vpop.f32.mrb[0].mxu0
      %v4493 = vpop.f32.mrb[0].mxu0
      %v4494 = vadd.f32 %v4331, %v4493
      %v4495 = vpop.f32.mrb[0].mxu0
      %4496 = vdwg.mxu0
      %4497 = vst.msk [vmem:[#allocation2] sm:$0xff] %vm780, %v4371
      %4498 = vst.msk [vmem:[#allocation2 + $0x8] sm:$0xff] %vm780, %v4374
      %4499 = vst.msk [vmem:[#allocation2 + $0x10] sm:$0xff] %vm780, %v4379
      %4500 = vst.msk [vmem:[#allocation2 + $0x18] sm:$0xff] %vm780, %v4382
      %4501 = vst.msk [vmem:[#allocation2 + $0x20] sm:$0xff] %vm780, %v4387
      %4502 = vst.msk [vmem:[#allocation2 + $0x28] sm:$0xff] %vm780, %v4390
      %4503 = vst.msk [vmem:[#allocation2 + $0x30] sm:$0xff] %vm780, %v4395
      %4504 = vst.msk [vmem:[#allocation2 + $0x38] sm:$0xff] %vm780, %v4398
      %4505 = vst.msk [vmem:[#allocation2 + $0x40] sm:$0xff] %vm780, %v4403
      %4506 = vst.msk [vmem:[#allocation2 + $0x48] sm:$0xff] %vm780, %v4406
      %4507 = vst.msk [vmem:[#allocation2 + $0x50] sm:$0xff] %vm780, %v4411
      %4508 = vst.msk [vmem:[#allocation2 + $0x58] sm:$0xff] %vm780, %v4414
      %4509 = vst.msk [vmem:[#allocation2 + $0x60] sm:$0xff] %vm780, %v4419
      %4510 = vst.msk [vmem:[#allocation2 + $0x68] sm:$0xff] %vm780, %v4422
      %4511 = vst.msk [vmem:[#allocation2 + $0x70] sm:$0xff] %vm780, %v4427
      %4512 = vst.msk [vmem:[#allocation2 + $0x78] sm:$0xff] %vm780, %v4430
      %4513 = vst.msk [vmem:[#allocation2 + $0x80] sm:$0xff] %vm780, %v4435
      %4514 = vst.msk [vmem:[#allocation2 + $0x88] sm:$0xff] %vm780, %v4438
      %4515 = vst.msk [vmem:[#allocation2 + $0x90] sm:$0xff] %vm780, %v4443
      %4516 = vst.msk [vmem:[#allocation2 + $0x98] sm:$0xff] %vm780, %v4446
      %4517 = vst.msk [vmem:[#allocation2 + $0xa0] sm:$0xff] %vm780, %v4451
      %4518 = vst.msk [vmem:[#allocation2 + $0xa8] sm:$0xff] %vm780, %v4454
      %4519 = vst.msk [vmem:[#allocation2 + $0xb0] sm:$0xff] %vm780, %v4459
      %4520 = vst.msk [vmem:[#allocation2 + $0xb8] sm:$0xff] %vm780, %v4462
      %4521 = vst.msk [vmem:[#allocation2 + $0xc0] sm:$0xff] %vm780, %v4467
      %4522 = vst.msk [vmem:[#allocation2 + $0xc8] sm:$0xff] %vm780, %v4470
      %4523 = vst.msk [vmem:[#allocation2 + $0xd0] sm:$0xff] %vm780, %v4475
      %4524 = vst.msk [vmem:[#allocation2 + $0xd8] sm:$0xff] %vm780, %v4478
      %4525 = vst.msk [vmem:[#allocation2 + $0xe0] sm:$0xff] %vm780, %v4483
      %4526 = vst.msk [vmem:[#allocation2 + $0xe8] sm:$0xff] %vm780, %v4486
      %4527 = vst.msk [vmem:[#allocation2 + $0xf0] sm:$0xff] %vm780, %v4491
      %4528 = vst.msk [vmem:[#allocation2 + $0xf8] sm:$0xff] %vm780, %v4494
      %v4529 = vld [vmem:[%s381] sm:$0xf]
      %v4530 = vld [vmem:[%s381 + $0x4] sm:$0xf]
      %v4531 = vld [vmem:[%s381 + $0x8] sm:$0xf]
      %v4532 = vld [vmem:[%s381 + $0xc] sm:$0xf]
      %v4533 = vld [vmem:[%s381 + $0x10] sm:$0xf]
      %v4534 = vld [vmem:[%s381 + $0x14] sm:$0xf]
      %v4535 = vld [vmem:[%s381 + $0x18] sm:$0xf]
      %v4536 = vld [vmem:[%s381 + $0x1c] sm:$0xf]
      %s4537 = scalar_lea.vmem %s3, 18
      %v4538 = vld [vmem:[%s4537] sm:$0x3]
      %v4547 = vunpack.c.l.b16 %v4529
      %v4548 = vunpack.c.l.b16 %v4530
      %v4549 = vunpack.c.l.b16 %v4531
      %v4550 = vunpack.c.l.b16 %v4532
      %v4551 = vunpack.c.l.b16 %v4533
      %v4552 = vunpack.c.l.b16 %v4534
      %v4553 = vunpack.c.l.b16 %v4535
      %v4554 = vunpack.c.l.b16 %v4536
      %v4555 = vpack.c.b16 %v4548, %v4547
      %v4556 = vpack.c.b16 %v4550, %v4549
      %v4557 = vpack.c.b16 %v4552, %v4551
      %v4558 = vpack.c.b16 %v4554, %v4553
      %v4560 = vsel %vm517, %v4555, 0
      %v4563 = vsel %vm517, %v4556, 0
      %v4566 = vsel %vm517, %v4557, 0
      %v4569 = vsel %vm517, %v4558, 0
      %v4572 = vsel %vm566, %v4538, 0
      %4574 = vmatprep.subr.bf16.mxu0 0
      %4575 = vmatpush1.bf16.msra.mxu0 %v4572
      %4576 = vmatprep.subr.bf16.mxu0 0
      %4577 = vmatpush1.bf16.msra.mxu0 0
      %4578 = vmatprep.subr.bf16.mxu0 0
      %4579 = vmatpush1.bf16.msra.mxu0 0
      %4580 = vmatprep.subr.bf16.mxu0 0
      %4581 = vmatpush1.bf16.msra.mxu0 0
      %4582 = vmatprep.subr.bf16.mxu0 0
      %4583 = vmatpush1.bf16.msra.mxu0 0
      %4584 = vmatprep.subr.bf16.mxu0 0
      %4585 = vmatpush1.bf16.msra.mxu0 0
      %4586 = vmatprep.subr.bf16.mxu0 0
      %4587 = vmatpush1.bf16.msra.mxu0 0
      %4588 = vmatprep.subr.bf16.mxu0 0
      %4589 = vmatpush1.bf16.msra.mxu0 0
      %4590 = vmatprep.subr.bf16.mxu0 0
      %4591 = vmatpush1.bf16.msra.mxu0 0
      %4592 = vmatprep.subr.bf16.mxu0 0
      %4593 = vmatpush1.bf16.msra.mxu0 0
      %4594 = vmatprep.subr.bf16.mxu0 0
      %4595 = vmatpush1.bf16.msra.mxu0 0
      %4596 = vmatprep.subr.bf16.mxu0 0
      %4597 = vmatpush1.bf16.msra.mxu0 0
      %4598 = vmatprep.subr.bf16.mxu0 0
      %4599 = vmatpush1.bf16.msra.mxu0 0
      %4600 = vmatprep.subr.bf16.mxu0 0
      %4601 = vmatpush1.bf16.msra.mxu0 0
      %4602 = vmatprep.subr.bf16.mxu0 0
      %4603 = vmatpush1.bf16.msra.mxu0 0
      %4604 = vmatprep.subr.bf16.mxu0 0
      %4605 = vmatpush1.bf16.msra.mxu0 0
      %4606 = vmatprep.mubr.bf16.mxu0 0
      %4607 = vmatmul.mubr.bf16.gmra.mrb[0].mxu0 %v4560
      %v4608 = vpop.f32.mrb[0].mxu0
      %v4609 = vadd.f32 0.0, %v4608
      %v4610 = vpop.f32.mrb[0].mxu0
      %v4611 = vpop.f32.mrb[0].mxu0
      %v4612 = vpop.f32.mrb[0].mxu0
      %4613 = vmatprep.mubr.bf16.mxu0 0
      %4614 = vmatmul.mubr.bf16.gmra.mrb[0].mxu0 %v4563
      %v4615 = vpop.f32.mrb[0].mxu0
      %v4616 = vadd.f32 0.0, %v4615
      %v4617 = vpop.f32.mrb[0].mxu0
      %v4618 = vpop.f32.mrb[0].mxu0
      %v4619 = vpop.f32.mrb[0].mxu0
      %4620 = vmatprep.mubr.bf16.mxu0 0
      %4621 = vmatmul.mubr.bf16.gmra.mrb[0].mxu0 %v4566
      %v4622 = vpop.f32.mrb[0].mxu0
      %v4623 = vadd.f32 0.0, %v4622
      %v4624 = vpop.f32.mrb[0].mxu0
      %v4625 = vpop.f32.mrb[0].mxu0
      %v4626 = vpop.f32.mrb[0].mxu0
      %4627 = vmatprep.mubr.bf16.mxu0 0
      %4628 = vmatmul.mubr.bf16.gmra.mrb[0].mxu0 %v4569
      %v4629 = vpop.f32.mrb[0].mxu0
      %v4630 = vadd.f32 0.0, %v4629
      %v4631 = vpop.f32.mrb[0].mxu0
      %v4632 = vpop.f32.mrb[0].mxu0
      %v4633 = vpop.f32.mrb[0].mxu0
      %4634 = vdwg.mxu0
      %s4635 = scalar_lea.vmem [#allocation2], 192
      %v4636 = vld [vmem:[%s4635 + $0xc] sm:$0xf]
      %v4637 = vld [vmem:[%s4635 + $0x1c] sm:$0xf]
      %v4638 = vld [vmem:[%s4635 + $0x2c] sm:$0xf]
      %v4639 = vld [vmem:[%s4635 + $0x3c] sm:$0xf]
      %v4640 = vadd.f32 %v4636, %v4609
      %v4641 = vadd.f32 %v4637, %v4616
      %v4642 = vadd.f32 %v4638, %v4623
      %v4643 = vadd.f32 %v4639, %v4630
      %vm4644 = vcmask 60416
      %4645 = vst.msk [vmem:[%s4635 + $0xc] sm:$0xf] %vm4644, %v4640
      %4646 = vst.msk [vmem:[%s4635 + $0x1c] sm:$0xf] %vm4644, %v4641
      %4647 = vst.msk [vmem:[%s4635 + $0x2c] sm:$0xf] %vm4644, %v4642
      %4648 = vst.msk [vmem:[%s4635 + $0x3c] sm:$0xf] %vm4644, %v4643
      %v4649 = vld [vmem:[%s381] sm:$0xf]
      %v4650 = vld [vmem:[%s381 + $0x4] sm:$0xf]
      %v4651 = vld [vmem:[%s381 + $0x8] sm:$0xf]
      %v4652 = vld [vmem:[%s381 + $0xc] sm:$0xf]
      %v4653 = vld [vmem:[%s381 + $0x10] sm:$0xf]
      %v4654 = vld [vmem:[%s381 + $0x14] sm:$0xf]
      %v4655 = vld [vmem:[%s381 + $0x18] sm:$0xf]
      %v4656 = vld [vmem:[%s381 + $0x1c] sm:$0xf]
      %s4657 = scalar_lea.vmem %s3, 20
      %v4658 = vld [vmem:[%s4657] sm:$0x3]
      %v4667 = vunpack.c.l.b16 %v4649
      %v4668 = vunpack.c.l.b16 %v4650
      %v4669 = vunpack.c.l.b16 %v4651
      %v4670 = vunpack.c.l.b16 %v4652
      %v4671 = vunpack.c.l.b16 %v4653
      %v4672 = vunpack.c.l.b16 %v4654
      %v4673 = vunpack.c.l.b16 %v4655
      %v4674 = vunpack.c.l.b16 %v4656
      %v4675 = vpack.c.b16 %v4668, %v4667
      %v4676 = vpack.c.b16 %v4670, %v4669
      %v4677 = vpack.c.b16 %v4672, %v4671
      %v4678 = vpack.c.b16 %v4674, %v4673
      %v4680 = vsel %vm517, %v4675, 0
      %v4683 = vsel %vm517, %v4676, 0
      %v4686 = vsel %vm517, %v4677, 0
      %v4689 = vsel %vm517, %v4678, 0
      %v4692 = vsel %vm566, %v4658, 0
      %4694 = vmatprep.subr.bf16.mxu0 0
      %4695 = vmatpush1.bf16.msra.mxu0 %v4692
      %4696 = vmatprep.subr.bf16.mxu0 0
      %4697 = vmatpush1.bf16.msra.mxu0 0
      %4698 = vmatprep.subr.bf16.mxu0 0
      %4699 = vmatpush1.bf16.msra.mxu0 0
      %4700 = vmatprep.subr.bf16.mxu0 0
      %4701 = vmatpush1.bf16.msra.mxu0 0
      %4702 = vmatprep.subr.bf16.mxu0 0
      %4703 = vmatpush1.bf16.msra.mxu0 0
      %4704 = vmatprep.subr.bf16.mxu0 0
      %4705 = vmatpush1.bf16.msra.mxu0 0
      %4706 = vmatprep.subr.bf16.mxu0 0
      %4707 = vmatpush1.bf16.msra.mxu0 0
      %4708 = vmatprep.subr.bf16.mxu0 0
      %4709 = vmatpush1.bf16.msra.mxu0 0
      %4710 = vmatprep.subr.bf16.mxu0 0
      %4711 = vmatpush1.bf16.msra.mxu0 0
      %4712 = vmatprep.subr.bf16.mxu0 0
      %4713 = vmatpush1.bf16.msra.mxu0 0
      %4714 = vmatprep.subr.bf16.mxu0 0
      %4715 = vmatpush1.bf16.msra.mxu0 0
      %4716 = vmatprep.subr.bf16.mxu0 0
      %4717 = vmatpush1.bf16.msra.mxu0 0
      %4718 = vmatprep.subr.bf16.mxu0 0
      %4719 = vmatpush1.bf16.msra.mxu0 0
      %4720 = vmatprep.subr.bf16.mxu0 0
      %4721 = vmatpush1.bf16.msra.mxu0 0
      %4722 = vmatprep.subr.bf16.mxu0 0
      %4723 = vmatpush1.bf16.msra.mxu0 0
      %4724 = vmatprep.subr.bf16.mxu0 0
      %4725 = vmatpush1.bf16.msra.mxu0 0
      %4726 = vmatprep.mubr.bf16.mxu0 0
      %4727 = vmatmul.mubr.bf16.gmra.mrb[0].mxu0 %v4680
      %v4728 = vpop.f32.mrb[0].mxu0
      %v4729 = vadd.f32 0.0, %v4728
      %v4730 = vpop.f32.mrb[0].mxu0
      %v4731 = vpop.f32.mrb[0].mxu0
      %v4732 = vadd.f32 0.0, %v4731
      %v4733 = vpop.f32.mrb[0].mxu0
      %4734 = vmatprep.mubr.bf16.mxu0 0
      %4735 = vmatmul.mubr.bf16.gmra.mrb[0].mxu0 %v4683
      %v4736 = vpop.f32.mrb[0].mxu0
      %v4737 = vadd.f32 0.0, %v4736
      %v4738 = vpop.f32.mrb[0].mxu0
      %v4739 = vpop.f32.mrb[0].mxu0
      %v4740 = vadd.f32 0.0, %v4739
      %v4741 = vpop.f32.mrb[0].mxu0
      %4742 = vmatprep.mubr.bf16.mxu0 0
      %4743 = vmatmul.mubr.bf16.gmra.mrb[0].mxu0 %v4686
      %v4744 = vpop.f32.mrb[0].mxu0
      %v4745 = vadd.f32 0.0, %v4744
      %v4746 = vpop.f32.mrb[0].mxu0
      %v4747 = vpop.f32.mrb[0].mxu0
      %v4748 = vadd.f32 0.0, %v4747
      %v4749 = vpop.f32.mrb[0].mxu0
      %4750 = vmatprep.mubr.bf16.mxu0 0
      %4751 = vmatmul.mubr.bf16.gmra.mrb[0].mxu0 %v4689
      %v4752 = vpop.f32.mrb[0].mxu0
      %v4753 = vadd.f32 0.0, %v4752
      %v4754 = vpop.f32.mrb[0].mxu0
      %v4755 = vpop.f32.mrb[0].mxu0
      %v4756 = vadd.f32 0.0, %v4755
      %v4757 = vpop.f32.mrb[0].mxu0
      %4758 = vdwg.mxu0
      %v4759 = vld [vmem:[%s4635] sm:$0xff]
      %v4760 = vld [vmem:[%s4635 + $0x8] sm:$0xff]
      %v4761 = vld [vmem:[%s4635 + $0x10] sm:$0xff]
      %v4762 = vld [vmem:[%s4635 + $0x18] sm:$0xff]
      %v4763 = vld [vmem:[%s4635 + $0x20] sm:$0xff]
      %v4764 = vld [vmem:[%s4635 + $0x28] sm:$0xff]
      %v4765 = vld [vmem:[%s4635 + $0x30] sm:$0xff]
      %v4766 = vld [vmem:[%s4635 + $0x38] sm:$0xff]
      %v4767 = vadd.f32 %v4759, %v4729
      %v4768 = vadd.f32 %v4760, %v4732
      %v4769 = vadd.f32 %v4761, %v4737
      %v4770 = vadd.f32 %v4762, %v4740
      %v4771 = vadd.f32 %v4763, %v4745
      %v4772 = vadd.f32 %v4764, %v4748
      %v4773 = vadd.f32 %v4765, %v4753
      %v4774 = vadd.f32 %v4766, %v4756
      %4775 = vst.msk [vmem:[%s4635] sm:$0xff] %vm780, %v4767
      %4776 = vst.msk [vmem:[%s4635 + $0x8] sm:$0xff] %vm780, %v4768
      %4777 = vst.msk [vmem:[%s4635 + $0x10] sm:$0xff] %vm780, %v4769
      %4778 = vst.msk [vmem:[%s4635 + $0x18] sm:$0xff] %vm780, %v4770
      %4779 = vst.msk [vmem:[%s4635 + $0x20] sm:$0xff] %vm780, %v4771
      %4780 = vst.msk [vmem:[%s4635 + $0x28] sm:$0xff] %vm780, %v4772
      %4781 = vst.msk [vmem:[%s4635 + $0x30] sm:$0xff] %vm780, %v4773
      %4782 = vst.msk [vmem:[%s4635 + $0x38] sm:$0xff] %vm780, %v4774
      %v4783 = vld [vmem:[%s381] sm:$0xf]
      %v4784 = vld [vmem:[%s381 + $0x4] sm:$0xf]
      %v4785 = vld [vmem:[%s381 + $0x8] sm:$0xf]
      %v4786 = vld [vmem:[%s381 + $0xc] sm:$0xf]
      %v4787 = vld [vmem:[%s381 + $0x10] sm:$0xf]
      %v4788 = vld [vmem:[%s381 + $0x14] sm:$0xf]
      %v4789 = vld [vmem:[%s381 + $0x18] sm:$0xf]
      %v4790 = vld [vmem:[%s381 + $0x1c] sm:$0xf]
      %s4791 = scalar_lea.vmem %s3, 22
      %v4792 = vld [vmem:[%s4791] sm:$0x3]
      %v4801 = vunpack.c.l.b16 %v4783
      %v4802 = vunpack.c.l.b16 %v4784
      %v4803 = vunpack.c.l.b16 %v4785
      %v4804 = vunpack.c.l.b16 %v4786
      %v4805 = vunpack.c.l.b16 %v4787
      %v4806 = vunpack.c.l.b16 %v4788
      %v4807 = vunpack.c.l.b16 %v4789
      %v4808 = vunpack.c.l.b16 %v4790
      %v4809 = vpack.c.b16 %v4802, %v4801
      %v4810 = vpack.c.b16 %v4804, %v4803
      %v4811 = vpack.c.b16 %v4806, %v4805
      %v4812 = vpack.c.b16 %v4808, %v4807
      %v4814 = vsel %vm517, %v4809, 0
      %v4817 = vsel %vm517, %v4810, 0
      %v4820 = vsel %vm517, %v4811, 0
      %v4823 = vsel %vm517, %v4812, 0
      %v4826 = vsel %vm566, %v4792, 0
      %4828 = vmatprep.subr.bf16.mxu0 0
      %4829 = vmatpush1.bf16.msra.mxu0 %v4826
      %4830 = vmatprep.subr.bf16.mxu0 0
      %4831 = vmatpush1.bf16.msra.mxu0 0
      %4832 = vmatprep.subr.bf16.mxu0 0
      %4833 = vmatpush1.bf16.msra.mxu0 0
      %4834 = vmatprep.subr.bf16.mxu0 0
      %4835 = vmatpush1.bf16.msra.mxu0 0
      %4836 = vmatprep.subr.bf16.mxu0 0
      %4837 = vmatpush1.bf16.msra.mxu0 0
      %4838 = vmatprep.subr.bf16.mxu0 0
      %4839 = vmatpush1.bf16.msra.mxu0 0
      %4840 = vmatprep.subr.bf16.mxu0 0
      %4841 = vmatpush1.bf16.msra.mxu0 0
      %4842 = vmatprep.subr.bf16.mxu0 0
      %4843 = vmatpush1.bf16.msra.mxu0 0
      %4844 = vmatprep.subr.bf16.mxu0 0
      %4845 = vmatpush1.bf16.msra.mxu0 0
      %4846 = vmatprep.subr.bf16.mxu0 0
      %4847 = vmatpush1.bf16.msra.mxu0 0
      %4848 = vmatprep.subr.bf16.mxu0 0
      %4849 = vmatpush1.bf16.msra.mxu0 0
      %4850 = vmatprep.subr.bf16.mxu0 0
      %4851 = vmatpush1.bf16.msra.mxu0 0
      %4852 = vmatprep.subr.bf16.mxu0 0
      %4853 = vmatpush1.bf16.msra.mxu0 0
      %4854 = vmatprep.subr.bf16.mxu0 0
      %4855 = vmatpush1.bf16.msra.mxu0 0
      %4856 = vmatprep.subr.bf16.mxu0 0
      %4857 = vmatpush1.bf16.msra.mxu0 0
      %4858 = vmatprep.subr.bf16.mxu0 0
      %4859 = vmatpush1.bf16.msra.mxu0 0
      %4860 = vmatprep.mubr.bf16.mxu0 0
      %4861 = vmatmul.mubr.bf16.gmra.mrb[0].mxu0 %v4814
      %v4862 = vpop.f32.mrb[0].mxu0
      %v4863 = vpop.f32.mrb[0].mxu0
      %v4864 = vpop.f32.mrb[0].mxu0
      %v4865 = vadd.f32 0.0, %v4864
      %v4866 = vpop.f32.mrb[0].mxu0
      %4867 = vmatprep.mubr.bf16.mxu0 0
      %4868 = vmatmul.mubr.bf16.gmra.mrb[0].mxu0 %v4817
      %v4869 = vpop.f32.mrb[0].mxu0
      %v4870 = vpop.f32.mrb[0].mxu0
      %v4871 = vpop.f32.mrb[0].mxu0
      %v4872 = vadd.f32 0.0, %v4871
      %v4873 = vpop.f32.mrb[0].mxu0
      %4874 = vmatprep.mubr.bf16.mxu0 0
      %4875 = vmatmul.mubr.bf16.gmra.mrb[0].mxu0 %v4820
      %v4876 = vpop.f32.mrb[0].mxu0
      %v4877 = vpop.f32.mrb[0].mxu0
      %v4878 = vpop.f32.mrb[0].mxu0
      %v4879 = vadd.f32 0.0, %v4878
      %v4880 = vpop.f32.mrb[0].mxu0
      %4881 = vmatprep.mubr.bf16.mxu0 0
      %4882 = vmatmul.mubr.bf16.gmra.mrb[0].mxu0 %v4823
      %v4883 = vpop.f32.mrb[0].mxu0
      %v4884 = vpop.f32.mrb[0].mxu0
      %v4885 = vpop.f32.mrb[0].mxu0
      %v4886 = vadd.f32 0.0, %v4885
      %v4887 = vpop.f32.mrb[0].mxu0
      %4888 = vdwg.mxu0
      %v4889 = vld [vmem:[%s4635] sm:$0xf]
      %v4890 = vld [vmem:[%s4635 + $0x10] sm:$0xf]
      %v4891 = vld [vmem:[%s4635 + $0x20] sm:$0xf]
      %v4892 = vld [vmem:[%s4635 + $0x30] sm:$0xf]
      %v4897 = vrot.slane %v4865, 4
      %v4898 = vrot.slane %v4872, 4
      %v4899 = vrot.slane %v4879, 4
      %v4900 = vrot.slane %v4886, 4
      %v4905 = vadd.f32 %v4889, %v4897
      %v4906 = vadd.f32 %v4890, %v4898
      %v4907 = vadd.f32 %v4891, %v4899
      %v4908 = vadd.f32 %v4892, %v4900
      %4909 = vst.msk [vmem:[%s4635] sm:$0xf] %vm4644, %v4905
      %4910 = vst.msk [vmem:[%s4635 + $0x10] sm:$0xf] %vm4644, %v4906
      %4911 = vst.msk [vmem:[%s4635 + $0x20] sm:$0xf] %vm4644, %v4907
      %4912 = vst.msk [vmem:[%s4635 + $0x30] sm:$0xf] %vm4644, %v4908
      %v4913 = vld [vmem:[%s381] sm:$0xf]
      %v4914 = vld [vmem:[%s381 + $0x4] sm:$0xf]
      %v4915 = vld [vmem:[%s381 + $0x8] sm:$0xf]
      %v4916 = vld [vmem:[%s381 + $0xc] sm:$0xf]
      %v4917 = vld [vmem:[%s381 + $0x10] sm:$0xf]
      %v4918 = vld [vmem:[%s381 + $0x14] sm:$0xf]
      %v4919 = vld [vmem:[%s381 + $0x18] sm:$0xf]
      %v4920 = vld [vmem:[%s381 + $0x1c] sm:$0xf]
      %v4921 = vld [vmem:[%s381 + $0x20] sm:$0xf]
      %v4922 = vld [vmem:[%s381 + $0x24] sm:$0xf]
      %v4923 = vld [vmem:[%s381 + $0x28] sm:$0xf]
      %v4924 = vld [vmem:[%s381 + $0x2c] sm:$0xf]
      %v4925 = vld [vmem:[%s381 + $0x30] sm:$0xf]
      %v4926 = vld [vmem:[%s381 + $0x34] sm:$0xf]
      %v4927 = vld [vmem:[%s381 + $0x38] sm:$0xf]
      %v4928 = vld [vmem:[%s381 + $0x3c] sm:$0xf]
      %v4929 = vld [vmem:[%s381 + $0x40] sm:$0xf]
      %v4930 = vld [vmem:[%s381 + $0x44] sm:$0xf]
      %v4931 = vld [vmem:[%s381 + $0x48] sm:$0xf]
      %v4932 = vld [vmem:[%s381 + $0x4c] sm:$0xf]
      %v4933 = vld [vmem:[%s381 + $0x50] sm:$0xf]
      %v4934 = vld [vmem:[%s381 + $0x54] sm:$0xf]
      %v4935 = vld [vmem:[%s381 + $0x58] sm:$0xf]
      %v4936 = vld [vmem:[%s381 + $0x5c] sm:$0xf]
      %v4937 = vld [vmem:[%s381 + $0x60] sm:$0xf]
      %v4938 = vld [vmem:[%s381 + $0x64] sm:$0xf]
      %v4939 = vld [vmem:[%s381 + $0x68] sm:$0xf]
      %v4940 = vld [vmem:[%s381 + $0x6c] sm:$0xf]
      %v4941 = vld [vmem:[%s381 + $0x70] sm:$0xf]
      %v4942 = vld [vmem:[%s381 + $0x74] sm:$0xf]
      %v4943 = vld [vmem:[%s381 + $0x78] sm:$0xf]
      %v4944 = vld [vmem:[%s381 + $0x7c] sm:$0xf]
      %s4945 = scalar_lea.vmem %s3, 24
      %v4946 = vld [vmem:[%s4945] sm:$0x3]
      %v4979 = vunpack.c.l.b16 %v4913
      %v4980 = vunpack.c.l.b16 %v4914
      %v4981 = vunpack.c.l.b16 %v4915
      %v4982 = vunpack.c.l.b16 %v4916
      %v4983 = vunpack.c.l.b16 %v4917
      %v4984 = vunpack.c.l.b16 %v4918
      %v4985 = vunpack.c.l.b16 %v4919
      %v4986 = vunpack.c.l.b16 %v4920
      %v4987 = vunpack.c.l.b16 %v4921
      %v4988 = vunpack.c.l.b16 %v4922
      %v4989 = vunpack.c.l.b16 %v4923
      %v4990 = vunpack.c.l.b16 %v4924
      %v4991 = vunpack.c.l.b16 %v4925
      %v4992 = vunpack.c.l.b16 %v4926
      %v4993 = vunpack.c.l.b16 %v4927
      %v4994 = vunpack.c.l.b16 %v4928
      %v4995 = vunpack.c.l.b16 %v4929
      %v4996 = vunpack.c.l.b16 %v4930
      %v4997 = vunpack.c.l.b16 %v4931
      %v4998 = vunpack.c.l.b16 %v4932
      %v4999 = vunpack.c.l.b16 %v4933
      %v5000 = vunpack.c.l.b16 %v4934
      %v5001 = vunpack.c.l.b16 %v4935
      %v5002 = vunpack.c.l.b16 %v4936
      %v5003 = vunpack.c.l.b16 %v4937
      %v5004 = vunpack.c.l.b16 %v4938
      %v5005 = vunpack.c.l.b16 %v4939
      %v5006 = vunpack.c.l.b16 %v4940
      %v5007 = vunpack.c.l.b16 %v4941
      %v5008 = vunpack.c.l.b16 %v4942
      %v5009 = vunpack.c.l.b16 %v4943
      %v5010 = vunpack.c.l.b16 %v4944
      %v5011 = vpack.c.b16 %v4980, %v4979
      %v5012 = vpack.c.b16 %v4982, %v4981
      %v5013 = vpack.c.b16 %v4984, %v4983
      %v5014 = vpack.c.b16 %v4986, %v4985
      %v5015 = vpack.c.b16 %v4988, %v4987
      %v5016 = vpack.c.b16 %v4990, %v4989
      %v5017 = vpack.c.b16 %v4992, %v4991
      %v5018 = vpack.c.b16 %v4994, %v4993
      %v5019 = vpack.c.b16 %v4996, %v4995
      %v5020 = vpack.c.b16 %v4998, %v4997
      %v5021 = vpack.c.b16 %v5000, %v4999
      %v5022 = vpack.c.b16 %v5002, %v5001
      %v5023 = vpack.c.b16 %v5004, %v5003
      %v5024 = vpack.c.b16 %v5006, %v5005
      %v5025 = vpack.c.b16 %v5008, %v5007
      %v5026 = vpack.c.b16 %v5010, %v5009
      %v5028 = vsel %vm517, %v5011, 0
      %v5031 = vsel %vm517, %v5012, 0
      %v5034 = vsel %vm517, %v5013, 0
      %v5037 = vsel %vm517, %v5014, 0
      %v5040 = vsel %vm517, %v5015, 0
      %v5043 = vsel %vm517, %v5016, 0
      %v5046 = vsel %vm517, %v5017, 0
      %v5049 = vsel %vm517, %v5018, 0
      %v5052 = vsel %vm517, %v5019, 0
      %v5055 = vsel %vm517, %v5020, 0
      %v5058 = vsel %vm517, %v5021, 0
      %v5061 = vsel %vm517, %v5022, 0
      %v5064 = vsel %vm517, %v5023, 0
      %v5067 = vsel %vm517, %v5024, 0
      %v5070 = vsel %vm517, %v5025, 0
      %v5073 = vsel %vm517, %v5026, 0
      %v5076 = vsel %vm566, %v4946, 0
      %5078 = vmatprep.subr.bf16.mxu0 0
      %5079 = vmatpush1.bf16.msra.mxu0 %v5076
      %5080 = vmatprep.subr.bf16.mxu0 0
      %5081 = vmatpush1.bf16.msra.mxu0 0
      %5082 = vmatprep.subr.bf16.mxu0 0
      %5083 = vmatpush1.bf16.msra.mxu0 0
      %5084 = vmatprep.subr.bf16.mxu0 0
      %5085 = vmatpush1.bf16.msra.mxu0 0
      %5086 = vmatprep.subr.bf16.mxu0 0
      %5087 = vmatpush1.bf16.msra.mxu0 0
      %5088 = vmatprep.subr.bf16.mxu0 0
      %5089 = vmatpush1.bf16.msra.mxu0 0
      %5090 = vmatprep.subr.bf16.mxu0 0
      %5091 = vmatpush1.bf16.msra.mxu0 0
      %5092 = vmatprep.subr.bf16.mxu0 0
      %5093 = vmatpush1.bf16.msra.mxu0 0
      %5094 = vmatprep.subr.bf16.mxu0 0
      %5095 = vmatpush1.bf16.msra.mxu0 0
      %5096 = vmatprep.subr.bf16.mxu0 0
      %5097 = vmatpush1.bf16.msra.mxu0 0
      %5098 = vmatprep.subr.bf16.mxu0 0
      %5099 = vmatpush1.bf16.msra.mxu0 0
      %5100 = vmatprep.subr.bf16.mxu0 0
      %5101 = vmatpush1.bf16.msra.mxu0 0
      %5102 = vmatprep.subr.bf16.mxu0 0
      %5103 = vmatpush1.bf16.msra.mxu0 0
      %5104 = vmatprep.subr.bf16.mxu0 0
      %5105 = vmatpush1.bf16.msra.mxu0 0
      %5106 = vmatprep.subr.bf16.mxu0 0
      %5107 = vmatpush1.bf16.msra.mxu0 0
      %5108 = vmatprep.subr.bf16.mxu0 0
      %5109 = vmatpush1.bf16.msra.mxu0 0
      %5110 = vmatprep.mubr.bf16.mxu0 0
      %5111 = vmatmul.mubr.bf16.gmra.mrb[0].mxu0 %v5028
      %v5112 = vpop.f32.mrb[0].mxu0
      %v5113 = vadd.f32 0.0, %v5112
      %v5114 = vpop.f32.mrb[0].mxu0
      %v5115 = vpop.f32.mrb[0].mxu0
      %v5116 = vpop.f32.mrb[0].mxu0
      %5117 = vmatprep.mubr.bf16.mxu0 0
      %5118 = vmatmul.mubr.bf16.gmra.mrb[0].mxu0 %v5031
      %v5119 = vpop.f32.mrb[0].mxu0
      %v5120 = vadd.f32 0.0, %v5119
      %v5121 = vpop.f32.mrb[0].mxu0
      %v5122 = vpop.f32.mrb[0].mxu0
      %v5123 = vpop.f32.mrb[0].mxu0
      %5124 = vmatprep.mubr.bf16.mxu0 0
      %5125 = vmatmul.mubr.bf16.gmra.mrb[0].mxu0 %v5034
      %v5126 = vpop.f32.mrb[0].mxu0
      %v5127 = vadd.f32 0.0, %v5126
      %v5128 = vpop.f32.mrb[0].mxu0
      %v5129 = vpop.f32.mrb[0].mxu0
      %v5130 = vpop.f32.mrb[0].mxu0
      %5131 = vmatprep.mubr.bf16.mxu0 0
      %5132 = vmatmul.mubr.bf16.gmra.mrb[0].mxu0 %v5037
      %v5133 = vpop.f32.mrb[0].mxu0
      %v5134 = vadd.f32 0.0, %v5133
      %v5135 = vpop.f32.mrb[0].mxu0
      %v5136 = vpop.f32.mrb[0].mxu0
      %v5137 = vpop.f32.mrb[0].mxu0
      %5138 = vmatprep.mubr.bf16.mxu0 0
      %5139 = vmatmul.mubr.bf16.gmra.mrb[0].mxu0 %v5040
      %v5140 = vpop.f32.mrb[0].mxu0
      %v5141 = vadd.f32 0.0, %v5140
      %v5142 = vpop.f32.mrb[0].mxu0
      %v5143 = vpop.f32.mrb[0].mxu0
      %v5144 = vpop.f32.mrb[0].mxu0
      %5145 = vmatprep.mubr.bf16.mxu0 0
      %5146 = vmatmul.mubr.bf16.gmra.mrb[0].mxu0 %v5043
      %v5147 = vpop.f32.mrb[0].mxu0
      %v5148 = vadd.f32 0.0, %v5147
      %v5149 = vpop.f32.mrb[0].mxu0
      %v5150 = vpop.f32.mrb[0].mxu0
      %v5151 = vpop.f32.mrb[0].mxu0
      %5152 = vmatprep.mubr.bf16.mxu0 0
      %5153 = vmatmul.mubr.bf16.gmra.mrb[0].mxu0 %v5046
      %v5154 = vpop.f32.mrb[0].mxu0
      %v5155 = vadd.f32 0.0, %v5154
      %v5156 = vpop.f32.mrb[0].mxu0
      %v5157 = vpop.f32.mrb[0].mxu0
      %v5158 = vpop.f32.mrb[0].mxu0
      %5159 = vmatprep.mubr.bf16.mxu0 0
      %5160 = vmatmul.mubr.bf16.gmra.mrb[0].mxu0 %v5049
      %v5161 = vpop.f32.mrb[0].mxu0
      %v5162 = vadd.f32 0.0, %v5161
      %v5163 = vpop.f32.mrb[0].mxu0
      %v5164 = vpop.f32.mrb[0].mxu0
      %v5165 = vpop.f32.mrb[0].mxu0
      %5166 = vmatprep.mubr.bf16.mxu0 0
      %5167 = vmatmul.mubr.bf16.gmra.mrb[0].mxu0 %v5052
      %v5168 = vpop.f32.mrb[0].mxu0
      %v5169 = vadd.f32 0.0, %v5168
      %v5170 = vpop.f32.mrb[0].mxu0
      %v5171 = vpop.f32.mrb[0].mxu0
      %v5172 = vpop.f32.mrb[0].mxu0
      %5173 = vmatprep.mubr.bf16.mxu0 0
      %5174 = vmatmul.mubr.bf16.gmra.mrb[0].mxu0 %v5055
      %v5175 = vpop.f32.mrb[0].mxu0
      %v5176 = vadd.f32 0.0, %v5175
      %v5177 = vpop.f32.mrb[0].mxu0
      %v5178 = vpop.f32.mrb[0].mxu0
      %v5179 = vpop.f32.mrb[0].mxu0
      %5180 = vmatprep.mubr.bf16.mxu0 0
      %5181 = vmatmul.mubr.bf16.gmra.mrb[0].mxu0 %v5058
      %v5182 = vpop.f32.mrb[0].mxu0
      %v5183 = vadd.f32 0.0, %v5182
      %v5184 = vpop.f32.mrb[0].mxu0
      %v5185 = vpop.f32.mrb[0].mxu0
      %v5186 = vpop.f32.mrb[0].mxu0
      %5187 = vmatprep.mubr.bf16.mxu0 0
      %5188 = vmatmul.mubr.bf16.gmra.mrb[0].mxu0 %v5061
      %v5189 = vpop.f32.mrb[0].mxu0
      %v5190 = vadd.f32 0.0, %v5189
      %v5191 = vpop.f32.mrb[0].mxu0
      %v5192 = vpop.f32.mrb[0].mxu0
      %v5193 = vpop.f32.mrb[0].mxu0
      %5194 = vmatprep.mubr.bf16.mxu0 0
      %5195 = vmatmul.mubr.bf16.gmra.mrb[0].mxu0 %v5064
      %v5196 = vpop.f32.mrb[0].mxu0
      %v5197 = vadd.f32 0.0, %v5196
      %v5198 = vpop.f32.mrb[0].mxu0
      %v5199 = vpop.f32.mrb[0].mxu0
      %v5200 = vpop.f32.mrb[0].mxu0
      %5201 = vmatprep.mubr.bf16.mxu0 0
      %5202 = vmatmul.mubr.bf16.gmra.mrb[0].mxu0 %v5067
      %v5203 = vpop.f32.mrb[0].mxu0
      %v5204 = vadd.f32 0.0, %v5203
      %v5205 = vpop.f32.mrb[0].mxu0
      %v5206 = vpop.f32.mrb[0].mxu0
      %v5207 = vpop.f32.mrb[0].mxu0
      %5208 = vmatprep.mubr.bf16.mxu0 0
      %5209 = vmatmul.mubr.bf16.gmra.mrb[0].mxu0 %v5070
      %v5210 = vpop.f32.mrb[0].mxu0
      %v5211 = vadd.f32 0.0, %v5210
      %v5212 = vpop.f32.mrb[0].mxu0
      %v5213 = vpop.f32.mrb[0].mxu0
      %v5214 = vpop.f32.mrb[0].mxu0
      %5215 = vmatprep.mubr.bf16.mxu0 0
      %5216 = vmatmul.mubr.bf16.gmra.mrb[0].mxu0 %v5073
      %v5217 = vpop.f32.mrb[0].mxu0
      %v5218 = vadd.f32 0.0, %v5217
      %v5219 = vpop.f32.mrb[0].mxu0
      %v5220 = vpop.f32.mrb[0].mxu0
      %v5221 = vpop.f32.mrb[0].mxu0
      %5222 = vdwg.mxu0
      %v5223 = vld [vmem:[#allocation2 + $0xc] sm:$0xf]
      %v5224 = vld [vmem:[#allocation2 + $0x1c] sm:$0xf]
      %v5225 = vld [vmem:[#allocation2 + $0x2c] sm:$0xf]
      %v5226 = vld [vmem:[#allocation2 + $0x3c] sm:$0xf]
      %v5227 = vld [vmem:[#allocation2 + $0x4c] sm:$0xf]
      %v5228 = vld [vmem:[#allocation2 + $0x5c] sm:$0xf]
      %v5229 = vld [vmem:[#allocation2 + $0x6c] sm:$0xf]
      %v5230 = vld [vmem:[#allocation2 + $0x7c] sm:$0xf]
      %v5231 = vld [vmem:[#allocation2 + $0x8c] sm:$0xf]
      %v5232 = vld [vmem:[#allocation2 + $0x9c] sm:$0xf]
      %v5233 = vld [vmem:[#allocation2 + $0xac] sm:$0xf]
      %v5234 = vld [vmem:[#allocation2 + $0xbc] sm:$0xf]
      %v5235 = vld [vmem:[#allocation2 + $0xcc] sm:$0xf]
      %v5236 = vld [vmem:[#allocation2 + $0xdc] sm:$0xf]
      %v5237 = vld [vmem:[#allocation2 + $0xec] sm:$0xf]
      %v5238 = vld [vmem:[#allocation2 + $0xfc] sm:$0xf]
      %v5239 = vadd.f32 %v5223, %v5113
      %v5240 = vadd.f32 %v5224, %v5120
      %v5241 = vadd.f32 %v5225, %v5127
      %v5242 = vadd.f32 %v5226, %v5134
      %v5243 = vadd.f32 %v5227, %v5141
      %v5244 = vadd.f32 %v5228, %v5148
      %v5245 = vadd.f32 %v5229, %v5155
      %v5246 = vadd.f32 %v5230, %v5162
      %v5247 = vadd.f32 %v5231, %v5169
      %v5248 = vadd.f32 %v5232, %v5176
      %v5249 = vadd.f32 %v5233, %v5183
      %v5250 = vadd.f32 %v5234, %v5190
      %v5251 = vadd.f32 %v5235, %v5197
      %v5252 = vadd.f32 %v5236, %v5204
      %v5253 = vadd.f32 %v5237, %v5211
      %v5254 = vadd.f32 %v5238, %v5218
      %5255 = vst.msk [vmem:[#allocation2 + $0xc] sm:$0xf] %vm4644, %v5239
      %5256 = vst.msk [vmem:[#allocation2 + $0x1c] sm:$0xf] %vm4644, %v5240
      %5257 = vst.msk [vmem:[#allocation2 + $0x2c] sm:$0xf] %vm4644, %v5241
      %5258 = vst.msk [vmem:[#allocation2 + $0x3c] sm:$0xf] %vm4644, %v5242
      %5259 = vst.msk [vmem:[#allocation2 + $0x4c] sm:$0xf] %vm4644, %v5243
      %5260 = vst.msk [vmem:[#allocation2 + $0x5c] sm:$0xf] %vm4644, %v5244
      %5261 = vst.msk [vmem:[#allocation2 + $0x6c] sm:$0xf] %vm4644, %v5245
      %5262 = vst.msk [vmem:[#allocation2 + $0x7c] sm:$0xf] %vm4644, %v5246
      %5263 = vst.msk [vmem:[#allocation2 + $0x8c] sm:$0xf] %vm4644, %v5247
      %5264 = vst.msk [vmem:[#allocation2 + $0x9c] sm:$0xf] %vm4644, %v5248
      %5265 = vst.msk [vmem:[#allocation2 + $0xac] sm:$0xf] %vm4644, %v5249
      %5266 = vst.msk [vmem:[#allocation2 + $0xbc] sm:$0xf] %vm4644, %v5250
      %5267 = vst.msk [vmem:[#allocation2 + $0xcc] sm:$0xf] %vm4644, %v5251
      %5268 = vst.msk [vmem:[#allocation2 + $0xdc] sm:$0xf] %vm4644, %v5252
      %5269 = vst.msk [vmem:[#allocation2 + $0xec] sm:$0xf] %vm4644, %v5253
      %5270 = vst.msk [vmem:[#allocation2 + $0xfc] sm:$0xf] %vm4644, %v5254
      %v5271 = vld [vmem:[%s381] sm:$0xf]
      %v5272 = vld [vmem:[%s381 + $0x4] sm:$0xf]
      %v5273 = vld [vmem:[%s381 + $0x8] sm:$0xf]
      %v5274 = vld [vmem:[%s381 + $0xc] sm:$0xf]
      %v5275 = vld [vmem:[%s381 + $0x10] sm:$0xf]
      %v5276 = vld [vmem:[%s381 + $0x14] sm:$0xf]
      %v5277 = vld [vmem:[%s381 + $0x18] sm:$0xf]
      %v5278 = vld [vmem:[%s381 + $0x1c] sm:$0xf]
      %v5279 = vld [vmem:[%s381 + $0x20] sm:$0xf]
      %v5280 = vld [vmem:[%s381 + $0x24] sm:$0xf]
      %v5281 = vld [vmem:[%s381 + $0x28] sm:$0xf]
      %v5282 = vld [vmem:[%s381 + $0x2c] sm:$0xf]
      %v5283 = vld [vmem:[%s381 + $0x30] sm:$0xf]
      %v5284 = vld [vmem:[%s381 + $0x34] sm:$0xf]
      %v5285 = vld [vmem:[%s381 + $0x38] sm:$0xf]
      %v5286 = vld [vmem:[%s381 + $0x3c] sm:$0xf]
      %v5287 = vld [vmem:[%s381 + $0x40] sm:$0xf]
      %v5288 = vld [vmem:[%s381 + $0x44] sm:$0xf]
      %v5289 = vld [vmem:[%s381 + $0x48] sm:$0xf]
      %v5290 = vld [vmem:[%s381 + $0x4c] sm:$0xf]
      %v5291 = vld [vmem:[%s381 + $0x50] sm:$0xf]
      %v5292 = vld [vmem:[%s381 + $0x54] sm:$0xf]
      %v5293 = vld [vmem:[%s381 + $0x58] sm:$0xf]
      %v5294 = vld [vmem:[%s381 + $0x5c] sm:$0xf]
      %v5295 = vld [vmem:[%s381 + $0x60] sm:$0xf]
      %v5296 = vld [vmem:[%s381 + $0x64] sm:$0xf]
      %v5297 = vld [vmem:[%s381 + $0x68] sm:$0xf]
      %v5298 = vld [vmem:[%s381 + $0x6c] sm:$0xf]
      %v5299 = vld [vmem:[%s381 + $0x70] sm:$0xf]
      %v5300 = vld [vmem:[%s381 + $0x74] sm:$0xf]
      %v5301 = vld [vmem:[%s381 + $0x78] sm:$0xf]
      %v5302 = vld [vmem:[%s381 + $0x7c] sm:$0xf]
      %s5303 = scalar_lea.vmem %s3, 28
      %v5304 = vld [vmem:[%s5303] sm:$0x3]
      %v5337 = vunpack.c.l.b16 %v5271
      %v5338 = vunpack.c.l.b16 %v5272
      %v5339 = vunpack.c.l.b16 %v5273
      %v5340 = vunpack.c.l.b16 %v5274
      %v5341 = vunpack.c.l.b16 %v5275
      %v5342 = vunpack.c.l.b16 %v5276
      %v5343 = vunpack.c.l.b16 %v5277
      %v5344 = vunpack.c.l.b16 %v5278
      %v5345 = vunpack.c.l.b16 %v5279
      %v5346 = vunpack.c.l.b16 %v5280
      %v5347 = vunpack.c.l.b16 %v5281
      %v5348 = vunpack.c.l.b16 %v5282
      %v5349 = vunpack.c.l.b16 %v5283
      %v5350 = vunpack.c.l.b16 %v5284
      %v5351 = vunpack.c.l.b16 %v5285
      %v5352 = vunpack.c.l.b16 %v5286
      %v5353 = vunpack.c.l.b16 %v5287
      %v5354 = vunpack.c.l.b16 %v5288
      %v5355 = vunpack.c.l.b16 %v5289
      %v5356 = vunpack.c.l.b16 %v5290
      %v5357 = vunpack.c.l.b16 %v5291
      %v5358 = vunpack.c.l.b16 %v5292
      %v5359 = vunpack.c.l.b16 %v5293
      %v5360 = vunpack.c.l.b16 %v5294
      %v5361 = vunpack.c.l.b16 %v5295
      %v5362 = vunpack.c.l.b16 %v5296
      %v5363 = vunpack.c.l.b16 %v5297
      %v5364 = vunpack.c.l.b16 %v5298
      %v5365 = vunpack.c.l.b16 %v5299
      %v5366 = vunpack.c.l.b16 %v5300
      %v5367 = vunpack.c.l.b16 %v5301
      %v5368 = vunpack.c.l.b16 %v5302
      %v5369 = vpack.c.b16 %v5338, %v5337
      %v5370 = vpack.c.b16 %v5340, %v5339
      %v5371 = vpack.c.b16 %v5342, %v5341
      %v5372 = vpack.c.b16 %v5344, %v5343
      %v5373 = vpack.c.b16 %v5346, %v5345
      %v5374 = vpack.c.b16 %v5348, %v5347
      %v5375 = vpack.c.b16 %v5350, %v5349
      %v5376 = vpack.c.b16 %v5352, %v5351
      %v5377 = vpack.c.b16 %v5354, %v5353
      %v5378 = vpack.c.b16 %v5356, %v5355
      %v5379 = vpack.c.b16 %v5358, %v5357
      %v5380 = vpack.c.b16 %v5360, %v5359
      %v5381 = vpack.c.b16 %v5362, %v5361
      %v5382 = vpack.c.b16 %v5364, %v5363
      %v5383 = vpack.c.b16 %v5366, %v5365
      %v5384 = vpack.c.b16 %v5368, %v5367
      %v5386 = vsel %vm517, %v5369, 0
      %v5389 = vsel %vm517, %v5370, 0
      %v5392 = vsel %vm517, %v5371, 0
      %v5395 = vsel %vm517, %v5372, 0
      %v5398 = vsel %vm517, %v5373, 0
      %v5401 = vsel %vm517, %v5374, 0
      %v5404 = vsel %vm517, %v5375, 0
      %v5407 = vsel %vm517, %v5376, 0
      %v5410 = vsel %vm517, %v5377, 0
      %v5413 = vsel %vm517, %v5378, 0
      %v5416 = vsel %vm517, %v5379, 0
      %v5419 = vsel %vm517, %v5380, 0
      %v5422 = vsel %vm517, %v5381, 0
      %v5425 = vsel %vm517, %v5382, 0
      %v5428 = vsel %vm517, %v5383, 0
      %v5431 = vsel %vm517, %v5384, 0
      %v5434 = vsel %vm566, %v5304, 0
      %5436 = vmatprep.subr.bf16.mxu0 0
      %5437 = vmatpush1.bf16.msra.mxu0 %v5434
      %5438 = vmatprep.subr.bf16.mxu0 0
      %5439 = vmatpush1.bf16.msra.mxu0 0
      %5440 = vmatprep.subr.bf16.mxu0 0
      %5441 = vmatpush1.bf16.msra.mxu0 0
      %5442 = vmatprep.subr.bf16.mxu0 0
      %5443 = vmatpush1.bf16.msra.mxu0 0
      %5444 = vmatprep.subr.bf16.mxu0 0
      %5445 = vmatpush1.bf16.msra.mxu0 0
      %5446 = vmatprep.subr.bf16.mxu0 0
      %5447 = vmatpush1.bf16.msra.mxu0 0
      %5448 = vmatprep.subr.bf16.mxu0 0
      %5449 = vmatpush1.bf16.msra.mxu0 0
      %5450 = vmatprep.subr.bf16.mxu0 0
      %5451 = vmatpush1.bf16.msra.mxu0 0
      %5452 = vmatprep.subr.bf16.mxu0 0
      %5453 = vmatpush1.bf16.msra.mxu0 0
      %5454 = vmatprep.subr.bf16.mxu0 0
      %5455 = vmatpush1.bf16.msra.mxu0 0
      %5456 = vmatprep.subr.bf16.mxu0 0
      %5457 = vmatpush1.bf16.msra.mxu0 0
      %5458 = vmatprep.subr.bf16.mxu0 0
      %5459 = vmatpush1.bf16.msra.mxu0 0
      %5460 = vmatprep.subr.bf16.mxu0 0
      %5461 = vmatpush1.bf16.msra.mxu0 0
      %5462 = vmatprep.subr.bf16.mxu0 0
      %5463 = vmatpush1.bf16.msra.mxu0 0
      %5464 = vmatprep.subr.bf16.mxu0 0
      %5465 = vmatpush1.bf16.msra.mxu0 0
      %5466 = vmatprep.subr.bf16.mxu0 0
      %5467 = vmatpush1.bf16.msra.mxu0 0
      %5468 = vmatprep.mubr.bf16.mxu0 0
      %5469 = vmatmul.mubr.bf16.gmra.mrb[0].mxu0 %v5386
      %v5470 = vpop.f32.mrb[0].mxu0
      %v5471 = vpop.f32.mrb[0].mxu0
      %v5472 = vpop.f32.mrb[0].mxu0
      %v5473 = vadd.f32 0.0, %v5472
      %v5474 = vpop.f32.mrb[0].mxu0
      %5475 = vmatprep.mubr.bf16.mxu0 0
      %5476 = vmatmul.mubr.bf16.gmra.mrb[0].mxu0 %v5389
      %v5477 = vpop.f32.mrb[0].mxu0
      %v5478 = vpop.f32.mrb[0].mxu0
      %v5479 = vpop.f32.mrb[0].mxu0
      %v5480 = vadd.f32 0.0, %v5479
      %v5481 = vpop.f32.mrb[0].mxu0
      %5482 = vmatprep.mubr.bf16.mxu0 0
      %5483 = vmatmul.mubr.bf16.gmra.mrb[0].mxu0 %v5392
      %v5484 = vpop.f32.mrb[0].mxu0
      %v5485 = vpop.f32.mrb[0].mxu0
      %v5486 = vpop.f32.mrb[0].mxu0
      %v5487 = vadd.f32 0.0, %v5486
      %v5488 = vpop.f32.mrb[0].mxu0
      %5489 = vmatprep.mubr.bf16.mxu0 0
      %5490 = vmatmul.mubr.bf16.gmra.mrb[0].mxu0 %v5395
      %v5491 = vpop.f32.mrb[0].mxu0
      %v5492 = vpop.f32.mrb[0].mxu0
      %v5493 = vpop.f32.mrb[0].mxu0
      %v5494 = vadd.f32 0.0, %v5493
      %v5495 = vpop.f32.mrb[0].mxu0
      %5496 = vmatprep.mubr.bf16.mxu0 0
      %5497 = vmatmul.mubr.bf16.gmra.mrb[0].mxu0 %v5398
      %v5498 = vpop.f32.mrb[0].mxu0
      %v5499 = vpop.f32.mrb[0].mxu0
      %v5500 = vpop.f32.mrb[0].mxu0
      %v5501 = vadd.f32 0.0, %v5500
      %v5502 = vpop.f32.mrb[0].mxu0
      %5503 = vmatprep.mubr.bf16.mxu0 0
      %5504 = vmatmul.mubr.bf16.gmra.mrb[0].mxu0 %v5401
      %v5505 = vpop.f32.mrb[0].mxu0
      %v5506 = vpop.f32.mrb[0].mxu0
      %v5507 = vpop.f32.mrb[0].mxu0
      %v5508 = vadd.f32 0.0, %v5507
      %v5509 = vpop.f32.mrb[0].mxu0
      %5510 = vmatprep.mubr.bf16.mxu0 0
      %5511 = vmatmul.mubr.bf16.gmra.mrb[0].mxu0 %v5404
      %v5512 = vpop.f32.mrb[0].mxu0
      %v5513 = vpop.f32.mrb[0].mxu0
      %v5514 = vpop.f32.mrb[0].mxu0
      %v5515 = vadd.f32 0.0, %v5514
      %v5516 = vpop.f32.mrb[0].mxu0
      %5517 = vmatprep.mubr.bf16.mxu0 0
      %5518 = vmatmul.mubr.bf16.gmra.mrb[0].mxu0 %v5407
      %v5519 = vpop.f32.mrb[0].mxu0
      %v5520 = vpop.f32.mrb[0].mxu0
      %v5521 = vpop.f32.mrb[0].mxu0
      %v5522 = vadd.f32 0.0, %v5521
      %v5523 = vpop.f32.mrb[0].mxu0
      %5524 = vmatprep.mubr.bf16.mxu0 0
      %5525 = vmatmul.mubr.bf16.gmra.mrb[0].mxu0 %v5410
      %v5526 = vpop.f32.mrb[0].mxu0
      %v5527 = vpop.f32.mrb[0].mxu0
      %v5528 = vpop.f32.mrb[0].mxu0
      %v5529 = vadd.f32 0.0, %v5528
      %v5530 = vpop.f32.mrb[0].mxu0
      %5531 = vmatprep.mubr.bf16.mxu0 0
      %5532 = vmatmul.mubr.bf16.gmra.mrb[0].mxu0 %v5413
      %v5533 = vpop.f32.mrb[0].mxu0
      %v5534 = vpop.f32.mrb[0].mxu0
      %v5535 = vpop.f32.mrb[0].mxu0
      %v5536 = vadd.f32 0.0, %v5535
      %v5537 = vpop.f32.mrb[0].mxu0
      %5538 = vmatprep.mubr.bf16.mxu0 0
      %5539 = vmatmul.mubr.bf16.gmra.mrb[0].mxu0 %v5416
      %v5540 = vpop.f32.mrb[0].mxu0
      %v5541 = vpop.f32.mrb[0].mxu0
      %v5542 = vpop.f32.mrb[0].mxu0
      %v5543 = vadd.f32 0.0, %v5542
      %v5544 = vpop.f32.mrb[0].mxu0
      %5545 = vmatprep.mubr.bf16.mxu0 0
      %5546 = vmatmul.mubr.bf16.gmra.mrb[0].mxu0 %v5419
      %v5547 = vpop.f32.mrb[0].mxu0
      %v5548 = vpop.f32.mrb[0].mxu0
      %v5549 = vpop.f32.mrb[0].mxu0
      %v5550 = vadd.f32 0.0, %v5549
      %v5551 = vpop.f32.mrb[0].mxu0
      %5552 = vmatprep.mubr.bf16.mxu0 0
      %5553 = vmatmul.mubr.bf16.gmra.mrb[0].mxu0 %v5422
      %v5554 = vpop.f32.mrb[0].mxu0
      %v5555 = vpop.f32.mrb[0].mxu0
      %v5556 = vpop.f32.mrb[0].mxu0
      %v5557 = vadd.f32 0.0, %v5556
      %v5558 = vpop.f32.mrb[0].mxu0
      %5559 = vmatprep.mubr.bf16.mxu0 0
      %5560 = vmatmul.mubr.bf16.gmra.mrb[0].mxu0 %v5425
      %v5561 = vpop.f32.mrb[0].mxu0
      %v5562 = vpop.f32.mrb[0].mxu0
      %v5563 = vpop.f32.mrb[0].mxu0
      %v5564 = vadd.f32 0.0, %v5563
      %v5565 = vpop.f32.mrb[0].mxu0
      %5566 = vmatprep.mubr.bf16.mxu0 0
      %5567 = vmatmul.mubr.bf16.gmra.mrb[0].mxu0 %v5428
      %v5568 = vpop.f32.mrb[0].mxu0
      %v5569 = vpop.f32.mrb[0].mxu0
      %v5570 = vpop.f32.mrb[0].mxu0
      %v5571 = vadd.f32 0.0, %v5570
      %v5572 = vpop.f32.mrb[0].mxu0
      %5573 = vmatprep.mubr.bf16.mxu0 0
      %5574 = vmatmul.mubr.bf16.gmra.mrb[0].mxu0 %v5431
      %v5575 = vpop.f32.mrb[0].mxu0
      %v5576 = vpop.f32.mrb[0].mxu0
      %v5577 = vpop.f32.mrb[0].mxu0
      %v5578 = vadd.f32 0.0, %v5577
      %v5579 = vpop.f32.mrb[0].mxu0
      %5580 = vdwg.mxu0
      %v5581 = vld [vmem:[#allocation2] sm:$0xf]
      %v5582 = vld [vmem:[#allocation2 + $0x10] sm:$0xf]
      %v5583 = vld [vmem:[#allocation2 + $0x20] sm:$0xf]
      %v5584 = vld [vmem:[#allocation2 + $0x30] sm:$0xf]
      %v5585 = vld [vmem:[#allocation2 + $0x40] sm:$0xf]
      %v5586 = vld [vmem:[#allocation2 + $0x50] sm:$0xf]
      %v5587 = vld [vmem:[#allocation2 + $0x60] sm:$0xf]
      %v5588 = vld [vmem:[#allocation2 + $0x70] sm:$0xf]
      %v5589 = vld [vmem:[#allocation2 + $0x80] sm:$0xf]
      %v5590 = vld [vmem:[#allocation2 + $0x90] sm:$0xf]
      %v5591 = vld [vmem:[#allocation2 + $0xa0] sm:$0xf]
      %v5592 = vld [vmem:[#allocation2 + $0xb0] sm:$0xf]
      %v5593 = vld [vmem:[#allocation2 + $0xc0] sm:$0xf]
      %v5594 = vld [vmem:[#allocation2 + $0xd0] sm:$0xf]
      %v5595 = vld [vmem:[#allocation2 + $0xe0] sm:$0xf]
      %v5596 = vld [vmem:[#allocation2 + $0xf0] sm:$0xf]
      %v5613 = vrot.slane %v5473, 4
      %v5614 = vrot.slane %v5480, 4
      %v5615 = vrot.slane %v5487, 4
      %v5616 = vrot.slane %v5494, 4
      %v5617 = vrot.slane %v5501, 4
      %v5618 = vrot.slane %v5508, 4
      %v5619 = vrot.slane %v5515, 4
      %v5620 = vrot.slane %v5522, 4
      %v5621 = vrot.slane %v5529, 4
      %v5622 = vrot.slane %v5536, 4
      %v5623 = vrot.slane %v5543, 4
      %v5624 = vrot.slane %v5550, 4
      %v5625 = vrot.slane %v5557, 4
      %v5626 = vrot.slane %v5564, 4
      %v5627 = vrot.slane %v5571, 4
      %v5628 = vrot.slane %v5578, 4
      %v5645 = vadd.f32 %v5581, %v5613
      %v5646 = vadd.f32 %v5582, %v5614
      %v5647 = vadd.f32 %v5583, %v5615
      %v5648 = vadd.f32 %v5584, %v5616
      %v5649 = vadd.f32 %v5585, %v5617
      %v5650 = vadd.f32 %v5586, %v5618
      %v5651 = vadd.f32 %v5587, %v5619
      %v5652 = vadd.f32 %v5588, %v5620
      %v5653 = vadd.f32 %v5589, %v5621
      %v5654 = vadd.f32 %v5590, %v5622
      %v5655 = vadd.f32 %v5591, %v5623
      %v5656 = vadd.f32 %v5592, %v5624
      %v5657 = vadd.f32 %v5593, %v5625
      %v5658 = vadd.f32 %v5594, %v5626
      %v5659 = vadd.f32 %v5595, %v5627
      %v5660 = vadd.f32 %v5596, %v5628
      %5661 = vst.msk [vmem:[#allocation2] sm:$0xf] %vm4644, %v5645
      %5662 = vst.msk [vmem:[#allocation2 + $0x10] sm:$0xf] %vm4644, %v5646
      %5663 = vst.msk [vmem:[#allocation2 + $0x20] sm:$0xf] %vm4644, %v5647
      %5664 = vst.msk [vmem:[#allocation2 + $0x30] sm:$0xf] %vm4644, %v5648
      %5665 = vst.msk [vmem:[#allocation2 + $0x40] sm:$0xf] %vm4644, %v5649
      %5666 = vst.msk [vmem:[#allocation2 + $0x50] sm:$0xf] %vm4644, %v5650
      %5667 = vst.msk [vmem:[#allocation2 + $0x60] sm:$0xf] %vm4644, %v5651
      %5668 = vst.msk [vmem:[#allocation2 + $0x70] sm:$0xf] %vm4644, %v5652
      %5669 = vst.msk [vmem:[#allocation2 + $0x80] sm:$0xf] %vm4644, %v5653
      %5670 = vst.msk [vmem:[#allocation2 + $0x90] sm:$0xf] %vm4644, %v5654
      %5671 = vst.msk [vmem:[#allocation2 + $0xa0] sm:$0xf] %vm4644, %v5655
      %5672 = vst.msk [vmem:[#allocation2 + $0xb0] sm:$0xf] %vm4644, %v5656
      %5673 = vst.msk [vmem:[#allocation2 + $0xc0] sm:$0xf] %vm4644, %v5657
      %5674 = vst.msk [vmem:[#allocation2 + $0xd0] sm:$0xf] %vm4644, %v5658
      %5675 = vst.msk [vmem:[#allocation2 + $0xe0] sm:$0xf] %vm4644, %v5659
      %5676 = vst.msk [vmem:[#allocation2 + $0xf0] sm:$0xf] %vm4644, %v5660
      %s5677 = scalar_lea.vmem %s381, 96
      %v5678 = vld [vmem:[%s5677] sm:$0xf]
      %v5679 = vld [vmem:[%s5677 + $0x4] sm:$0xf]
      %v5680 = vld [vmem:[%s5677 + $0x8] sm:$0xf]
      %v5681 = vld [vmem:[%s5677 + $0xc] sm:$0xf]
      %v5682 = vld [vmem:[%s5677 + $0x10] sm:$0xf]
      %v5683 = vld [vmem:[%s5677 + $0x14] sm:$0xf]
      %v5684 = vld [vmem:[%s5677 + $0x18] sm:$0xf]
      %v5685 = vld [vmem:[%s5677 + $0x1c] sm:$0xf]
      %s5686 = scalar_lea.vmem %s3, 30
      %v5687 = vld [vmem:[%s5686] sm:$0x3]
      %v5696 = vunpack.c.l.b16 %v5678
      %v5697 = vunpack.c.l.b16 %v5679
      %v5698 = vunpack.c.l.b16 %v5680
      %v5699 = vunpack.c.l.b16 %v5681
      %v5700 = vunpack.c.l.b16 %v5682
      %v5701 = vunpack.c.l.b16 %v5683
      %v5702 = vunpack.c.l.b16 %v5684
      %v5703 = vunpack.c.l.b16 %v5685
      %v5704 = vpack.c.b16 %v5697, %v5696
      %v5705 = vpack.c.b16 %v5699, %v5698
      %v5706 = vpack.c.b16 %v5701, %v5700
      %v5707 = vpack.c.b16 %v5703, %v5702
      %v5709 = vsel %vm517, %v5704, 0
      %v5712 = vsel %vm517, %v5705, 0
      %v5715 = vsel %vm517, %v5706, 0
      %v5718 = vsel %vm517, %v5707, 0
      %v5721 = vsel %vm566, %v5687, 0
      %5723 = vmatprep.subr.bf16.mxu0 0
      %5724 = vmatpush1.bf16.msra.mxu0 %v5721
      %5725 = vmatprep.subr.bf16.mxu0 0
      %5726 = vmatpush1.bf16.msra.mxu0 0
      %5727 = vmatprep.subr.bf16.mxu0 0
      %5728 = vmatpush1.bf16.msra.mxu0 0
      %5729 = vmatprep.subr.bf16.mxu0 0
      %5730 = vmatpush1.bf16.msra.mxu0 0
      %5731 = vmatprep.subr.bf16.mxu0 0
      %5732 = vmatpush1.bf16.msra.mxu0 0
      %5733 = vmatprep.subr.bf16.mxu0 0
      %5734 = vmatpush1.bf16.msra.mxu0 0
      %5735 = vmatprep.subr.bf16.mxu0 0
      %5736 = vmatpush1.bf16.msra.mxu0 0
      %5737 = vmatprep.subr.bf16.mxu0 0
      %5738 = vmatpush1.bf16.msra.mxu0 0
      %5739 = vmatprep.subr.bf16.mxu0 0
      %5740 = vmatpush1.bf16.msra.mxu0 0
      %5741 = vmatprep.subr.bf16.mxu0 0
      %5742 = vmatpush1.bf16.msra.mxu0 0
      %5743 = vmatprep.subr.bf16.mxu0 0
      %5744 = vmatpush1.bf16.msra.mxu0 0
      %5745 = vmatprep.subr.bf16.mxu0 0
      %5746 = vmatpush1.bf16.msra.mxu0 0
      %5747 = vmatprep.subr.bf16.mxu0 0
      %5748 = vmatpush1.bf16.msra.mxu0 0
      %5749 = vmatprep.subr.bf16.mxu0 0
      %5750 = vmatpush1.bf16.msra.mxu0 0
      %5751 = vmatprep.subr.bf16.mxu0 0
      %5752 = vmatpush1.bf16.msra.mxu0 0
      %5753 = vmatprep.subr.bf16.mxu0 0
      %5754 = vmatpush1.bf16.msra.mxu0 0
      %5755 = vmatprep.mubr.bf16.mxu0 0
      %5756 = vmatmul.mubr.bf16.gmra.mrb[0].mxu0 %v5709
      %v5757 = vpop.f32.mrb[0].mxu0
      %v5758 = vadd.f32 0.0, %v5757
      %v5759 = vpop.f32.mrb[0].mxu0
      %v5760 = vpop.f32.mrb[0].mxu0
      %v5761 = vpop.f32.mrb[0].mxu0
      %5762 = vmatprep.mubr.bf16.mxu0 0
      %5763 = vmatmul.mubr.bf16.gmra.mrb[0].mxu0 %v5712
      %v5764 = vpop.f32.mrb[0].mxu0
      %v5765 = vadd.f32 0.0, %v5764
      %v5766 = vpop.f32.mrb[0].mxu0
      %v5767 = vpop.f32.mrb[0].mxu0
      %v5768 = vpop.f32.mrb[0].mxu0
      %5769 = vmatprep.mubr.bf16.mxu0 0
      %5770 = vmatmul.mubr.bf16.gmra.mrb[0].mxu0 %v5715
      %v5771 = vpop.f32.mrb[0].mxu0
      %v5772 = vadd.f32 0.0, %v5771
      %v5773 = vpop.f32.mrb[0].mxu0
      %v5774 = vpop.f32.mrb[0].mxu0
      %v5775 = vpop.f32.mrb[0].mxu0
      %5776 = vmatprep.mubr.bf16.mxu0 0
      %5777 = vmatmul.mubr.bf16.gmra.mrb[0].mxu0 %v5718
      %v5778 = vpop.f32.mrb[0].mxu0
      %v5779 = vadd.f32 0.0, %v5778
      %v5780 = vpop.f32.mrb[0].mxu0
      %v5781 = vpop.f32.mrb[0].mxu0
      %v5782 = vpop.f32.mrb[0].mxu0
      %5783 = vdwg.mxu0
      %v5784 = vld [vmem:[#allocation2 + $0xc] sm:$0xf]
      %v5785 = vld [vmem:[#allocation2 + $0x1c] sm:$0xf]
      %v5786 = vld [vmem:[#allocation2 + $0x2c] sm:$0xf]
      %v5787 = vld [vmem:[#allocation2 + $0x3c] sm:$0xf]
      %v5788 = vadd.f32 %v5784, %v5758
      %v5789 = vadd.f32 %v5785, %v5765
      %v5790 = vadd.f32 %v5786, %v5772
      %v5791 = vadd.f32 %v5787, %v5779
      %5792 = vst.msk [vmem:[#allocation2 + $0xc] sm:$0xf] %vm4644, %v5788
      %5793 = vst.msk [vmem:[#allocation2 + $0x1c] sm:$0xf] %vm4644, %v5789
      %5794 = vst.msk [vmem:[#allocation2 + $0x2c] sm:$0xf] %vm4644, %v5790
      %5795 = vst.msk [vmem:[#allocation2 + $0x3c] sm:$0xf] %vm4644, %v5791
      %v5796 = vld [vmem:[%s5677] sm:$0xf]
      %v5797 = vld [vmem:[%s5677 + $0x4] sm:$0xf]
      %v5798 = vld [vmem:[%s5677 + $0x8] sm:$0xf]
      %v5799 = vld [vmem:[%s5677 + $0xc] sm:$0xf]
      %v5800 = vld [vmem:[%s5677 + $0x10] sm:$0xf]
      %v5801 = vld [vmem:[%s5677 + $0x14] sm:$0xf]
      %v5802 = vld [vmem:[%s5677 + $0x18] sm:$0xf]
      %v5803 = vld [vmem:[%s5677 + $0x1c] sm:$0xf]
      %s5804 = scalar_lea.vmem %s3, 32
      %v5805 = vld [vmem:[%s5804] sm:$0x3]
      %v5814 = vunpack.c.l.b16 %v5796
      %v5815 = vunpack.c.l.b16 %v5797
      %v5816 = vunpack.c.l.b16 %v5798
      %v5817 = vunpack.c.l.b16 %v5799
      %v5818 = vunpack.c.l.b16 %v5800
      %v5819 = vunpack.c.l.b16 %v5801
      %v5820 = vunpack.c.l.b16 %v5802
      %v5821 = vunpack.c.l.b16 %v5803
      %v5822 = vpack.c.b16 %v5815, %v5814
      %v5823 = vpack.c.b16 %v5817, %v5816
      %v5824 = vpack.c.b16 %v5819, %v5818
      %v5825 = vpack.c.b16 %v5821, %v5820
      %v5827 = vsel %vm517, %v5822, 0
      %v5830 = vsel %vm517, %v5823, 0
      %v5833 = vsel %vm517, %v5824, 0
      %v5836 = vsel %vm517, %v5825, 0
      %v5839 = vsel %vm566, %v5805, 0
      %5841 = vmatprep.subr.bf16.mxu0 0
      %5842 = vmatpush1.bf16.msra.mxu0 %v5839
      %5843 = vmatprep.subr.bf16.mxu0 0
      %5844 = vmatpush1.bf16.msra.mxu0 0
      %5845 = vmatprep.subr.bf16.mxu0 0
      %5846 = vmatpush1.bf16.msra.mxu0 0
      %5847 = vmatprep.subr.bf16.mxu0 0
      %5848 = vmatpush1.bf16.msra.mxu0 0
      %5849 = vmatprep.subr.bf16.mxu0 0
      %5850 = vmatpush1.bf16.msra.mxu0 0
      %5851 = vmatprep.subr.bf16.mxu0 0
      %5852 = vmatpush1.bf16.msra.mxu0 0
      %5853 = vmatprep.subr.bf16.mxu0 0
      %5854 = vmatpush1.bf16.msra.mxu0 0
      %5855 = vmatprep.subr.bf16.mxu0 0
      %5856 = vmatpush1.bf16.msra.mxu0 0
      %5857 = vmatprep.subr.bf16.mxu0 0
      %5858 = vmatpush1.bf16.msra.mxu0 0
      %5859 = vmatprep.subr.bf16.mxu0 0
      %5860 = vmatpush1.bf16.msra.mxu0 0
      %5861 = vmatprep.subr.bf16.mxu0 0
      %5862 = vmatpush1.bf16.msra.mxu0 0
      %5863 = vmatprep.subr.bf16.mxu0 0
      %5864 = vmatpush1.bf16.msra.mxu0 0
      %5865 = vmatprep.subr.bf16.mxu0 0
      %5866 = vmatpush1.bf16.msra.mxu0 0
      %5867 = vmatprep.subr.bf16.mxu0 0
      %5868 = vmatpush1.bf16.msra.mxu0 0
      %5869 = vmatprep.subr.bf16.mxu0 0
      %5870 = vmatpush1.bf16.msra.mxu0 0
      %5871 = vmatprep.subr.bf16.mxu0 0
      %5872 = vmatpush1.bf16.msra.mxu0 0
      %5873 = vmatprep.mubr.bf16.mxu0 0
      %5874 = vmatmul.mubr.bf16.gmra.mrb[0].mxu0 %v5827
      %v5875 = vpop.f32.mrb[0].mxu0
      %v5876 = vadd.f32 0.0, %v5875
      %v5877 = vpop.f32.mrb[0].mxu0
      %v5878 = vpop.f32.mrb[0].mxu0
      %v5879 = vadd.f32 0.0, %v5878
      %v5880 = vpop.f32.mrb[0].mxu0
      %5881 = vmatprep.mubr.bf16.mxu0 0
      %5882 = vmatmul.mubr.bf16.gmra.mrb[0].mxu0 %v5830
      %v5883 = vpop.f32.mrb[0].mxu0
      %v5884 = vadd.f32 0.0, %v5883
      %v5885 = vpop.f32.mrb[0].mxu0
      %v5886 = vpop.f32.mrb[0].mxu0
      %v5887 = vadd.f32 0.0, %v5886
      %v5888 = vpop.f32.mrb[0].mxu0
      %5889 = vmatprep.mubr.bf16.mxu0 0
      %5890 = vmatmul.mubr.bf16.gmra.mrb[0].mxu0 %v5833
      %v5891 = vpop.f32.mrb[0].mxu0
      %v5892 = vadd.f32 0.0, %v5891
      %v5893 = vpop.f32.mrb[0].mxu0
      %v5894 = vpop.f32.mrb[0].mxu0
      %v5895 = vadd.f32 0.0, %v5894
      %v5896 = vpop.f32.mrb[0].mxu0
      %5897 = vmatprep.mubr.bf16.mxu0 0
      %5898 = vmatmul.mubr.bf16.gmra.mrb[0].mxu0 %v5836
      %v5899 = vpop.f32.mrb[0].mxu0
      %v5900 = vadd.f32 0.0, %v5899
      %v5901 = vpop.f32.mrb[0].mxu0
      %v5902 = vpop.f32.mrb[0].mxu0
      %v5903 = vadd.f32 0.0, %v5902
      %v5904 = vpop.f32.mrb[0].mxu0
      %5905 = vdwg.mxu0
      %v5906 = vld [vmem:[#allocation2] sm:$0xff]
      %v5907 = vld [vmem:[#allocation2 + $0x8] sm:$0xff]
      %v5908 = vld [vmem:[#allocation2 + $0x10] sm:$0xff]
      %v5909 = vld [vmem:[#allocation2 + $0x18] sm:$0xff]
      %v5910 = vld [vmem:[#allocation2 + $0x20] sm:$0xff]
      %v5911 = vld [vmem:[#allocation2 + $0x28] sm:$0xff]
      %v5912 = vld [vmem:[#allocation2 + $0x30] sm:$0xff]
      %v5913 = vld [vmem:[#allocation2 + $0x38] sm:$0xff]
      %v5914 = vadd.f32 %v5906, %v5876
      %v5915 = vadd.f32 %v5907, %v5879
      %v5916 = vadd.f32 %v5908, %v5884
      %v5917 = vadd.f32 %v5909, %v5887
      %v5918 = vadd.f32 %v5910, %v5892
      %v5919 = vadd.f32 %v5911, %v5895
      %v5920 = vadd.f32 %v5912, %v5900
      %v5921 = vadd.f32 %v5913, %v5903
      %5922 = vst.msk [vmem:[#allocation2] sm:$0xff] %vm780, %v5914
      %5923 = vst.msk [vmem:[#allocation2 + $0x8] sm:$0xff] %vm780, %v5915
      %5924 = vst.msk [vmem:[#allocation2 + $0x10] sm:$0xff] %vm780, %v5916
      %5925 = vst.msk [vmem:[#allocation2 + $0x18] sm:$0xff] %vm780, %v5917
      %5926 = vst.msk [vmem:[#allocation2 + $0x20] sm:$0xff] %vm780, %v5918
      %5927 = vst.msk [vmem:[#allocation2 + $0x28] sm:$0xff] %vm780, %v5919
      %5928 = vst.msk [vmem:[#allocation2 + $0x30] sm:$0xff] %vm780, %v5920
      %5929 = vst.msk [vmem:[#allocation2 + $0x38] sm:$0xff] %vm780, %v5921
      %v5930 = vld [vmem:[%s5677] sm:$0xf]
      %v5931 = vld [vmem:[%s5677 + $0x4] sm:$0xf]
      %v5932 = vld [vmem:[%s5677 + $0x8] sm:$0xf]
      %v5933 = vld [vmem:[%s5677 + $0xc] sm:$0xf]
      %v5934 = vld [vmem:[%s5677 + $0x10] sm:$0xf]
      %v5935 = vld [vmem:[%s5677 + $0x14] sm:$0xf]
      %v5936 = vld [vmem:[%s5677 + $0x18] sm:$0xf]
      %v5937 = vld [vmem:[%s5677 + $0x1c] sm:$0xf]
      %s5938 = scalar_lea.vmem %s3, 34
      %v5939 = vld [vmem:[%s5938] sm:$0x3]
      %v5948 = vunpack.c.l.b16 %v5930
      %v5949 = vunpack.c.l.b16 %v5931
      %v5950 = vunpack.c.l.b16 %v5932
      %v5951 = vunpack.c.l.b16 %v5933
      %v5952 = vunpack.c.l.b16 %v5934
      %v5953 = vunpack.c.l.b16 %v5935
      %v5954 = vunpack.c.l.b16 %v5936
      %v5955 = vunpack.c.l.b16 %v5937
      %v5956 = vpack.c.b16 %v5949, %v5948
      %v5957 = vpack.c.b16 %v5951, %v5950
      %v5958 = vpack.c.b16 %v5953, %v5952
      %v5959 = vpack.c.b16 %v5955, %v5954
      %v5961 = vsel %vm517, %v5956, 0
      %v5964 = vsel %vm517, %v5957, 0
      %v5967 = vsel %vm517, %v5958, 0
      %v5970 = vsel %vm517, %v5959, 0
      %v5973 = vsel %vm566, %v5939, 0
      %5975 = vmatprep.subr.bf16.mxu0 0
      %5976 = vmatpush1.bf16.msra.mxu0 %v5973
      %5977 = vmatprep.subr.bf16.mxu0 0
      %5978 = vmatpush1.bf16.msra.mxu0 0
      %5979 = vmatprep.subr.bf16.mxu0 0
      %5980 = vmatpush1.bf16.msra.mxu0 0
      %5981 = vmatprep.subr.bf16.mxu0 0
      %5982 = vmatpush1.bf16.msra.mxu0 0
      %5983 = vmatprep.subr.bf16.mxu0 0
      %5984 = vmatpush1.bf16.msra.mxu0 0
      %5985 = vmatprep.subr.bf16.mxu0 0
      %5986 = vmatpush1.bf16.msra.mxu0 0
      %5987 = vmatprep.subr.bf16.mxu0 0
      %5988 = vmatpush1.bf16.msra.mxu0 0
      %5989 = vmatprep.subr.bf16.mxu0 0
      %5990 = vmatpush1.bf16.msra.mxu0 0
      %5991 = vmatprep.subr.bf16.mxu0 0
      %5992 = vmatpush1.bf16.msra.mxu0 0
      %5993 = vmatprep.subr.bf16.mxu0 0
      %5994 = vmatpush1.bf16.msra.mxu0 0
      %5995 = vmatprep.subr.bf16.mxu0 0
      %5996 = vmatpush1.bf16.msra.mxu0 0
      %5997 = vmatprep.subr.bf16.mxu0 0
      %5998 = vmatpush1.bf16.msra.mxu0 0
      %5999 = vmatprep.subr.bf16.mxu0 0
      %6000 = vmatpush1.bf16.msra.mxu0 0
      %6001 = vmatprep.subr.bf16.mxu0 0
      %6002 = vmatpush1.bf16.msra.mxu0 0
      %6003 = vmatprep.subr.bf16.mxu0 0
      %6004 = vmatpush1.bf16.msra.mxu0 0
      %6005 = vmatprep.subr.bf16.mxu0 0
      %6006 = vmatpush1.bf16.msra.mxu0 0
      %6007 = vmatprep.mubr.bf16.mxu0 0
      %6008 = vmatmul.mubr.bf16.gmra.mrb[0].mxu0 %v5961
      %v6009 = vpop.f32.mrb[0].mxu0
      %v6010 = vpop.f32.mrb[0].mxu0
      %v6011 = vpop.f32.mrb[0].mxu0
      %v6012 = vadd.f32 0.0, %v6011
      %v6013 = vpop.f32.mrb[0].mxu0
      %6014 = vmatprep.mubr.bf16.mxu0 0
      %6015 = vmatmul.mubr.bf16.gmra.mrb[0].mxu0 %v5964
      %v6016 = vpop.f32.mrb[0].mxu0
      %v6017 = vpop.f32.mrb[0].mxu0
      %v6018 = vpop.f32.mrb[0].mxu0
      %v6019 = vadd.f32 0.0, %v6018
      %v6020 = vpop.f32.mrb[0].mxu0
      %6021 = vmatprep.mubr.bf16.mxu0 0
      %6022 = vmatmul.mubr.bf16.gmra.mrb[0].mxu0 %v5967
      %v6023 = vpop.f32.mrb[0].mxu0
      %v6024 = vpop.f32.mrb[0].mxu0
      %v6025 = vpop.f32.mrb[0].mxu0
      %v6026 = vadd.f32 0.0, %v6025
      %v6027 = vpop.f32.mrb[0].mxu0
      %6028 = vmatprep.mubr.bf16.mxu0 0
      %6029 = vmatmul.mubr.bf16.gmra.mrb[0].mxu0 %v5970
      %v6030 = vpop.f32.mrb[0].mxu0
      %v6031 = vpop.f32.mrb[0].mxu0
      %v6032 = vpop.f32.mrb[0].mxu0
      %v6033 = vadd.f32 0.0, %v6032
      %v6034 = vpop.f32.mrb[0].mxu0
      %6035 = vdwg.mxu0
      %v6036 = vld [vmem:[#allocation2] sm:$0xf]
      %v6037 = vld [vmem:[#allocation2 + $0x10] sm:$0xf]
      %v6038 = vld [vmem:[#allocation2 + $0x20] sm:$0xf]
      %v6039 = vld [vmem:[#allocation2 + $0x30] sm:$0xf]
      %v6044 = vrot.slane %v6012, 4
      %v6045 = vrot.slane %v6019, 4
      %v6046 = vrot.slane %v6026, 4
      %v6047 = vrot.slane %v6033, 4
      %v6052 = vadd.f32 %v6036, %v6044
      %v6053 = vadd.f32 %v6037, %v6045
      %v6054 = vadd.f32 %v6038, %v6046
      %v6055 = vadd.f32 %v6039, %v6047
      %6056 = vst.msk [vmem:[#allocation2] sm:$0xf] %vm4644, %v6052
      %6057 = vst.msk [vmem:[#allocation2 + $0x10] sm:$0xf] %vm4644, %v6053
      %6058 = vst.msk [vmem:[#allocation2 + $0x20] sm:$0xf] %vm4644, %v6054
      %6059 = vst.msk [vmem:[#allocation2 + $0x30] sm:$0xf] %vm4644, %v6055
      %v6060 = vld [vmem:[#allocation2] sm:$0xff]
      %v6061 = vld [vmem:[#allocation2 + $0x8] sm:$0xff]
      %v6062 = vld [vmem:[#allocation2 + $0x10] sm:$0xff]
      %v6063 = vld [vmem:[#allocation2 + $0x18] sm:$0xff]
      %v6064 = vld [vmem:[#allocation2 + $0x20] sm:$0xff]
      %v6065 = vld [vmem:[#allocation2 + $0x28] sm:$0xff]
      %v6066 = vld [vmem:[#allocation2 + $0x30] sm:$0xff]
      %v6067 = vld [vmem:[#allocation2 + $0x38] sm:$0xff]
      %v6068 = vld [vmem:[#allocation2 + $0x40] sm:$0xff]
      %v6069 = vld [vmem:[#allocation2 + $0x48] sm:$0xff]
      %v6070 = vld [vmem:[#allocation2 + $0x50] sm:$0xff]
      %v6071 = vld [vmem:[#allocation2 + $0x58] sm:$0xff]
      %v6072 = vld [vmem:[#allocation2 + $0x60] sm:$0xff]
      %v6073 = vld [vmem:[#allocation2 + $0x68] sm:$0xff]
      %v6074 = vld [vmem:[#allocation2 + $0x70] sm:$0xff]
      %v6075 = vld [vmem:[#allocation2 + $0x78] sm:$0xff]
      %v6076 = vld [vmem:[#allocation2 + $0x80] sm:$0xff]
      %v6077 = vld [vmem:[#allocation2 + $0x88] sm:$0xff]
      %v6078 = vld [vmem:[#allocation2 + $0x90] sm:$0xff]
      %v6079 = vld [vmem:[#allocation2 + $0x98] sm:$0xff]
      %v6080 = vld [vmem:[#allocation2 + $0xa0] sm:$0xff]
      %v6081 = vld [vmem:[#allocation2 + $0xa8] sm:$0xff]
      %v6082 = vld [vmem:[#allocation2 + $0xb0] sm:$0xff]
      %v6083 = vld [vmem:[#allocation2 + $0xb8] sm:$0xff]
      %v6084 = vld [vmem:[#allocation2 + $0xc0] sm:$0xff]
      %v6085 = vld [vmem:[#allocation2 + $0xc8] sm:$0xff]
      %v6086 = vld [vmem:[#allocation2 + $0xd0] sm:$0xff]
      %v6087 = vld [vmem:[#allocation2 + $0xd8] sm:$0xff]
      %v6088 = vld [vmem:[#allocation2 + $0xe0] sm:$0xff]
      %v6089 = vld [vmem:[#allocation2 + $0xe8] sm:$0xff]
      %v6090 = vld [vmem:[#allocation2 + $0xf0] sm:$0xff]
      %v6091 = vld [vmem:[#allocation2 + $0xf8] sm:$0xff]
      %v6092 = vmax.f32 %v6060, 0.0
      %v6093 = vmax.f32 %v6061, 0.0
      %v6094 = vmax.f32 %v6062, 0.0
      %v6095 = vmax.f32 %v6063, 0.0
      %v6096 = vmax.f32 %v6064, 0.0
      %v6097 = vmax.f32 %v6065, 0.0
      %v6098 = vmax.f32 %v6066, 0.0
      %v6099 = vmax.f32 %v6067, 0.0
      %v6100 = vmax.f32 %v6068, 0.0
      %v6101 = vmax.f32 %v6069, 0.0
      %v6102 = vmax.f32 %v6070, 0.0
      %v6103 = vmax.f32 %v6071, 0.0
      %v6104 = vmax.f32 %v6072, 0.0
      %v6105 = vmax.f32 %v6073, 0.0
      %v6106 = vmax.f32 %v6074, 0.0
      %v6107 = vmax.f32 %v6075, 0.0
      %v6108 = vmax.f32 %v6076, 0.0
      %v6109 = vmax.f32 %v6077, 0.0
      %v6110 = vmax.f32 %v6078, 0.0
      %v6111 = vmax.f32 %v6079, 0.0
      %v6112 = vmax.f32 %v6080, 0.0
      %v6113 = vmax.f32 %v6081, 0.0
      %v6114 = vmax.f32 %v6082, 0.0
      %v6115 = vmax.f32 %v6083, 0.0
      %v6116 = vmax.f32 %v6084, 0.0
      %v6117 = vmax.f32 %v6085, 0.0
      %v6118 = vmax.f32 %v6086, 0.0
      %v6119 = vmax.f32 %v6087, 0.0
      %v6120 = vmax.f32 %v6088, 0.0
      %v6121 = vmax.f32 %v6089, 0.0
      %v6122 = vmax.f32 %v6090, 0.0
      %v6123 = vmax.f32 %v6091, 0.0
      %v6124 = vpack.c.bf16 %v6093, %v6092
      %v6125 = vpack.c.bf16 %v6095, %v6094
      %v6126 = vpack.c.bf16 %v6097, %v6096
      %v6127 = vpack.c.bf16 %v6099, %v6098
      %v6128 = vpack.c.bf16 %v6101, %v6100
      %v6129 = vpack.c.bf16 %v6103, %v6102
      %v6130 = vpack.c.bf16 %v6105, %v6104
      %v6131 = vpack.c.bf16 %v6107, %v6106
      %v6132 = vpack.c.bf16 %v6109, %v6108
      %v6133 = vpack.c.bf16 %v6111, %v6110
      %v6134 = vpack.c.bf16 %v6113, %v6112
      %v6135 = vpack.c.bf16 %v6115, %v6114
      %v6136 = vpack.c.bf16 %v6117, %v6116
      %v6137 = vpack.c.bf16 %v6119, %v6118
      %v6138 = vpack.c.bf16 %v6121, %v6120
      %v6139 = vpack.c.bf16 %v6123, %v6122
      %s6140 = scalar_lea.vmem %s9, 8
      %v6141 = vld [vmem:[%s6140] sm:$0xf]
      %v6143 = vsel %vm780, %v6124, 0
      %v6146 = vsel %vm780, %v6125, 0
      %v6149 = vsel %vm780, %v6126, 0
      %v6152 = vsel %vm780, %v6127, 0
      %v6155 = vsel %vm780, %v6128, 0
      %v6158 = vsel %vm780, %v6129, 0
      %v6161 = vsel %vm780, %v6130, 0
      %v6164 = vsel %vm780, %v6131, 0
      %v6167 = vsel %vm780, %v6132, 0
      %v6170 = vsel %vm780, %v6133, 0
      %v6173 = vsel %vm780, %v6134, 0
      %v6176 = vsel %vm780, %v6135, 0
      %v6179 = vsel %vm780, %v6136, 0
      %v6182 = vsel %vm780, %v6137, 0
      %v6185 = vsel %vm780, %v6138, 0
      %v6188 = vsel %vm780, %v6139, 0
      %v6191 = vsel %vm829, %v6141, 0
      %6193 = vmatprep.subr.bf16.mxu0 0
      %6194 = vmatpush1.bf16.msra.mxu0 %v6191
      %6195 = vmatprep.subr.bf16.mxu0 0
      %6196 = vmatpush1.bf16.msra.mxu0 0
      %6197 = vmatprep.subr.bf16.mxu0 0
      %6198 = vmatpush1.bf16.msra.mxu0 0
      %6199 = vmatprep.subr.bf16.mxu0 0
      %6200 = vmatpush1.bf16.msra.mxu0 0
      %6201 = vmatprep.subr.bf16.mxu0 0
      %6202 = vmatpush1.bf16.msra.mxu0 0
      %6203 = vmatprep.subr.bf16.mxu0 0
      %6204 = vmatpush1.bf16.msra.mxu0 0
      %6205 = vmatprep.subr.bf16.mxu0 0
      %6206 = vmatpush1.bf16.msra.mxu0 0
      %6207 = vmatprep.subr.bf16.mxu0 0
      %6208 = vmatpush1.bf16.msra.mxu0 0
      %6209 = vmatprep.subr.bf16.mxu0 0
      %6210 = vmatpush1.bf16.msra.mxu0 0
      %6211 = vmatprep.subr.bf16.mxu0 0
      %6212 = vmatpush1.bf16.msra.mxu0 0
      %6213 = vmatprep.subr.bf16.mxu0 0
      %6214 = vmatpush1.bf16.msra.mxu0 0
      %6215 = vmatprep.subr.bf16.mxu0 0
      %6216 = vmatpush1.bf16.msra.mxu0 0
      %6217 = vmatprep.subr.bf16.mxu0 0
      %6218 = vmatpush1.bf16.msra.mxu0 0
      %6219 = vmatprep.subr.bf16.mxu0 0
      %6220 = vmatpush1.bf16.msra.mxu0 0
      %6221 = vmatprep.subr.bf16.mxu0 0
      %6222 = vmatpush1.bf16.msra.mxu0 0
      %6223 = vmatprep.subr.bf16.mxu0 0
      %6224 = vmatpush1.bf16.msra.mxu0 0
      %6225 = vmatprep.mubr.bf16.mxu0 0
      %6226 = vmatmul.mubr.bf16.gmra.mrb[0].mxu0 %v6143
      %v6227 = vpop.f32.mrb[0].mxu0
      %v6228 = vadd.f32 0.0, %v6227
      %v6229 = vpop.f32.mrb[0].mxu0
      %v6230 = vpop.f32.mrb[0].mxu0
      %v6231 = vadd.f32 0.0, %v6230
      %v6232 = vpop.f32.mrb[0].mxu0
      %6233 = vmatprep.mubr.bf16.mxu0 0
      %6234 = vmatmul.mubr.bf16.gmra.mrb[0].mxu0 %v6146
      %v6235 = vpop.f32.mrb[0].mxu0
      %v6236 = vadd.f32 0.0, %v6235
      %v6237 = vpop.f32.mrb[0].mxu0
      %v6238 = vpop.f32.mrb[0].mxu0
      %v6239 = vadd.f32 0.0, %v6238
      %v6240 = vpop.f32.mrb[0].mxu0
      %6241 = vmatprep.mubr.bf16.mxu0 0
      %6242 = vmatmul.mubr.bf16.gmra.mrb[0].mxu0 %v6149
      %v6243 = vpop.f32.mrb[0].mxu0
      %v6244 = vadd.f32 0.0, %v6243
      %v6245 = vpop.f32.mrb[0].mxu0
      %v6246 = vpop.f32.mrb[0].mxu0
      %v6247 = vadd.f32 0.0, %v6246
      %v6248 = vpop.f32.mrb[0].mxu0
      %6249 = vmatprep.mubr.bf16.mxu0 0
      %6250 = vmatmul.mubr.bf16.gmra.mrb[0].mxu0 %v6152
      %v6251 = vpop.f32.mrb[0].mxu0
      %v6252 = vadd.f32 0.0, %v6251
      %v6253 = vpop.f32.mrb[0].mxu0
      %v6254 = vpop.f32.mrb[0].mxu0
      %v6255 = vadd.f32 0.0, %v6254
      %v6256 = vpop.f32.mrb[0].mxu0
      %6257 = vmatprep.mubr.bf16.mxu0 0
      %6258 = vmatmul.mubr.bf16.gmra.mrb[0].mxu0 %v6155
      %v6259 = vpop.f32.mrb[0].mxu0
      %v6260 = vadd.f32 0.0, %v6259
      %v6261 = vpop.f32.mrb[0].mxu0
      %v6262 = vpop.f32.mrb[0].mxu0
      %v6263 = vadd.f32 0.0, %v6262
      %v6264 = vpop.f32.mrb[0].mxu0
      %6265 = vmatprep.mubr.bf16.mxu0 0
      %6266 = vmatmul.mubr.bf16.gmra.mrb[0].mxu0 %v6158
      %v6267 = vpop.f32.mrb[0].mxu0
      %v6268 = vadd.f32 0.0, %v6267
      %v6269 = vpop.f32.mrb[0].mxu0
      %v6270 = vpop.f32.mrb[0].mxu0
      %v6271 = vadd.f32 0.0, %v6270
      %v6272 = vpop.f32.mrb[0].mxu0
      %6273 = vmatprep.mubr.bf16.mxu0 0
      %6274 = vmatmul.mubr.bf16.gmra.mrb[0].mxu0 %v6161
      %v6275 = vpop.f32.mrb[0].mxu0
      %v6276 = vadd.f32 0.0, %v6275
      %v6277 = vpop.f32.mrb[0].mxu0
      %v6278 = vpop.f32.mrb[0].mxu0
      %v6279 = vadd.f32 0.0, %v6278
      %v6280 = vpop.f32.mrb[0].mxu0
      %6281 = vmatprep.mubr.bf16.mxu0 0
      %6282 = vmatmul.mubr.bf16.gmra.mrb[0].mxu0 %v6164
      %v6283 = vpop.f32.mrb[0].mxu0
      %v6284 = vadd.f32 0.0, %v6283
      %v6285 = vpop.f32.mrb[0].mxu0
      %v6286 = vpop.f32.mrb[0].mxu0
      %v6287 = vadd.f32 0.0, %v6286
      %v6288 = vpop.f32.mrb[0].mxu0
      %6289 = vmatprep.mubr.bf16.mxu0 0
      %6290 = vmatmul.mubr.bf16.gmra.mrb[0].mxu0 %v6167
      %v6291 = vpop.f32.mrb[0].mxu0
      %v6292 = vadd.f32 0.0, %v6291
      %v6293 = vpop.f32.mrb[0].mxu0
      %v6294 = vpop.f32.mrb[0].mxu0
      %v6295 = vadd.f32 0.0, %v6294
      %v6296 = vpop.f32.mrb[0].mxu0
      %6297 = vmatprep.mubr.bf16.mxu0 0
      %6298 = vmatmul.mubr.bf16.gmra.mrb[0].mxu0 %v6170
      %v6299 = vpop.f32.mrb[0].mxu0
      %v6300 = vadd.f32 0.0, %v6299
      %v6301 = vpop.f32.mrb[0].mxu0
      %v6302 = vpop.f32.mrb[0].mxu0
      %v6303 = vadd.f32 0.0, %v6302
      %v6304 = vpop.f32.mrb[0].mxu0
      %6305 = vmatprep.mubr.bf16.mxu0 0
      %6306 = vmatmul.mubr.bf16.gmra.mrb[0].mxu0 %v6173
      %v6307 = vpop.f32.mrb[0].mxu0
      %v6308 = vadd.f32 0.0, %v6307
      %v6309 = vpop.f32.mrb[0].mxu0
      %v6310 = vpop.f32.mrb[0].mxu0
      %v6311 = vadd.f32 0.0, %v6310
      %v6312 = vpop.f32.mrb[0].mxu0
      %6313 = vmatprep.mubr.bf16.mxu0 0
      %6314 = vmatmul.mubr.bf16.gmra.mrb[0].mxu0 %v6176
      %v6315 = vpop.f32.mrb[0].mxu0
      %v6316 = vadd.f32 0.0, %v6315
      %v6317 = vpop.f32.mrb[0].mxu0
      %v6318 = vpop.f32.mrb[0].mxu0
      %v6319 = vadd.f32 0.0, %v6318
      %v6320 = vpop.f32.mrb[0].mxu0
      %6321 = vmatprep.mubr.bf16.mxu0 0
      %6322 = vmatmul.mubr.bf16.gmra.mrb[0].mxu0 %v6179
      %v6323 = vpop.f32.mrb[0].mxu0
      %v6324 = vadd.f32 0.0, %v6323
      %v6325 = vpop.f32.mrb[0].mxu0
      %v6326 = vpop.f32.mrb[0].mxu0
      %v6327 = vadd.f32 0.0, %v6326
      %v6328 = vpop.f32.mrb[0].mxu0
      %6329 = vmatprep.mubr.bf16.mxu0 0
      %6330 = vmatmul.mubr.bf16.gmra.mrb[0].mxu0 %v6182
      %v6331 = vpop.f32.mrb[0].mxu0
      %v6332 = vadd.f32 0.0, %v6331
      %v6333 = vpop.f32.mrb[0].mxu0
      %v6334 = vpop.f32.mrb[0].mxu0
      %v6335 = vadd.f32 0.0, %v6334
      %v6336 = vpop.f32.mrb[0].mxu0
      %6337 = vmatprep.mubr.bf16.mxu0 0
      %6338 = vmatmul.mubr.bf16.gmra.mrb[0].mxu0 %v6185
      %v6339 = vpop.f32.mrb[0].mxu0
      %v6340 = vadd.f32 0.0, %v6339
      %v6341 = vpop.f32.mrb[0].mxu0
      %v6342 = vpop.f32.mrb[0].mxu0
      %v6343 = vadd.f32 0.0, %v6342
      %v6344 = vpop.f32.mrb[0].mxu0
      %6345 = vmatprep.mubr.bf16.mxu0 0
      %6346 = vmatmul.mubr.bf16.gmra.mrb[0].mxu0 %v6188
      %v6347 = vpop.f32.mrb[0].mxu0
      %v6348 = vadd.f32 0.0, %v6347
      %v6349 = vpop.f32.mrb[0].mxu0
      %v6350 = vpop.f32.mrb[0].mxu0
      %v6351 = vadd.f32 0.0, %v6350
      %v6352 = vpop.f32.mrb[0].mxu0
      %6353 = vdwg.mxu0
      %v6354 = vadd.f32 %v4291, %v6228
      %v6355 = vadd.f32 %v4292, %v6231
      %v6356 = vadd.f32 %v4293, %v6236
      %v6357 = vadd.f32 %v4294, %v6239
      %v6358 = vadd.f32 %v4295, %v6244
      %v6359 = vadd.f32 %v4296, %v6247
      %v6360 = vadd.f32 %v4297, %v6252
      %v6361 = vadd.f32 %v4298, %v6255
      %v6362 = vadd.f32 %v4299, %v6260
      %v6363 = vadd.f32 %v4300, %v6263
      %v6364 = vadd.f32 %v4301, %v6268
      %v6365 = vadd.f32 %v4302, %v6271
      %v6366 = vadd.f32 %v4303, %v6276
      %v6367 = vadd.f32 %v4304, %v6279
      %v6368 = vadd.f32 %v4305, %v6284
      %v6369 = vadd.f32 %v4306, %v6287
      %v6370 = vadd.f32 %v4307, %v6292
      %v6371 = vadd.f32 %v4308, %v6295
      %v6372 = vadd.f32 %v4309, %v6300
      %v6373 = vadd.f32 %v4310, %v6303
      %v6374 = vadd.f32 %v4311, %v6308
      %v6375 = vadd.f32 %v4312, %v6311
      %v6376 = vadd.f32 %v4313, %v6316
      %v6377 = vadd.f32 %v4314, %v6319
      %v6378 = vadd.f32 %v4315, %v6324
      %v6379 = vadd.f32 %v4316, %v6327
      %v6380 = vadd.f32 %v4317, %v6332
      %v6381 = vadd.f32 %v4318, %v6335
      %v6382 = vadd.f32 %v4319, %v6340
      %v6383 = vadd.f32 %v4320, %v6343
      %v6384 = vadd.f32 %v4321, %v6348
      %v6385 = vadd.f32 %v4322, %v6351
      %s6386 = scalar_lea.vmem %s3, 44
      %v6387 = vld [vmem:[%s6386] sm:$0x3]
      %s6388 = scalar_lea.vmem %s4, 2
      %v6389 = vld [vmem:[%s6388] sm:$0x1]
      %v6391 = vlaneseq
      %v6392 = vshrl.u32 %v6391, 7
      %v6393 = vsub.s32 0, %v6392
      %v6394 = vrot.slane %v6389, %v6393
      %v6397 = vsel %vm566, %v6387, 0
      %6399 = vmatprep.subr.bf16.mxu0 0
      %6400 = vmatpush1.bf16.msra.mxu0 %v6397
      %6401 = vmatprep.subr.bf16.mxu0 0
      %6402 = vmatpush1.bf16.msra.mxu0 0
      %6403 = vmatprep.subr.bf16.mxu0 0
      %6404 = vmatpush1.bf16.msra.mxu0 0
      %6405 = vmatprep.subr.bf16.mxu0 0
      %6406 = vmatpush1.bf16.msra.mxu0 0
      %6407 = vmatprep.subr.bf16.mxu0 0
      %6408 = vmatpush1.bf16.msra.mxu0 0
      %6409 = vmatprep.subr.bf16.mxu0 0
      %6410 = vmatpush1.bf16.msra.mxu0 0
      %6411 = vmatprep.subr.bf16.mxu0 0
      %6412 = vmatpush1.bf16.msra.mxu0 0
      %6413 = vmatprep.subr.bf16.mxu0 0
      %6414 = vmatpush1.bf16.msra.mxu0 0
      %6415 = vmatprep.subr.bf16.mxu0 0
      %6416 = vmatpush1.bf16.msra.mxu0 0
      %6417 = vmatprep.subr.bf16.mxu0 0
      %6418 = vmatpush1.bf16.msra.mxu0 0
      %6419 = vmatprep.subr.bf16.mxu0 0
      %6420 = vmatpush1.bf16.msra.mxu0 0
      %6421 = vmatprep.subr.bf16.mxu0 0
      %6422 = vmatpush1.bf16.msra.mxu0 0
      %6423 = vmatprep.subr.bf16.mxu0 0
      %6424 = vmatpush1.bf16.msra.mxu0 0
      %6425 = vmatprep.subr.bf16.mxu0 0
      %6426 = vmatpush1.bf16.msra.mxu0 0
      %6427 = vmatprep.subr.bf16.mxu0 0
      %6428 = vmatpush1.bf16.msra.mxu0 0
      %6429 = vmatprep.subr.bf16.mxu0 0
      %6430 = vmatpush1.bf16.msra.mxu0 0
      %6431 = vmatprep.mubr.bf16.mxu0 0
      %6432 = vmatmul.mubr.bf16.gmra.mrb[0].mxu0 %v519
      %v6433 = vpop.f32.mrb[0].mxu0
      %v6434 = vadd.f32 %v6394, %v6433
      %v6435 = vpop.f32.mrb[0].mxu0
      %v6436 = vpop.f32.mrb[0].mxu0
      %v6437 = vadd.f32 %v6394, %v6436
      %v6438 = vpop.f32.mrb[0].mxu0
      %6439 = vmatprep.mubr.bf16.mxu0 0
      %6440 = vmatmul.mubr.bf16.gmra.mrb[0].mxu0 %v522
      %v6441 = vpop.f32.mrb[0].mxu0
      %v6442 = vadd.f32 %v6394, %v6441
      %v6443 = vpop.f32.mrb[0].mxu0
      %v6444 = vpop.f32.mrb[0].mxu0
      %v6445 = vadd.f32 %v6394, %v6444
      %v6446 = vpop.f32.mrb[0].mxu0
      %6447 = vmatprep.mubr.bf16.mxu0 0
      %6448 = vmatmul.mubr.bf16.gmra.mrb[0].mxu0 %v525
      %v6449 = vpop.f32.mrb[0].mxu0
      %v6450 = vadd.f32 %v6394, %v6449
      %v6451 = vpop.f32.mrb[0].mxu0
      %v6452 = vpop.f32.mrb[0].mxu0
      %v6453 = vadd.f32 %v6394, %v6452
      %v6454 = vpop.f32.mrb[0].mxu0
      %6455 = vmatprep.mubr.bf16.mxu0 0
      %6456 = vmatmul.mubr.bf16.gmra.mrb[0].mxu0 %v528
      %v6457 = vpop.f32.mrb[0].mxu0
      %v6458 = vadd.f32 %v6394, %v6457
      %v6459 = vpop.f32.mrb[0].mxu0
      %v6460 = vpop.f32.mrb[0].mxu0
      %v6461 = vadd.f32 %v6394, %v6460
      %v6462 = vpop.f32.mrb[0].mxu0
      %6463 = vmatprep.mubr.bf16.mxu0 0
      %6464 = vmatmul.mubr.bf16.gmra.mrb[0].mxu0 %v531
      %v6465 = vpop.f32.mrb[0].mxu0
      %v6466 = vadd.f32 %v6394, %v6465
      %v6467 = vpop.f32.mrb[0].mxu0
      %v6468 = vpop.f32.mrb[0].mxu0
      %v6469 = vadd.f32 %v6394, %v6468
      %v6470 = vpop.f32.mrb[0].mxu0
      %6471 = vmatprep.mubr.bf16.mxu0 0
      %6472 = vmatmul.mubr.bf16.gmra.mrb[0].mxu0 %v534
      %v6473 = vpop.f32.mrb[0].mxu0
      %v6474 = vadd.f32 %v6394, %v6473
      %v6475 = vpop.f32.mrb[0].mxu0
      %v6476 = vpop.f32.mrb[0].mxu0
      %v6477 = vadd.f32 %v6394, %v6476
      %v6478 = vpop.f32.mrb[0].mxu0
      %6479 = vmatprep.mubr.bf16.mxu0 0
      %6480 = vmatmul.mubr.bf16.gmra.mrb[0].mxu0 %v537
      %v6481 = vpop.f32.mrb[0].mxu0
      %v6482 = vadd.f32 %v6394, %v6481
      %v6483 = vpop.f32.mrb[0].mxu0
      %v6484 = vpop.f32.mrb[0].mxu0
      %v6485 = vadd.f32 %v6394, %v6484
      %v6486 = vpop.f32.mrb[0].mxu0
      %6487 = vmatprep.mubr.bf16.mxu0 0
      %6488 = vmatmul.mubr.bf16.gmra.mrb[0].mxu0 %v540
      %v6489 = vpop.f32.mrb[0].mxu0
      %v6490 = vadd.f32 %v6394, %v6489
      %v6491 = vpop.f32.mrb[0].mxu0
      %v6492 = vpop.f32.mrb[0].mxu0
      %v6493 = vadd.f32 %v6394, %v6492
      %v6494 = vpop.f32.mrb[0].mxu0
      %6495 = vmatprep.mubr.bf16.mxu0 0
      %6496 = vmatmul.mubr.bf16.gmra.mrb[0].mxu0 %v543
      %v6497 = vpop.f32.mrb[0].mxu0
      %v6498 = vadd.f32 %v6394, %v6497
      %v6499 = vpop.f32.mrb[0].mxu0
      %v6500 = vpop.f32.mrb[0].mxu0
      %v6501 = vadd.f32 %v6394, %v6500
      %v6502 = vpop.f32.mrb[0].mxu0
      %6503 = vmatprep.mubr.bf16.mxu0 0
      %6504 = vmatmul.mubr.bf16.gmra.mrb[0].mxu0 %v546
      %v6505 = vpop.f32.mrb[0].mxu0
      %v6506 = vadd.f32 %v6394, %v6505
      %v6507 = vpop.f32.mrb[0].mxu0
      %v6508 = vpop.f32.mrb[0].mxu0
      %v6509 = vadd.f32 %v6394, %v6508
      %v6510 = vpop.f32.mrb[0].mxu0
      %6511 = vmatprep.mubr.bf16.mxu0 0
      %6512 = vmatmul.mubr.bf16.gmra.mrb[0].mxu0 %v549
      %v6513 = vpop.f32.mrb[0].mxu0
      %v6514 = vadd.f32 %v6394, %v6513
      %v6515 = vpop.f32.mrb[0].mxu0
      %v6516 = vpop.f32.mrb[0].mxu0
      %v6517 = vadd.f32 %v6394, %v6516
      %v6518 = vpop.f32.mrb[0].mxu0
      %6519 = vmatprep.mubr.bf16.mxu0 0
      %6520 = vmatmul.mubr.bf16.gmra.mrb[0].mxu0 %v552
      %v6521 = vpop.f32.mrb[0].mxu0
      %v6522 = vadd.f32 %v6394, %v6521
      %v6523 = vpop.f32.mrb[0].mxu0
      %v6524 = vpop.f32.mrb[0].mxu0
      %v6525 = vadd.f32 %v6394, %v6524
      %v6526 = vpop.f32.mrb[0].mxu0
      %6527 = vmatprep.mubr.bf16.mxu0 0
      %6528 = vmatmul.mubr.bf16.gmra.mrb[0].mxu0 %v555
      %v6529 = vpop.f32.mrb[0].mxu0
      %v6530 = vadd.f32 %v6394, %v6529
      %v6531 = vpop.f32.mrb[0].mxu0
      %v6532 = vpop.f32.mrb[0].mxu0
      %v6533 = vadd.f32 %v6394, %v6532
      %v6534 = vpop.f32.mrb[0].mxu0
      %6535 = vmatprep.mubr.bf16.mxu0 0
      %6536 = vmatmul.mubr.bf16.gmra.mrb[0].mxu0 %v558
      %v6537 = vpop.f32.mrb[0].mxu0
      %v6538 = vadd.f32 %v6394, %v6537
      %v6539 = vpop.f32.mrb[0].mxu0
      %v6540 = vpop.f32.mrb[0].mxu0
      %v6541 = vadd.f32 %v6394, %v6540
      %v6542 = vpop.f32.mrb[0].mxu0
      %6543 = vmatprep.mubr.bf16.mxu0 0
      %6544 = vmatmul.mubr.bf16.gmra.mrb[0].mxu0 %v561
      %v6545 = vpop.f32.mrb[0].mxu0
      %v6546 = vadd.f32 %v6394, %v6545
      %v6547 = vpop.f32.mrb[0].mxu0
      %v6548 = vpop.f32.mrb[0].mxu0
      %v6549 = vadd.f32 %v6394, %v6548
      %v6550 = vpop.f32.mrb[0].mxu0
      %6551 = vmatprep.mubr.bf16.mxu0 0
      %6552 = vmatmul.mubr.bf16.gmra.mrb[0].mxu0 %v564
      %v6553 = vpop.f32.mrb[0].mxu0
      %v6554 = vadd.f32 %v6394, %v6553
      %v6555 = vpop.f32.mrb[0].mxu0
      %v6556 = vpop.f32.mrb[0].mxu0
      %v6557 = vadd.f32 %v6394, %v6556
      %v6558 = vpop.f32.mrb[0].mxu0
      %6559 = vdwg.mxu0
      %6560 = vst.msk [vmem:[#allocation2] sm:$0xff] %vm780, %v6434
      %6561 = vst.msk [vmem:[#allocation2 + $0x8] sm:$0xff] %vm780, %v6437
      %6562 = vst.msk [vmem:[#allocation2 + $0x10] sm:$0xff] %vm780, %v6442
      %6563 = vst.msk [vmem:[#allocation2 + $0x18] sm:$0xff] %vm780, %v6445
      %6564 = vst.msk [vmem:[#allocation2 + $0x20] sm:$0xff] %vm780, %v6450
      %6565 = vst.msk [vmem:[#allocation2 + $0x28] sm:$0xff] %vm780, %v6453
      %6566 = vst.msk [vmem:[#allocation2 + $0x30] sm:$0xff] %vm780, %v6458
      %6567 = vst.msk [vmem:[#allocation2 + $0x38] sm:$0xff] %vm780, %v6461
      %6568 = vst.msk [vmem:[#allocation2 + $0x40] sm:$0xff] %vm780, %v6466
      %6569 = vst.msk [vmem:[#allocation2 + $0x48] sm:$0xff] %vm780, %v6469
      %6570 = vst.msk [vmem:[#allocation2 + $0x50] sm:$0xff] %vm780, %v6474
      %6571 = vst.msk [vmem:[#allocation2 + $0x58] sm:$0xff] %vm780, %v6477
      %6572 = vst.msk [vmem:[#allocation2 + $0x60] sm:$0xff] %vm780, %v6482
      %6573 = vst.msk [vmem:[#allocation2 + $0x68] sm:$0xff] %vm780, %v6485
      %6574 = vst.msk [vmem:[#allocation2 + $0x70] sm:$0xff] %vm780, %v6490
      %6575 = vst.msk [vmem:[#allocation2 + $0x78] sm:$0xff] %vm780, %v6493
      %6576 = vst.msk [vmem:[#allocation2 + $0x80] sm:$0xff] %vm780, %v6498
      %6577 = vst.msk [vmem:[#allocation2 + $0x88] sm:$0xff] %vm780, %v6501
      %6578 = vst.msk [vmem:[#allocation2 + $0x90] sm:$0xff] %vm780, %v6506
      %6579 = vst.msk [vmem:[#allocation2 + $0x98] sm:$0xff] %vm780, %v6509
      %6580 = vst.msk [vmem:[#allocation2 + $0xa0] sm:$0xff] %vm780, %v6514
      %6581 = vst.msk [vmem:[#allocation2 + $0xa8] sm:$0xff] %vm780, %v6517
      %6582 = vst.msk [vmem:[#allocation2 + $0xb0] sm:$0xff] %vm780, %v6522
      %6583 = vst.msk [vmem:[#allocation2 + $0xb8] sm:$0xff] %vm780, %v6525
      %6584 = vst.msk [vmem:[#allocation2 + $0xc0] sm:$0xff] %vm780, %v6530
      %6585 = vst.msk [vmem:[#allocation2 + $0xc8] sm:$0xff] %vm780, %v6533
      %6586 = vst.msk [vmem:[#allocation2 + $0xd0] sm:$0xff] %vm780, %v6538
      %6587 = vst.msk [vmem:[#allocation2 + $0xd8] sm:$0xff] %vm780, %v6541
      %6588 = vst.msk [vmem:[#allocation2 + $0xe0] sm:$0xff] %vm780, %v6546
      %6589 = vst.msk [vmem:[#allocation2 + $0xe8] sm:$0xff] %vm780, %v6549
      %6590 = vst.msk [vmem:[#allocation2 + $0xf0] sm:$0xff] %vm780, %v6554
      %6591 = vst.msk [vmem:[#allocation2 + $0xf8] sm:$0xff] %vm780, %v6557
      %v6592 = vld [vmem:[#allocation2] sm:$0xff]
      %v6593 = vld [vmem:[#allocation2 + $0x8] sm:$0xff]
      %v6594 = vld [vmem:[#allocation2 + $0x10] sm:$0xff]
      %v6595 = vld [vmem:[#allocation2 + $0x18] sm:$0xff]
      %v6596 = vld [vmem:[#allocation2 + $0x20] sm:$0xff]
      %v6597 = vld [vmem:[#allocation2 + $0x28] sm:$0xff]
      %v6598 = vld [vmem:[#allocation2 + $0x30] sm:$0xff]
      %v6599 = vld [vmem:[#allocation2 + $0x38] sm:$0xff]
      %v6600 = vld [vmem:[#allocation2 + $0x40] sm:$0xff]
      %v6601 = vld [vmem:[#allocation2 + $0x48] sm:$0xff]
      %v6602 = vld [vmem:[#allocation2 + $0x50] sm:$0xff]
      %v6603 = vld [vmem:[#allocation2 + $0x58] sm:$0xff]
      %v6604 = vld [vmem:[#allocation2 + $0x60] sm:$0xff]
      %v6605 = vld [vmem:[#allocation2 + $0x68] sm:$0xff]
      %v6606 = vld [vmem:[#allocation2 + $0x70] sm:$0xff]
      %v6607 = vld [vmem:[#allocation2 + $0x78] sm:$0xff]
      %v6608 = vld [vmem:[#allocation2 + $0x80] sm:$0xff]
      %v6609 = vld [vmem:[#allocation2 + $0x88] sm:$0xff]
      %v6610 = vld [vmem:[#allocation2 + $0x90] sm:$0xff]
      %v6611 = vld [vmem:[#allocation2 + $0x98] sm:$0xff]
      %v6612 = vld [vmem:[#allocation2 + $0xa0] sm:$0xff]
      %v6613 = vld [vmem:[#allocation2 + $0xa8] sm:$0xff]
      %v6614 = vld [vmem:[#allocation2 + $0xb0] sm:$0xff]
      %v6615 = vld [vmem:[#allocation2 + $0xb8] sm:$0xff]
      %v6616 = vld [vmem:[#allocation2 + $0xc0] sm:$0xff]
      %v6617 = vld [vmem:[#allocation2 + $0xc8] sm:$0xff]
      %v6618 = vld [vmem:[#allocation2 + $0xd0] sm:$0xff]
      %v6619 = vld [vmem:[#allocation2 + $0xd8] sm:$0xff]
      %v6620 = vld [vmem:[#allocation2 + $0xe0] sm:$0xff]
      %v6621 = vld [vmem:[#allocation2 + $0xe8] sm:$0xff]
      %v6622 = vld [vmem:[#allocation2 + $0xf0] sm:$0xff]
      %v6623 = vld [vmem:[#allocation2 + $0xf8] sm:$0xff]
      %v6624 = vmax.f32 %v6592, 0.0
      %v6625 = vmax.f32 %v6593, 0.0
      %v6626 = vmax.f32 %v6594, 0.0
      %v6627 = vmax.f32 %v6595, 0.0
      %v6628 = vmax.f32 %v6596, 0.0
      %v6629 = vmax.f32 %v6597, 0.0
      %v6630 = vmax.f32 %v6598, 0.0
      %v6631 = vmax.f32 %v6599, 0.0
      %v6632 = vmax.f32 %v6600, 0.0
      %v6633 = vmax.f32 %v6601, 0.0
      %v6634 = vmax.f32 %v6602, 0.0
      %v6635 = vmax.f32 %v6603, 0.0
      %v6636 = vmax.f32 %v6604, 0.0
      %v6637 = vmax.f32 %v6605, 0.0
      %v6638 = vmax.f32 %v6606, 0.0
      %v6639 = vmax.f32 %v6607, 0.0
      %v6640 = vmax.f32 %v6608, 0.0
      %v6641 = vmax.f32 %v6609, 0.0
      %v6642 = vmax.f32 %v6610, 0.0
      %v6643 = vmax.f32 %v6611, 0.0
      %v6644 = vmax.f32 %v6612, 0.0
      %v6645 = vmax.f32 %v6613, 0.0
      %v6646 = vmax.f32 %v6614, 0.0
      %v6647 = vmax.f32 %v6615, 0.0
      %v6648 = vmax.f32 %v6616, 0.0
      %v6649 = vmax.f32 %v6617, 0.0
      %v6650 = vmax.f32 %v6618, 0.0
      %v6651 = vmax.f32 %v6619, 0.0
      %v6652 = vmax.f32 %v6620, 0.0
      %v6653 = vmax.f32 %v6621, 0.0
      %v6654 = vmax.f32 %v6622, 0.0
      %v6655 = vmax.f32 %v6623, 0.0
      %v6656 = vpack.c.bf16 %v6625, %v6624
      %v6657 = vpack.c.bf16 %v6627, %v6626
      %v6658 = vpack.c.bf16 %v6629, %v6628
      %v6659 = vpack.c.bf16 %v6631, %v6630
      %v6660 = vpack.c.bf16 %v6633, %v6632
      %v6661 = vpack.c.bf16 %v6635, %v6634
      %v6662 = vpack.c.bf16 %v6637, %v6636
      %v6663 = vpack.c.bf16 %v6639, %v6638
      %v6664 = vpack.c.bf16 %v6641, %v6640
      %v6665 = vpack.c.bf16 %v6643, %v6642
      %v6666 = vpack.c.bf16 %v6645, %v6644
      %v6667 = vpack.c.bf16 %v6647, %v6646
      %v6668 = vpack.c.bf16 %v6649, %v6648
      %v6669 = vpack.c.bf16 %v6651, %v6650
      %v6670 = vpack.c.bf16 %v6653, %v6652
      %v6671 = vpack.c.bf16 %v6655, %v6654
      %s6672 = scalar_lea.vmem %s9, 12
      %v6673 = vld [vmem:[%s6672] sm:$0xf]
      %v6675 = vsel %vm780, %v6656, 0
      %v6678 = vsel %vm780, %v6657, 0
      %v6681 = vsel %vm780, %v6658, 0
      %v6684 = vsel %vm780, %v6659, 0
      %v6687 = vsel %vm780, %v6660, 0
      %v6690 = vsel %vm780, %v6661, 0
      %v6693 = vsel %vm780, %v6662, 0
      %v6696 = vsel %vm780, %v6663, 0
      %v6699 = vsel %vm780, %v6664, 0
      %v6702 = vsel %vm780, %v6665, 0
      %v6705 = vsel %vm780, %v6666, 0
      %v6708 = vsel %vm780, %v6667, 0
      %v6711 = vsel %vm780, %v6668, 0
      %v6714 = vsel %vm780, %v6669, 0
      %v6717 = vsel %vm780, %v6670, 0
      %v6720 = vsel %vm780, %v6671, 0
      %v6723 = vsel %vm829, %v6673, 0
      %6725 = vmatprep.subr.bf16.mxu0 0
      %6726 = vmatpush1.bf16.msra.mxu0 %v6723
      %6727 = vmatprep.subr.bf16.mxu0 0
      %6728 = vmatpush1.bf16.msra.mxu0 0
      %6729 = vmatprep.subr.bf16.mxu0 0
      %6730 = vmatpush1.bf16.msra.mxu0 0
      %6731 = vmatprep.subr.bf16.mxu0 0
      %6732 = vmatpush1.bf16.msra.mxu0 0
      %6733 = vmatprep.subr.bf16.mxu0 0
      %6734 = vmatpush1.bf16.msra.mxu0 0
      %6735 = vmatprep.subr.bf16.mxu0 0
      %6736 = vmatpush1.bf16.msra.mxu0 0
      %6737 = vmatprep.subr.bf16.mxu0 0
      %6738 = vmatpush1.bf16.msra.mxu0 0
      %6739 = vmatprep.subr.bf16.mxu0 0
      %6740 = vmatpush1.bf16.msra.mxu0 0
      %6741 = vmatprep.subr.bf16.mxu0 0
      %6742 = vmatpush1.bf16.msra.mxu0 0
      %6743 = vmatprep.subr.bf16.mxu0 0
      %6744 = vmatpush1.bf16.msra.mxu0 0
      %6745 = vmatprep.subr.bf16.mxu0 0
      %6746 = vmatpush1.bf16.msra.mxu0 0
      %6747 = vmatprep.subr.bf16.mxu0 0
      %6748 = vmatpush1.bf16.msra.mxu0 0
      %6749 = vmatprep.subr.bf16.mxu0 0
      %6750 = vmatpush1.bf16.msra.mxu0 0
      %6751 = vmatprep.subr.bf16.mxu0 0
      %6752 = vmatpush1.bf16.msra.mxu0 0
      %6753 = vmatprep.subr.bf16.mxu0 0
      %6754 = vmatpush1.bf16.msra.mxu0 0
      %6755 = vmatprep.subr.bf16.mxu0 0
      %6756 = vmatpush1.bf16.msra.mxu0 0
      %6757 = vmatprep.mubr.bf16.mxu0 0
      %6758 = vmatmul.mubr.bf16.gmra.mrb[0].mxu0 %v6675
      %v6759 = vpop.f32.mrb[0].mxu0
      %v6760 = vadd.f32 0.0, %v6759
      %v6761 = vpop.f32.mrb[0].mxu0
      %v6762 = vpop.f32.mrb[0].mxu0
      %v6763 = vadd.f32 0.0, %v6762
      %v6764 = vpop.f32.mrb[0].mxu0
      %6765 = vmatprep.mubr.bf16.mxu0 0
      %6766 = vmatmul.mubr.bf16.gmra.mrb[0].mxu0 %v6678
      %v6767 = vpop.f32.mrb[0].mxu0
      %v6768 = vadd.f32 0.0, %v6767
      %v6769 = vpop.f32.mrb[0].mxu0
      %v6770 = vpop.f32.mrb[0].mxu0
      %v6771 = vadd.f32 0.0, %v6770
      %v6772 = vpop.f32.mrb[0].mxu0
      %6773 = vmatprep.mubr.bf16.mxu0 0
      %6774 = vmatmul.mubr.bf16.gmra.mrb[0].mxu0 %v6681
      %v6775 = vpop.f32.mrb[0].mxu0
      %v6776 = vadd.f32 0.0, %v6775
      %v6777 = vpop.f32.mrb[0].mxu0
      %v6778 = vpop.f32.mrb[0].mxu0
      %v6779 = vadd.f32 0.0, %v6778
      %v6780 = vpop.f32.mrb[0].mxu0
      %6781 = vmatprep.mubr.bf16.mxu0 0
      %6782 = vmatmul.mubr.bf16.gmra.mrb[0].mxu0 %v6684
      %v6783 = vpop.f32.mrb[0].mxu0
      %v6784 = vadd.f32 0.0, %v6783
      %v6785 = vpop.f32.mrb[0].mxu0
      %v6786 = vpop.f32.mrb[0].mxu0
      %v6787 = vadd.f32 0.0, %v6786
      %v6788 = vpop.f32.mrb[0].mxu0
      %6789 = vmatprep.mubr.bf16.mxu0 0
      %6790 = vmatmul.mubr.bf16.gmra.mrb[0].mxu0 %v6687
      %v6791 = vpop.f32.mrb[0].mxu0
      %v6792 = vadd.f32 0.0, %v6791
      %v6793 = vpop.f32.mrb[0].mxu0
      %v6794 = vpop.f32.mrb[0].mxu0
      %v6795 = vadd.f32 0.0, %v6794
      %v6796 = vpop.f32.mrb[0].mxu0
      %6797 = vmatprep.mubr.bf16.mxu0 0
      %6798 = vmatmul.mubr.bf16.gmra.mrb[0].mxu0 %v6690
      %v6799 = vpop.f32.mrb[0].mxu0
      %v6800 = vadd.f32 0.0, %v6799
      %v6801 = vpop.f32.mrb[0].mxu0
      %v6802 = vpop.f32.mrb[0].mxu0
      %v6803 = vadd.f32 0.0, %v6802
      %v6804 = vpop.f32.mrb[0].mxu0
      %6805 = vmatprep.mubr.bf16.mxu0 0
      %6806 = vmatmul.mubr.bf16.gmra.mrb[0].mxu0 %v6693
      %v6807 = vpop.f32.mrb[0].mxu0
      %v6808 = vadd.f32 0.0, %v6807
      %v6809 = vpop.f32.mrb[0].mxu0
      %v6810 = vpop.f32.mrb[0].mxu0
      %v6811 = vadd.f32 0.0, %v6810
      %v6812 = vpop.f32.mrb[0].mxu0
      %6813 = vmatprep.mubr.bf16.mxu0 0
      %6814 = vmatmul.mubr.bf16.gmra.mrb[0].mxu0 %v6696
      %v6815 = vpop.f32.mrb[0].mxu0
      %v6816 = vadd.f32 0.0, %v6815
      %v6817 = vpop.f32.mrb[0].mxu0
      %v6818 = vpop.f32.mrb[0].mxu0
      %v6819 = vadd.f32 0.0, %v6818
      %v6820 = vpop.f32.mrb[0].mxu0
      %6821 = vmatprep.mubr.bf16.mxu0 0
      %6822 = vmatmul.mubr.bf16.gmra.mrb[0].mxu0 %v6699
      %v6823 = vpop.f32.mrb[0].mxu0
      %v6824 = vadd.f32 0.0, %v6823
      %v6825 = vpop.f32.mrb[0].mxu0
      %v6826 = vpop.f32.mrb[0].mxu0
      %v6827 = vadd.f32 0.0, %v6826
      %v6828 = vpop.f32.mrb[0].mxu0
      %6829 = vmatprep.mubr.bf16.mxu0 0
      %6830 = vmatmul.mubr.bf16.gmra.mrb[0].mxu0 %v6702
      %v6831 = vpop.f32.mrb[0].mxu0
      %v6832 = vadd.f32 0.0, %v6831
      %v6833 = vpop.f32.mrb[0].mxu0
      %v6834 = vpop.f32.mrb[0].mxu0
      %v6835 = vadd.f32 0.0, %v6834
      %v6836 = vpop.f32.mrb[0].mxu0
      %6837 = vmatprep.mubr.bf16.mxu0 0
      %6838 = vmatmul.mubr.bf16.gmra.mrb[0].mxu0 %v6705
      %v6839 = vpop.f32.mrb[0].mxu0
      %v6840 = vadd.f32 0.0, %v6839
      %v6841 = vpop.f32.mrb[0].mxu0
      %v6842 = vpop.f32.mrb[0].mxu0
      %v6843 = vadd.f32 0.0, %v6842
      %v6844 = vpop.f32.mrb[0].mxu0
      %6845 = vmatprep.mubr.bf16.mxu0 0
      %6846 = vmatmul.mubr.bf16.gmra.mrb[0].mxu0 %v6708
      %v6847 = vpop.f32.mrb[0].mxu0
      %v6848 = vadd.f32 0.0, %v6847
      %v6849 = vpop.f32.mrb[0].mxu0
      %v6850 = vpop.f32.mrb[0].mxu0
      %v6851 = vadd.f32 0.0, %v6850
      %v6852 = vpop.f32.mrb[0].mxu0
      %6853 = vmatprep.mubr.bf16.mxu0 0
      %6854 = vmatmul.mubr.bf16.gmra.mrb[0].mxu0 %v6711
      %v6855 = vpop.f32.mrb[0].mxu0
      %v6856 = vadd.f32 0.0, %v6855
      %v6857 = vpop.f32.mrb[0].mxu0
      %v6858 = vpop.f32.mrb[0].mxu0
      %v6859 = vadd.f32 0.0, %v6858
      %v6860 = vpop.f32.mrb[0].mxu0
      %6861 = vmatprep.mubr.bf16.mxu0 0
      %6862 = vmatmul.mubr.bf16.gmra.mrb[0].mxu0 %v6714
      %v6863 = vpop.f32.mrb[0].mxu0
      %v6864 = vadd.f32 0.0, %v6863
      %v6865 = vpop.f32.mrb[0].mxu0
      %v6866 = vpop.f32.mrb[0].mxu0
      %v6867 = vadd.f32 0.0, %v6866
      %v6868 = vpop.f32.mrb[0].mxu0
      %6869 = vmatprep.mubr.bf16.mxu0 0
      %6870 = vmatmul.mubr.bf16.gmra.mrb[0].mxu0 %v6717
      %v6871 = vpop.f32.mrb[0].mxu0
      %v6872 = vadd.f32 0.0, %v6871
      %v6873 = vpop.f32.mrb[0].mxu0
      %v6874 = vpop.f32.mrb[0].mxu0
      %v6875 = vadd.f32 0.0, %v6874
      %v6876 = vpop.f32.mrb[0].mxu0
      %6877 = vmatprep.mubr.bf16.mxu0 0
      %6878 = vmatmul.mubr.bf16.gmra.mrb[0].mxu0 %v6720
      %v6879 = vpop.f32.mrb[0].mxu0
      %v6880 = vadd.f32 0.0, %v6879
      %v6881 = vpop.f32.mrb[0].mxu0
      %v6882 = vpop.f32.mrb[0].mxu0
      %v6883 = vadd.f32 0.0, %v6882
      %v6884 = vpop.f32.mrb[0].mxu0
      %6885 = vdwg.mxu0
      %v6886 = vadd.f32 %v6354, %v6760
      %v6887 = vadd.f32 %v6355, %v6763
      %v6888 = vadd.f32 %v6356, %v6768
      %v6889 = vadd.f32 %v6357, %v6771
      %v6890 = vadd.f32 %v6358, %v6776
      %v6891 = vadd.f32 %v6359, %v6779
      %v6892 = vadd.f32 %v6360, %v6784
      %v6893 = vadd.f32 %v6361, %v6787
      %v6894 = vadd.f32 %v6362, %v6792
      %v6895 = vadd.f32 %v6363, %v6795
      %v6896 = vadd.f32 %v6364, %v6800
      %v6897 = vadd.f32 %v6365, %v6803
      %v6898 = vadd.f32 %v6366, %v6808
      %v6899 = vadd.f32 %v6367, %v6811
      %v6900 = vadd.f32 %v6368, %v6816
      %v6901 = vadd.f32 %v6369, %v6819
      %v6902 = vadd.f32 %v6370, %v6824
      %v6903 = vadd.f32 %v6371, %v6827
      %v6904 = vadd.f32 %v6372, %v6832
      %v6905 = vadd.f32 %v6373, %v6835
      %v6906 = vadd.f32 %v6374, %v6840
      %v6907 = vadd.f32 %v6375, %v6843
      %v6908 = vadd.f32 %v6376, %v6848
      %v6909 = vadd.f32 %v6377, %v6851
      %v6910 = vadd.f32 %v6378, %v6856
      %v6911 = vadd.f32 %v6379, %v6859
      %v6912 = vadd.f32 %v6380, %v6864
      %v6913 = vadd.f32 %v6381, %v6867
      %v6914 = vadd.f32 %v6382, %v6872
      %v6915 = vadd.f32 %v6383, %v6875
      %v6916 = vadd.f32 %v6384, %v6880
      %v6917 = vadd.f32 %v6385, %v6883
      %s6918 = scalar_lea.vmem %s3, 62
      %v6919 = vld [vmem:[%s6918] sm:$0x3]
      %s6920 = scalar_lea.vmem %s4, 3
      %v6921 = vld [vmem:[%s6920] sm:$0x1]
      %v6923 = vlaneseq
      %v6924 = vshrl.u32 %v6923, 7
      %v6925 = vsub.s32 0, %v6924
      %v6926 = vrot.slane %v6921, %v6925
      %v6929 = vsel %vm566, %v6919, 0
      %6931 = vmatprep.subr.bf16.mxu0 0
      %6932 = vmatpush1.bf16.msra.mxu0 %v6929
      %6933 = vmatprep.subr.bf16.mxu0 0
      %6934 = vmatpush1.bf16.msra.mxu0 0
      %6935 = vmatprep.subr.bf16.mxu0 0
      %6936 = vmatpush1.bf16.msra.mxu0 0
      %6937 = vmatprep.subr.bf16.mxu0 0
      %6938 = vmatpush1.bf16.msra.mxu0 0
      %6939 = vmatprep.subr.bf16.mxu0 0
      %6940 = vmatpush1.bf16.msra.mxu0 0
      %6941 = vmatprep.subr.bf16.mxu0 0
      %6942 = vmatpush1.bf16.msra.mxu0 0
      %6943 = vmatprep.subr.bf16.mxu0 0
      %6944 = vmatpush1.bf16.msra.mxu0 0
      %6945 = vmatprep.subr.bf16.mxu0 0
      %6946 = vmatpush1.bf16.msra.mxu0 0
      %6947 = vmatprep.subr.bf16.mxu0 0
      %6948 = vmatpush1.bf16.msra.mxu0 0
      %6949 = vmatprep.subr.bf16.mxu0 0
      %6950 = vmatpush1.bf16.msra.mxu0 0
      %6951 = vmatprep.subr.bf16.mxu0 0
      %6952 = vmatpush1.bf16.msra.mxu0 0
      %6953 = vmatprep.subr.bf16.mxu0 0
      %6954 = vmatpush1.bf16.msra.mxu0 0
      %6955 = vmatprep.subr.bf16.mxu0 0
      %6956 = vmatpush1.bf16.msra.mxu0 0
      %6957 = vmatprep.subr.bf16.mxu0 0
      %6958 = vmatpush1.bf16.msra.mxu0 0
      %6959 = vmatprep.subr.bf16.mxu0 0
      %6960 = vmatpush1.bf16.msra.mxu0 0
      %6961 = vmatprep.subr.bf16.mxu0 0
      %6962 = vmatpush1.bf16.msra.mxu0 0
      %6963 = vmatprep.mubr.bf16.mxu0 0
      %6964 = vmatmul.mubr.bf16.gmra.mrb[0].mxu0 %v519
      %v6965 = vpop.f32.mrb[0].mxu0
      %v6966 = vadd.f32 %v6926, %v6965
      %v6967 = vpop.f32.mrb[0].mxu0
      %v6968 = vpop.f32.mrb[0].mxu0
      %v6969 = vadd.f32 %v6926, %v6968
      %v6970 = vpop.f32.mrb[0].mxu0
      %6971 = vmatprep.mubr.bf16.mxu0 0
      %6972 = vmatmul.mubr.bf16.gmra.mrb[0].mxu0 %v522
      %v6973 = vpop.f32.mrb[0].mxu0
      %v6974 = vadd.f32 %v6926, %v6973
      %v6975 = vpop.f32.mrb[0].mxu0
      %v6976 = vpop.f32.mrb[0].mxu0
      %v6977 = vadd.f32 %v6926, %v6976
      %v6978 = vpop.f32.mrb[0].mxu0
      %6979 = vmatprep.mubr.bf16.mxu0 0
      %6980 = vmatmul.mubr.bf16.gmra.mrb[0].mxu0 %v525
      %v6981 = vpop.f32.mrb[0].mxu0
      %v6982 = vadd.f32 %v6926, %v6981
      %v6983 = vpop.f32.mrb[0].mxu0
      %v6984 = vpop.f32.mrb[0].mxu0
      %v6985 = vadd.f32 %v6926, %v6984
      %v6986 = vpop.f32.mrb[0].mxu0
      %6987 = vmatprep.mubr.bf16.mxu0 0
      %6988 = vmatmul.mubr.bf16.gmra.mrb[0].mxu0 %v528
      %v6989 = vpop.f32.mrb[0].mxu0
      %v6990 = vadd.f32 %v6926, %v6989
      %v6991 = vpop.f32.mrb[0].mxu0
      %v6992 = vpop.f32.mrb[0].mxu0
      %v6993 = vadd.f32 %v6926, %v6992
      %v6994 = vpop.f32.mrb[0].mxu0
      %6995 = vmatprep.mubr.bf16.mxu0 0
      %6996 = vmatmul.mubr.bf16.gmra.mrb[0].mxu0 %v531
      %v6997 = vpop.f32.mrb[0].mxu0
      %v6998 = vadd.f32 %v6926, %v6997
      %v6999 = vpop.f32.mrb[0].mxu0
      %v7000 = vpop.f32.mrb[0].mxu0
      %v7001 = vadd.f32 %v6926, %v7000
      %v7002 = vpop.f32.mrb[0].mxu0
      %7003 = vmatprep.mubr.bf16.mxu0 0
      %7004 = vmatmul.mubr.bf16.gmra.mrb[0].mxu0 %v534
      %v7005 = vpop.f32.mrb[0].mxu0
      %v7006 = vadd.f32 %v6926, %v7005
      %v7007 = vpop.f32.mrb[0].mxu0
      %v7008 = vpop.f32.mrb[0].mxu0
      %v7009 = vadd.f32 %v6926, %v7008
      %v7010 = vpop.f32.mrb[0].mxu0
      %7011 = vmatprep.mubr.bf16.mxu0 0
      %7012 = vmatmul.mubr.bf16.gmra.mrb[0].mxu0 %v537
      %v7013 = vpop.f32.mrb[0].mxu0
      %v7014 = vadd.f32 %v6926, %v7013
      %v7015 = vpop.f32.mrb[0].mxu0
      %v7016 = vpop.f32.mrb[0].mxu0
      %v7017 = vadd.f32 %v6926, %v7016
      %v7018 = vpop.f32.mrb[0].mxu0
      %7019 = vmatprep.mubr.bf16.mxu0 0
      %7020 = vmatmul.mubr.bf16.gmra.mrb[0].mxu0 %v540
      %v7021 = vpop.f32.mrb[0].mxu0
      %v7022 = vadd.f32 %v6926, %v7021
      %v7023 = vpop.f32.mrb[0].mxu0
      %v7024 = vpop.f32.mrb[0].mxu0
      %v7025 = vadd.f32 %v6926, %v7024
      %v7026 = vpop.f32.mrb[0].mxu0
      %7027 = vmatprep.mubr.bf16.mxu0 0
      %7028 = vmatmul.mubr.bf16.gmra.mrb[0].mxu0 %v543
      %v7029 = vpop.f32.mrb[0].mxu0
      %v7030 = vadd.f32 %v6926, %v7029
      %v7031 = vpop.f32.mrb[0].mxu0
      %v7032 = vpop.f32.mrb[0].mxu0
      %v7033 = vadd.f32 %v6926, %v7032
      %v7034 = vpop.f32.mrb[0].mxu0
      %7035 = vmatprep.mubr.bf16.mxu0 0
      %7036 = vmatmul.mubr.bf16.gmra.mrb[0].mxu0 %v546
      %v7037 = vpop.f32.mrb[0].mxu0
      %v7038 = vadd.f32 %v6926, %v7037
      %v7039 = vpop.f32.mrb[0].mxu0
      %v7040 = vpop.f32.mrb[0].mxu0
      %v7041 = vadd.f32 %v6926, %v7040
      %v7042 = vpop.f32.mrb[0].mxu0
      %7043 = vmatprep.mubr.bf16.mxu0 0
      %7044 = vmatmul.mubr.bf16.gmra.mrb[0].mxu0 %v549
      %v7045 = vpop.f32.mrb[0].mxu0
      %v7046 = vadd.f32 %v6926, %v7045
      %v7047 = vpop.f32.mrb[0].mxu0
      %v7048 = vpop.f32.mrb[0].mxu0
      %v7049 = vadd.f32 %v6926, %v7048
      %v7050 = vpop.f32.mrb[0].mxu0
      %7051 = vmatprep.mubr.bf16.mxu0 0
      %7052 = vmatmul.mubr.bf16.gmra.mrb[0].mxu0 %v552
      %v7053 = vpop.f32.mrb[0].mxu0
      %v7054 = vadd.f32 %v6926, %v7053
      %v7055 = vpop.f32.mrb[0].mxu0
      %v7056 = vpop.f32.mrb[0].mxu0
      %v7057 = vadd.f32 %v6926, %v7056
      %v7058 = vpop.f32.mrb[0].mxu0
      %7059 = vmatprep.mubr.bf16.mxu0 0
      %7060 = vmatmul.mubr.bf16.gmra.mrb[0].mxu0 %v555
      %v7061 = vpop.f32.mrb[0].mxu0
      %v7062 = vadd.f32 %v6926, %v7061
      %v7063 = vpop.f32.mrb[0].mxu0
      %v7064 = vpop.f32.mrb[0].mxu0
      %v7065 = vadd.f32 %v6926, %v7064
      %v7066 = vpop.f32.mrb[0].mxu0
      %7067 = vmatprep.mubr.bf16.mxu0 0
      %7068 = vmatmul.mubr.bf16.gmra.mrb[0].mxu0 %v558
      %v7069 = vpop.f32.mrb[0].mxu0
      %v7070 = vadd.f32 %v6926, %v7069
      %v7071 = vpop.f32.mrb[0].mxu0
      %v7072 = vpop.f32.mrb[0].mxu0
      %v7073 = vadd.f32 %v6926, %v7072
      %v7074 = vpop.f32.mrb[0].mxu0
      %7075 = vmatprep.mubr.bf16.mxu0 0
      %7076 = vmatmul.mubr.bf16.gmra.mrb[0].mxu0 %v561
      %v7077 = vpop.f32.mrb[0].mxu0
      %v7078 = vadd.f32 %v6926, %v7077
      %v7079 = vpop.f32.mrb[0].mxu0
      %v7080 = vpop.f32.mrb[0].mxu0
      %v7081 = vadd.f32 %v6926, %v7080
      %v7082 = vpop.f32.mrb[0].mxu0
      %7083 = vmatprep.mubr.bf16.mxu0 0
      %7084 = vmatmul.mubr.bf16.gmra.mrb[0].mxu0 %v564
      %v7085 = vpop.f32.mrb[0].mxu0
      %v7086 = vadd.f32 %v6926, %v7085
      %v7087 = vpop.f32.mrb[0].mxu0
      %v7088 = vpop.f32.mrb[0].mxu0
      %v7089 = vadd.f32 %v6926, %v7088
      %v7090 = vpop.f32.mrb[0].mxu0
      %7091 = vdwg.mxu0
      %7092 = vst.msk [vmem:[#allocation2] sm:$0xff] %vm780, %v6966
      %7093 = vst.msk [vmem:[#allocation2 + $0x8] sm:$0xff] %vm780, %v6969
      %7094 = vst.msk [vmem:[#allocation2 + $0x10] sm:$0xff] %vm780, %v6974
      %7095 = vst.msk [vmem:[#allocation2 + $0x18] sm:$0xff] %vm780, %v6977
      %7096 = vst.msk [vmem:[#allocation2 + $0x20] sm:$0xff] %vm780, %v6982
      %7097 = vst.msk [vmem:[#allocation2 + $0x28] sm:$0xff] %vm780, %v6985
      %7098 = vst.msk [vmem:[#allocation2 + $0x30] sm:$0xff] %vm780, %v6990
      %7099 = vst.msk [vmem:[#allocation2 + $0x38] sm:$0xff] %vm780, %v6993
      %7100 = vst.msk [vmem:[#allocation2 + $0x40] sm:$0xff] %vm780, %v6998
      %7101 = vst.msk [vmem:[#allocation2 + $0x48] sm:$0xff] %vm780, %v7001
      %7102 = vst.msk [vmem:[#allocation2 + $0x50] sm:$0xff] %vm780, %v7006
      %7103 = vst.msk [vmem:[#allocation2 + $0x58] sm:$0xff] %vm780, %v7009
      %7104 = vst.msk [vmem:[#allocation2 + $0x60] sm:$0xff] %vm780, %v7014
      %7105 = vst.msk [vmem:[#allocation2 + $0x68] sm:$0xff] %vm780, %v7017
      %7106 = vst.msk [vmem:[#allocation2 + $0x70] sm:$0xff] %vm780, %v7022
      %7107 = vst.msk [vmem:[#allocation2 + $0x78] sm:$0xff] %vm780, %v7025
      %7108 = vst.msk [vmem:[#allocation2 + $0x80] sm:$0xff] %vm780, %v7030
      %7109 = vst.msk [vmem:[#allocation2 + $0x88] sm:$0xff] %vm780, %v7033
      %7110 = vst.msk [vmem:[#allocation2 + $0x90] sm:$0xff] %vm780, %v7038
      %7111 = vst.msk [vmem:[#allocation2 + $0x98] sm:$0xff] %vm780, %v7041
      %7112 = vst.msk [vmem:[#allocation2 + $0xa0] sm:$0xff] %vm780, %v7046
      %7113 = vst.msk [vmem:[#allocation2 + $0xa8] sm:$0xff] %vm780, %v7049
      %7114 = vst.msk [vmem:[#allocation2 + $0xb0] sm:$0xff] %vm780, %v7054
      %7115 = vst.msk [vmem:[#allocation2 + $0xb8] sm:$0xff] %vm780, %v7057
      %7116 = vst.msk [vmem:[#allocation2 + $0xc0] sm:$0xff] %vm780, %v7062
      %7117 = vst.msk [vmem:[#allocation2 + $0xc8] sm:$0xff] %vm780, %v7065
      %7118 = vst.msk [vmem:[#allocation2 + $0xd0] sm:$0xff] %vm780, %v7070
      %7119 = vst.msk [vmem:[#allocation2 + $0xd8] sm:$0xff] %vm780, %v7073
      %7120 = vst.msk [vmem:[#allocation2 + $0xe0] sm:$0xff] %vm780, %v7078
      %7121 = vst.msk [vmem:[#allocation2 + $0xe8] sm:$0xff] %vm780, %v7081
      %7122 = vst.msk [vmem:[#allocation2 + $0xf0] sm:$0xff] %vm780, %v7086
      %7123 = vst.msk [vmem:[#allocation2 + $0xf8] sm:$0xff] %vm780, %v7089
      %v7124 = vld [vmem:[#allocation2] sm:$0xff]
      %v7125 = vld [vmem:[#allocation2 + $0x8] sm:$0xff]
      %v7126 = vld [vmem:[#allocation2 + $0x10] sm:$0xff]
      %v7127 = vld [vmem:[#allocation2 + $0x18] sm:$0xff]
      %v7128 = vld [vmem:[#allocation2 + $0x20] sm:$0xff]
      %v7129 = vld [vmem:[#allocation2 + $0x28] sm:$0xff]
      %v7130 = vld [vmem:[#allocation2 + $0x30] sm:$0xff]
      %v7131 = vld [vmem:[#allocation2 + $0x38] sm:$0xff]
      %v7132 = vld [vmem:[#allocation2 + $0x40] sm:$0xff]
      %v7133 = vld [vmem:[#allocation2 + $0x48] sm:$0xff]
      %v7134 = vld [vmem:[#allocation2 + $0x50] sm:$0xff]
      %v7135 = vld [vmem:[#allocation2 + $0x58] sm:$0xff]
      %v7136 = vld [vmem:[#allocation2 + $0x60] sm:$0xff]
      %v7137 = vld [vmem:[#allocation2 + $0x68] sm:$0xff]
      %v7138 = vld [vmem:[#allocation2 + $0x70] sm:$0xff]
      %v7139 = vld [vmem:[#allocation2 + $0x78] sm:$0xff]
      %v7140 = vld [vmem:[#allocation2 + $0x80] sm:$0xff]
      %v7141 = vld [vmem:[#allocation2 + $0x88] sm:$0xff]
      %v7142 = vld [vmem:[#allocation2 + $0x90] sm:$0xff]
      %v7143 = vld [vmem:[#allocation2 + $0x98] sm:$0xff]
      %v7144 = vld [vmem:[#allocation2 + $0xa0] sm:$0xff]
      %v7145 = vld [vmem:[#allocation2 + $0xa8] sm:$0xff]
      %v7146 = vld [vmem:[#allocation2 + $0xb0] sm:$0xff]
      %v7147 = vld [vmem:[#allocation2 + $0xb8] sm:$0xff]
      %v7148 = vld [vmem:[#allocation2 + $0xc0] sm:$0xff]
      %v7149 = vld [vmem:[#allocation2 + $0xc8] sm:$0xff]
      %v7150 = vld [vmem:[#allocation2 + $0xd0] sm:$0xff]
      %v7151 = vld [vmem:[#allocation2 + $0xd8] sm:$0xff]
      %v7152 = vld [vmem:[#allocation2 + $0xe0] sm:$0xff]
      %v7153 = vld [vmem:[#allocation2 + $0xe8] sm:$0xff]
      %v7154 = vld [vmem:[#allocation2 + $0xf0] sm:$0xff]
      %v7155 = vld [vmem:[#allocation2 + $0xf8] sm:$0xff]
      %v7156 = vmax.f32 %v7124, 0.0
      %v7157 = vmax.f32 %v7125, 0.0
      %v7158 = vmax.f32 %v7126, 0.0
      %v7159 = vmax.f32 %v7127, 0.0
      %v7160 = vmax.f32 %v7128, 0.0
      %v7161 = vmax.f32 %v7129, 0.0
      %v7162 = vmax.f32 %v7130, 0.0
      %v7163 = vmax.f32 %v7131, 0.0
      %v7164 = vmax.f32 %v7132, 0.0
      %v7165 = vmax.f32 %v7133, 0.0
      %v7166 = vmax.f32 %v7134, 0.0
      %v7167 = vmax.f32 %v7135, 0.0
      %v7168 = vmax.f32 %v7136, 0.0
      %v7169 = vmax.f32 %v7137, 0.0
      %v7170 = vmax.f32 %v7138, 0.0
      %v7171 = vmax.f32 %v7139, 0.0
      %v7172 = vmax.f32 %v7140, 0.0
      %v7173 = vmax.f32 %v7141, 0.0
      %v7174 = vmax.f32 %v7142, 0.0
      %v7175 = vmax.f32 %v7143, 0.0
      %v7176 = vmax.f32 %v7144, 0.0
      %v7177 = vmax.f32 %v7145, 0.0
      %v7178 = vmax.f32 %v7146, 0.0
      %v7179 = vmax.f32 %v7147, 0.0
      %v7180 = vmax.f32 %v7148, 0.0
      %v7181 = vmax.f32 %v7149, 0.0
      %v7182 = vmax.f32 %v7150, 0.0
      %v7183 = vmax.f32 %v7151, 0.0
      %v7184 = vmax.f32 %v7152, 0.0
      %v7185 = vmax.f32 %v7153, 0.0
      %v7186 = vmax.f32 %v7154, 0.0
      %v7187 = vmax.f32 %v7155, 0.0
      %v7188 = vpack.c.bf16 %v7157, %v7156
      %v7189 = vpack.c.bf16 %v7159, %v7158
      %v7190 = vpack.c.bf16 %v7161, %v7160
      %v7191 = vpack.c.bf16 %v7163, %v7162
      %v7192 = vpack.c.bf16 %v7165, %v7164
      %v7193 = vpack.c.bf16 %v7167, %v7166
      %v7194 = vpack.c.bf16 %v7169, %v7168
      %v7195 = vpack.c.bf16 %v7171, %v7170
      %v7196 = vpack.c.bf16 %v7173, %v7172
      %v7197 = vpack.c.bf16 %v7175, %v7174
      %v7198 = vpack.c.bf16 %v7177, %v7176
      %v7199 = vpack.c.bf16 %v7179, %v7178
      %v7200 = vpack.c.bf16 %v7181, %v7180
      %v7201 = vpack.c.bf16 %v7183, %v7182
      %v7202 = vpack.c.bf16 %v7185, %v7184
      %v7203 = vpack.c.bf16 %v7187, %v7186
      %s7204 = scalar_lea.vmem %s9, 16
      %v7205 = vld [vmem:[%s7204] sm:$0xf]
      %v7207 = vsel %vm780, %v7188, 0
      %v7210 = vsel %vm780, %v7189, 0
      %v7213 = vsel %vm780, %v7190, 0
      %v7216 = vsel %vm780, %v7191, 0
      %v7219 = vsel %vm780, %v7192, 0
      %v7222 = vsel %vm780, %v7193, 0
      %v7225 = vsel %vm780, %v7194, 0
      %v7228 = vsel %vm780, %v7195, 0
      %v7231 = vsel %vm780, %v7196, 0
      %v7234 = vsel %vm780, %v7197, 0
      %v7237 = vsel %vm780, %v7198, 0
      %v7240 = vsel %vm780, %v7199, 0
      %v7243 = vsel %vm780, %v7200, 0
      %v7246 = vsel %vm780, %v7201, 0
      %v7249 = vsel %vm780, %v7202, 0
      %v7252 = vsel %vm780, %v7203, 0
      %v7255 = vsel %vm829, %v7205, 0
      %7257 = vmatprep.subr.bf16.mxu0 0
      %7258 = vmatpush1.bf16.msra.mxu0 %v7255
      %7259 = vmatprep.subr.bf16.mxu0 0
      %7260 = vmatpush1.bf16.msra.mxu0 0
      %7261 = vmatprep.subr.bf16.mxu0 0
      %7262 = vmatpush1.bf16.msra.mxu0 0
      %7263 = vmatprep.subr.bf16.mxu0 0
      %7264 = vmatpush1.bf16.msra.mxu0 0
      %7265 = vmatprep.subr.bf16.mxu0 0
      %7266 = vmatpush1.bf16.msra.mxu0 0
      %7267 = vmatprep.subr.bf16.mxu0 0
      %7268 = vmatpush1.bf16.msra.mxu0 0
      %7269 = vmatprep.subr.bf16.mxu0 0
      %7270 = vmatpush1.bf16.msra.mxu0 0
      %7271 = vmatprep.subr.bf16.mxu0 0
      %7272 = vmatpush1.bf16.msra.mxu0 0
      %7273 = vmatprep.subr.bf16.mxu0 0
      %7274 = vmatpush1.bf16.msra.mxu0 0
      %7275 = vmatprep.subr.bf16.mxu0 0
      %7276 = vmatpush1.bf16.msra.mxu0 0
      %7277 = vmatprep.subr.bf16.mxu0 0
      %7278 = vmatpush1.bf16.msra.mxu0 0
      %7279 = vmatprep.subr.bf16.mxu0 0
      %7280 = vmatpush1.bf16.msra.mxu0 0
      %7281 = vmatprep.subr.bf16.mxu0 0
      %7282 = vmatpush1.bf16.msra.mxu0 0
      %7283 = vmatprep.subr.bf16.mxu0 0
      %7284 = vmatpush1.bf16.msra.mxu0 0
      %7285 = vmatprep.subr.bf16.mxu0 0
      %7286 = vmatpush1.bf16.msra.mxu0 0
      %7287 = vmatprep.subr.bf16.mxu0 0
      %7288 = vmatpush1.bf16.msra.mxu0 0
      %7289 = vmatprep.mubr.bf16.mxu0 0
      %7290 = vmatmul.mubr.bf16.gmra.mrb[0].mxu0 %v7207
      %v7291 = vpop.f32.mrb[0].mxu0
      %v7292 = vadd.f32 0.0, %v7291
      %v7293 = vpop.f32.mrb[0].mxu0
      %v7294 = vpop.f32.mrb[0].mxu0
      %v7295 = vadd.f32 0.0, %v7294
      %v7296 = vpop.f32.mrb[0].mxu0
      %7297 = vmatprep.mubr.bf16.mxu0 0
      %7298 = vmatmul.mubr.bf16.gmra.mrb[0].mxu0 %v7210
      %v7299 = vpop.f32.mrb[0].mxu0
      %v7300 = vadd.f32 0.0, %v7299
      %v7301 = vpop.f32.mrb[0].mxu0
      %v7302 = vpop.f32.mrb[0].mxu0
      %v7303 = vadd.f32 0.0, %v7302
      %v7304 = vpop.f32.mrb[0].mxu0
      %7305 = vmatprep.mubr.bf16.mxu0 0
      %7306 = vmatmul.mubr.bf16.gmra.mrb[0].mxu0 %v7213
      %v7307 = vpop.f32.mrb[0].mxu0
      %v7308 = vadd.f32 0.0, %v7307
      %v7309 = vpop.f32.mrb[0].mxu0
      %v7310 = vpop.f32.mrb[0].mxu0
      %v7311 = vadd.f32 0.0, %v7310
      %v7312 = vpop.f32.mrb[0].mxu0
      %7313 = vmatprep.mubr.bf16.mxu0 0
      %7314 = vmatmul.mubr.bf16.gmra.mrb[0].mxu0 %v7216
      %v7315 = vpop.f32.mrb[0].mxu0
      %v7316 = vadd.f32 0.0, %v7315
      %v7317 = vpop.f32.mrb[0].mxu0
      %v7318 = vpop.f32.mrb[0].mxu0
      %v7319 = vadd.f32 0.0, %v7318
      %v7320 = vpop.f32.mrb[0].mxu0
      %7321 = vmatprep.mubr.bf16.mxu0 0
      %7322 = vmatmul.mubr.bf16.gmra.mrb[0].mxu0 %v7219
      %v7323 = vpop.f32.mrb[0].mxu0
      %v7324 = vadd.f32 0.0, %v7323
      %v7325 = vpop.f32.mrb[0].mxu0
      %v7326 = vpop.f32.mrb[0].mxu0
      %v7327 = vadd.f32 0.0, %v7326
      %v7328 = vpop.f32.mrb[0].mxu0
      %7329 = vmatprep.mubr.bf16.mxu0 0
      %7330 = vmatmul.mubr.bf16.gmra.mrb[0].mxu0 %v7222
      %v7331 = vpop.f32.mrb[0].mxu0
      %v7332 = vadd.f32 0.0, %v7331
      %v7333 = vpop.f32.mrb[0].mxu0
      %v7334 = vpop.f32.mrb[0].mxu0
      %v7335 = vadd.f32 0.0, %v7334
      %v7336 = vpop.f32.mrb[0].mxu0
      %7337 = vmatprep.mubr.bf16.mxu0 0
      %7338 = vmatmul.mubr.bf16.gmra.mrb[0].mxu0 %v7225
      %v7339 = vpop.f32.mrb[0].mxu0
      %v7340 = vadd.f32 0.0, %v7339
      %v7341 = vpop.f32.mrb[0].mxu0
      %v7342 = vpop.f32.mrb[0].mxu0
      %v7343 = vadd.f32 0.0, %v7342
      %v7344 = vpop.f32.mrb[0].mxu0
      %7345 = vmatprep.mubr.bf16.mxu0 0
      %7346 = vmatmul.mubr.bf16.gmra.mrb[0].mxu0 %v7228
      %v7347 = vpop.f32.mrb[0].mxu0
      %v7348 = vadd.f32 0.0, %v7347
      %v7349 = vpop.f32.mrb[0].mxu0
      %v7350 = vpop.f32.mrb[0].mxu0
      %v7351 = vadd.f32 0.0, %v7350
      %v7352 = vpop.f32.mrb[0].mxu0
      %7353 = vmatprep.mubr.bf16.mxu0 0
      %7354 = vmatmul.mubr.bf16.gmra.mrb[0].mxu0 %v7231
      %v7355 = vpop.f32.mrb[0].mxu0
      %v7356 = vadd.f32 0.0, %v7355
      %v7357 = vpop.f32.mrb[0].mxu0
      %v7358 = vpop.f32.mrb[0].mxu0
      %v7359 = vadd.f32 0.0, %v7358
      %v7360 = vpop.f32.mrb[0].mxu0
      %7361 = vmatprep.mubr.bf16.mxu0 0
      %7362 = vmatmul.mubr.bf16.gmra.mrb[0].mxu0 %v7234
      %v7363 = vpop.f32.mrb[0].mxu0
      %v7364 = vadd.f32 0.0, %v7363
      %v7365 = vpop.f32.mrb[0].mxu0
      %v7366 = vpop.f32.mrb[0].mxu0
      %v7367 = vadd.f32 0.0, %v7366
      %v7368 = vpop.f32.mrb[0].mxu0
      %7369 = vmatprep.mubr.bf16.mxu0 0
      %7370 = vmatmul.mubr.bf16.gmra.mrb[0].mxu0 %v7237
      %v7371 = vpop.f32.mrb[0].mxu0
      %v7372 = vadd.f32 0.0, %v7371
      %v7373 = vpop.f32.mrb[0].mxu0
      %v7374 = vpop.f32.mrb[0].mxu0
      %v7375 = vadd.f32 0.0, %v7374
      %v7376 = vpop.f32.mrb[0].mxu0
      %7377 = vmatprep.mubr.bf16.mxu0 0
      %7378 = vmatmul.mubr.bf16.gmra.mrb[0].mxu0 %v7240
      %v7379 = vpop.f32.mrb[0].mxu0
      %v7380 = vadd.f32 0.0, %v7379
      %v7381 = vpop.f32.mrb[0].mxu0
      %v7382 = vpop.f32.mrb[0].mxu0
      %v7383 = vadd.f32 0.0, %v7382
      %v7384 = vpop.f32.mrb[0].mxu0
      %7385 = vmatprep.mubr.bf16.mxu0 0
      %7386 = vmatmul.mubr.bf16.gmra.mrb[0].mxu0 %v7243
      %v7387 = vpop.f32.mrb[0].mxu0
      %v7388 = vadd.f32 0.0, %v7387
      %v7389 = vpop.f32.mrb[0].mxu0
      %v7390 = vpop.f32.mrb[0].mxu0
      %v7391 = vadd.f32 0.0, %v7390
      %v7392 = vpop.f32.mrb[0].mxu0
      %7393 = vmatprep.mubr.bf16.mxu0 0
      %7394 = vmatmul.mubr.bf16.gmra.mrb[0].mxu0 %v7246
      %v7395 = vpop.f32.mrb[0].mxu0
      %v7396 = vadd.f32 0.0, %v7395
      %v7397 = vpop.f32.mrb[0].mxu0
      %v7398 = vpop.f32.mrb[0].mxu0
      %v7399 = vadd.f32 0.0, %v7398
      %v7400 = vpop.f32.mrb[0].mxu0
      %7401 = vmatprep.mubr.bf16.mxu0 0
      %7402 = vmatmul.mubr.bf16.gmra.mrb[0].mxu0 %v7249
      %v7403 = vpop.f32.mrb[0].mxu0
      %v7404 = vadd.f32 0.0, %v7403
      %v7405 = vpop.f32.mrb[0].mxu0
      %v7406 = vpop.f32.mrb[0].mxu0
      %v7407 = vadd.f32 0.0, %v7406
      %v7408 = vpop.f32.mrb[0].mxu0
      %7409 = vmatprep.mubr.bf16.mxu0 0
      %7410 = vmatmul.mubr.bf16.gmra.mrb[0].mxu0 %v7252
      %v7411 = vpop.f32.mrb[0].mxu0
      %v7412 = vadd.f32 0.0, %v7411
      %v7413 = vpop.f32.mrb[0].mxu0
      %v7414 = vpop.f32.mrb[0].mxu0
      %v7415 = vadd.f32 0.0, %v7414
      %v7416 = vpop.f32.mrb[0].mxu0
      %7417 = vdwg.mxu0
      %v7418 = vadd.f32 %v6886, %v7292
      %v7419 = vadd.f32 %v6887, %v7295
      %v7420 = vadd.f32 %v6888, %v7300
      %v7421 = vadd.f32 %v6889, %v7303
      %v7422 = vadd.f32 %v6890, %v7308
      %v7423 = vadd.f32 %v6891, %v7311
      %v7424 = vadd.f32 %v6892, %v7316
      %v7425 = vadd.f32 %v6893, %v7319
      %v7426 = vadd.f32 %v6894, %v7324
      %v7427 = vadd.f32 %v6895, %v7327
      %v7428 = vadd.f32 %v6896, %v7332
      %v7429 = vadd.f32 %v6897, %v7335
      %v7430 = vadd.f32 %v6898, %v7340
      %v7431 = vadd.f32 %v6899, %v7343
      %v7432 = vadd.f32 %v6900, %v7348
      %v7433 = vadd.f32 %v6901, %v7351
      %v7434 = vadd.f32 %v6902, %v7356
      %v7435 = vadd.f32 %v6903, %v7359
      %v7436 = vadd.f32 %v6904, %v7364
      %v7437 = vadd.f32 %v6905, %v7367
      %v7438 = vadd.f32 %v6906, %v7372
      %v7439 = vadd.f32 %v6907, %v7375
      %v7440 = vadd.f32 %v6908, %v7380
      %v7441 = vadd.f32 %v6909, %v7383
      %v7442 = vadd.f32 %v6910, %v7388
      %v7443 = vadd.f32 %v6911, %v7391
      %v7444 = vadd.f32 %v6912, %v7396
      %v7445 = vadd.f32 %v6913, %v7399
      %v7446 = vadd.f32 %v6914, %v7404
      %v7447 = vadd.f32 %v6915, %v7407
      %v7448 = vadd.f32 %v6916, %v7412
      %v7449 = vadd.f32 %v6917, %v7415
      %7466 = vmatprep.subr.bf16.mxu0 0
      %7467 = vmatpush1.bf16.msra.mxu0 %v501
      %7468 = vmatprep.subr.bf16.mxu0 0
      %7469 = vmatpush1.bf16.msra.mxu0 %v502
      %7470 = vmatprep.subr.bf16.mxu0 0
      %7471 = vmatpush1.bf16.msra.mxu0 %v503
      %7472 = vmatprep.subr.bf16.mxu0 0
      %7473 = vmatpush1.bf16.msra.mxu0 %v504
      %7474 = vmatprep.subr.bf16.mxu0 0
      %7475 = vmatpush1.bf16.msra.mxu0 %v505
      %7476 = vmatprep.subr.bf16.mxu0 0
      %7477 = vmatpush1.bf16.msra.mxu0 %v506
      %7478 = vmatprep.subr.bf16.mxu0 0
      %7479 = vmatpush1.bf16.msra.mxu0 %v507
      %7480 = vmatprep.subr.bf16.mxu0 0
      %7481 = vmatpush1.bf16.msra.mxu0 %v508
      %7482 = vmatprep.subr.bf16.mxu0 0
      %7483 = vmatpush1.bf16.msra.mxu0 %v509
      %7484 = vmatprep.subr.bf16.mxu0 0
      %7485 = vmatpush1.bf16.msra.mxu0 %v510
      %7486 = vmatprep.subr.bf16.mxu0 0
      %7487 = vmatpush1.bf16.msra.mxu0 %v511
      %7488 = vmatprep.subr.bf16.mxu0 0
      %7489 = vmatpush1.bf16.msra.mxu0 %v512
      %7490 = vmatprep.subr.bf16.mxu0 0
      %7491 = vmatpush1.bf16.msra.mxu0 %v513
      %7492 = vmatprep.subr.bf16.mxu0 0
      %7493 = vmatpush1.bf16.msra.mxu0 %v514
      %7494 = vmatprep.subr.bf16.mxu0 0
      %7495 = vmatpush1.bf16.msra.mxu0 %v515
      %7496 = vmatprep.subr.bf16.mxu0 0
      %7497 = vmatpush1.bf16.msra.mxu0 %v516
      %7498 = vmatprep.mubr.bf16.mxu0 1065369472
      %7499 = vmatmul.mubr.bf16.gmra.mrb[0].mxu0 1065369472
      %v7500 = vpop.f32.mrb[0].mxu0
      %v7501 = vadd.f32 0.0, %v7500
      %v7502 = vpop.f32.mrb[0].mxu0
      %v7503 = vpop.f32.mrb[0].mxu0
      %v7504 = vpop.f32.mrb[0].mxu0
      %7505 = vdwg.mxu0
      %v7506 = vmul.f32 %v7501, 0.00390625
      %v7507 = vld [vmem:[%s5] sm:$0xf]
      %v7508 = vld [vmem:[%s6] sm:$0x1]
      %v7510 = vsel %vm517, %v7506, 0
      %v7513 = vsel %vm829, %v7507, 0
      %7515 = vmatprep.subr.mxu0 0.0
      %7516 = vmatpush1.msra.mxu0 %v7513
      %7517 = vmatprep.subr.mxu0 0.0
      %7518 = vmatpush1.msra.mxu0 0.0
      %7519 = vmatprep.subr.mxu0 0.0
      %7520 = vmatpush1.msra.mxu0 0.0
      %7521 = vmatprep.subr.mxu0 0.0
      %7522 = vmatpush1.msra.mxu0 0.0
      %7523 = vmatprep.subr.mxu0 0.0
      %7524 = vmatpush1.msra.mxu0 0.0
      %7525 = vmatprep.subr.mxu0 0.0
      %7526 = vmatpush1.msra.mxu0 0.0
      %7527 = vmatprep.subr.mxu0 0.0
      %7528 = vmatpush1.msra.mxu0 0.0
      %7529 = vmatprep.subr.mxu0 0.0
      %7530 = vmatpush1.msra.mxu0 0.0
      %7531 = vmatprep.subr.mxu0 0.0
      %7532 = vmatpush1.msra.mxu0 0.0
      %7533 = vmatprep.subr.mxu0 0.0
      %7534 = vmatpush1.msra.mxu0 0.0
      %7535 = vmatprep.subr.mxu0 0.0
      %7536 = vmatpush1.msra.mxu0 0.0
      %7537 = vmatprep.subr.mxu0 0.0
      %7538 = vmatpush1.msra.mxu0 0.0
      %7539 = vmatprep.subr.mxu0 0.0
      %7540 = vmatpush1.msra.mxu0 0.0
      %7541 = vmatprep.subr.mxu0 0.0
      %7542 = vmatpush1.msra.mxu0 0.0
      %7543 = vmatprep.subr.mxu0 0.0
      %7544 = vmatpush1.msra.mxu0 0.0
      %7545 = vmatprep.subr.mxu0 0.0
      %7546 = vmatpush1.msra.mxu0 0.0
      %7547 = vmatprep.subr.mxu0 0.0
      %7548 = vmatpush1.msra.mxu0 0.0
      %7549 = vmatprep.subr.mxu0 0.0
      %7550 = vmatpush1.msra.mxu0 0.0
      %7551 = vmatprep.subr.mxu0 0.0
      %7552 = vmatpush1.msra.mxu0 0.0
      %7553 = vmatprep.subr.mxu0 0.0
      %7554 = vmatpush1.msra.mxu0 0.0
      %7555 = vmatprep.subr.mxu0 0.0
      %7556 = vmatpush1.msra.mxu0 0.0
      %7557 = vmatprep.subr.mxu0 0.0
      %7558 = vmatpush1.msra.mxu0 0.0
      %7559 = vmatprep.subr.mxu0 0.0
      %7560 = vmatpush1.msra.mxu0 0.0
      %7561 = vmatprep.subr.mxu0 0.0
      %7562 = vmatpush1.msra.mxu0 0.0
      %7563 = vmatprep.subr.mxu0 0.0
      %7564 = vmatpush1.msra.mxu0 0.0
      %7565 = vmatprep.subr.mxu0 0.0
      %7566 = vmatpush1.msra.mxu0 0.0
      %7567 = vmatprep.subr.mxu0 0.0
      %7568 = vmatpush1.msra.mxu0 0.0
      %7569 = vmatprep.subr.mxu0 0.0
      %7570 = vmatpush1.msra.mxu0 0.0
      %7571 = vmatprep.subr.mxu0 0.0
      %7572 = vmatpush1.msra.mxu0 0.0
      %7573 = vmatprep.subr.mxu0 0.0
      %7574 = vmatpush1.msra.mxu0 0.0
      %7575 = vmatprep.subr.mxu0 0.0
      %7576 = vmatpush1.msra.mxu0 0.0
      %7577 = vmatprep.subr.mxu0 0.0
      %7578 = vmatpush1.msra.mxu0 0.0
      %7579 = vmatprep.mubr.f32.mxu0 0.0
      %7580 = vmatmul.mubr.f32.gmra.mrb[0].mxu0 %v7510
      %v7581 = vpop.f32.mrb[0].mxu0
      %v7582 = vadd.f32 %v7508, %v7581
      %v7583 = vpop.f32.mrb[0].mxu0
      %7584 = vdwg.mxu0
      %v7585 = vld [vmem:[%s7] sm:$0x1]
      %v7586 = vmul.f32 %v7582, %v7585
      %v7587 = vld [vmem:[%s8] sm:$0x1]
      %v7588 = vadd.f32 %v7586, %v7587
      %v7589 = vmax.f32 %v7588, 0.0
      %v7590 = vpack.c.bf16 %v7589, %v7589
      %s7591 = scalar_lea.vmem %s9, 20
      %v7592 = vld [vmem:[%s7591] sm:$0xf]
      %v7594 = vsel %vm780, %v7590, 0
      %v7597 = vsel %vm829, %v7592, 0
      %7599 = vmatprep.subr.bf16.mxu0 0
      %7600 = vmatpush1.bf16.msra.mxu0 %v7597
      %7601 = vmatprep.subr.bf16.mxu0 0
      %7602 = vmatpush1.bf16.msra.mxu0 0
      %7603 = vmatprep.subr.bf16.mxu0 0
      %7604 = vmatpush1.bf16.msra.mxu0 0
      %7605 = vmatprep.subr.bf16.mxu0 0
      %7606 = vmatpush1.bf16.msra.mxu0 0
      %7607 = vmatprep.subr.bf16.mxu0 0
      %7608 = vmatpush1.bf16.msra.mxu0 0
      %7609 = vmatprep.subr.bf16.mxu0 0
      %7610 = vmatpush1.bf16.msra.mxu0 0
      %7611 = vmatprep.subr.bf16.mxu0 0
      %7612 = vmatpush1.bf16.msra.mxu0 0
      %7613 = vmatprep.subr.bf16.mxu0 0
      %7614 = vmatpush1.bf16.msra.mxu0 0
      %7615 = vmatprep.subr.bf16.mxu0 0
      %7616 = vmatpush1.bf16.msra.mxu0 0
      %7617 = vmatprep.subr.bf16.mxu0 0
      %7618 = vmatpush1.bf16.msra.mxu0 0
      %7619 = vmatprep.subr.bf16.mxu0 0
      %7620 = vmatpush1.bf16.msra.mxu0 0
      %7621 = vmatprep.subr.bf16.mxu0 0
      %7622 = vmatpush1.bf16.msra.mxu0 0
      %7623 = vmatprep.subr.bf16.mxu0 0
      %7624 = vmatpush1.bf16.msra.mxu0 0
      %7625 = vmatprep.subr.bf16.mxu0 0
      %7626 = vmatpush1.bf16.msra.mxu0 0
      %7627 = vmatprep.subr.bf16.mxu0 0
      %7628 = vmatpush1.bf16.msra.mxu0 0
      %7629 = vmatprep.subr.bf16.mxu0 0
      %7630 = vmatpush1.bf16.msra.mxu0 0
      %7631 = vmatprep.mubr.bf16.mxu0 0
      %7632 = vmatmul.mubr.bf16.gmra.mrb[0].mxu0 %v7594
      %v7633 = vpop.f32.mrb[0].mxu0
      %v7634 = vadd.f32 0.0, %v7633
      %v7635 = vpop.f32.mrb[0].mxu0
      %v7636 = vpop.f32.mrb[0].mxu0
      %v7637 = vpop.f32.mrb[0].mxu0
      %7638 = vdwg.mxu0
      %v7639 = vlaneseq
      %v7640 = vshrl.u32 %v7639, 7
      %v7641 = vsub.s32 0, %v7640
      %v7642 = vrot.slane %v7634, %v7641
      %v7643 = vadd.f32 %v7418, %v7642
      %v7644 = vadd.f32 %v7419, %v7642
      %v7645 = vadd.f32 %v7420, %v7642
      %v7646 = vadd.f32 %v7421, %v7642
      %v7647 = vadd.f32 %v7422, %v7642
      %v7648 = vadd.f32 %v7423, %v7642
      %v7649 = vadd.f32 %v7424, %v7642
      %v7650 = vadd.f32 %v7425, %v7642
      %v7651 = vadd.f32 %v7426, %v7642
      %v7652 = vadd.f32 %v7427, %v7642
      %v7653 = vadd.f32 %v7428, %v7642
      %v7654 = vadd.f32 %v7429, %v7642
      %v7655 = vadd.f32 %v7430, %v7642
      %v7656 = vadd.f32 %v7431, %v7642
      %v7657 = vadd.f32 %v7432, %v7642
      %v7658 = vadd.f32 %v7433, %v7642
      %v7659 = vadd.f32 %v7434, %v7642
      %v7660 = vadd.f32 %v7435, %v7642
      %v7661 = vadd.f32 %v7436, %v7642
      %v7662 = vadd.f32 %v7437, %v7642
      %v7663 = vadd.f32 %v7438, %v7642
      %v7664 = vadd.f32 %v7439, %v7642
      %v7665 = vadd.f32 %v7440, %v7642
      %v7666 = vadd.f32 %v7441, %v7642
      %v7667 = vadd.f32 %v7442, %v7642
      %v7668 = vadd.f32 %v7443, %v7642
      %v7669 = vadd.f32 %v7444, %v7642
      %v7670 = vadd.f32 %v7445, %v7642
      %v7671 = vadd.f32 %v7446, %v7642
      %v7672 = vadd.f32 %v7447, %v7642
      %v7673 = vadd.f32 %v7448, %v7642
      %v7674 = vadd.f32 %v7449, %v7642
      %7675 = vst.msk [vmem:[%s386] sm:$0xff] %vm780, %v7643
      %7676 = vst.msk [vmem:[%s386 + $0x8] sm:$0xff] %vm780, %v7644
      %7677 = vst.msk [vmem:[%s386 + $0x10] sm:$0xff] %vm780, %v7645
      %7678 = vst.msk [vmem:[%s386 + $0x18] sm:$0xff] %vm780, %v7646
      %7679 = vst.msk [vmem:[%s386 + $0x20] sm:$0xff] %vm780, %v7647
      %7680 = vst.msk [vmem:[%s386 + $0x28] sm:$0xff] %vm780, %v7648
      %7681 = vst.msk [vmem:[%s386 + $0x30] sm:$0xff] %vm780, %v7649
      %7682 = vst.msk [vmem:[%s386 + $0x38] sm:$0xff] %vm780, %v7650
      %7683 = vst.msk [vmem:[%s386 + $0x40] sm:$0xff] %vm780, %v7651
      %7684 = vst.msk [vmem:[%s386 + $0x48] sm:$0xff] %vm780, %v7652
      %7685 = vst.msk [vmem:[%s386 + $0x50] sm:$0xff] %vm780, %v7653
      %7686 = vst.msk [vmem:[%s386 + $0x58] sm:$0xff] %vm780, %v7654
      %7687 = vst.msk [vmem:[%s386 + $0x60] sm:$0xff] %vm780, %v7655
      %7688 = vst.msk [vmem:[%s386 + $0x68] sm:$0xff] %vm780, %v7656
      %7689 = vst.msk [vmem:[%s386 + $0x70] sm:$0xff] %vm780, %v7657
      %7690 = vst.msk [vmem:[%s386 + $0x78] sm:$0xff] %vm780, %v7658
      %7691 = vst.msk [vmem:[%s386 + $0x80] sm:$0xff] %vm780, %v7659
      %7692 = vst.msk [vmem:[%s386 + $0x88] sm:$0xff] %vm780, %v7660
      %7693 = vst.msk [vmem:[%s386 + $0x90] sm:$0xff] %vm780, %v7661
      %7694 = vst.msk [vmem:[%s386 + $0x98] sm:$0xff] %vm780, %v7662
      %7695 = vst.msk [vmem:[%s386 + $0xa0] sm:$0xff] %vm780, %v7663
      %7696 = vst.msk [vmem:[%s386 + $0xa8] sm:$0xff] %vm780, %v7664
      %7697 = vst.msk [vmem:[%s386 + $0xb0] sm:$0xff] %vm780, %v7665
      %7698 = vst.msk [vmem:[%s386 + $0xb8] sm:$0xff] %vm780, %v7666
      %7699 = vst.msk [vmem:[%s386 + $0xc0] sm:$0xff] %vm780, %v7667
      %7700 = vst.msk [vmem:[%s386 + $0xc8] sm:$0xff] %vm780, %v7668
      %7701 = vst.msk [vmem:[%s386 + $0xd0] sm:$0xff] %vm780, %v7669
      %7702 = vst.msk [vmem:[%s386 + $0xd8] sm:$0xff] %vm780, %v7670
      %7703 = vst.msk [vmem:[%s386 + $0xe0] sm:$0xff] %vm780, %v7671
      %7704 = vst.msk [vmem:[%s386 + $0xe8] sm:$0xff] %vm780, %v7672
      %7705 = vst.msk [vmem:[%s386 + $0xf0] sm:$0xff] %vm780, %v7673
      %7706 = vst.msk [vmem:[%s386 + $0xf8] sm:$0xff] %vm780, %v7674
      %p7707 = scmp.lt.s32.totalorder %s22, 1
      %s7708 = scalar_select %p7707, %s22, 1
      %s7709 = smul.addr %s7708, 32
      %s7710 = smul.addr %s7709, 8
      %s7711 = scalar_lea.vmem %s11, %s7710
      // Predicated region
      $region65: #{tpu_custom_call.1} parent=63 // pred_check
        %p7712 = pneg %p276
      $region66: #{tpu_custom_call.1} parent=63 // pred_check_branch
        %7714 = sbr.rel (%p7712) target = $region68
      $region67: #{tpu_custom_call.1} parent=63 // pred_region
        _
      $region68: #{tpu_custom_call.1} parent=63 // pred_fallthru
        _
    $region64: #{tpu_custom_call.1} parent=5 // pred_fallthru
      _
    %p7715 = scmp.le.s32.totalorder 2, %s17
    // Predicated region
    $region69: #{tpu_custom_call.1} parent=5 // pred_check
      %p7716 = pneg %p7715
    $region70: #{tpu_custom_call.1} parent=5 // pred_check_branch
      %7718 = sbr.rel (%p7716) target = $region72
    $region71: #{tpu_custom_call.1} parent=5 // pred_region
      %s7719 = ssub.s32 %s17, 2
      // Predicated region
      $region73: #{tpu_custom_call.1} parent=71 // pred_check
        %p7720 = pneg %p282
      $region74: #{tpu_custom_call.1} parent=71 // pred_check_branch
        %7722 = sbr.rel (%p7720) target = $region76
      $region75: #{tpu_custom_call.1} parent=71 // pred_region
        %p7723 = scmp.lt.s32.totalorder %s23, 1
        %s7724 = scalar_select %p7723, %s23, 1
        %s7725 = smul.addr %s7724, 32
        %s7726 = smul.addr %s7725, 8
        %s7727 = scalar_lea.vmem %s11, %s7726
      $region76: #{tpu_custom_call.1} parent=71 // pred_fallthru
        _
    $region72: #{tpu_custom_call.1} parent=5 // pred_fallthru
      _
  $region6: #{tpu_custom_call.1} parent=0 // loop_footer
    %s21 = sadd.s32 1, %s17
  $region7: #{tpu_custom_call.1} parent=0 // loop_footer_branch
    %16 = sbr.rel target = $region3
  $region8: #{tpu_custom_call.1} parent=0 // loop_exit
    _

</llo_original>
